<compile_context>
chip_gen: v6e
topology: v6e:2x2x1
jax: 0.10.0
libtpu: 0.0.40
codegen_flags: <defaults>
</compile_context>

<pallas_src>
import math

import jax
import jax.numpy as jnp
from jax.experimental import pallas as pl
from jax.experimental.pallas import tpu as pltpu

_EPS = 1e-5


# ---------------------------------------------------------------------------
# In-kernel helpers
# ---------------------------------------------------------------------------
def _conv3x3(src_bf16, pad_ref, w_ref):
    """3x3 same-padded conv of one (H, W, Cin) bf16 tile.

    src is written into the bf16 padded scratch (halo rows stored separately,
    W halo glued on in-register -> one dense aligned interior store), then the
    conv is 9 accumulated K=Cin MXU dots (no materialized 9*Cin im2col slab).
    Returns the f32 accumulator in matmul-natural (H*W, Cout) layout.
    """
    H, W, Cin = src_bf16.shape
    Cout = w_ref.shape[-1]

    zrow = jnp.zeros((1, W + 2, Cin), jnp.bfloat16)
    zcol = jnp.zeros((H, 1, Cin), jnp.bfloat16)
    pad_ref[0:1, :, :] = zrow                      # top halo row
    pad_ref[H + 1:H + 2, :, :] = zrow              # bottom halo row
    # Interior rows: rows are the untiled major axis, so this is one dense,
    # fully aligned store; no width-1 masked column stores for the W halo.
    pad_ref[1:H + 1, :, :] = jnp.concatenate([zcol, src_bf16, zcol], axis=1)

    acc = jnp.zeros((H * W, Cout), jnp.float32)
    for dh in range(3):
        for dw in range(3):
            win = pad_ref[dh:dh + H, dw:dw + W, :]          # (H, W, Cin) bf16
            acc = acc + jnp.dot(win.reshape(H * W, Cin), w_ref[dh, dw],
                                preferred_element_type=jnp.float32)
    return acc


def _accumulate_stats(stats_ref, acc):
    """Accumulate per-channel sum / sum-of-squares across batch grid steps."""
    @pl.when(pl.program_id(0) == 0)
    def _():
        stats_ref[...] = jnp.zeros_like(stats_ref)

    s = jnp.sum(acc, axis=0, keepdims=True)                  # (1, C)
    s2 = jnp.sum(acc * acc, axis=0, keepdims=True)           # (1, C)
    stats_ref[...] = stats_ref[...] + jnp.concatenate([s, s2], axis=0)


def _bn_scale_shift(stats_ref, g_ref, be_ref, inv_count):
    """Fold train-mode BN (biased batch stats) into a per-channel affine."""
    mean = stats_ref[0:1, :] * inv_count
    var = stats_ref[1:2, :] * inv_count - mean * mean        # E[x^2] - mean^2
    scale = g_ref[...] * jax.lax.rsqrt(var + _EPS)
    shift = be_ref[...] - mean * scale
    return scale, shift


# ---------------------------------------------------------------------------
# Kernels (one per pass, each tiled over the batch axis)
# ---------------------------------------------------------------------------
def _conv_stats_kernel(x_ref, w_ref, y_ref, stats_ref, pad_ref):
    # x_ref: (1,H,W,Cin) f32 | w_ref: (3,3,Cin,C1) bf16
    # y_ref: (1,H*W,C1) bf16 | stats_ref: (2,C1) f32 resident accumulator
    acc = _conv3x3(x_ref[0].astype(jnp.bfloat16), pad_ref, w_ref)
    _accumulate_stats(stats_ref, acc)
    y_ref[0] = acc.astype(jnp.bfloat16)            # matmul-natural, lane = C1


def _make_bn_relu_conv_stats_kernel(count):
    inv_count = 1.0 / count

    def kernel(stats_in_ref, g_ref, be_ref, h_ref, w_ref,
               y_ref, stats_out_ref, pad_ref):
        Hp2, Wp2, C1 = pad_ref.shape
        H, W = Hp2 - 2, Wp2 - 2
        scale, shift = _bn_scale_shift(stats_in_ref, g_ref, be_ref, inv_count)
        h = jnp.maximum(h_ref[0].astype(jnp.float32) * scale + shift, 0.0)
        acc = _conv3x3(h.astype(jnp.bfloat16).reshape(H, W, C1), pad_ref, w_ref)
        _accumulate_stats(stats_out_ref, acc)
        y_ref[0] = acc.astype(jnp.bfloat16)

    return kernel


def _make_bn_relu_out_kernel(count, lane_dense):
    inv_count = 1.0 / count

    def kernel(stats_ref, g_ref, be_ref, h_ref, o_ref):
        scale, shift = _bn_scale_shift(stats_ref, g_ref, be_ref, inv_count)
        y = jnp.maximum(h_ref[0].astype(jnp.float32) * scale + shift, 0.0)
        if lane_dense:
            # C2 < 128: transpose so lanes = H*W (dense, unmasked stores);
            # the wrapper's NCHW reshape is then a pure bitcast.
            o_ref[0] = jnp.transpose(y)            # (C2, H*W)
        else:
            o_ref[0] = y                           # (H*W, C2) already lane-dense

    return kernel


# ---------------------------------------------------------------------------
# Parameter prep (hoisted out of the forward pass)
# ---------------------------------------------------------------------------
def init_double_conv_params(key, in_ch, out_ch):
    """Parameters in PyTorch layout (Conv2d weight: (Cout, Cin, 3, 3))."""
    ks = jax.random.split(key, 4)
    return dict(
        w1=0.1 * jax.random.normal(ks[0], (out_ch, in_ch, 3, 3), jnp.float32),
        b1=0.1 * jax.random.normal(ks[1], (out_ch,), jnp.float32),
        g1=jnp.ones((out_ch,), jnp.float32),
        be1=jnp.zeros((out_ch,), jnp.float32),
        w2=0.1 * jax.random.normal(ks[2], (out_ch, out_ch, 3, 3), jnp.float32),
        b2=0.1 * jax.random.normal(ks[3], (out_ch,), jnp.float32),
        g2=jnp.ones((out_ch,), jnp.float32),
        be2=jnp.zeros((out_ch,), jnp.float32),
    )


def prepare_params(p):
    """Conv weights (Cout,Cin,3,3) -> (3,3,Cin,Cout) bf16 (kernel slices
    w[dh,dw] -> (Cin,Cout)); BN gamma/beta -> (1,C) f32.  Conv biases are
    dropped: with train-mode BatchNorm right after each conv, a per-channel
    bias is exactly cancelled by the mean subtraction (valid only for
    use_batchnorm=True in training mode)."""
    def conv_w(w):
        return jnp.transpose(w, (2, 3, 1, 0)).astype(jnp.bfloat16)

    def vec(v):
        return v.astype(jnp.float32)[None, :]

    return dict(w1=conv_w(p['w1']), g1=vec(p['g1']), be1=vec(p['be1']),
                w2=conv_w(p['w2']), g2=vec(p['g2']), be2=vec(p['be2']))


# ---------------------------------------------------------------------------
# Forward wrapper
# ---------------------------------------------------------------------------
def _nbytes(shape, dtype):
    return math.prod(shape) * jnp.dtype(dtype).itemsize


def _vmem_limit(block_bytes, scratch_bytes):
    # 2x for BlockSpec double-buffering of the pipelined blocks, plus scratch
    # and headroom for in-kernel temporaries (f32 accumulator, window copies).
    return int(min(2 * block_bytes + scratch_bytes + (8 << 20), 96 << 20))


@jax.jit
def double_conv_block_forward(params, x_nchw):
    N, Cin, H, W = x_nchw.shape
    C1 = params['g1'].shape[-1]
    C2 = params['g2'].shape[-1]
    HW = H * W
    count = float(N * HW)                 # BN (train mode) reduces over N*H*W
    bf16, f32 = jnp.bfloat16, jnp.float32

    # NCHW -> NHWC so channels sit on the MXU contraction (lane) axis.
    x = jnp.transpose(x_nchw, (0, 2, 3, 1))

    # ---- pass 1: conv1 per batch tile (pipelined) + BN1 partial stats ------
    blk1 = (_nbytes((1, H, W, Cin), f32) + _nbytes((3, 3, Cin, C1), bf16)
            + _nbytes((1, HW, C1), bf16) + _nbytes((2, C1), f32))
    scr1 = _nbytes((H + 2, W + 2, Cin), bf16)
    y1, stats1 = pl.pallas_call(
        _conv_stats_kernel,
        grid=(N,),
        in_specs=[pl.BlockSpec((1, H, W, Cin), lambda n: (n, 0, 0, 0)),
                  pl.BlockSpec((3, 3, Cin, C1), lambda n: (0, 0, 0, 0))],
        out_specs=[pl.BlockSpec((1, HW, C1), lambda n: (n, 0, 0)),
                   pl.BlockSpec((2, C1), lambda n: (0, 0))],
        out_shape=(jax.ShapeDtypeStruct((N, HW, C1), bf16),
                   jax.ShapeDtypeStruct((2, C1), f32)),
        scratch_shapes=[pltpu.VMEM((H + 2, W + 2, Cin), bf16)],
        compiler_params=pltpu.CompilerParams(
            dimension_semantics=("arbitrary",),   # stats accumulate over batch
            vmem_limit_bytes=_vmem_limit(blk1, scr1)),
    )(x, params['w1'])

    # ---- pass 2: BN1 + ReLU -> conv2 + BN2 partial stats --------------------
    blk2 = (_nbytes((2, C1), f32) + 2 * _nbytes((1, C1), f32)
            + _nbytes((1, HW, C1), bf16) + _nbytes((3, 3, C1, C2), bf16)
            + _nbytes((1, HW, C2), bf16) + _nbytes((2, C2), f32))
    scr2 = _nbytes((H + 2, W + 2, C1), bf16)
    y2, stats2 = pl.pallas_call(
        _make_bn_relu_conv_stats_kernel(count),
        grid=(N,),
        in_specs=[pl.BlockSpec((2, C1), lambda n: (0, 0)),
                  pl.BlockSpec((1, C1), lambda n: (0, 0)),
                  pl.BlockSpec((1, C1), lambda n: (0, 0)),
                  pl.BlockSpec((1, HW, C1), lambda n: (n, 0, 0)),
                  pl.BlockSpec((3, 3, C1, C2), lambda n: (0, 0, 0, 0))],
        out_specs=[pl.BlockSpec((1, HW, C2), lambda n: (n, 0, 0)),
                   pl.BlockSpec((2, C2), lambda n: (0, 0))],
        out_shape=(jax.ShapeDtypeStruct((N, HW, C2), bf16),
                   jax.ShapeDtypeStruct((2, C2), f32)),
        scratch_shapes=[pltpu.VMEM((H + 2, W + 2, C1), bf16)],
        compiler_params=pltpu.CompilerParams(
            dimension_semantics=("arbitrary",),
            vmem_limit_bytes=_vmem_limit(blk2, scr2)),
    )(stats1, params['g1'], params['be1'], y1, params['w2'])

    # ---- pass 3: BN2 + ReLU, final store ------------------------------------
    lane_dense = C2 < 128      # keep (N, C2, H*W) layout only for narrow C2
    if lane_dense:
        out_shape = jax.ShapeDtypeStruct((N, C2, HW), f32)
        out_spec = pl.BlockSpec((1, C2, HW), lambda n: (n, 0, 0))
    else:
        out_shape = jax.ShapeDtypeStruct((N, HW, C2), f32)
        out_spec = pl.BlockSpec((1, HW, C2), lambda n: (n, 0, 0))
    blk3 = (_nbytes((2, C2), f32) + 2 * _nbytes((1, C2), f32)
            + _nbytes((1, HW, C2), bf16) + _nbytes((1, HW, C2), f32))
    out = pl.pallas_call(
        _make_bn_relu_out_kernel(count, lane_dense),
        grid=(N,),
        in_specs=[pl.BlockSpec((2, C2), lambda n: (0, 0)),
                  pl.BlockSpec((1, C2), lambda n: (0, 0)),
                  pl.BlockSpec((1, C2), lambda n: (0, 0)),
                  pl.BlockSpec((1, HW, C2), lambda n: (n, 0, 0))],
        out_specs=out_spec,
        out_shape=out_shape,
        compiler_params=pltpu.CompilerParams(
            dimension_semantics=("parallel",),    # no cross-tile reduction here
            vmem_limit_bytes=_vmem_limit(blk3, 0)),
    )(stats2, params['g2'], params['be2'], y2)

    if lane_dense:
        return out.reshape(N, C2, H, W)           # pure reshape, already NCHW
    return jnp.transpose(out.reshape(N, H, W, C2), (0, 3, 1, 2))


# ---------------------------------------------------------------------------
if __name__ == "__main__":
    key = jax.random.PRNGKey(0)
    N, Cin, Cout, H, W = 2, 4, 8, 16, 16

    kp, kx = jax.random.split(key)
    raw_params = init_double_conv_params(kp, Cin, Cout)
    params = prepare_params(raw_params)

    x = jax.random.normal(kx, (N, Cin, H, W), jnp.float32)   # NCHW (PyTorch)

    out = jax.block_until_ready(double_conv_block_forward(params, x))

    assert out.shape == (N, Cout, H, W), out.shape
    assert bool(jnp.all(jnp.isfinite(out)))
    print("KERNEL_OK")
</pallas_src>

<mosaic_0001>
module attributes {stable_mosaic.version = 11 : i64} {
  func.func @kernel(%arg0: i32, %arg1: memref<2x8xf32, #tpu.memory_space<vmem>>, %arg2: memref<1x8xf32, #tpu.memory_space<vmem>>, %arg3: memref<1x8xf32, #tpu.memory_space<vmem>>, %arg4: memref<1x256x8xbf16, #tpu.memory_space<vmem>>, %arg5: memref<1x8x256xf32, #tpu.memory_space<vmem>>) attributes {dimension_semantics = [#tpu.dimension_semantics<parallel>], iteration_bounds = array<i64: 2>, scalar_prefetch = 0 : i64, scratch_operands = 0 : i64, tpu.core_type = #tpu.core_type<tc>, window_params = [{pipeline_mode = #tpu.pipeline_mode<synchronous>, transform_indices = @transform_0, window_bounds = array<i64: 2, 8>}, {pipeline_mode = #tpu.pipeline_mode<synchronous>, transform_indices = @transform_1, window_bounds = array<i64: 1, 8>}, {pipeline_mode = #tpu.pipeline_mode<synchronous>, transform_indices = @transform_2, window_bounds = array<i64: 1, 8>}, {transform_indices = @transform_3, window_bounds = array<i64: 1, 256, 8>}, {transform_indices = @transform_4, window_bounds = array<i64: 1, 8, 256>}]} {
    %c0 = arith.constant 0 : index
    %c0_0 = arith.constant 0 : index
    %0 = vector.load %arg1[%c0, %c0_0] : memref<2x8xf32, #tpu.memory_space<vmem>>, vector<1x8xf32>
    %cst = arith.constant 0.001953125 : f32
    %1 = vector.broadcast %cst : f32 to vector<1x8xf32>
    %2 = arith.mulf %0, %1 : vector<1x8xf32>
    %c1 = arith.constant 1 : index
    %c0_1 = arith.constant 0 : index
    %3 = vector.load %arg1[%c1, %c0_1] : memref<2x8xf32, #tpu.memory_space<vmem>>, vector<1x8xf32>
    %cst_2 = arith.constant 0.001953125 : f32
    %4 = vector.broadcast %cst_2 : f32 to vector<1x8xf32>
    %5 = arith.mulf %3, %4 : vector<1x8xf32>
    %6 = arith.mulf %2, %2 : vector<1x8xf32>
    %7 = arith.subf %5, %6 : vector<1x8xf32>
    %c0_3 = arith.constant 0 : index
    %c0_4 = arith.constant 0 : index
    %8 = vector.load %arg2[%c0_3, %c0_4] : memref<1x8xf32, #tpu.memory_space<vmem>>, vector<1x8xf32>
    %cst_5 = arith.constant 9.99999974E-6 : f32
    %9 = vector.broadcast %cst_5 : f32 to vector<1x8xf32>
    %10 = arith.addf %7, %9 : vector<1x8xf32>
    %11 = math.rsqrt %10 : vector<1x8xf32>
    %12 = arith.mulf %8, %11 : vector<1x8xf32>
    %c0_6 = arith.constant 0 : index
    %c0_7 = arith.constant 0 : index
    %13 = vector.load %arg3[%c0_6, %c0_7] : memref<1x8xf32, #tpu.memory_space<vmem>>, vector<1x8xf32>
    %14 = arith.mulf %2, %12 : vector<1x8xf32>
    %15 = arith.subf %13, %14 : vector<1x8xf32>
    %c0_8 = arith.constant 0 : index
    %c0_9 = arith.constant 0 : index
    %c0_10 = arith.constant 0 : index
    %16 = vector.load %arg4[%c0_8, %c0_9, %c0_10] : memref<1x256x8xbf16, #tpu.memory_space<vmem>>, vector<1x256x8xbf16>
    %17 = vector.shape_cast %16 : vector<1x256x8xbf16> to vector<256x8xbf16>
    %18 = arith.extf %17 : vector<256x8xbf16> to vector<256x8xf32>
    %19 = vector.broadcast %12 : vector<1x8xf32> to vector<256x8xf32>
    %20 = arith.mulf %18, %19 : vector<256x8xf32>
    %21 = vector.broadcast %15 : vector<1x8xf32> to vector<256x8xf32>
    %22 = arith.addf %20, %21 : vector<256x8xf32>
    %cst_11 = arith.constant 0.000000e+00 : f32
    %23 = vector.broadcast %cst_11 : f32 to vector<256x8xf32>
    %24 = arith.maximumf %22, %23 : vector<256x8xf32>
    %25 = tpu.transpose %24, [1, 0] : vector<256x8xf32> -> vector<8x256xf32>
    %c0_12 = arith.constant 0 : index
    %c0_13 = arith.constant 0 : index
    %c0_14 = arith.constant 0 : index
    %26 = vector.load %arg5[%c0_12, %c0_13, %c0_14] : memref<1x8x256xf32, #tpu.memory_space<vmem>>, vector<1x8x256xf32>
    %27 = vector.shape_cast %26 : vector<1x8x256xf32> to vector<8x256xf32>
    %28 = vector.shape_cast %25 : vector<8x256xf32> to vector<1x8x256xf32>
    tpu.vector_store %arg5[%c0_12, %c0_13, %c0_14], %28 {strides = array<i32>} : memref<1x8x256xf32, #tpu.memory_space<vmem>>, vector<1x8x256xf32>,
    return
  }
  func.func @transform_0(%arg0: i32) -> (i32, i32) {
    %c0_i32 = arith.constant 0 : i32
    %c0_i32_0 = arith.constant 0 : i32
    %c0_i32_1 = arith.constant 0 : i32
    return %c0_i32, %c0_i32_0 : i32, i32
  }
  func.func @transform_1(%arg0: i32) -> (i32, i32) {
    %c0_i32 = arith.constant 0 : i32
    %c0_i32_0 = arith.constant 0 : i32
    %c0_i32_1 = arith.constant 0 : i32
    return %c0_i32, %c0_i32_0 : i32, i32
  }
  func.func @transform_2(%arg0: i32) -> (i32, i32) {
    %c0_i32 = arith.constant 0 : i32
    %c0_i32_0 = arith.constant 0 : i32
    %c0_i32_1 = arith.constant 0 : i32
    return %c0_i32, %c0_i32_0 : i32, i32
  }
  func.func @transform_3(%arg0: i32) -> (i32, i32, i32) {
    %c0_i32 = arith.constant 0 : i32
    %c0_i32_0 = arith.constant 0 : i32
    %c0_i32_1 = arith.constant 0 : i32
    return %arg0, %c0_i32, %c0_i32_0 : i32, i32, i32
  }
  func.func @transform_4(%arg0: i32) -> (i32, i32, i32) {
    %c0_i32 = arith.constant 0 : i32
    %c0_i32_0 = arith.constant 0 : i32
    %c0_i32_1 = arith.constant 0 : i32
    return %arg0, %c0_i32, %c0_i32_0 : i32, i32, i32
  }
}

module attributes {stable_mosaic.version = 11 : i64} {
  func.func @_conv_stats_kernel(%arg0: i32, %arg1: memref<1x16x16x4xf32, #tpu.memory_space<vmem>>, %arg2: memref<3x3x4x8xbf16, #tpu.memory_space<vmem>>, %arg3: memref<1x256x8xbf16, #tpu.memory_space<vmem>>, %arg4: memref<2x8xf32, #tpu.memory_space<vmem>>, %arg5: memref<18x18x4xbf16, #tpu.memory_space<vmem>>) attributes {dimension_semantics = [#tpu.dimension_semantics<arbitrary>], iteration_bounds = array<i64: 2>, scalar_prefetch = 0 : i64, scratch_operands = 1 : i64, tpu.core_type = #tpu.core_type<tc>, window_params = [{transform_indices = @transform_0, window_bounds = array<i64: 1, 16, 16, 4>}, {pipeline_mode = #tpu.pipeline_mode<synchronous>, transform_indices = @transform_1, window_bounds = array<i64: 3, 3, 4, 8>}, {transform_indices = @transform_2, window_bounds = array<i64: 1, 256, 8>}, {pipeline_mode = #tpu.pipeline_mode<synchronous>, transform_indices = @transform_3, window_bounds = array<i64: 2, 8>}]} {
    %c0 = arith.constant 0 : index
    %c0_0 = arith.constant 0 : index
    %c0_1 = arith.constant 0 : index
    %c0_2 = arith.constant 0 : index
    %0 = vector.load %arg1[%c0, %c0_0, %c0_1, %c0_2] : memref<1x16x16x4xf32, #tpu.memory_space<vmem>>, vector<1x16x16x4xf32>
    %1 = vector.shape_cast %0 : vector<1x16x16x4xf32> to vector<16x16x4xf32>
    %2 = arith.truncf %1 : vector<16x16x4xf32> to vector<16x16x4xbf16>
    %cst = arith.constant 0.000000e+00 : bf16
    %3 = vector.broadcast %cst : bf16 to vector<1x18x4xbf16>
    %cst_3 = arith.constant 0.000000e+00 : bf16
    %4 = vector.broadcast %cst_3 : bf16 to vector<16x1x4xbf16>
    %c0_4 = arith.constant 0 : index
    %c0_5 = arith.constant 0 : index
    %c0_6 = arith.constant 0 : index
    %5 = vector.load %arg5[%c0_4, %c0_5, %c0_6] : memref<18x18x4xbf16, #tpu.memory_space<vmem>>, vector<1x18x4xbf16>
    tpu.vector_store %arg5[%c0_4, %c0_5, %c0_6], %3 {strides = array<i32>} : memref<18x18x4xbf16, #tpu.memory_space<vmem>>, vector<1x18x4xbf16>,
    %c17 = arith.constant 17 : index
    %c0_7 = arith.constant 0 : index
    %c0_8 = arith.constant 0 : index
    %6 = vector.load %arg5[%c17, %c0_7, %c0_8] : memref<18x18x4xbf16, #tpu.memory_space<vmem>>, vector<1x18x4xbf16>
    tpu.vector_store %arg5[%c17, %c0_7, %c0_8], %3 {strides = array<i32>} : memref<18x18x4xbf16, #tpu.memory_space<vmem>>, vector<1x18x4xbf16>,
    %7 = tpu.concatenate %4, %2, %4 in 1 : vector<16x1x4xbf16>, vector<16x16x4xbf16>, vector<16x1x4xbf16> -> vector<16x18x4xbf16>
    %c1 = arith.constant 1 : index
    %c0_9 = arith.constant 0 : index
    %c0_10 = arith.constant 0 : index
    %8 = vector.load %arg5[%c1, %c0_9, %c0_10] : memref<18x18x4xbf16, #tpu.memory_space<vmem>>, vector<16x18x4xbf16>
    tpu.vector_store %arg5[%c1, %c0_9, %c0_10], %7 {strides = array<i32>} : memref<18x18x4xbf16, #tpu.memory_space<vmem>>, vector<16x18x4xbf16>,
    %cst_11 = arith.constant 0.000000e+00 : f32
    %9 = vector.broadcast %cst_11 : f32 to vector<256x8xf32>
    %c0_12 = arith.constant 0 : index
    %c0_13 = arith.constant 0 : index
    %c0_14 = arith.constant 0 : index
    %10 = vector.load %arg5[%c0_12, %c0_13, %c0_14] : memref<18x18x4xbf16, #tpu.memory_space<vmem>>, vector<16x16x4xbf16>
    %11 = vector.shape_cast %10 : vector<16x16x4xbf16> to vector<256x4xbf16>
    %c0_15 = arith.constant 0 : index
    %c0_16 = arith.constant 0 : index
    %c0_17 = arith.constant 0 : index
    %c0_18 = arith.constant 0 : index
    %12 = vector.load %arg2[%c0_15, %c0_16, %c0_17, %c0_18] : memref<3x3x4x8xbf16, #tpu.memory_space<vmem>>, vector<1x1x4x8xbf16>
    %13 = vector.shape_cast %12 : vector<1x1x4x8xbf16> to vector<4x8xbf16>
    %cst_19 = arith.constant dense<0.000000e+00> : vector<256x8xf32>
    %14 = tpu.matmul %11, %13, %cst_19 {dimension_numbers = #tpu.dot_dimension_numbers<[1], [0], [0], [1], [0, 0, 1, 1], [], []>} : vector<256x4xbf16>, vector<4x8xbf16>, vector<256x8xf32> -> vector<256x8xf32>
    %15 = arith.addf %9, %14 : vector<256x8xf32>
    %c0_20 = arith.constant 0 : index
    %c1_21 = arith.constant 1 : index
    %c0_22 = arith.constant 0 : index
    %16 = vector.load %arg5[%c0_20, %c1_21, %c0_22] : memref<18x18x4xbf16, #tpu.memory_space<vmem>>, vector<16x16x4xbf16>
    %17 = vector.shape_cast %16 : vector<16x16x4xbf16> to vector<256x4xbf16>
    %c0_23 = arith.constant 0 : index
    %c1_24 = arith.constant 1 : index
    %c0_25 = arith.constant 0 : index
    %c0_26 = arith.constant 0 : index
    %18 = vector.load %arg2[%c0_23, %c1_24, %c0_25, %c0_26] : memref<3x3x4x8xbf16, #tpu.memory_space<vmem>>, vector<1x1x4x8xbf16>
    %19 = vector.shape_cast %18 : vector<1x1x4x8xbf16> to vector<4x8xbf16>
    %cst_27 = arith.constant dense<0.000000e+00> : vector<256x8xf32>
    %20 = tpu.matmul %17, %19, %cst_27 {dimension_numbers = #tpu.dot_dimension_numbers<[1], [0], [0], [1], [0, 0, 1, 1], [], []>} : vector<256x4xbf16>, vector<4x8xbf16>, vector<256x8xf32> -> vector<256x8xf32>
    %21 = arith.addf %15, %20 : vector<256x8xf32>
    %c0_28 = arith.constant 0 : index
    %c2 = arith.constant 2 : index
    %c0_29 = arith.constant 0 : index
    %22 = vector.load %arg5[%c0_28, %c2, %c0_29] : memref<18x18x4xbf16, #tpu.memory_space<vmem>>, vector<16x16x4xbf16>
    %23 = vector.shape_cast %22 : vector<16x16x4xbf16> to vector<256x4xbf16>
    %c0_30 = arith.constant 0 : index
    %c2_31 = arith.constant 2 : index
    %c0_32 = arith.constant 0 : index
    %c0_33 = arith.constant 0 : index
    %24 = vector.load %arg2[%c0_30, %c2_31, %c0_32, %c0_33] : memref<3x3x4x8xbf16, #tpu.memory_space<vmem>>, vector<1x1x4x8xbf16>
    %25 = vector.shape_cast %24 : vector<1x1x4x8xbf16> to vector<4x8xbf16>
    %cst_34 = arith.constant dense<0.000000e+00> : vector<256x8xf32>
    %26 = tpu.matmul %23, %25, %cst_34 {dimension_numbers = #tpu.dot_dimension_numbers<[1], [0], [0], [1], [0, 0, 1, 1], [], []>} : vector<256x4xbf16>, vector<4x8xbf16>, vector<256x8xf32> -> vector<256x8xf32>
    %27 = arith.addf %21, %26 : vector<256x8xf32>
    %c1_35 = arith.constant 1 : index
    %c0_36 = arith.constant 0 : index
    %c0_37 = arith.constant 0 : index
    %28 = vector.load %arg5[%c1_35, %c0_36, %c0_37] : memref<18x18x4xbf16, #tpu.memory_space<vmem>>, vector<16x16x4xbf16>
    %29 = vector.shape_cast %28 : vector<16x16x4xbf16> to vector<256x4xbf16>
    %c1_38 = arith.constant 1 : index
    %c0_39 = arith.constant 0 : index
    %c0_40 = arith.constant 0 : index
    %c0_41 = arith.constant 0 : index
    %30 = vector.load %arg2[%c1_38, %c0_39, %c0_40, %c0_41] : memref<3x3x4x8xbf16, #tpu.memory_space<vmem>>, vector<1x1x4x8xbf16>
    %31 = vector.shape_cast %30 : vector<1x1x4x8xbf16> to vector<4x8xbf16>
    %cst_42 = arith.constant dense<0.000000e+00> : vector<256x8xf32>
    %32 = tpu.matmul %29, %31, %cst_42 {dimension_numbers = #tpu.dot_dimension_numbers<[1], [0], [0], [1], [0, 0, 1, 1], [], []>} : vector<256x4xbf16>, vector<4x8xbf16>, vector<256x8xf32> -> vector<256x8xf32>
    %33 = arith.addf %27, %32 : vector<256x8xf32>
    %c1_43 = arith.constant 1 : index
    %c1_44 = arith.constant 1 : index
    %c0_45 = arith.constant 0 : index
    %34 = vector.load %arg5[%c1_43, %c1_44, %c0_45] : memref<18x18x4xbf16, #tpu.memory_space<vmem>>, vector<16x16x4xbf16>
    %35 = vector.shape_cast %34 : vector<16x16x4xbf16> to vector<256x4xbf16>
    %c1_46 = arith.constant 1 : index
    %c1_47 = arith.constant 1 : index
    %c0_48 = arith.constant 0 : index
    %c0_49 = arith.constant 0 : index
    %36 = vector.load %arg2[%c1_46, %c1_47, %c0_48, %c0_49] : memref<3x3x4x8xbf16, #tpu.memory_space<vmem>>, vector<1x1x4x8xbf16>
    %37 = vector.shape_cast %36 : vector<1x1x4x8xbf16> to vector<4x8xbf16>
    %cst_50 = arith.constant dense<0.000000e+00> : vector<256x8xf32>
    %38 = tpu.matmul %35, %37, %cst_50 {dimension_numbers = #tpu.dot_dimension_numbers<[1], [0], [0], [1], [0, 0, 1, 1], [], []>} : vector<256x4xbf16>, vector<4x8xbf16>, vector<256x8xf32> -> vector<256x8xf32>
    %39 = arith.addf %33, %38 : vector<256x8xf32>
    %c1_51 = arith.constant 1 : index
    %c2_52 = arith.constant 2 : index
    %c0_53 = arith.constant 0 : index
    %40 = vector.load %arg5[%c1_51, %c2_52, %c0_53] : memref<18x18x4xbf16, #tpu.memory_space<vmem>>, vector<16x16x4xbf16>
    %41 = vector.shape_cast %40 : vector<16x16x4xbf16> to vector<256x4xbf16>
    %c1_54 = arith.constant 1 : index
    %c2_55 = arith.constant 2 : index
    %c0_56 = arith.constant 0 : index
    %c0_57 = arith.constant 0 : index
    %42 = vector.load %arg2[%c1_54, %c2_55, %c0_56, %c0_57] : memref<3x3x4x8xbf16, #tpu.memory_space<vmem>>, vector<1x1x4x8xbf16>
    %43 = vector.shape_cast %42 : vector<1x1x4x8xbf16> to vector<4x8xbf16>
    %cst_58 = arith.constant dense<0.000000e+00> : vector<256x8xf32>
    %44 = tpu.matmul %41, %43, %cst_58 {dimension_numbers = #tpu.dot_dimension_numbers<[1], [0], [0], [1], [0, 0, 1, 1], [], []>} : vector<256x4xbf16>, vector<4x8xbf16>, vector<256x8xf32> -> vector<256x8xf32>
    %45 = arith.addf %39, %44 : vector<256x8xf32>
    %c2_59 = arith.constant 2 : index
    %c0_60 = arith.constant 0 : index
    %c0_61 = arith.constant 0 : index
    %46 = vector.load %arg5[%c2_59, %c0_60, %c0_61] : memref<18x18x4xbf16, #tpu.memory_space<vmem>>, vector<16x16x4xbf16>
    %47 = vector.shape_cast %46 : vector<16x16x4xbf16> to vector<256x4xbf16>
    %c2_62 = arith.constant 2 : index
    %c0_63 = arith.constant 0 : index
    %c0_64 = arith.constant 0 : index
    %c0_65 = arith.constant 0 : index
    %48 = vector.load %arg2[%c2_62, %c0_63, %c0_64, %c0_65] : memref<3x3x4x8xbf16, #tpu.memory_space<vmem>>, vector<1x1x4x8xbf16>
    %49 = vector.shape_cast %48 : vector<1x1x4x8xbf16> to vector<4x8xbf16>
    %cst_66 = arith.constant dense<0.000000e+00> : vector<256x8xf32>
    %50 = tpu.matmul %47, %49, %cst_66 {dimension_numbers = #tpu.dot_dimension_numbers<[1], [0], [0], [1], [0, 0, 1, 1], [], []>} : vector<256x4xbf16>, vector<4x8xbf16>, vector<256x8xf32> -> vector<256x8xf32>
    %51 = arith.addf %45, %50 : vector<256x8xf32>
    %c2_67 = arith.constant 2 : index
    %c1_68 = arith.constant 1 : index
    %c0_69 = arith.constant 0 : index
    %52 = vector.load %arg5[%c2_67, %c1_68, %c0_69] : memref<18x18x4xbf16, #tpu.memory_space<vmem>>, vector<16x16x4xbf16>
    %53 = vector.shape_cast %52 : vector<16x16x4xbf16> to vector<256x4xbf16>
    %c2_70 = arith.constant 2 : index
    %c1_71 = arith.constant 1 : index
    %c0_72 = arith.constant 0 : index
    %c0_73 = arith.constant 0 : index
    %54 = vector.load %arg2[%c2_70, %c1_71, %c0_72, %c0_73] : memref<3x3x4x8xbf16, #tpu.memory_space<vmem>>, vector<1x1x4x8xbf16>
    %55 = vector.shape_cast %54 : vector<1x1x4x8xbf16> to vector<4x8xbf16>
    %cst_74 = arith.constant dense<0.000000e+00> : vector<256x8xf32>
    %56 = tpu.matmul %53, %55, %cst_74 {dimension_numbers = #tpu.dot_dimension_numbers<[1], [0], [0], [1], [0, 0, 1, 1], [], []>} : vector<256x4xbf16>, vector<4x8xbf16>, vector<256x8xf32> -> vector<256x8xf32>
    %57 = arith.addf %51, %56 : vector<256x8xf32>
    %c2_75 = arith.constant 2 : index
    %c2_76 = arith.constant 2 : index
    %c0_77 = arith.constant 0 : index
    %58 = vector.load %arg5[%c2_75, %c2_76, %c0_77] : memref<18x18x4xbf16, #tpu.memory_space<vmem>>, vector<16x16x4xbf16>
    %59 = vector.shape_cast %58 : vector<16x16x4xbf16> to vector<256x4xbf16>
    %c2_78 = arith.constant 2 : index
    %c2_79 = arith.constant 2 : index
    %c0_80 = arith.constant 0 : index
    %c0_81 = arith.constant 0 : index
    %60 = vector.load %arg2[%c2_78, %c2_79, %c0_80, %c0_81] : memref<3x3x4x8xbf16, #tpu.memory_space<vmem>>, vector<1x1x4x8xbf16>
    %61 = vector.shape_cast %60 : vector<1x1x4x8xbf16> to vector<4x8xbf16>
    %cst_82 = arith.constant dense<0.000000e+00> : vector<256x8xf32>
    %62 = tpu.matmul %59, %61, %cst_82 {dimension_numbers = #tpu.dot_dimension_numbers<[1], [0], [0], [1], [0, 0, 1, 1], [], []>} : vector<256x4xbf16>, vector<4x8xbf16>, vector<256x8xf32> -> vector<256x8xf32>
    %63 = arith.addf %57, %62 : vector<256x8xf32>
    %c0_i32 = arith.constant 0 : i32
    %64 = arith.cmpi eq, %arg0, %c0_i32 : i32
    %65 = arith.extui %64 : i1 to i32
    %c0_i32_83 = arith.constant 0 : i32
    %66 = arith.cmpi ne, %65, %c0_i32_83 : i32
    scf.if %66 {
      %cst_93 = arith.constant 0.000000e+00 : f32
      %80 = vector.broadcast %cst_93 : f32 to vector<2x8xf32>
      %c0_94 = arith.constant 0 : index
      %c0_95 = arith.constant 0 : index
      %81 = vector.load %arg4[%c0_94, %c0_95] : memref<2x8xf32, #tpu.memory_space<vmem>>, vector<2x8xf32>
      tpu.vector_store %arg4[%c0_94, %c0_95], %80 {strides = array<i32>} : memref<2x8xf32, #tpu.memory_space<vmem>>, vector<2x8xf32>,
    } else {
    }
    %cst_84 = arith.constant dense<0.000000e+00> : vector<8xf32>
    %67 = vector.multi_reduction <add>, %63, %cst_84 [0] : vector<256x8xf32> to vector<8xf32>
    %68 = vector.shape_cast %67 : vector<8xf32> to vector<1x8xf32>
    %69 = arith.mulf %63, %63 : vector<256x8xf32>
    %cst_85 = arith.constant dense<0.000000e+00> : vector<8xf32>
    %70 = vector.multi_reduction <add>, %69, %cst_85 [0] : vector<256x8xf32> to vector<8xf32>
    %71 = vector.shape_cast %70 : vector<8xf32> to vector<1x8xf32>
    %c0_86 = arith.constant 0 : index
    %c0_87 = arith.constant 0 : index
    %72 = vector.load %arg4[%c0_86, %c0_87] : memref<2x8xf32, #tpu.memory_space<vmem>>, vector<2x8xf32>
    %73 = tpu.concatenate %68, %71 in 0 : vector<1x8xf32>, vector<1x8xf32> -> vector<2x8xf32>
    %74 = arith.addf %72, %73 : vector<2x8xf32>
    %c0_88 = arith.constant 0 : index
    %c0_89 = arith.constant 0 : index
    %75 = vector.load %arg4[%c0_88, %c0_89] : memref<2x8xf32, #tpu.memory_space<vmem>>, vector<2x8xf32>
    tpu.vector_store %arg4[%c0_88, %c0_89], %74 {strides = array<i32>} : memref<2x8xf32, #tpu.memory_space<vmem>>, vector<2x8xf32>,
    %76 = arith.truncf %63 : vector<256x8xf32> to vector<256x8xbf16>
    %c0_90 = arith.constant 0 : index
    %c0_91 = arith.constant 0 : index
    %c0_92 = arith.constant 0 : index
    %77 = vector.load %arg3[%c0_90, %c0_91, %c0_92] : memref<1x256x8xbf16, #tpu.memory_space<vmem>>, vector<1x256x8xbf16>
    %78 = vector.shape_cast %77 : vector<1x256x8xbf16> to vector<256x8xbf16>
    %79 = vector.shape_cast %76 : vector<256x8xbf16> to vector<1x256x8xbf16>
    tpu.vector_store %arg3[%c0_90, %c0_91, %c0_92], %79 {strides = array<i32>} : memref<1x256x8xbf16, #tpu.memory_space<vmem>>, vector<1x256x8xbf16>,
    return
  }
  func.func @transform_0(%arg0: i32) -> (i32, i32, i32, i32) {
    %c0_i32 = arith.constant 0 : i32
    %c0_i32_0 = arith.constant 0 : i32
    %c0_i32_1 = arith.constant 0 : i32
    %c0_i32_2 = arith.constant 0 : i32
    return %arg0, %c0_i32, %c0_i32_0, %c0_i32_1 : i32, i32, i32, i32
  }
  func.func @transform_1(%arg0: i32) -> (i32, i32, i32, i32) {
    %c0_i32 = arith.constant 0 : i32
    %c0_i32_0 = arith.constant 0 : i32
    %c0_i32_1 = arith.constant 0 : i32
    %c0_i32_2 = arith.constant 0 : i32
    %c0_i32_3 = arith.constant 0 : i32
    return %c0_i32, %c0_i32_0, %c0_i32_1, %c0_i32_2 : i32, i32, i32, i32
  }
  func.func @transform_2(%arg0: i32) -> (i32, i32, i32) {
    %c0_i32 = arith.constant 0 : i32
    %c0_i32_0 = arith.constant 0 : i32
    %c0_i32_1 = arith.constant 0 : i32
    return %arg0, %c0_i32, %c0_i32_0 : i32, i32, i32
  }
  func.func @transform_3(%arg0: i32) -> (i32, i32) {
    %c0_i32 = arith.constant 0 : i32
    %c0_i32_0 = arith.constant 0 : i32
    %c0_i32_1 = arith.constant 0 : i32
    return %c0_i32, %c0_i32_0 : i32, i32
  }
}

module attributes {stable_mosaic.version = 11 : i64} {
  func.func @kernel(%arg0: i32, %arg1: memref<2x8xf32, #tpu.memory_space<vmem>>, %arg2: memref<1x8xf32, #tpu.memory_space<vmem>>, %arg3: memref<1x8xf32, #tpu.memory_space<vmem>>, %arg4: memref<1x256x8xbf16, #tpu.memory_space<vmem>>, %arg5: memref<3x3x8x8xbf16, #tpu.memory_space<vmem>>, %arg6: memref<1x256x8xbf16, #tpu.memory_space<vmem>>, %arg7: memref<2x8xf32, #tpu.memory_space<vmem>>, %arg8: memref<18x18x8xbf16, #tpu.memory_space<vmem>>) attributes {dimension_semantics = [#tpu.dimension_semantics<arbitrary>], iteration_bounds = array<i64: 2>, scalar_prefetch = 0 : i64, scratch_operands = 1 : i64, tpu.core_type = #tpu.core_type<tc>, window_params = [{pipeline_mode = #tpu.pipeline_mode<synchronous>, transform_indices = @transform_0, window_bounds = array<i64: 2, 8>}, {pipeline_mode = #tpu.pipeline_mode<synchronous>, transform_indices = @transform_1, window_bounds = array<i64: 1, 8>}, {pipeline_mode = #tpu.pipeline_mode<synchronous>, transform_indices = @transform_2, window_bounds = array<i64: 1, 8>}, {transform_indices = @transform_3, window_bounds = array<i64: 1, 256, 8>}, {pipeline_mode = #tpu.pipeline_mode<synchronous>, transform_indices = @transform_4, window_bounds = array<i64: 3, 3, 8, 8>}, {transform_indices = @transform_5, window_bounds = array<i64: 1, 256, 8>}, {pipeline_mode = #tpu.pipeline_mode<synchronous>, transform_indices = @transform_6, window_bounds = array<i64: 2, 8>}]} {
    %c0 = arith.constant 0 : index
    %c0_0 = arith.constant 0 : index
    %0 = vector.load %arg1[%c0, %c0_0] : memref<2x8xf32, #tpu.memory_space<vmem>>, vector<1x8xf32>
    %cst = arith.constant 0.001953125 : f32
    %1 = vector.broadcast %cst : f32 to vector<1x8xf32>
    %2 = arith.mulf %0, %1 : vector<1x8xf32>
    %c1 = arith.constant 1 : index
    %c0_1 = arith.constant 0 : index
    %3 = vector.load %arg1[%c1, %c0_1] : memref<2x8xf32, #tpu.memory_space<vmem>>, vector<1x8xf32>
    %cst_2 = arith.constant 0.001953125 : f32
    %4 = vector.broadcast %cst_2 : f32 to vector<1x8xf32>
    %5 = arith.mulf %3, %4 : vector<1x8xf32>
    %6 = arith.mulf %2, %2 : vector<1x8xf32>
    %7 = arith.subf %5, %6 : vector<1x8xf32>
    %c0_3 = arith.constant 0 : index
    %c0_4 = arith.constant 0 : index
    %8 = vector.load %arg2[%c0_3, %c0_4] : memref<1x8xf32, #tpu.memory_space<vmem>>, vector<1x8xf32>
    %cst_5 = arith.constant 9.99999974E-6 : f32
    %9 = vector.broadcast %cst_5 : f32 to vector<1x8xf32>
    %10 = arith.addf %7, %9 : vector<1x8xf32>
    %11 = math.rsqrt %10 : vector<1x8xf32>
    %12 = arith.mulf %8, %11 : vector<1x8xf32>
    %c0_6 = arith.constant 0 : index
    %c0_7 = arith.constant 0 : index
    %13 = vector.load %arg3[%c0_6, %c0_7] : memref<1x8xf32, #tpu.memory_space<vmem>>, vector<1x8xf32>
    %14 = arith.mulf %2, %12 : vector<1x8xf32>
    %15 = arith.subf %13, %14 : vector<1x8xf32>
    %c0_8 = arith.constant 0 : index
    %c0_9 = arith.constant 0 : index
    %c0_10 = arith.constant 0 : index
    %16 = vector.load %arg4[%c0_8, %c0_9, %c0_10] : memref<1x256x8xbf16, #tpu.memory_space<vmem>>, vector<1x256x8xbf16>
    %17 = vector.shape_cast %16 : vector<1x256x8xbf16> to vector<256x8xbf16>
    %18 = arith.extf %17 : vector<256x8xbf16> to vector<256x8xf32>
    %19 = vector.broadcast %12 : vector<1x8xf32> to vector<256x8xf32>
    %20 = arith.mulf %18, %19 : vector<256x8xf32>
    %21 = vector.broadcast %15 : vector<1x8xf32> to vector<256x8xf32>
    %22 = arith.addf %20, %21 : vector<256x8xf32>
    %cst_11 = arith.constant 0.000000e+00 : f32
    %23 = vector.broadcast %cst_11 : f32 to vector<256x8xf32>
    %24 = arith.maximumf %22, %23 : vector<256x8xf32>
    %25 = arith.truncf %24 : vector<256x8xf32> to vector<256x8xbf16>
    %26 = vector.shape_cast %25 : vector<256x8xbf16> to vector<16x16x8xbf16>
    %cst_12 = arith.constant 0.000000e+00 : bf16
    %27 = vector.broadcast %cst_12 : bf16 to vector<1x18x8xbf16>
    %cst_13 = arith.constant 0.000000e+00 : bf16
    %28 = vector.broadcast %cst_13 : bf16 to vector<16x1x8xbf16>
    %c0_14 = arith.constant 0 : index
    %c0_15 = arith.constant 0 : index
    %c0_16 = arith.constant 0 : index
    %29 = vector.load %arg8[%c0_14, %c0_15, %c0_16] : memref<18x18x8xbf16, #tpu.memory_space<vmem>>, vector<1x18x8xbf16>
    tpu.vector_store %arg8[%c0_14, %c0_15, %c0_16], %27 {strides = array<i32>} : memref<18x18x8xbf16, #tpu.memory_space<vmem>>, vector<1x18x8xbf16>,
    %c17 = arith.constant 17 : index
    %c0_17 = arith.constant 0 : index
    %c0_18 = arith.constant 0 : index
    %30 = vector.load %arg8[%c17, %c0_17, %c0_18] : memref<18x18x8xbf16, #tpu.memory_space<vmem>>, vector<1x18x8xbf16>
    tpu.vector_store %arg8[%c17, %c0_17, %c0_18], %27 {strides = array<i32>} : memref<18x18x8xbf16, #tpu.memory_space<vmem>>, vector<1x18x8xbf16>,
    %31 = tpu.concatenate %28, %26, %28 in 1 : vector<16x1x8xbf16>, vector<16x16x8xbf16>, vector<16x1x8xbf16> -> vector<16x18x8xbf16>
    %c1_19 = arith.constant 1 : index
    %c0_20 = arith.constant 0 : index
    %c0_21 = arith.constant 0 : index
    %32 = vector.load %arg8[%c1_19, %c0_20, %c0_21] : memref<18x18x8xbf16, #tpu.memory_space<vmem>>, vector<16x18x8xbf16>
    tpu.vector_store %arg8[%c1_19, %c0_20, %c0_21], %31 {strides = array<i32>} : memref<18x18x8xbf16, #tpu.memory_space<vmem>>, vector<16x18x8xbf16>,
    %cst_22 = arith.constant 0.000000e+00 : f32
    %33 = vector.broadcast %cst_22 : f32 to vector<256x8xf32>
    %c0_23 = arith.constant 0 : index
    %c0_24 = arith.constant 0 : index
    %c0_25 = arith.constant 0 : index
    %34 = vector.load %arg8[%c0_23, %c0_24, %c0_25] : memref<18x18x8xbf16, #tpu.memory_space<vmem>>, vector<16x16x8xbf16>
    %35 = vector.shape_cast %34 : vector<16x16x8xbf16> to vector<256x8xbf16>
    %c0_26 = arith.constant 0 : index
    %c0_27 = arith.constant 0 : index
    %c0_28 = arith.constant 0 : index
    %c0_29 = arith.constant 0 : index
    %36 = vector.load %arg5[%c0_26, %c0_27, %c0_28, %c0_29] : memref<3x3x8x8xbf16, #tpu.memory_space<vmem>>, vector<1x1x8x8xbf16>
    %37 = vector.shape_cast %36 : vector<1x1x8x8xbf16> to vector<8x8xbf16>
    %cst_30 = arith.constant dense<0.000000e+00> : vector<256x8xf32>
    %38 = tpu.matmul %35, %37, %cst_30 {dimension_numbers = #tpu.dot_dimension_numbers<[1], [0], [0], [1], [0, 0, 1, 1], [], []>} : vector<256x8xbf16>, vector<8x8xbf16>, vector<256x8xf32> -> vector<256x8xf32>
    %39 = arith.addf %33, %38 : vector<256x8xf32>
    %c0_31 = arith.constant 0 : index
    %c1_32 = arith.constant 1 : index
    %c0_33 = arith.constant 0 : index
    %40 = vector.load %arg8[%c0_31, %c1_32, %c0_33] : memref<18x18x8xbf16, #tpu.memory_space<vmem>>, vector<16x16x8xbf16>
    %41 = vector.shape_cast %40 : vector<16x16x8xbf16> to vector<256x8xbf16>
    %c0_34 = arith.constant 0 : index
    %c1_35 = arith.constant 1 : index
    %c0_36 = arith.constant 0 : index
    %c0_37 = arith.constant 0 : index
    %42 = vector.load %arg5[%c0_34, %c1_35, %c0_36, %c0_37] : memref<3x3x8x8xbf16, #tpu.memory_space<vmem>>, vector<1x1x8x8xbf16>
    %43 = vector.shape_cast %42 : vector<1x1x8x8xbf16> to vector<8x8xbf16>
    %cst_38 = arith.constant dense<0.000000e+00> : vector<256x8xf32>
    %44 = tpu.matmul %41, %43, %cst_38 {dimension_numbers = #tpu.dot_dimension_numbers<[1], [0], [0], [1], [0, 0, 1, 1], [], []>} : vector<256x8xbf16>, vector<8x8xbf16>, vector<256x8xf32> -> vector<256x8xf32>
    %45 = arith.addf %39, %44 : vector<256x8xf32>
    %c0_39 = arith.constant 0 : index
    %c2 = arith.constant 2 : index
    %c0_40 = arith.constant 0 : index
    %46 = vector.load %arg8[%c0_39, %c2, %c0_40] : memref<18x18x8xbf16, #tpu.memory_space<vmem>>, vector<16x16x8xbf16>
    %47 = vector.shape_cast %46 : vector<16x16x8xbf16> to vector<256x8xbf16>
    %c0_41 = arith.constant 0 : index
    %c2_42 = arith.constant 2 : index
    %c0_43 = arith.constant 0 : index
    %c0_44 = arith.constant 0 : index
    %48 = vector.load %arg5[%c0_41, %c2_42, %c0_43, %c0_44] : memref<3x3x8x8xbf16, #tpu.memory_space<vmem>>, vector<1x1x8x8xbf16>
    %49 = vector.shape_cast %48 : vector<1x1x8x8xbf16> to vector<8x8xbf16>
    %cst_45 = arith.constant dense<0.000000e+00> : vector<256x8xf32>
    %50 = tpu.matmul %47, %49, %cst_45 {dimension_numbers = #tpu.dot_dimension_numbers<[1], [0], [0], [1], [0, 0, 1, 1], [], []>} : vector<256x8xbf16>, vector<8x8xbf16>, vector<256x8xf32> -> vector<256x8xf32>
    %51 = arith.addf %45, %50 : vector<256x8xf32>
    %c1_46 = arith.constant 1 : index
    %c0_47 = arith.constant 0 : index
    %c0_48 = arith.constant 0 : index
    %52 = vector.load %arg8[%c1_46, %c0_47, %c0_48] : memref<18x18x8xbf16, #tpu.memory_space<vmem>>, vector<16x16x8xbf16>
    %53 = vector.shape_cast %52 : vector<16x16x8xbf16> to vector<256x8xbf16>
    %c1_49 = arith.constant 1 : index
    %c0_50 = arith.constant 0 : index
    %c0_51 = arith.constant 0 : index
    %c0_52 = arith.constant 0 : index
    %54 = vector.load %arg5[%c1_49, %c0_50, %c0_51, %c0_52] : memref<3x3x8x8xbf16, #tpu.memory_space<vmem>>, vector<1x1x8x8xbf16>
    %55 = vector.shape_cast %54 : vector<1x1x8x8xbf16> to vector<8x8xbf16>
    %cst_53 = arith.constant dense<0.000000e+00> : vector<256x8xf32>
    %56 = tpu.matmul %53, %55, %cst_53 {dimension_numbers = #tpu.dot_dimension_numbers<[1], [0], [0], [1], [0, 0, 1, 1], [], []>} : vector<256x8xbf16>, vector<8x8xbf16>, vector<256x8xf32> -> vector<256x8xf32>
    %57 = arith.addf %51, %56 : vector<256x8xf32>
    %c1_54 = arith.constant 1 : index
    %c1_55 = arith.constant 1 : index
    %c0_56 = arith.constant 0 : index
    %58 = vector.load %arg8[%c1_54, %c1_55, %c0_56] : memref<18x18x8xbf16, #tpu.memory_space<vmem>>, vector<16x16x8xbf16>
    %59 = vector.shape_cast %58 : vector<16x16x8xbf16> to vector<256x8xbf16>
    %c1_57 = arith.constant 1 : index
    %c1_58 = arith.constant 1 : index
    %c0_59 = arith.constant 0 : index
    %c0_60 = arith.constant 0 : index
    %60 = vector.load %arg5[%c1_57, %c1_58, %c0_59, %c0_60] : memref<3x3x8x8xbf16, #tpu.memory_space<vmem>>, vector<1x1x8x8xbf16>
    %61 = vector.shape_cast %60 : vector<1x1x8x8xbf16> to vector<8x8xbf16>
    %cst_61 = arith.constant dense<0.000000e+00> : vector<256x8xf32>
    %62 = tpu.matmul %59, %61, %cst_61 {dimension_numbers = #tpu.dot_dimension_numbers<[1], [0], [0], [1], [0, 0, 1, 1], [], []>} : vector<256x8xbf16>, vector<8x8xbf16>, vector<256x8xf32> -> vector<256x8xf32>
    %63 = arith.addf %57, %62 : vector<256x8xf32>
    %c1_62 = arith.constant 1 : index
    %c2_63 = arith.constant 2 : index
    %c0_64 = arith.constant 0 : index
    %64 = vector.load %arg8[%c1_62, %c2_63, %c0_64] : memref<18x18x8xbf16, #tpu.memory_space<vmem>>, vector<16x16x8xbf16>
    %65 = vector.shape_cast %64 : vector<16x16x8xbf16> to vector<256x8xbf16>
    %c1_65 = arith.constant 1 : index
    %c2_66 = arith.constant 2 : index
    %c0_67 = arith.constant 0 : index
    %c0_68 = arith.constant 0 : index
    %66 = vector.load %arg5[%c1_65, %c2_66, %c0_67, %c0_68] : memref<3x3x8x8xbf16, #tpu.memory_space<vmem>>, vector<1x1x8x8xbf16>
    %67 = vector.shape_cast %66 : vector<1x1x8x8xbf16> to vector<8x8xbf16>
    %cst_69 = arith.constant dense<0.000000e+00> : vector<256x8xf32>
    %68 = tpu.matmul %65, %67, %cst_69 {dimension_numbers = #tpu.dot_dimension_numbers<[1], [0], [0], [1], [0, 0, 1, 1], [], []>} : vector<256x8xbf16>, vector<8x8xbf16>, vector<256x8xf32> -> vector<256x8xf32>
    %69 = arith.addf %63, %68 : vector<256x8xf32>
    %c2_70 = arith.constant 2 : index
    %c0_71 = arith.constant 0 : index
    %c0_72 = arith.constant 0 : index
    %70 = vector.load %arg8[%c2_70, %c0_71, %c0_72] : memref<18x18x8xbf16, #tpu.memory_space<vmem>>, vector<16x16x8xbf16>
    %71 = vector.shape_cast %70 : vector<16x16x8xbf16> to vector<256x8xbf16>
    %c2_73 = arith.constant 2 : index
    %c0_74 = arith.constant 0 : index
    %c0_75 = arith.constant 0 : index
    %c0_76 = arith.constant 0 : index
    %72 = vector.load %arg5[%c2_73, %c0_74, %c0_75, %c0_76] : memref<3x3x8x8xbf16, #tpu.memory_space<vmem>>, vector<1x1x8x8xbf16>
    %73 = vector.shape_cast %72 : vector<1x1x8x8xbf16> to vector<8x8xbf16>
    %cst_77 = arith.constant dense<0.000000e+00> : vector<256x8xf32>
    %74 = tpu.matmul %71, %73, %cst_77 {dimension_numbers = #tpu.dot_dimension_numbers<[1], [0], [0], [1], [0, 0, 1, 1], [], []>} : vector<256x8xbf16>, vector<8x8xbf16>, vector<256x8xf32> -> vector<256x8xf32>
    %75 = arith.addf %69, %74 : vector<256x8xf32>
    %c2_78 = arith.constant 2 : index
    %c1_79 = arith.constant 1 : index
    %c0_80 = arith.constant 0 : index
    %76 = vector.load %arg8[%c2_78, %c1_79, %c0_80] : memref<18x18x8xbf16, #tpu.memory_space<vmem>>, vector<16x16x8xbf16>
    %77 = vector.shape_cast %76 : vector<16x16x8xbf16> to vector<256x8xbf16>
    %c2_81 = arith.constant 2 : index
    %c1_82 = arith.constant 1 : index
    %c0_83 = arith.constant 0 : index
    %c0_84 = arith.constant 0 : index
    %78 = vector.load %arg5[%c2_81, %c1_82, %c0_83, %c0_84] : memref<3x3x8x8xbf16, #tpu.memory_space<vmem>>, vector<1x1x8x8xbf16>
    %79 = vector.shape_cast %78 : vector<1x1x8x8xbf16> to vector<8x8xbf16>
    %cst_85 = arith.constant dense<0.000000e+00> : vector<256x8xf32>
    %80 = tpu.matmul %77, %79, %cst_85 {dimension_numbers = #tpu.dot_dimension_numbers<[1], [0], [0], [1], [0, 0, 1, 1], [], []>} : vector<256x8xbf16>, vector<8x8xbf16>, vector<256x8xf32> -> vector<256x8xf32>
    %81 = arith.addf %75, %80 : vector<256x8xf32>
    %c2_86 = arith.constant 2 : index
    %c2_87 = arith.constant 2 : index
    %c0_88 = arith.constant 0 : index
    %82 = vector.load %arg8[%c2_86, %c2_87, %c0_88] : memref<18x18x8xbf16, #tpu.memory_space<vmem>>, vector<16x16x8xbf16>
    %83 = vector.shape_cast %82 : vector<16x16x8xbf16> to vector<256x8xbf16>
    %c2_89 = arith.constant 2 : index
    %c2_90 = arith.constant 2 : index
    %c0_91 = arith.constant 0 : index
    %c0_92 = arith.constant 0 : index
    %84 = vector.load %arg5[%c2_89, %c2_90, %c0_91, %c0_92] : memref<3x3x8x8xbf16, #tpu.memory_space<vmem>>, vector<1x1x8x8xbf16>
    %85 = vector.shape_cast %84 : vector<1x1x8x8xbf16> to vector<8x8xbf16>
    %cst_93 = arith.constant dense<0.000000e+00> : vector<256x8xf32>
    %86 = tpu.matmul %83, %85, %cst_93 {dimension_numbers = #tpu.dot_dimension_numbers<[1], [0], [0], [1], [0, 0, 1, 1], [], []>} : vector<256x8xbf16>, vector<8x8xbf16>, vector<256x8xf32> -> vector<256x8xf32>
    %87 = arith.addf %81, %86 : vector<256x8xf32>
    %c0_i32 = arith.constant 0 : i32
    %88 = arith.cmpi eq, %arg0, %c0_i32 : i32
    %89 = arith.extui %88 : i1 to i32
    %c0_i32_94 = arith.constant 0 : i32
    %90 = arith.cmpi ne, %89, %c0_i32_94 : i32
    scf.if %90 {
      %cst_104 = arith.constant 0.000000e+00 : f32
      %104 = vector.broadcast %cst_104 : f32 to vector<2x8xf32>
      %c0_105 = arith.constant 0 : index
      %c0_106 = arith.constant 0 : index
      %105 = vector.load %arg7[%c0_105, %c0_106] : memref<2x8xf32, #tpu.memory_space<vmem>>, vector<2x8xf32>
      tpu.vector_store %arg7[%c0_105, %c0_106], %104 {strides = array<i32>} : memref<2x8xf32, #tpu.memory_space<vmem>>, vector<2x8xf32>,
    } else {
    }
    %cst_95 = arith.constant dense<0.000000e+00> : vector<8xf32>
    %91 = vector.multi_reduction <add>, %87, %cst_95 [0] : vector<256x8xf32> to vector<8xf32>
    %92 = vector.shape_cast %91 : vector<8xf32> to vector<1x8xf32>
    %93 = arith.mulf %87, %87 : vector<256x8xf32>
    %cst_96 = arith.constant dense<0.000000e+00> : vector<8xf32>
    %94 = vector.multi_reduction <add>, %93, %cst_96 [0] : vector<256x8xf32> to vector<8xf32>
    %95 = vector.shape_cast %94 : vector<8xf32> to vector<1x8xf32>
    %c0_97 = arith.constant 0 : index
    %c0_98 = arith.constant 0 : index
    %96 = vector.load %arg7[%c0_97, %c0_98] : memref<2x8xf32, #tpu.memory_space<vmem>>, vector<2x8xf32>
    %97 = tpu.concatenate %92, %95 in 0 : vector<1x8xf32>, vector<1x8xf32> -> vector<2x8xf32>
    %98 = arith.addf %96, %97 : vector<2x8xf32>
    %c0_99 = arith.constant 0 : index
    %c0_100 = arith.constant 0 : index
    %99 = vector.load %arg7[%c0_99, %c0_100] : memref<2x8xf32, #tpu.memory_space<vmem>>, vector<2x8xf32>
    tpu.vector_store %arg7[%c0_99, %c0_100], %98 {strides = array<i32>} : memref<2x8xf32, #tpu.memory_space<vmem>>, vector<2x8xf32>,
    %100 = arith.truncf %87 : vector<256x8xf32> to vector<256x8xbf16>
    %c0_101 = arith.constant 0 : index
    %c0_102 = arith.constant 0 : index
    %c0_103 = arith.constant 0 : index
    %101 = vector.load %arg6[%c0_101, %c0_102, %c0_103] : memref<1x256x8xbf16, #tpu.memory_space<vmem>>, vector<1x256x8xbf16>
    %102 = vector.shape_cast %101 : vector<1x256x8xbf16> to vector<256x8xbf16>
    %103 = vector.shape_cast %100 : vector<256x8xbf16> to vector<1x256x8xbf16>
    tpu.vector_store %arg6[%c0_101, %c0_102, %c0_103], %103 {strides = array<i32>} : memref<1x256x8xbf16, #tpu.memory_space<vmem>>, vector<1x256x8xbf16>,
    return
  }
  func.func @transform_0(%arg0: i32) -> (i32, i32) {
    %c0_i32 = arith.constant 0 : i32
    %c0_i32_0 = arith.constant 0 : i32
    %c0_i32_1 = arith.constant 0 : i32
    return %c0_i32, %c0_i32_0 : i32, i32
  }
  func.func @transform_1(%arg0: i32) -> (i32, i32) {
    %c0_i32 = arith.constant 0 : i32
    %c0_i32_0 = arith.constant 0 : i32
    %c0_i32_1 = arith.constant 0 : i32
    return %c0_i32, %c0_i32_0 : i32, i32
  }
  func.func @transform_2(%arg0: i32) -> (i32, i32) {
    %c0_i32 = arith.constant 0 : i32
    %c0_i32_0 = arith.constant 0 : i32
    %c0_i32_1 = arith.constant 0 : i32
    return %c0_i32, %c0_i32_0 : i32, i32
  }
  func.func @transform_3(%arg0: i32) -> (i32, i32, i32) {
    %c0_i32 = arith.constant 0 : i32
    %c0_i32_0 = arith.constant 0 : i32
    %c0_i32_1 = arith.constant 0 : i32
    return %arg0, %c0_i32, %c0_i32_0 : i32, i32, i32
  }
  func.func @transform_4(%arg0: i32) -> (i32, i32, i32, i32) {
    %c0_i32 = arith.constant 0 : i32
    %c0_i32_0 = arith.constant 0 : i32
    %c0_i32_1 = arith.constant 0 : i32
    %c0_i32_2 = arith.constant 0 : i32
    %c0_i32_3 = arith.constant 0 : i32
    return %c0_i32, %c0_i32_0, %c0_i32_1, %c0_i32_2 : i32, i32, i32, i32
  }
  func.func @transform_5(%arg0: i32) -> (i32, i32, i32) {
    %c0_i32 = arith.constant 0 : i32
    %c0_i32_0 = arith.constant 0 : i32
    %c0_i32_1 = arith.constant 0 : i32
    return %arg0, %c0_i32, %c0_i32_0 : i32, i32, i32
  }
  func.func @transform_6(%arg0: i32) -> (i32, i32) {
    %c0_i32 = arith.constant 0 : i32
    %c0_i32_0 = arith.constant 0 : i32
    %c0_i32_1 = arith.constant 0 : i32
    return %c0_i32, %c0_i32_0 : i32, i32
  }
}

</mosaic_0001>

<llo_original>
// kernel: double_conv_block_forward.5
$region0: #{double_conv_block_forward.5}
  #allocation0 [shape = 'u32[]', space=smem, size = 0x4, offset = 0x4, fixed_abs, tag = 'smem constant byte address 0x4 - core index']
  #allocation1 [shape = 'u32[144,128]{1,0:T(1,128)}', space=vmem, size = 0x12000, scoped, tag = 'internal scratch']
  %s0 = inlined_call_operand.vmem [shape: f32[2,8], index: 0, kind: input, shape index: {}]
  %s1 = inlined_call_operand.vmem [shape: f32[1,8], index: 1, kind: input, shape index: {}]
  %s2 = inlined_call_operand.vmem [shape: f32[1,8], index: 2, kind: input, shape index: {}]
  %s3 = inlined_call_operand.vmem [shape: bf16[2,256,8], index: 3, kind: input, shape index: {}]
  %s4 = inlined_call_operand.vmem [shape: f32[2,8,256], index: 4, kind: output, shape index: {}]
  %s5 = sld [smem:[#allocation0]]
  $region49: #{double_conv_block_forward.5} parent=0
    _
  %s7 = ssub.s32 1, %s5
  %s8 = scalar_select 0, %s7, %s5
  loop: start=0, step=1, limit=4
  $region2: #{double_conv_block_forward.5} parent=0 // loop_pre_header
    _
  $region3: #{double_conv_block_forward.5} parent=0 // loop_header
    %s10 = sphi 0, %s14
    %p11 = scmp.ge.s32.totalorder %s10, 4
    %s18 = sphi 0, %s18
    %s20 = sphi 0, %s18
    %s21 = sphi 0, %s20
    %s35 = sphi 0, %s21
    %s39 = sphi 0, %s39
    %s41 = sphi 0, %s39
    %s42 = sphi 0, %s41
    %s56 = sphi 0, %s42
    %s60 = sphi 0, %s60
    %s62 = sphi 0, %s60
    %s63 = sphi 0, %s62
    %s77 = sphi 0, %s63
    %s83 = sphi 0, %s85
    %s86 = sphi 0, %s83
    %s87 = sphi 0, %s86
    %s103 = sphi 0, %s87
    %s109 = sphi 0, %s111
    %s112 = sphi 0, %s109
    %s113 = sphi 0, %s112
    %s129 = sphi 0, %s113
  $region4: #{double_conv_block_forward.5} parent=0 // loop_header_branch
    %13 = sbr.rel (%p11) target = $region8
  $region5: #{double_conv_block_forward.5} parent=0 // loop_body
    %s15 = ssub.s32 %s10, 1
    %s16 = ssub.s32 %s10, 2
    %s17 = sadd.s32 %s10, 1
    %s19 = sadd.s32 %s18, 1
    %p22 = scmp.eq.s32.totalorder %s10, 1
    %p23 = scmp.ne.s32.totalorder %s18, %s20
    %p24 = scmp.eq.s32.totalorder %s10, 0
    %p25 = por %p23, %p24
    %p26 = scmp.ne.s32.totalorder %s18, %s20
    %p27 = scmp.eq.s32.totalorder %s15, 1
    %p28 = por %p26, %p27
    %p29 = scmp.ne.s32.totalorder %s20, %s21
    %p30 = scmp.eq.s32.totalorder %s15, 0
    %p31 = por %p29, %p30
    %p32 = scmp.ne.s32.totalorder %s20, %s21
    %p33 = scmp.eq.s32.totalorder %s16, 1
    %p34 = por %p32, %p33
    %p36 = scmp.ne.s32.totalorder %s21, %s35
    %p37 = scmp.eq.s32.totalorder %s16, 0
    %p38 = por %p36, %p37
    %s40 = sadd.s32 %s39, 1
    %p43 = scmp.eq.s32.totalorder %s10, 1
    %p44 = scmp.ne.s32.totalorder %s39, %s41
    %p45 = scmp.eq.s32.totalorder %s10, 0
    %p46 = por %p44, %p45
    %p47 = scmp.ne.s32.totalorder %s39, %s41
    %p48 = scmp.eq.s32.totalorder %s15, 1
    %p49 = por %p47, %p48
    %p50 = scmp.ne.s32.totalorder %s41, %s42
    %p51 = scmp.eq.s32.totalorder %s15, 0
    %p52 = por %p50, %p51
    %p53 = scmp.ne.s32.totalorder %s41, %s42
    %p54 = scmp.eq.s32.totalorder %s16, 1
    %p55 = por %p53, %p54
    %p57 = scmp.ne.s32.totalorder %s42, %s56
    %p58 = scmp.eq.s32.totalorder %s16, 0
    %p59 = por %p57, %p58
    %s61 = sadd.s32 %s60, 1
    %p64 = scmp.eq.s32.totalorder %s10, 1
    %p65 = scmp.ne.s32.totalorder %s60, %s62
    %p66 = scmp.eq.s32.totalorder %s10, 0
    %p67 = por %p65, %p66
    %p68 = scmp.ne.s32.totalorder %s60, %s62
    %p69 = scmp.eq.s32.totalorder %s15, 1
    %p70 = por %p68, %p69
    %p71 = scmp.ne.s32.totalorder %s62, %s63
    %p72 = scmp.eq.s32.totalorder %s15, 0
    %p73 = por %p71, %p72
    %p74 = scmp.ne.s32.totalorder %s62, %s63
    %p75 = scmp.eq.s32.totalorder %s16, 1
    %p76 = por %p74, %p75
    %p78 = scmp.ne.s32.totalorder %s63, %s77
    %p79 = scmp.eq.s32.totalorder %s16, 0
    %p80 = por %p78, %p79
    %s81 = ssub.s32 %s10, %s17
    %p82 = scmp.eq.s32.totalorder %s81, 0
    %s84 = sadd.s32 %s83, 1
    %s85 = scalar_select %p82, %s83, %s84
    %p88 = pneg %p82
    %p89 = scmp.eq.s32.totalorder %s10, 1
    %p90 = por %p88, %p89
    %p91 = scmp.ne.s32.totalorder %s83, %s86
    %p92 = scmp.eq.s32.totalorder %s10, 0
    %p93 = por %p91, %p92
    %p94 = scmp.ne.s32.totalorder %s83, %s86
    %p95 = scmp.eq.s32.totalorder %s15, 1
    %p96 = por %p94, %p95
    %p97 = scmp.ne.s32.totalorder %s86, %s87
    %p98 = scmp.eq.s32.totalorder %s15, 0
    %p99 = por %p97, %p98
    %p100 = scmp.ne.s32.totalorder %s86, %s87
    %p101 = scmp.eq.s32.totalorder %s16, 1
    %p102 = por %p100, %p101
    %p104 = scmp.ne.s32.totalorder %s87, %s103
    %p105 = scmp.eq.s32.totalorder %s16, 0
    %p106 = por %p104, %p105
    %s107 = ssub.s32 %s10, %s17
    %p108 = scmp.eq.s32.totalorder %s107, 0
    %s110 = sadd.s32 %s109, 1
    %s111 = scalar_select %p108, %s109, %s110
    %p114 = pneg %p108
    %p115 = scmp.eq.s32.totalorder %s10, 1
    %p116 = por %p114, %p115
    %p117 = scmp.ne.s32.totalorder %s109, %s112
    %p118 = scmp.eq.s32.totalorder %s10, 0
    %p119 = por %p117, %p118
    %p120 = scmp.ne.s32.totalorder %s109, %s112
    %p121 = scmp.eq.s32.totalorder %s15, 1
    %p122 = por %p120, %p121
    %p123 = scmp.ne.s32.totalorder %s112, %s113
    %p124 = scmp.eq.s32.totalorder %s15, 0
    %p125 = por %p123, %p124
    %p126 = scmp.ne.s32.totalorder %s112, %s113
    %p127 = scmp.eq.s32.totalorder %s16, 1
    %p128 = por %p126, %p127
    %p130 = scmp.ne.s32.totalorder %s113, %s129
    %p131 = scmp.eq.s32.totalorder %s16, 0
    %p132 = por %p130, %p131
    %p133 = scmp.le.s32.totalorder 1, %s10
    %p134 = scmp.lt.s32.totalorder %s10, 3
    %p135 = pnand %p133, %p134
    %p136 = pneg %p135
    // Predicated region
    $region9: #{double_conv_block_forward.5} parent=5 // pred_check
      _
    $region10: #{double_conv_block_forward.5} parent=5 // pred_check_branch
      %138 = sbr.rel (%p135) target = $region12
    $region11: #{double_conv_block_forward.5} parent=5 // pred_region
      %s139 = ssub.s32 %s10, 1
      // Predicated region
      $region13: #{double_conv_block_forward.5} parent=11 // pred_check
        %p140 = pneg %p31
      $region14: #{double_conv_block_forward.5} parent=11 // pred_check_branch
        %142 = sbr.rel (%p140) target = $region16
      $region15: #{double_conv_block_forward.5} parent=11 // pred_region
        _
      $region16: #{double_conv_block_forward.5} parent=11 // pred_fallthru
        _
      // Predicated region
      $region17: #{double_conv_block_forward.5} parent=11 // pred_check
        %p143 = pneg %p52
      $region18: #{double_conv_block_forward.5} parent=11 // pred_check_branch
        %145 = sbr.rel (%p143) target = $region20
      $region19: #{double_conv_block_forward.5} parent=11 // pred_region
        _
      $region20: #{double_conv_block_forward.5} parent=11 // pred_fallthru
        _
      // Predicated region
      $region21: #{double_conv_block_forward.5} parent=11 // pred_check
        %p146 = pneg %p73
      $region22: #{double_conv_block_forward.5} parent=11 // pred_check_branch
        %148 = sbr.rel (%p146) target = $region24
      $region23: #{double_conv_block_forward.5} parent=11 // pred_region
        _
      $region24: #{double_conv_block_forward.5} parent=11 // pred_fallthru
        _
    $region12: #{double_conv_block_forward.5} parent=5 // pred_fallthru
      _
    %p149 = scmp.lt.s32.totalorder %s10, 2
    // Predicated region
    $region25: #{double_conv_block_forward.5} parent=5 // pred_check
      %p150 = pneg %p149
    $region26: #{double_conv_block_forward.5} parent=5 // pred_check_branch
      %152 = sbr.rel (%p150) target = $region28
    $region27: #{double_conv_block_forward.5} parent=5 // pred_region
      // Predicated region
      $region29: #{double_conv_block_forward.5} parent=27 // pred_check
        %p153 = pneg %p93
      $region30: #{double_conv_block_forward.5} parent=27 // pred_check_branch
        %155 = sbr.rel (%p153) target = $region32
      $region31: #{double_conv_block_forward.5} parent=27 // pred_region
        %p156 = scmp.lt.s32.totalorder %s10, 1
        %s157 = scalar_select %p156, %s10, 1
        %s158 = smul.addr %s157, 32
        %s159 = smul.addr %s158, 4
        %s160 = scalar_lea.vmem %s3, %s159
      $region32: #{double_conv_block_forward.5} parent=27 // pred_fallthru
        _
    $region28: #{double_conv_block_forward.5} parent=5 // pred_fallthru
      _
    %p161 = scmp.le.s32.totalorder 1, %s10
    %p162 = scmp.lt.s32.totalorder %s10, 3
    %p163 = pnand %p161, %p162
    %p164 = pneg %p163
    // Predicated region
    $region33: #{double_conv_block_forward.5} parent=5 // pred_check
      _
    $region34: #{double_conv_block_forward.5} parent=5 // pred_check_branch
      %166 = sbr.rel (%p163) target = $region36
    $region35: #{double_conv_block_forward.5} parent=5 // pred_region
      %s167 = ssub.s32 %s10, 1
      %p168 = pneg %p31
      %p169 = pneg %p28
      %p170 = pneg %p52
      %p171 = pneg %p49
      %p172 = pneg %p73
      %p173 = pneg %p70
      %p174 = scmp.lt.s32.totalorder %s15, 1
      %s175 = scalar_select %p174, %s15, 1
      %s176 = smul.addr %s175, 32
      %s177 = smul.addr %s176, 4
      %s178 = scalar_lea.vmem %s3, %s177
      %p179 = pneg %p99
      %p180 = pneg %p96
      %p181 = pneg %p125
      %p182 = pneg %p122
      %p183 = scmp.lt.s32.totalorder %s15, 1
      %s184 = scalar_select %p183, %s15, 1
      %s185 = smul.addr %s184, 2
      %s186 = smul.addr %s185, 8
      %s187 = scalar_lea.vmem %s4, %s186
      %p188 = scmp.lt.s32.totalorder %s15, 1
      %s189 = scalar_select %p188, %s15, 1
      %s190 = smul.addr %s189, 32
      %s191 = smul.addr %s190, 4
      %s192 = scalar_lea.vmem %s3, %s191
      %p193 = scmp.lt.s32.totalorder %s15, 1
      %s194 = scalar_select %p193, %s15, 1
      %s195 = smul.addr %s194, 2
      %s196 = smul.addr %s195, 8
      %s197 = scalar_lea.vmem %s4, %s196
      %v198 = vld [vmem:[%s0] sm:$0x1]
      %v199 = vmul.f32 %v198, 0.001953125
      %v200 = vld [vmem:[%s0 + $0x1] sm:$0x1]
      %v201 = vmul.f32 %v200, 0.001953125
      %v202 = vmul.f32 %v199, %v199
      %v203 = vsub.f32 %v201, %v202
      %v204 = vld [vmem:[%s1] sm:$0x1]
      %v205 = vadd.f32 %v203, 1e-05
      %v206 = vrsqrt.pop %v205
      %v207 = vmul.f32 %v204, %v206
      %v208 = vld [vmem:[%s2] sm:$0x1]
      %v209 = vmul.f32 %v199, %v207
      %v210 = vsub.f32 %v208, %v209
      %v211 = vld [vmem:[%s192] sm:$0xf]
      %v212 = vld [vmem:[%s192 + $0x4] sm:$0xf]
      %v213 = vld [vmem:[%s192 + $0x8] sm:$0xf]
      %v214 = vld [vmem:[%s192 + $0xc] sm:$0xf]
      %v215 = vld [vmem:[%s192 + $0x10] sm:$0xf]
      %v216 = vld [vmem:[%s192 + $0x14] sm:$0xf]
      %v217 = vld [vmem:[%s192 + $0x18] sm:$0xf]
      %v218 = vld [vmem:[%s192 + $0x1c] sm:$0xf]
      %v219 = vld [vmem:[%s192 + $0x20] sm:$0xf]
      %v220 = vld [vmem:[%s192 + $0x24] sm:$0xf]
      %v221 = vld [vmem:[%s192 + $0x28] sm:$0xf]
      %v222 = vld [vmem:[%s192 + $0x2c] sm:$0xf]
      %v223 = vld [vmem:[%s192 + $0x30] sm:$0xf]
      %v224 = vld [vmem:[%s192 + $0x34] sm:$0xf]
      %v225 = vld [vmem:[%s192 + $0x38] sm:$0xf]
      %v226 = vld [vmem:[%s192 + $0x3c] sm:$0xf]
      %v227 = vld [vmem:[%s192 + $0x40] sm:$0xf]
      %v228 = vld [vmem:[%s192 + $0x44] sm:$0xf]
      %v229 = vld [vmem:[%s192 + $0x48] sm:$0xf]
      %v230 = vld [vmem:[%s192 + $0x4c] sm:$0xf]
      %v231 = vld [vmem:[%s192 + $0x50] sm:$0xf]
      %v232 = vld [vmem:[%s192 + $0x54] sm:$0xf]
      %v233 = vld [vmem:[%s192 + $0x58] sm:$0xf]
      %v234 = vld [vmem:[%s192 + $0x5c] sm:$0xf]
      %v235 = vld [vmem:[%s192 + $0x60] sm:$0xf]
      %v236 = vld [vmem:[%s192 + $0x64] sm:$0xf]
      %v237 = vld [vmem:[%s192 + $0x68] sm:$0xf]
      %v238 = vld [vmem:[%s192 + $0x6c] sm:$0xf]
      %v239 = vld [vmem:[%s192 + $0x70] sm:$0xf]
      %v240 = vld [vmem:[%s192 + $0x74] sm:$0xf]
      %v241 = vld [vmem:[%s192 + $0x78] sm:$0xf]
      %v242 = vld [vmem:[%s192 + $0x7c] sm:$0xf]
      %v243 = vunpack.c.l.bf16 %v211
      %v244 = vunpack.c.l.bf16 %v212
      %v245 = vunpack.c.l.bf16 %v213
      %v246 = vunpack.c.l.bf16 %v214
      %v247 = vunpack.c.l.bf16 %v215
      %v248 = vunpack.c.l.bf16 %v216
      %v249 = vunpack.c.l.bf16 %v217
      %v250 = vunpack.c.l.bf16 %v218
      %v251 = vunpack.c.l.bf16 %v219
      %v252 = vunpack.c.l.bf16 %v220
      %v253 = vunpack.c.l.bf16 %v221
      %v254 = vunpack.c.l.bf16 %v222
      %v255 = vunpack.c.l.bf16 %v223
      %v256 = vunpack.c.l.bf16 %v224
      %v257 = vunpack.c.l.bf16 %v225
      %v258 = vunpack.c.l.bf16 %v226
      %v259 = vunpack.c.l.bf16 %v227
      %v260 = vunpack.c.l.bf16 %v228
      %v261 = vunpack.c.l.bf16 %v229
      %v262 = vunpack.c.l.bf16 %v230
      %v263 = vunpack.c.l.bf16 %v231
      %v264 = vunpack.c.l.bf16 %v232
      %v265 = vunpack.c.l.bf16 %v233
      %v266 = vunpack.c.l.bf16 %v234
      %v267 = vunpack.c.l.bf16 %v235
      %v268 = vunpack.c.l.bf16 %v236
      %v269 = vunpack.c.l.bf16 %v237
      %v270 = vunpack.c.l.bf16 %v238
      %v271 = vunpack.c.l.bf16 %v239
      %v272 = vunpack.c.l.bf16 %v240
      %v273 = vunpack.c.l.bf16 %v241
      %v274 = vunpack.c.l.bf16 %v242
      %v276 = vlaneseq
      %v277 = vshrl.u32 %v276, 7
      %v278 = vsub.s32 0, %v277
      %v279 = vrot.slane %v207, %v278
      %v281 = vmul.f32 %v243, %v279
      %v282 = vmul.f32 %v244, %v279
      %v283 = vmul.f32 %v245, %v279
      %v284 = vmul.f32 %v246, %v279
      %v285 = vmul.f32 %v247, %v279
      %v286 = vmul.f32 %v248, %v279
      %v287 = vmul.f32 %v249, %v279
      %v288 = vmul.f32 %v250, %v279
      %v289 = vmul.f32 %v251, %v279
      %v290 = vmul.f32 %v252, %v279
      %v291 = vmul.f32 %v253, %v279
      %v292 = vmul.f32 %v254, %v279
      %v293 = vmul.f32 %v255, %v279
      %v294 = vmul.f32 %v256, %v279
      %v295 = vmul.f32 %v257, %v279
      %v296 = vmul.f32 %v258, %v279
      %v297 = vmul.f32 %v259, %v279
      %v298 = vmul.f32 %v260, %v279
      %v299 = vmul.f32 %v261, %v279
      %v300 = vmul.f32 %v262, %v279
      %v301 = vmul.f32 %v263, %v279
      %v302 = vmul.f32 %v264, %v279
      %v303 = vmul.f32 %v265, %v279
      %v304 = vmul.f32 %v266, %v279
      %v305 = vmul.f32 %v267, %v279
      %v306 = vmul.f32 %v268, %v279
      %v307 = vmul.f32 %v269, %v279
      %v308 = vmul.f32 %v270, %v279
      %v309 = vmul.f32 %v271, %v279
      %v310 = vmul.f32 %v272, %v279
      %v311 = vmul.f32 %v273, %v279
      %v312 = vmul.f32 %v274, %v279
      %v314 = vlaneseq
      %v315 = vshrl.u32 %v314, 7
      %v316 = vsub.s32 0, %v315
      %v317 = vrot.slane %v210, %v316
      %v319 = vadd.f32 %v281, %v317
      %v320 = vadd.f32 %v282, %v317
      %v321 = vadd.f32 %v283, %v317
      %v322 = vadd.f32 %v284, %v317
      %v323 = vadd.f32 %v285, %v317
      %v324 = vadd.f32 %v286, %v317
      %v325 = vadd.f32 %v287, %v317
      %v326 = vadd.f32 %v288, %v317
      %v327 = vadd.f32 %v289, %v317
      %v328 = vadd.f32 %v290, %v317
      %v329 = vadd.f32 %v291, %v317
      %v330 = vadd.f32 %v292, %v317
      %v331 = vadd.f32 %v293, %v317
      %v332 = vadd.f32 %v294, %v317
      %v333 = vadd.f32 %v295, %v317
      %v334 = vadd.f32 %v296, %v317
      %v335 = vadd.f32 %v297, %v317
      %v336 = vadd.f32 %v298, %v317
      %v337 = vadd.f32 %v299, %v317
      %v338 = vadd.f32 %v300, %v317
      %v339 = vadd.f32 %v301, %v317
      %v340 = vadd.f32 %v302, %v317
      %v341 = vadd.f32 %v303, %v317
      %v342 = vadd.f32 %v304, %v317
      %v343 = vadd.f32 %v305, %v317
      %v344 = vadd.f32 %v306, %v317
      %v345 = vadd.f32 %v307, %v317
      %v346 = vadd.f32 %v308, %v317
      %v347 = vadd.f32 %v309, %v317
      %v348 = vadd.f32 %v310, %v317
      %v349 = vadd.f32 %v311, %v317
      %v350 = vadd.f32 %v312, %v317
      %v351 = vmax.f32 %v319, 0.0
      %v352 = vmax.f32 %v320, 0.0
      %v353 = vmax.f32 %v321, 0.0
      %v354 = vmax.f32 %v322, 0.0
      %v355 = vmax.f32 %v323, 0.0
      %v356 = vmax.f32 %v324, 0.0
      %v357 = vmax.f32 %v325, 0.0
      %v358 = vmax.f32 %v326, 0.0
      %v359 = vmax.f32 %v327, 0.0
      %v360 = vmax.f32 %v328, 0.0
      %v361 = vmax.f32 %v329, 0.0
      %v362 = vmax.f32 %v330, 0.0
      %v363 = vmax.f32 %v331, 0.0
      %v364 = vmax.f32 %v332, 0.0
      %v365 = vmax.f32 %v333, 0.0
      %v366 = vmax.f32 %v334, 0.0
      %v367 = vmax.f32 %v335, 0.0
      %v368 = vmax.f32 %v336, 0.0
      %v369 = vmax.f32 %v337, 0.0
      %v370 = vmax.f32 %v338, 0.0
      %v371 = vmax.f32 %v339, 0.0
      %v372 = vmax.f32 %v340, 0.0
      %v373 = vmax.f32 %v341, 0.0
      %v374 = vmax.f32 %v342, 0.0
      %v375 = vmax.f32 %v343, 0.0
      %v376 = vmax.f32 %v344, 0.0
      %v377 = vmax.f32 %v345, 0.0
      %v378 = vmax.f32 %v346, 0.0
      %v379 = vmax.f32 %v347, 0.0
      %v380 = vmax.f32 %v348, 0.0
      %v381 = vmax.f32 %v349, 0.0
      %v382 = vmax.f32 %v350, 0.0
      %383 = vxpose.xlu0.b32.start [1/16] %v351, 128
      %384 = vxpose.xlu0.b32.cont [2/16] %v352, 128
      %385 = vxpose.xlu0.b32.cont [3/16] %v353, 128
      %386 = vxpose.xlu0.b32.cont [4/16] %v354, 128
      %387 = vxpose.xlu0.b32.cont [5/16] %v355, 128
      %388 = vxpose.xlu0.b32.cont [6/16] %v356, 128
      %389 = vxpose.xlu0.b32.cont [7/16] %v357, 128
      %390 = vxpose.xlu0.b32.cont [8/16] %v358, 128
      %391 = vxpose.xlu0.b32.cont [9/16] %v359, 128
      %392 = vxpose.xlu0.b32.cont [10/16] %v360, 128
      %393 = vxpose.xlu0.b32.cont [11/16] %v361, 128
      %394 = vxpose.xlu0.b32.cont [12/16] %v362, 128
      %395 = vxpose.xlu0.b32.cont [13/16] %v363, 128
      %396 = vxpose.xlu0.b32.cont [14/16] %v364, 128
      %397 = vxpose.xlu0.b32.cont [15/16] %v365, 128
      %398 = vxpose.xlu0.b32.end [16/16] %v366, 128
      %v399 = vpop.trf.xlu0
      %v400 = vpop.trf.xlu0
      %v401 = vpop.trf.xlu0
      %v402 = vpop.trf.xlu0
      %v403 = vpop.trf.xlu0
      %v404 = vpop.trf.xlu0
      %v405 = vpop.trf.xlu0
      %v406 = vpop.trf.xlu0
      %v407 = vpop.trf.xlu0
      %v408 = vpop.trf.xlu0
      %v409 = vpop.trf.xlu0
      %v410 = vpop.trf.xlu0
      %v411 = vpop.trf.xlu0
      %v412 = vpop.trf.xlu0
      %v413 = vpop.trf.xlu0
      %v414 = vpop.trf.xlu0
      %415 = vxpose.xlu0.b32.start [1/16] %v367, 128
      %416 = vxpose.xlu0.b32.cont [2/16] %v368, 128
      %417 = vxpose.xlu0.b32.cont [3/16] %v369, 128
      %418 = vxpose.xlu0.b32.cont [4/16] %v370, 128
      %419 = vxpose.xlu0.b32.cont [5/16] %v371, 128
      %420 = vxpose.xlu0.b32.cont [6/16] %v372, 128
      %421 = vxpose.xlu0.b32.cont [7/16] %v373, 128
      %422 = vxpose.xlu0.b32.cont [8/16] %v374, 128
      %423 = vxpose.xlu0.b32.cont [9/16] %v375, 128
      %424 = vxpose.xlu0.b32.cont [10/16] %v376, 128
      %425 = vxpose.xlu0.b32.cont [11/16] %v377, 128
      %426 = vxpose.xlu0.b32.cont [12/16] %v378, 128
      %427 = vxpose.xlu0.b32.cont [13/16] %v379, 128
      %428 = vxpose.xlu0.b32.cont [14/16] %v380, 128
      %429 = vxpose.xlu0.b32.cont [15/16] %v381, 128
      %430 = vxpose.xlu0.b32.end [16/16] %v382, 128
      %v431 = vpop.trf.xlu0
      %v432 = vpop.trf.xlu0
      %v433 = vpop.trf.xlu0
      %v434 = vpop.trf.xlu0
      %v435 = vpop.trf.xlu0
      %v436 = vpop.trf.xlu0
      %v437 = vpop.trf.xlu0
      %v438 = vpop.trf.xlu0
      %v439 = vpop.trf.xlu0
      %v440 = vpop.trf.xlu0
      %v441 = vpop.trf.xlu0
      %v442 = vpop.trf.xlu0
      %v443 = vpop.trf.xlu0
      %v444 = vpop.trf.xlu0
      %v445 = vpop.trf.xlu0
      %v446 = vpop.trf.xlu0
      %447 = vst [vmem:[%s197] sm:$0xff] %v399
      %448 = vst [vmem:[%s197 + $0x8] sm:$0xff] %v431
      %p449 = scmp.lt.s32.totalorder %s15, 1
      %s450 = scalar_select %p449, %s15, 1
      %s451 = smul.addr %s450, 2
      %s452 = smul.addr %s451, 8
      %s453 = scalar_lea.vmem %s4, %s452
      // Predicated region
      $region37: #{double_conv_block_forward.5} parent=35 // pred_check
        %p454 = pneg %p122
      $region38: #{double_conv_block_forward.5} parent=35 // pred_check_branch
        %456 = sbr.rel (%p454) target = $region40
      $region39: #{double_conv_block_forward.5} parent=35 // pred_region
        _
      $region40: #{double_conv_block_forward.5} parent=35 // pred_fallthru
        _
    $region36: #{double_conv_block_forward.5} parent=5 // pred_fallthru
      _
    %p457 = scmp.le.s32.totalorder 2, %s10
    // Predicated region
    $region41: #{double_conv_block_forward.5} parent=5 // pred_check
      %p458 = pneg %p457
    $region42: #{double_conv_block_forward.5} parent=5 // pred_check_branch
      %460 = sbr.rel (%p458) target = $region44
    $region43: #{double_conv_block_forward.5} parent=5 // pred_region
      %s461 = ssub.s32 %s10, 2
      // Predicated region
      $region45: #{double_conv_block_forward.5} parent=43 // pred_check
        %p462 = pneg %p128
      $region46: #{double_conv_block_forward.5} parent=43 // pred_check_branch
        %464 = sbr.rel (%p462) target = $region48
      $region47: #{double_conv_block_forward.5} parent=43 // pred_region
        %p465 = scmp.lt.s32.totalorder %s16, 1
        %s466 = scalar_select %p465, %s16, 1
        %s467 = smul.addr %s466, 2
        %s468 = smul.addr %s467, 8
        %s469 = scalar_lea.vmem %s4, %s468
      $region48: #{double_conv_block_forward.5} parent=43 // pred_fallthru
        _
    $region44: #{double_conv_block_forward.5} parent=5 // pred_fallthru
      _
  $region6: #{double_conv_block_forward.5} parent=0 // loop_footer
    %s14 = sadd.s32 1, %s10
  $region7: #{double_conv_block_forward.5} parent=0 // loop_footer_branch
    %9 = sbr.rel target = $region3
  $region8: #{double_conv_block_forward.5} parent=0 // loop_exit
    _

// kernel: double_conv_block_forward.3
$region0: #{double_conv_block_forward.3}
  #allocation0 [shape = 'u32[]', space=smem, size = 0x4, offset = 0x4, fixed_abs, tag = 'smem constant byte address 0x4 - core index']
  #allocation1 [shape = 'u32[144,128]{1,0:T(1,128)}', space=vmem, size = 0x12000, scoped, tag = 'internal scratch']
  #allocation2 [shape = 'bf16[18,18,4]{2,1,0:T(8,128)(2,1)}', space=vmem, size = 0x1b000, scoped, tag = 'scratch operand']
  %s0 = inlined_call_operand.vmem [shape: f32[2,16,16,4], index: 0, kind: input, shape index: {}]
  %s1 = inlined_call_operand.vmem [shape: bf16[3,3,4,8], index: 1, kind: input, shape index: {}]
  %s2 = inlined_call_operand.vmem [shape: bf16[2,256,8], index: 2, kind: output, shape index: {0}]
  %s3 = inlined_call_operand.vmem [shape: f32[2,8], index: 3, kind: output, shape index: {1}]
  %4 = xla_tuple %s2, %s3
  %s5 = sld [smem:[#allocation0]]
  $region53: #{double_conv_block_forward.3} parent=0
    _
  %s7 = ssub.s32 1, %s5
  %s8 = scalar_select 0, %s7, %s5
  loop: start=0, step=1, limit=4
  $region2: #{double_conv_block_forward.3} parent=0 // loop_pre_header
    _
  $region3: #{double_conv_block_forward.3} parent=0 // loop_header
    %s10 = sphi 0, %s14
    %p11 = scmp.ge.s32.totalorder %s10, 4
    %s20 = sphi 0, %s22
    %s23 = sphi 0, %s20
    %s24 = sphi 0, %s23
    %s40 = sphi 0, %s24
    %s44 = sphi 0, %s44
    %s46 = sphi 0, %s44
    %s47 = sphi 0, %s46
    %s61 = sphi 0, %s47
    %s67 = sphi 0, %s69
    %s70 = sphi 0, %s67
    %s71 = sphi 0, %s70
    %s87 = sphi 0, %s71
    %s91 = sphi 0, %s91
    %s93 = sphi 0, %s91
    %s94 = sphi 0, %s93
    %s108 = sphi 0, %s94
  $region4: #{double_conv_block_forward.3} parent=0 // loop_header_branch
    %13 = sbr.rel (%p11) target = $region8
  $region5: #{double_conv_block_forward.3} parent=0 // loop_body
    %s15 = ssub.s32 %s10, 1
    %s16 = ssub.s32 %s10, 2
    %s17 = sadd.s32 %s10, 1
    %s18 = ssub.s32 %s10, %s17
    %p19 = scmp.eq.s32.totalorder %s18, 0
    %s21 = sadd.s32 %s20, 1
    %s22 = scalar_select %p19, %s20, %s21
    %p25 = pneg %p19
    %p26 = scmp.eq.s32.totalorder %s10, 1
    %p27 = por %p25, %p26
    %p28 = scmp.ne.s32.totalorder %s20, %s23
    %p29 = scmp.eq.s32.totalorder %s10, 0
    %p30 = por %p28, %p29
    %p31 = scmp.ne.s32.totalorder %s20, %s23
    %p32 = scmp.eq.s32.totalorder %s15, 1
    %p33 = por %p31, %p32
    %p34 = scmp.ne.s32.totalorder %s23, %s24
    %p35 = scmp.eq.s32.totalorder %s15, 0
    %p36 = por %p34, %p35
    %p37 = scmp.ne.s32.totalorder %s23, %s24
    %p38 = scmp.eq.s32.totalorder %s16, 1
    %p39 = por %p37, %p38
    %p41 = scmp.ne.s32.totalorder %s24, %s40
    %p42 = scmp.eq.s32.totalorder %s16, 0
    %p43 = por %p41, %p42
    %s45 = sadd.s32 %s44, 1
    %p48 = scmp.eq.s32.totalorder %s10, 1
    %p49 = scmp.ne.s32.totalorder %s44, %s46
    %p50 = scmp.eq.s32.totalorder %s10, 0
    %p51 = por %p49, %p50
    %p52 = scmp.ne.s32.totalorder %s44, %s46
    %p53 = scmp.eq.s32.totalorder %s15, 1
    %p54 = por %p52, %p53
    %p55 = scmp.ne.s32.totalorder %s46, %s47
    %p56 = scmp.eq.s32.totalorder %s15, 0
    %p57 = por %p55, %p56
    %p58 = scmp.ne.s32.totalorder %s46, %s47
    %p59 = scmp.eq.s32.totalorder %s16, 1
    %p60 = por %p58, %p59
    %p62 = scmp.ne.s32.totalorder %s47, %s61
    %p63 = scmp.eq.s32.totalorder %s16, 0
    %p64 = por %p62, %p63
    %s65 = ssub.s32 %s10, %s17
    %p66 = scmp.eq.s32.totalorder %s65, 0
    %s68 = sadd.s32 %s67, 1
    %s69 = scalar_select %p66, %s67, %s68
    %p72 = pneg %p66
    %p73 = scmp.eq.s32.totalorder %s10, 1
    %p74 = por %p72, %p73
    %p75 = scmp.ne.s32.totalorder %s67, %s70
    %p76 = scmp.eq.s32.totalorder %s10, 0
    %p77 = por %p75, %p76
    %p78 = scmp.ne.s32.totalorder %s67, %s70
    %p79 = scmp.eq.s32.totalorder %s15, 1
    %p80 = por %p78, %p79
    %p81 = scmp.ne.s32.totalorder %s70, %s71
    %p82 = scmp.eq.s32.totalorder %s15, 0
    %p83 = por %p81, %p82
    %p84 = scmp.ne.s32.totalorder %s70, %s71
    %p85 = scmp.eq.s32.totalorder %s16, 1
    %p86 = por %p84, %p85
    %p88 = scmp.ne.s32.totalorder %s71, %s87
    %p89 = scmp.eq.s32.totalorder %s16, 0
    %p90 = por %p88, %p89
    %s92 = sadd.s32 %s91, 1
    %p95 = scmp.eq.s32.totalorder %s10, 1
    %p96 = scmp.ne.s32.totalorder %s91, %s93
    %p97 = scmp.eq.s32.totalorder %s10, 0
    %p98 = por %p96, %p97
    %p99 = scmp.ne.s32.totalorder %s91, %s93
    %p100 = scmp.eq.s32.totalorder %s15, 1
    %p101 = por %p99, %p100
    %p102 = scmp.ne.s32.totalorder %s93, %s94
    %p103 = scmp.eq.s32.totalorder %s15, 0
    %p104 = por %p102, %p103
    %p105 = scmp.ne.s32.totalorder %s93, %s94
    %p106 = scmp.eq.s32.totalorder %s16, 1
    %p107 = por %p105, %p106
    %p109 = scmp.ne.s32.totalorder %s94, %s108
    %p110 = scmp.eq.s32.totalorder %s16, 0
    %p111 = por %p109, %p110
    %p112 = scmp.le.s32.totalorder 1, %s10
    %p113 = scmp.lt.s32.totalorder %s10, 3
    %p114 = pnand %p112, %p113
    %p115 = pneg %p114
    // Predicated region
    $region9: #{double_conv_block_forward.3} parent=5 // pred_check
      _
    $region10: #{double_conv_block_forward.3} parent=5 // pred_check_branch
      %117 = sbr.rel (%p114) target = $region12
    $region11: #{double_conv_block_forward.3} parent=5 // pred_region
      %s118 = ssub.s32 %s10, 1
      // Predicated region
      $region13: #{double_conv_block_forward.3} parent=11 // pred_check
        %p119 = pneg %p57
      $region14: #{double_conv_block_forward.3} parent=11 // pred_check_branch
        %121 = sbr.rel (%p119) target = $region16
      $region15: #{double_conv_block_forward.3} parent=11 // pred_region
        _
      $region16: #{double_conv_block_forward.3} parent=11 // pred_fallthru
        _
    $region12: #{double_conv_block_forward.3} parent=5 // pred_fallthru
      _
    %p122 = scmp.lt.s32.totalorder %s10, 2
    // Predicated region
    $region17: #{double_conv_block_forward.3} parent=5 // pred_check
      %p123 = pneg %p122
    $region18: #{double_conv_block_forward.3} parent=5 // pred_check_branch
      %125 = sbr.rel (%p123) target = $region20
    $region19: #{double_conv_block_forward.3} parent=5 // pred_region
      // Predicated region
      $region21: #{double_conv_block_forward.3} parent=19 // pred_check
        %p126 = pneg %p30
      $region22: #{double_conv_block_forward.3} parent=19 // pred_check_branch
        %128 = sbr.rel (%p126) target = $region24
      $region23: #{double_conv_block_forward.3} parent=19 // pred_region
        %p129 = scmp.lt.s32.totalorder %s10, 1
        %s130 = scalar_select %p129, %s10, 1
        %s131 = smul.addr %s130, 32
        %s132 = smul.addr %s131, 8
        %s133 = scalar_lea.vmem %s0, %s132
      $region24: #{double_conv_block_forward.3} parent=19 // pred_fallthru
        _
    $region20: #{double_conv_block_forward.3} parent=5 // pred_fallthru
      _
    %p134 = scmp.le.s32.totalorder 1, %s10
    %p135 = scmp.lt.s32.totalorder %s10, 3
    %p136 = pnand %p134, %p135
    %p137 = pneg %p136
    // Predicated region
    $region25: #{double_conv_block_forward.3} parent=5 // pred_check
      _
    $region26: #{double_conv_block_forward.3} parent=5 // pred_check_branch
      %139 = sbr.rel (%p136) target = $region28
    $region27: #{double_conv_block_forward.3} parent=5 // pred_region
      %s140 = ssub.s32 %s10, 1
      %p141 = scmp.lt.s32.totalorder %s15, 1
      %s142 = scalar_select %p141, %s15, 1
      %s143 = smul.addr %s142, 32
      %s144 = smul.addr %s143, 8
      %s145 = scalar_lea.vmem %s0, %s144
      %p146 = pneg %p36
      %p147 = pneg %p33
      %p148 = pneg %p57
      %p149 = pneg %p54
      %p150 = pneg %p83
      %p151 = pneg %p80
      %p152 = scmp.lt.s32.totalorder %s15, 1
      %s153 = scalar_select %p152, %s15, 1
      %s154 = smul.addr %s153, 32
      %s155 = smul.addr %s154, 4
      %s156 = scalar_lea.vmem %s2, %s155
      %p157 = pneg %p104
      %p158 = pneg %p101
      %p159 = scmp.lt.s32.totalorder %s15, 1
      %s160 = scalar_select %p159, %s15, 1
      %s161 = smul.addr %s160, 32
      %s162 = smul.addr %s161, 8
      %s163 = scalar_lea.vmem %s0, %s162
      %p164 = scmp.lt.s32.totalorder %s15, 1
      %s165 = scalar_select %p164, %s15, 1
      %s166 = smul.addr %s165, 32
      %s167 = smul.addr %s166, 4
      %s168 = scalar_lea.vmem %s2, %s167
      %v170 = vld [vmem:[%s163] sm:$0xff]
      %v171 = vld [vmem:[%s163 + $0x8] sm:$0xff]
      %v172 = vld [vmem:[%s163 + $0x10] sm:$0xff]
      %v173 = vld [vmem:[%s163 + $0x18] sm:$0xff]
      %v174 = vld [vmem:[%s163 + $0x20] sm:$0xff]
      %v175 = vld [vmem:[%s163 + $0x28] sm:$0xff]
      %v176 = vld [vmem:[%s163 + $0x30] sm:$0xff]
      %v177 = vld [vmem:[%s163 + $0x38] sm:$0xff]
      %v178 = vld [vmem:[%s163 + $0x40] sm:$0xff]
      %v179 = vld [vmem:[%s163 + $0x48] sm:$0xff]
      %v180 = vld [vmem:[%s163 + $0x50] sm:$0xff]
      %v181 = vld [vmem:[%s163 + $0x58] sm:$0xff]
      %v182 = vld [vmem:[%s163 + $0x60] sm:$0xff]
      %v183 = vld [vmem:[%s163 + $0x68] sm:$0xff]
      %v184 = vld [vmem:[%s163 + $0x70] sm:$0xff]
      %v185 = vld [vmem:[%s163 + $0x78] sm:$0xff]
      %v186 = vld [vmem:[%s163 + $0x80] sm:$0xff]
      %v187 = vld [vmem:[%s163 + $0x88] sm:$0xff]
      %v188 = vld [vmem:[%s163 + $0x90] sm:$0xff]
      %v189 = vld [vmem:[%s163 + $0x98] sm:$0xff]
      %v190 = vld [vmem:[%s163 + $0xa0] sm:$0xff]
      %v191 = vld [vmem:[%s163 + $0xa8] sm:$0xff]
      %v192 = vld [vmem:[%s163 + $0xb0] sm:$0xff]
      %v193 = vld [vmem:[%s163 + $0xb8] sm:$0xff]
      %v194 = vld [vmem:[%s163 + $0xc0] sm:$0xff]
      %v195 = vld [vmem:[%s163 + $0xc8] sm:$0xff]
      %v196 = vld [vmem:[%s163 + $0xd0] sm:$0xff]
      %v197 = vld [vmem:[%s163 + $0xd8] sm:$0xff]
      %v198 = vld [vmem:[%s163 + $0xe0] sm:$0xff]
      %v199 = vld [vmem:[%s163 + $0xe8] sm:$0xff]
      %v200 = vld [vmem:[%s163 + $0xf0] sm:$0xff]
      %v201 = vld [vmem:[%s163 + $0xf8] sm:$0xff]
      %v202 = vpack.c.bf16 %v171, %v170
      %v203 = vpack.c.bf16 %v173, %v172
      %v204 = vpack.c.bf16 %v175, %v174
      %v205 = vpack.c.bf16 %v177, %v176
      %v206 = vpack.c.bf16 %v179, %v178
      %v207 = vpack.c.bf16 %v181, %v180
      %v208 = vpack.c.bf16 %v183, %v182
      %v209 = vpack.c.bf16 %v185, %v184
      %v210 = vpack.c.bf16 %v187, %v186
      %v211 = vpack.c.bf16 %v189, %v188
      %v212 = vpack.c.bf16 %v191, %v190
      %v213 = vpack.c.bf16 %v193, %v192
      %v214 = vpack.c.bf16 %v195, %v194
      %v215 = vpack.c.bf16 %v197, %v196
      %v216 = vpack.c.bf16 %v199, %v198
      %v217 = vpack.c.bf16 %v201, %v200
      %vm218 = vcmask 27648
      %219 = vst.msk [vmem:[#allocation2] sm:$0xf] %vm218, 0
      %220 = vst.msk [vmem:[#allocation2 + $0x4] sm:$0xf] %vm218, 0
      %vm221 = vcmask 24576
      %222 = vst.msk [vmem:[#allocation2 + $0x8] sm:$0x1] %vm221, 0
      %s223 = scalar_lea.vmem [#allocation2], 204
      %224 = vst.msk [vmem:[%s223] sm:$0xf] %vm218, 0
      %225 = vst.msk [vmem:[%s223 + $0x4] sm:$0xf] %vm218, 0
      %226 = vst.msk [vmem:[%s223 + $0x8] sm:$0x1] %vm221, 0
      %v228 = vshrl.u32 %v202, 16
      %v230 = vrot.slane %v228, 7
      %v231 = vshll.u32 %v202, 16
      %v233 = vor.u32 %v230, %v231
      %v235 = vshrl.u32 %v203, 16
      %v237 = vrot.slane %v235, 7
      %v238 = vshll.u32 %v203, 16
      %v240 = vor.u32 %v237, %v238
      %v242 = vshrl.u32 %v204, 16
      %v244 = vrot.slane %v242, 7
      %v245 = vshll.u32 %v204, 16
      %v247 = vor.u32 %v244, %v245
      %v249 = vshrl.u32 %v205, 16
      %v251 = vrot.slane %v249, 7
      %v252 = vshll.u32 %v205, 16
      %v254 = vor.u32 %v251, %v252
      %v256 = vshrl.u32 %v206, 16
      %v258 = vrot.slane %v256, 7
      %v259 = vshll.u32 %v206, 16
      %v261 = vor.u32 %v258, %v259
      %v263 = vshrl.u32 %v207, 16
      %v265 = vrot.slane %v263, 7
      %v266 = vshll.u32 %v207, 16
      %v268 = vor.u32 %v265, %v266
      %v270 = vshrl.u32 %v208, 16
      %v272 = vrot.slane %v270, 7
      %v273 = vshll.u32 %v208, 16
      %v275 = vor.u32 %v272, %v273
      %v277 = vshrl.u32 %v209, 16
      %v279 = vrot.slane %v277, 7
      %v280 = vshll.u32 %v209, 16
      %v282 = vor.u32 %v279, %v280
      %v284 = vshrl.u32 %v210, 16
      %v286 = vrot.slane %v284, 7
      %v287 = vshll.u32 %v210, 16
      %v289 = vor.u32 %v286, %v287
      %v291 = vshrl.u32 %v211, 16
      %v293 = vrot.slane %v291, 7
      %v294 = vshll.u32 %v211, 16
      %v296 = vor.u32 %v293, %v294
      %v298 = vshrl.u32 %v212, 16
      %v300 = vrot.slane %v298, 7
      %v301 = vshll.u32 %v212, 16
      %v303 = vor.u32 %v300, %v301
      %v305 = vshrl.u32 %v213, 16
      %v307 = vrot.slane %v305, 7
      %v308 = vshll.u32 %v213, 16
      %v310 = vor.u32 %v307, %v308
      %v312 = vshrl.u32 %v214, 16
      %v314 = vrot.slane %v312, 7
      %v315 = vshll.u32 %v214, 16
      %v317 = vor.u32 %v314, %v315
      %v319 = vshrl.u32 %v215, 16
      %v321 = vrot.slane %v319, 7
      %v322 = vshll.u32 %v215, 16
      %v324 = vor.u32 %v321, %v322
      %v326 = vshrl.u32 %v216, 16
      %v328 = vrot.slane %v326, 7
      %v329 = vshll.u32 %v216, 16
      %v331 = vor.u32 %v328, %v329
      %v333 = vshrl.u32 %v217, 16
      %v335 = vrot.slane %v333, 7
      %v336 = vshll.u32 %v217, 16
      %v338 = vor.u32 %v335, %v336
      %vm371 = vcmask 1040384
      %vm372 = vsmask.f32 256
      %vm373 = vmand %vm371, %vm372
      %v374 = vsel %vm373, 0, %v233
      %v375 = vsel %vm373, 0, %v240
      %v376 = vsel %vm373, 0, %v247
      %v377 = vsel %vm373, 0, %v254
      %v378 = vsel %vm373, 0, %v261
      %v379 = vsel %vm373, 0, %v268
      %v380 = vsel %vm373, 0, %v275
      %v381 = vsel %vm373, 0, %v282
      %v382 = vsel %vm373, 0, %v289
      %v383 = vsel %vm373, 0, %v296
      %v384 = vsel %vm373, 0, %v303
      %v385 = vsel %vm373, 0, %v310
      %v386 = vsel %vm373, 0, %v317
      %v387 = vsel %vm373, 0, %v324
      %v388 = vsel %vm373, 0, %v331
      %v389 = vsel %vm373, 0, %v338
      %v390 = vsel %vm373, %v230, 0
      %v391 = vsel %vm373, %v237, 0
      %v392 = vsel %vm373, %v244, 0
      %v393 = vsel %vm373, %v251, 0
      %v394 = vsel %vm373, %v258, 0
      %v395 = vsel %vm373, %v265, 0
      %v396 = vsel %vm373, %v272, 0
      %v397 = vsel %vm373, %v279, 0
      %v398 = vsel %vm373, %v286, 0
      %v399 = vsel %vm373, %v293, 0
      %v400 = vsel %vm373, %v300, 0
      %v401 = vsel %vm373, %v307, 0
      %v402 = vsel %vm373, %v314, 0
      %v403 = vsel %vm373, %v321, 0
      %v404 = vsel %vm373, %v328, 0
      %v405 = vsel %vm373, %v335, 0
      %v438 = vunpack.c.l.b16 %v374
      %v439 = vunpack.c.h.b16 %v374
      %v440 = vunpack.c.l.b16 %v390
      %v441 = vunpack.c.l.b16 %v375
      %v442 = vunpack.c.h.b16 %v375
      %v443 = vunpack.c.l.b16 %v391
      %v444 = vunpack.c.l.b16 %v376
      %v445 = vunpack.c.h.b16 %v376
      %v446 = vunpack.c.l.b16 %v392
      %v447 = vunpack.c.l.b16 %v377
      %v448 = vunpack.c.h.b16 %v377
      %v449 = vunpack.c.l.b16 %v393
      %v450 = vunpack.c.l.b16 %v378
      %v451 = vunpack.c.h.b16 %v378
      %v452 = vunpack.c.l.b16 %v394
      %v453 = vunpack.c.l.b16 %v379
      %v454 = vunpack.c.h.b16 %v379
      %v455 = vunpack.c.l.b16 %v395
      %v456 = vunpack.c.l.b16 %v380
      %v457 = vunpack.c.h.b16 %v380
      %v458 = vunpack.c.l.b16 %v396
      %v459 = vunpack.c.l.b16 %v381
      %v460 = vunpack.c.h.b16 %v381
      %v461 = vunpack.c.l.b16 %v397
      %v462 = vunpack.c.l.b16 %v382
      %v463 = vunpack.c.h.b16 %v382
      %v464 = vunpack.c.l.b16 %v398
      %v465 = vunpack.c.l.b16 %v383
      %v466 = vunpack.c.h.b16 %v383
      %v467 = vunpack.c.l.b16 %v399
      %v468 = vunpack.c.l.b16 %v384
      %v469 = vunpack.c.h.b16 %v384
      %v470 = vunpack.c.l.b16 %v400
      %v471 = vunpack.c.l.b16 %v385
      %v472 = vunpack.c.h.b16 %v385
      %v473 = vunpack.c.l.b16 %v401
      %v474 = vunpack.c.l.b16 %v386
      %v475 = vunpack.c.h.b16 %v386
      %v476 = vunpack.c.l.b16 %v402
      %v477 = vunpack.c.l.b16 %v387
      %v478 = vunpack.c.h.b16 %v387
      %v479 = vunpack.c.l.b16 %v403
      %v480 = vunpack.c.l.b16 %v388
      %v481 = vunpack.c.h.b16 %v388
      %v482 = vunpack.c.l.b16 %v404
      %v483 = vunpack.c.l.b16 %v389
      %v484 = vunpack.c.h.b16 %v389
      %v485 = vunpack.c.l.b16 %v405
      %v486 = vpack.c.b16 %v438, %v438
      %v487 = vpack.c.b16 %v439, %v439
      %v488 = vpack.c.b16 %v440, %v440
      %v489 = vpack.c.b16 %v441, %v441
      %v490 = vpack.c.b16 %v442, %v442
      %v491 = vpack.c.b16 %v443, %v443
      %v492 = vpack.c.b16 %v444, %v444
      %v493 = vpack.c.b16 %v445, %v445
      %v494 = vpack.c.b16 %v446, %v446
      %v495 = vpack.c.b16 %v447, %v447
      %v496 = vpack.c.b16 %v448, %v448
      %v497 = vpack.c.b16 %v449, %v449
      %v498 = vpack.c.b16 %v450, %v450
      %v499 = vpack.c.b16 %v451, %v451
      %v500 = vpack.c.b16 %v452, %v452
      %v501 = vpack.c.b16 %v453, %v453
      %v502 = vpack.c.b16 %v454, %v454
      %v503 = vpack.c.b16 %v455, %v455
      %v504 = vpack.c.b16 %v456, %v456
      %v505 = vpack.c.b16 %v457, %v457
      %v506 = vpack.c.b16 %v458, %v458
      %v507 = vpack.c.b16 %v459, %v459
      %v508 = vpack.c.b16 %v460, %v460
      %v509 = vpack.c.b16 %v461, %v461
      %v510 = vpack.c.b16 %v462, %v462
      %v511 = vpack.c.b16 %v463, %v463
      %v512 = vpack.c.b16 %v464, %v464
      %v513 = vpack.c.b16 %v465, %v465
      %v514 = vpack.c.b16 %v466, %v466
      %v515 = vpack.c.b16 %v467, %v467
      %v516 = vpack.c.b16 %v468, %v468
      %v517 = vpack.c.b16 %v469, %v469
      %v518 = vpack.c.b16 %v470, %v470
      %v519 = vpack.c.b16 %v471, %v471
      %v520 = vpack.c.b16 %v472, %v472
      %v521 = vpack.c.b16 %v473, %v473
      %v522 = vpack.c.b16 %v474, %v474
      %v523 = vpack.c.b16 %v475, %v475
      %v524 = vpack.c.b16 %v476, %v476
      %v525 = vpack.c.b16 %v477, %v477
      %v526 = vpack.c.b16 %v478, %v478
      %v527 = vpack.c.b16 %v479, %v479
      %v528 = vpack.c.b16 %v480, %v480
      %v529 = vpack.c.b16 %v481, %v481
      %v530 = vpack.c.b16 %v482, %v482
      %v531 = vpack.c.b16 %v483, %v483
      %v532 = vpack.c.b16 %v484, %v484
      %v533 = vpack.c.b16 %v485, %v485
      %s582 = scalar_lea.vmem [#allocation2], 12
      %583 = vst.msk [vmem:[%s582] sm:$0xf] %vm218, %v486
      %584 = vst.msk [vmem:[%s582 + $0x4] sm:$0xf] %vm218, %v487
      %585 = vst.msk [vmem:[%s582 + $0x8] sm:$0x1] %vm221, %v488
      %586 = vst.msk [vmem:[%s582 + $0xc] sm:$0xf] %vm218, %v489
      %587 = vst.msk [vmem:[%s582 + $0x10] sm:$0xf] %vm218, %v490
      %588 = vst.msk [vmem:[%s582 + $0x14] sm:$0x1] %vm221, %v491
      %589 = vst.msk [vmem:[%s582 + $0x18] sm:$0xf] %vm218, %v492
      %590 = vst.msk [vmem:[%s582 + $0x1c] sm:$0xf] %vm218, %v493
      %591 = vst.msk [vmem:[%s582 + $0x20] sm:$0x1] %vm221, %v494
      %592 = vst.msk [vmem:[%s582 + $0x24] sm:$0xf] %vm218, %v495
      %593 = vst.msk [vmem:[%s582 + $0x28] sm:$0xf] %vm218, %v496
      %594 = vst.msk [vmem:[%s582 + $0x2c] sm:$0x1] %vm221, %v497
      %595 = vst.msk [vmem:[%s582 + $0x30] sm:$0xf] %vm218, %v498
      %596 = vst.msk [vmem:[%s582 + $0x34] sm:$0xf] %vm218, %v499
      %597 = vst.msk [vmem:[%s582 + $0x38] sm:$0x1] %vm221, %v500
      %598 = vst.msk [vmem:[%s582 + $0x3c] sm:$0xf] %vm218, %v501
      %599 = vst.msk [vmem:[%s582 + $0x40] sm:$0xf] %vm218, %v502
      %600 = vst.msk [vmem:[%s582 + $0x44] sm:$0x1] %vm221, %v503
      %601 = vst.msk [vmem:[%s582 + $0x48] sm:$0xf] %vm218, %v504
      %602 = vst.msk [vmem:[%s582 + $0x4c] sm:$0xf] %vm218, %v505
      %603 = vst.msk [vmem:[%s582 + $0x50] sm:$0x1] %vm221, %v506
      %604 = vst.msk [vmem:[%s582 + $0x54] sm:$0xf] %vm218, %v507
      %605 = vst.msk [vmem:[%s582 + $0x58] sm:$0xf] %vm218, %v508
      %606 = vst.msk [vmem:[%s582 + $0x5c] sm:$0x1] %vm221, %v509
      %607 = vst.msk [vmem:[%s582 + $0x60] sm:$0xf] %vm218, %v510
      %608 = vst.msk [vmem:[%s582 + $0x64] sm:$0xf] %vm218, %v511
      %609 = vst.msk [vmem:[%s582 + $0x68] sm:$0x1] %vm221, %v512
      %610 = vst.msk [vmem:[%s582 + $0x6c] sm:$0xf] %vm218, %v513
      %611 = vst.msk [vmem:[%s582 + $0x70] sm:$0xf] %vm218, %v514
      %612 = vst.msk [vmem:[%s582 + $0x74] sm:$0x1] %vm221, %v515
      %613 = vst.msk [vmem:[%s582 + $0x78] sm:$0xf] %vm218, %v516
      %614 = vst.msk [vmem:[%s582 + $0x7c] sm:$0xf] %vm218, %v517
      %615 = vst.msk [vmem:[%s582 + $0x80] sm:$0x1] %vm221, %v518
      %616 = vst.msk [vmem:[%s582 + $0x84] sm:$0xf] %vm218, %v519
      %617 = vst.msk [vmem:[%s582 + $0x88] sm:$0xf] %vm218, %v520
      %618 = vst.msk [vmem:[%s582 + $0x8c] sm:$0x1] %vm221, %v521
      %619 = vst.msk [vmem:[%s582 + $0x90] sm:$0xf] %vm218, %v522
      %620 = vst.msk [vmem:[%s582 + $0x94] sm:$0xf] %vm218, %v523
      %621 = vst.msk [vmem:[%s582 + $0x98] sm:$0x1] %vm221, %v524
      %622 = vst.msk [vmem:[%s582 + $0x9c] sm:$0xf] %vm218, %v525
      %623 = vst.msk [vmem:[%s582 + $0xa0] sm:$0xf] %vm218, %v526
      %624 = vst.msk [vmem:[%s582 + $0xa4] sm:$0x1] %vm221, %v527
      %625 = vst.msk [vmem:[%s582 + $0xa8] sm:$0xf] %vm218, %v528
      %626 = vst.msk [vmem:[%s582 + $0xac] sm:$0xf] %vm218, %v529
      %627 = vst.msk [vmem:[%s582 + $0xb0] sm:$0x1] %vm221, %v530
      %628 = vst.msk [vmem:[%s582 + $0xb4] sm:$0xf] %vm218, %v531
      %629 = vst.msk [vmem:[%s582 + $0xb8] sm:$0xf] %vm218, %v532
      %630 = vst.msk [vmem:[%s582 + $0xbc] sm:$0x1] %vm221, %v533
      %v631 = vld [vmem:[#allocation2] sm:$0xf]
      %v632 = vld [vmem:[#allocation2 + $0x4] sm:$0xf]
      %v633 = vld [vmem:[#allocation2 + $0xc] sm:$0xf]
      %v634 = vld [vmem:[#allocation2 + $0x10] sm:$0xf]
      %v635 = vld [vmem:[#allocation2 + $0x18] sm:$0xf]
      %v636 = vld [vmem:[#allocation2 + $0x1c] sm:$0xf]
      %v637 = vld [vmem:[#allocation2 + $0x24] sm:$0xf]
      %v638 = vld [vmem:[#allocation2 + $0x28] sm:$0xf]
      %v639 = vld [vmem:[#allocation2 + $0x30] sm:$0xf]
      %v640 = vld [vmem:[#allocation2 + $0x34] sm:$0xf]
      %v641 = vld [vmem:[#allocation2 + $0x3c] sm:$0xf]
      %v642 = vld [vmem:[#allocation2 + $0x40] sm:$0xf]
      %v643 = vld [vmem:[#allocation2 + $0x48] sm:$0xf]
      %v644 = vld [vmem:[#allocation2 + $0x4c] sm:$0xf]
      %v645 = vld [vmem:[#allocation2 + $0x54] sm:$0xf]
      %v646 = vld [vmem:[#allocation2 + $0x58] sm:$0xf]
      %v647 = vld [vmem:[#allocation2 + $0x60] sm:$0xf]
      %v648 = vld [vmem:[#allocation2 + $0x64] sm:$0xf]
      %v649 = vld [vmem:[#allocation2 + $0x6c] sm:$0xf]
      %v650 = vld [vmem:[#allocation2 + $0x70] sm:$0xf]
      %v651 = vld [vmem:[#allocation2 + $0x78] sm:$0xf]
      %v652 = vld [vmem:[#allocation2 + $0x7c] sm:$0xf]
      %v653 = vld [vmem:[#allocation2 + $0x84] sm:$0xf]
      %v654 = vld [vmem:[#allocation2 + $0x88] sm:$0xf]
      %v655 = vld [vmem:[#allocation2 + $0x90] sm:$0xf]
      %v656 = vld [vmem:[#allocation2 + $0x94] sm:$0xf]
      %v657 = vld [vmem:[#allocation2 + $0x9c] sm:$0xf]
      %v658 = vld [vmem:[#allocation2 + $0xa0] sm:$0xf]
      %v659 = vld [vmem:[#allocation2 + $0xa8] sm:$0xf]
      %v660 = vld [vmem:[#allocation2 + $0xac] sm:$0xf]
      %v661 = vld [vmem:[#allocation2 + $0xb4] sm:$0xf]
      %v662 = vld [vmem:[#allocation2 + $0xb8] sm:$0xf]
      %v663 = vld [vmem:[%s1] sm:$0x3]
      %v664 = vld [vmem:[#allocation2 + $0x8] sm:$0x1]
      %v665 = vld [vmem:[#allocation2 + $0x14] sm:$0x1]
      %v666 = vld [vmem:[#allocation2 + $0x20] sm:$0x1]
      %v667 = vld [vmem:[#allocation2 + $0x2c] sm:$0x1]
      %v668 = vld [vmem:[#allocation2 + $0x38] sm:$0x1]
      %v669 = vld [vmem:[#allocation2 + $0x44] sm:$0x1]
      %v670 = vld [vmem:[#allocation2 + $0x50] sm:$0x1]
      %v671 = vld [vmem:[#allocation2 + $0x5c] sm:$0x1]
      %v672 = vld [vmem:[#allocation2 + $0x68] sm:$0x1]
      %v673 = vld [vmem:[#allocation2 + $0x74] sm:$0x1]
      %v674 = vld [vmem:[#allocation2 + $0x80] sm:$0x1]
      %v675 = vld [vmem:[#allocation2 + $0x8c] sm:$0x1]
      %v676 = vld [vmem:[#allocation2 + $0x98] sm:$0x1]
      %v677 = vld [vmem:[#allocation2 + $0xa4] sm:$0x1]
      %v678 = vld [vmem:[#allocation2 + $0xb0] sm:$0x1]
      %v679 = vld [vmem:[#allocation2 + $0xbc] sm:$0x1]
      %vm680 = vsmask.f32 3328
      %vm681 = vsmask.f32 7440
      %vm682 = vmor %vm680, %vm681
      %v684 = vshrl.u32 %v631, 16
      %v686 = vrot.slane %v684, 4
      %v687 = vshll.u32 %v631, 16
      %v689 = vrot.slane %v687, 5
      %v690 = vor.u32 %v686, %v689
      %v691 = vrot.slane %v690, 4
      %v693 = vshll.u32 %v632, 16
      %v695 = vrot.slane %v693, 5
      %v696 = vsel %vm682, %v691, %v695
      %v697 = vshrl.u32 %v632, 16
      %v699 = vrot.slane %v697, 4
      %v700 = vor.u32 %v699, %v695
      %v701 = vrot.slane %v700, 4
      %v703 = vshll.u32 %v664, 16
      %v705 = vrot.slane %v703, 5
      %v706 = vsel %vm682, %v701, %v705
      %v708 = vshrl.u32 %v633, 16
      %v710 = vrot.slane %v708, 4
      %v711 = vshll.u32 %v633, 16
      %v713 = vrot.slane %v711, 5
      %v714 = vor.u32 %v710, %v713
      %v715 = vrot.slane %v714, 4
      %v717 = vshll.u32 %v634, 16
      %v719 = vrot.slane %v717, 5
      %v720 = vsel %vm682, %v715, %v719
      %v721 = vshrl.u32 %v634, 16
      %v723 = vrot.slane %v721, 4
      %v724 = vor.u32 %v723, %v719
      %v725 = vrot.slane %v724, 4
      %v727 = vshll.u32 %v665, 16
      %v729 = vrot.slane %v727, 5
      %v730 = vsel %vm682, %v725, %v729
      %v732 = vshrl.u32 %v635, 16
      %v734 = vrot.slane %v732, 4
      %v735 = vshll.u32 %v635, 16
      %v737 = vrot.slane %v735, 5
      %v738 = vor.u32 %v734, %v737
      %v739 = vrot.slane %v738, 4
      %v741 = vshll.u32 %v636, 16
      %v743 = vrot.slane %v741, 5
      %v744 = vsel %vm682, %v739, %v743
      %v745 = vshrl.u32 %v636, 16
      %v747 = vrot.slane %v745, 4
      %v748 = vor.u32 %v747, %v743
      %v749 = vrot.slane %v748, 4
      %v751 = vshll.u32 %v666, 16
      %v753 = vrot.slane %v751, 5
      %v754 = vsel %vm682, %v749, %v753
      %v756 = vshrl.u32 %v637, 16
      %v758 = vrot.slane %v756, 4
      %v759 = vshll.u32 %v637, 16
      %v761 = vrot.slane %v759, 5
      %v762 = vor.u32 %v758, %v761
      %v763 = vrot.slane %v762, 4
      %v765 = vshll.u32 %v638, 16
      %v767 = vrot.slane %v765, 5
      %v768 = vsel %vm682, %v763, %v767
      %v769 = vshrl.u32 %v638, 16
      %v771 = vrot.slane %v769, 4
      %v772 = vor.u32 %v771, %v767
      %v773 = vrot.slane %v772, 4
      %v775 = vshll.u32 %v667, 16
      %v777 = vrot.slane %v775, 5
      %v778 = vsel %vm682, %v773, %v777
      %v780 = vshrl.u32 %v639, 16
      %v782 = vrot.slane %v780, 4
      %v783 = vshll.u32 %v639, 16
      %v785 = vrot.slane %v783, 5
      %v786 = vor.u32 %v782, %v785
      %v787 = vrot.slane %v786, 4
      %v789 = vshll.u32 %v640, 16
      %v791 = vrot.slane %v789, 5
      %v792 = vsel %vm682, %v787, %v791
      %v793 = vshrl.u32 %v640, 16
      %v795 = vrot.slane %v793, 4
      %v796 = vor.u32 %v795, %v791
      %v797 = vrot.slane %v796, 4
      %v799 = vshll.u32 %v668, 16
      %v801 = vrot.slane %v799, 5
      %v802 = vsel %vm682, %v797, %v801
      %v804 = vshrl.u32 %v641, 16
      %v806 = vrot.slane %v804, 4
      %v807 = vshll.u32 %v641, 16
      %v809 = vrot.slane %v807, 5
      %v810 = vor.u32 %v806, %v809
      %v811 = vrot.slane %v810, 4
      %v813 = vshll.u32 %v642, 16
      %v815 = vrot.slane %v813, 5
      %v816 = vsel %vm682, %v811, %v815
      %v817 = vshrl.u32 %v642, 16
      %v819 = vrot.slane %v817, 4
      %v820 = vor.u32 %v819, %v815
      %v821 = vrot.slane %v820, 4
      %v823 = vshll.u32 %v669, 16
      %v825 = vrot.slane %v823, 5
      %v826 = vsel %vm682, %v821, %v825
      %v828 = vshrl.u32 %v643, 16
      %v830 = vrot.slane %v828, 4
      %v831 = vshll.u32 %v643, 16
      %v833 = vrot.slane %v831, 5
      %v834 = vor.u32 %v830, %v833
      %v835 = vrot.slane %v834, 4
      %v837 = vshll.u32 %v644, 16
      %v839 = vrot.slane %v837, 5
      %v840 = vsel %vm682, %v835, %v839
      %v841 = vshrl.u32 %v644, 16
      %v843 = vrot.slane %v841, 4
      %v844 = vor.u32 %v843, %v839
      %v845 = vrot.slane %v844, 4
      %v847 = vshll.u32 %v670, 16
      %v849 = vrot.slane %v847, 5
      %v850 = vsel %vm682, %v845, %v849
      %v852 = vshrl.u32 %v645, 16
      %v854 = vrot.slane %v852, 4
      %v855 = vshll.u32 %v645, 16
      %v857 = vrot.slane %v855, 5
      %v858 = vor.u32 %v854, %v857
      %v859 = vrot.slane %v858, 4
      %v861 = vshll.u32 %v646, 16
      %v863 = vrot.slane %v861, 5
      %v864 = vsel %vm682, %v859, %v863
      %v865 = vshrl.u32 %v646, 16
      %v867 = vrot.slane %v865, 4
      %v868 = vor.u32 %v867, %v863
      %v869 = vrot.slane %v868, 4
      %v871 = vshll.u32 %v671, 16
      %v873 = vrot.slane %v871, 5
      %v874 = vsel %vm682, %v869, %v873
      %v876 = vshrl.u32 %v647, 16
      %v878 = vrot.slane %v876, 4
      %v879 = vshll.u32 %v647, 16
      %v881 = vrot.slane %v879, 5
      %v882 = vor.u32 %v878, %v881
      %v883 = vrot.slane %v882, 4
      %v885 = vshll.u32 %v648, 16
      %v887 = vrot.slane %v885, 5
      %v888 = vsel %vm682, %v883, %v887
      %v889 = vshrl.u32 %v648, 16
      %v891 = vrot.slane %v889, 4
      %v892 = vor.u32 %v891, %v887
      %v893 = vrot.slane %v892, 4
      %v895 = vshll.u32 %v672, 16
      %v897 = vrot.slane %v895, 5
      %v898 = vsel %vm682, %v893, %v897
      %v900 = vshrl.u32 %v649, 16
      %v902 = vrot.slane %v900, 4
      %v903 = vshll.u32 %v649, 16
      %v905 = vrot.slane %v903, 5
      %v906 = vor.u32 %v902, %v905
      %v907 = vrot.slane %v906, 4
      %v909 = vshll.u32 %v650, 16
      %v911 = vrot.slane %v909, 5
      %v912 = vsel %vm682, %v907, %v911
      %v913 = vshrl.u32 %v650, 16
      %v915 = vrot.slane %v913, 4
      %v916 = vor.u32 %v915, %v911
      %v917 = vrot.slane %v916, 4
      %v919 = vshll.u32 %v673, 16
      %v921 = vrot.slane %v919, 5
      %v922 = vsel %vm682, %v917, %v921
      %v924 = vshrl.u32 %v651, 16
      %v926 = vrot.slane %v924, 4
      %v927 = vshll.u32 %v651, 16
      %v929 = vrot.slane %v927, 5
      %v930 = vor.u32 %v926, %v929
      %v931 = vrot.slane %v930, 4
      %v933 = vshll.u32 %v652, 16
      %v935 = vrot.slane %v933, 5
      %v936 = vsel %vm682, %v931, %v935
      %v937 = vshrl.u32 %v652, 16
      %v939 = vrot.slane %v937, 4
      %v940 = vor.u32 %v939, %v935
      %v941 = vrot.slane %v940, 4
      %v943 = vshll.u32 %v674, 16
      %v945 = vrot.slane %v943, 5
      %v946 = vsel %vm682, %v941, %v945
      %v948 = vshrl.u32 %v653, 16
      %v950 = vrot.slane %v948, 4
      %v951 = vshll.u32 %v653, 16
      %v953 = vrot.slane %v951, 5
      %v954 = vor.u32 %v950, %v953
      %v955 = vrot.slane %v954, 4
      %v957 = vshll.u32 %v654, 16
      %v959 = vrot.slane %v957, 5
      %v960 = vsel %vm682, %v955, %v959
      %v961 = vshrl.u32 %v654, 16
      %v963 = vrot.slane %v961, 4
      %v964 = vor.u32 %v963, %v959
      %v965 = vrot.slane %v964, 4
      %v967 = vshll.u32 %v675, 16
      %v969 = vrot.slane %v967, 5
      %v970 = vsel %vm682, %v965, %v969
      %v972 = vshrl.u32 %v655, 16
      %v974 = vrot.slane %v972, 4
      %v975 = vshll.u32 %v655, 16
      %v977 = vrot.slane %v975, 5
      %v978 = vor.u32 %v974, %v977
      %v979 = vrot.slane %v978, 4
      %v981 = vshll.u32 %v656, 16
      %v983 = vrot.slane %v981, 5
      %v984 = vsel %vm682, %v979, %v983
      %v985 = vshrl.u32 %v656, 16
      %v987 = vrot.slane %v985, 4
      %v988 = vor.u32 %v987, %v983
      %v989 = vrot.slane %v988, 4
      %v991 = vshll.u32 %v676, 16
      %v993 = vrot.slane %v991, 5
      %v994 = vsel %vm682, %v989, %v993
      %v996 = vshrl.u32 %v657, 16
      %v998 = vrot.slane %v996, 4
      %v999 = vshll.u32 %v657, 16
      %v1001 = vrot.slane %v999, 5
      %v1002 = vor.u32 %v998, %v1001
      %v1003 = vrot.slane %v1002, 4
      %v1005 = vshll.u32 %v658, 16
      %v1007 = vrot.slane %v1005, 5
      %v1008 = vsel %vm682, %v1003, %v1007
      %v1009 = vshrl.u32 %v658, 16
      %v1011 = vrot.slane %v1009, 4
      %v1012 = vor.u32 %v1011, %v1007
      %v1013 = vrot.slane %v1012, 4
      %v1015 = vshll.u32 %v677, 16
      %v1017 = vrot.slane %v1015, 5
      %v1018 = vsel %vm682, %v1013, %v1017
      %v1020 = vshrl.u32 %v659, 16
      %v1022 = vrot.slane %v1020, 4
      %v1023 = vshll.u32 %v659, 16
      %v1025 = vrot.slane %v1023, 5
      %v1026 = vor.u32 %v1022, %v1025
      %v1027 = vrot.slane %v1026, 4
      %v1029 = vshll.u32 %v660, 16
      %v1031 = vrot.slane %v1029, 5
      %v1032 = vsel %vm682, %v1027, %v1031
      %v1033 = vshrl.u32 %v660, 16
      %v1035 = vrot.slane %v1033, 4
      %v1036 = vor.u32 %v1035, %v1031
      %v1037 = vrot.slane %v1036, 4
      %v1039 = vshll.u32 %v678, 16
      %v1041 = vrot.slane %v1039, 5
      %v1042 = vsel %vm682, %v1037, %v1041
      %v1044 = vshrl.u32 %v661, 16
      %v1046 = vrot.slane %v1044, 4
      %v1047 = vshll.u32 %v661, 16
      %v1049 = vrot.slane %v1047, 5
      %v1050 = vor.u32 %v1046, %v1049
      %v1051 = vrot.slane %v1050, 4
      %v1053 = vshll.u32 %v662, 16
      %v1055 = vrot.slane %v1053, 5
      %v1056 = vsel %vm682, %v1051, %v1055
      %v1057 = vshrl.u32 %v662, 16
      %v1059 = vrot.slane %v1057, 4
      %v1060 = vor.u32 %v1059, %v1055
      %v1061 = vrot.slane %v1060, 4
      %v1063 = vshll.u32 %v679, 16
      %v1065 = vrot.slane %v1063, 5
      %v1066 = vsel %vm682, %v1061, %v1065
      %s1067 = scalar_lea.vmem %s1, 2
      %v1068 = vld [vmem:[%s1067] sm:$0x3]
      %v1069 = vunpack.c.l.b16 %v696
      %v1070 = vunpack.c.l.b16 %v706
      %v1071 = vunpack.c.l.b16 %v720
      %v1072 = vunpack.c.l.b16 %v730
      %v1073 = vunpack.c.l.b16 %v744
      %v1074 = vunpack.c.l.b16 %v754
      %v1075 = vunpack.c.l.b16 %v768
      %v1076 = vunpack.c.l.b16 %v778
      %v1077 = vunpack.c.l.b16 %v792
      %v1078 = vunpack.c.l.b16 %v802
      %v1079 = vunpack.c.l.b16 %v816
      %v1080 = vunpack.c.l.b16 %v826
      %v1081 = vunpack.c.l.b16 %v840
      %v1082 = vunpack.c.l.b16 %v850
      %v1083 = vunpack.c.l.b16 %v864
      %v1084 = vunpack.c.l.b16 %v874
      %v1085 = vunpack.c.l.b16 %v888
      %v1086 = vunpack.c.l.b16 %v898
      %v1087 = vunpack.c.l.b16 %v912
      %v1088 = vunpack.c.l.b16 %v922
      %v1089 = vunpack.c.l.b16 %v936
      %v1090 = vunpack.c.l.b16 %v946
      %v1091 = vunpack.c.l.b16 %v960
      %v1092 = vunpack.c.l.b16 %v970
      %v1093 = vunpack.c.l.b16 %v984
      %v1094 = vunpack.c.l.b16 %v994
      %v1095 = vunpack.c.l.b16 %v1008
      %v1096 = vunpack.c.l.b16 %v1018
      %v1097 = vunpack.c.l.b16 %v1032
      %v1098 = vunpack.c.l.b16 %v1042
      %v1099 = vunpack.c.l.b16 %v1056
      %v1100 = vunpack.c.l.b16 %v1066
      %v1101 = vpack.c.b16 %v1070, %v1069
      %v1102 = vpack.c.b16 %v1072, %v1071
      %v1103 = vpack.c.b16 %v1074, %v1073
      %v1104 = vpack.c.b16 %v1076, %v1075
      %v1105 = vpack.c.b16 %v1078, %v1077
      %v1106 = vpack.c.b16 %v1080, %v1079
      %v1107 = vpack.c.b16 %v1082, %v1081
      %v1108 = vpack.c.b16 %v1084, %v1083
      %v1109 = vpack.c.b16 %v1086, %v1085
      %v1110 = vpack.c.b16 %v1088, %v1087
      %v1111 = vpack.c.b16 %v1090, %v1089
      %v1112 = vpack.c.b16 %v1092, %v1091
      %v1113 = vpack.c.b16 %v1094, %v1093
      %v1114 = vpack.c.b16 %v1096, %v1095
      %v1115 = vpack.c.b16 %v1098, %v1097
      %v1116 = vpack.c.b16 %v1100, %v1099
      %vm1117 = vcmask 31744
      %v1119 = vsel %vm1117, %v1101, 0
      %v1122 = vsel %vm1117, %v1102, 0
      %v1125 = vsel %vm1117, %v1103, 0
      %v1128 = vsel %vm1117, %v1104, 0
      %v1131 = vsel %vm1117, %v1105, 0
      %v1134 = vsel %vm1117, %v1106, 0
      %v1137 = vsel %vm1117, %v1107, 0
      %v1140 = vsel %vm1117, %v1108, 0
      %v1143 = vsel %vm1117, %v1109, 0
      %v1146 = vsel %vm1117, %v1110, 0
      %v1149 = vsel %vm1117, %v1111, 0
      %v1152 = vsel %vm1117, %v1112, 0
      %v1155 = vsel %vm1117, %v1113, 0
      %v1158 = vsel %vm1117, %v1114, 0
      %v1161 = vsel %vm1117, %v1115, 0
      %v1164 = vsel %vm1117, %v1116, 0
      %vm1166 = vcmask 1041408
      %v1168 = vsel %vm1166, %v1068, 0
      %1170 = vmatprep.subr.bf16.mxu0 0
      %1171 = vmatpush1.bf16.msra.mxu0 0
      %1172 = vmatprep.subr.bf16.mxu0 0
      %1173 = vmatpush1.bf16.msra.mxu0 0
      %1174 = vmatprep.subr.bf16.mxu0 0
      %1175 = vmatpush1.bf16.msra.mxu0 0
      %1176 = vmatprep.subr.bf16.mxu0 0
      %1177 = vmatpush1.bf16.msra.mxu0 0
      %1178 = vmatprep.subr.bf16.mxu0 0
      %1179 = vmatpush1.bf16.msra.mxu0 0
      %1180 = vmatprep.subr.bf16.mxu0 0
      %1181 = vmatpush1.bf16.msra.mxu0 0
      %1182 = vmatprep.subr.bf16.mxu0 0
      %1183 = vmatpush1.bf16.msra.mxu0 0
      %1184 = vmatprep.subr.bf16.mxu0 0
      %1185 = vmatpush1.bf16.msra.mxu0 %v1168
      %1186 = vmatprep.subr.bf16.mxu0 0
      %1187 = vmatpush2.bf16.msra.mxu0 0
      %1188 = vmatprep.subr.bf16.mxu0 0
      %1189 = vmatpush2.bf16.msra.mxu0 0
      %1190 = vmatprep.subr.bf16.mxu0 0
      %1191 = vmatpush2.bf16.msra.mxu0 0
      %1192 = vmatprep.subr.bf16.mxu0 0
      %1193 = vmatpush2.bf16.msra.mxu0 0
      %1194 = vmatprep.subr.bf16.mxu0 0
      %1195 = vmatpush2.bf16.msra.mxu0 0
      %1196 = vmatprep.subr.bf16.mxu0 0
      %1197 = vmatpush2.bf16.msra.mxu0 0
      %1198 = vmatprep.subr.bf16.mxu0 0
      %1199 = vmatpush2.bf16.msra.mxu0 0
      %1200 = vmatprep.subr.bf16.mxu0 0
      %1201 = vmatpush2.bf16.msra.mxu0 0
      %1202 = vmatprep.mubr.bf16.mxu0 0
      %1203 = vmatmul.mubr.bf16.gmra.mxu0 %v1119
      %v1204 = vpop.f32.mrf.mxu0
      %v1205 = vadd.f32 0.0, %v1204
      %v1206 = vpop.f32.mrf.mxu0
      %v1207 = vpop.f32.mrf.mxu0
      %v1208 = vadd.f32 0.0, %v1207
      %v1209 = vpop.f32.mrf.mxu0
      %1210 = vmatprep.mubr.bf16.mxu0 0
      %1211 = vmatmul.mubr.bf16.gmra.mxu0 %v1122
      %v1212 = vpop.f32.mrf.mxu0
      %v1213 = vadd.f32 0.0, %v1212
      %v1214 = vpop.f32.mrf.mxu0
      %v1215 = vpop.f32.mrf.mxu0
      %v1216 = vadd.f32 0.0, %v1215
      %v1217 = vpop.f32.mrf.mxu0
      %1218 = vmatprep.mubr.bf16.mxu0 0
      %1219 = vmatmul.mubr.bf16.gmra.mxu0 %v1125
      %v1220 = vpop.f32.mrf.mxu0
      %v1221 = vadd.f32 0.0, %v1220
      %v1222 = vpop.f32.mrf.mxu0
      %v1223 = vpop.f32.mrf.mxu0
      %v1224 = vadd.f32 0.0, %v1223
      %v1225 = vpop.f32.mrf.mxu0
      %1226 = vmatprep.mubr.bf16.mxu0 0
      %1227 = vmatmul.mubr.bf16.gmra.mxu0 %v1128
      %v1228 = vpop.f32.mrf.mxu0
      %v1229 = vadd.f32 0.0, %v1228
      %v1230 = vpop.f32.mrf.mxu0
      %v1231 = vpop.f32.mrf.mxu0
      %v1232 = vadd.f32 0.0, %v1231
      %v1233 = vpop.f32.mrf.mxu0
      %1234 = vmatprep.mubr.bf16.mxu0 0
      %1235 = vmatmul.mubr.bf16.gmra.mxu0 %v1131
      %v1236 = vpop.f32.mrf.mxu0
      %v1237 = vadd.f32 0.0, %v1236
      %v1238 = vpop.f32.mrf.mxu0
      %v1239 = vpop.f32.mrf.mxu0
      %v1240 = vadd.f32 0.0, %v1239
      %v1241 = vpop.f32.mrf.mxu0
      %1242 = vmatprep.mubr.bf16.mxu0 0
      %1243 = vmatmul.mubr.bf16.gmra.mxu0 %v1134
      %v1244 = vpop.f32.mrf.mxu0
      %v1245 = vadd.f32 0.0, %v1244
      %v1246 = vpop.f32.mrf.mxu0
      %v1247 = vpop.f32.mrf.mxu0
      %v1248 = vadd.f32 0.0, %v1247
      %v1249 = vpop.f32.mrf.mxu0
      %1250 = vmatprep.mubr.bf16.mxu0 0
      %1251 = vmatmul.mubr.bf16.gmra.mxu0 %v1137
      %v1252 = vpop.f32.mrf.mxu0
      %v1253 = vadd.f32 0.0, %v1252
      %v1254 = vpop.f32.mrf.mxu0
      %v1255 = vpop.f32.mrf.mxu0
      %v1256 = vadd.f32 0.0, %v1255
      %v1257 = vpop.f32.mrf.mxu0
      %1258 = vmatprep.mubr.bf16.mxu0 0
      %1259 = vmatmul.mubr.bf16.gmra.mxu0 %v1140
      %v1260 = vpop.f32.mrf.mxu0
      %v1261 = vadd.f32 0.0, %v1260
      %v1262 = vpop.f32.mrf.mxu0
      %v1263 = vpop.f32.mrf.mxu0
      %v1264 = vadd.f32 0.0, %v1263
      %v1265 = vpop.f32.mrf.mxu0
      %1266 = vmatprep.mubr.bf16.mxu0 0
      %1267 = vmatmul.mubr.bf16.gmra.mxu0 %v1143
      %v1268 = vpop.f32.mrf.mxu0
      %v1269 = vadd.f32 0.0, %v1268
      %v1270 = vpop.f32.mrf.mxu0
      %v1271 = vpop.f32.mrf.mxu0
      %v1272 = vadd.f32 0.0, %v1271
      %v1273 = vpop.f32.mrf.mxu0
      %1274 = vmatprep.mubr.bf16.mxu0 0
      %1275 = vmatmul.mubr.bf16.gmra.mxu0 %v1146
      %v1276 = vpop.f32.mrf.mxu0
      %v1277 = vadd.f32 0.0, %v1276
      %v1278 = vpop.f32.mrf.mxu0
      %v1279 = vpop.f32.mrf.mxu0
      %v1280 = vadd.f32 0.0, %v1279
      %v1281 = vpop.f32.mrf.mxu0
      %1282 = vmatprep.mubr.bf16.mxu0 0
      %1283 = vmatmul.mubr.bf16.gmra.mxu0 %v1149
      %v1284 = vpop.f32.mrf.mxu0
      %v1285 = vadd.f32 0.0, %v1284
      %v1286 = vpop.f32.mrf.mxu0
      %v1287 = vpop.f32.mrf.mxu0
      %v1288 = vadd.f32 0.0, %v1287
      %v1289 = vpop.f32.mrf.mxu0
      %1290 = vmatprep.mubr.bf16.mxu0 0
      %1291 = vmatmul.mubr.bf16.gmra.mxu0 %v1152
      %v1292 = vpop.f32.mrf.mxu0
      %v1293 = vadd.f32 0.0, %v1292
      %v1294 = vpop.f32.mrf.mxu0
      %v1295 = vpop.f32.mrf.mxu0
      %v1296 = vadd.f32 0.0, %v1295
      %v1297 = vpop.f32.mrf.mxu0
      %1298 = vmatprep.mubr.bf16.mxu0 0
      %1299 = vmatmul.mubr.bf16.gmra.mxu0 %v1155
      %v1300 = vpop.f32.mrf.mxu0
      %v1301 = vadd.f32 0.0, %v1300
      %v1302 = vpop.f32.mrf.mxu0
      %v1303 = vpop.f32.mrf.mxu0
      %v1304 = vadd.f32 0.0, %v1303
      %v1305 = vpop.f32.mrf.mxu0
      %1306 = vmatprep.mubr.bf16.mxu0 0
      %1307 = vmatmul.mubr.bf16.gmra.mxu0 %v1158
      %v1308 = vpop.f32.mrf.mxu0
      %v1309 = vadd.f32 0.0, %v1308
      %v1310 = vpop.f32.mrf.mxu0
      %v1311 = vpop.f32.mrf.mxu0
      %v1312 = vadd.f32 0.0, %v1311
      %v1313 = vpop.f32.mrf.mxu0
      %1314 = vmatprep.mubr.bf16.mxu0 0
      %1315 = vmatmul.mubr.bf16.gmra.mxu0 %v1161
      %v1316 = vpop.f32.mrf.mxu0
      %v1317 = vadd.f32 0.0, %v1316
      %v1318 = vpop.f32.mrf.mxu0
      %v1319 = vpop.f32.mrf.mxu0
      %v1320 = vadd.f32 0.0, %v1319
      %v1321 = vpop.f32.mrf.mxu0
      %1322 = vmatprep.mubr.bf16.mxu0 0
      %1323 = vmatmul.mubr.bf16.gmra.mxu0 %v1164
      %v1324 = vpop.f32.mrf.mxu0
      %v1325 = vadd.f32 0.0, %v1324
      %v1326 = vpop.f32.mrf.mxu0
      %v1327 = vpop.f32.mrf.mxu0
      %v1328 = vadd.f32 0.0, %v1327
      %v1329 = vpop.f32.mrf.mxu0
      %1330 = vdwg.mxu0
      %v1363 = vunpack.c.l.b16 %v631
      %v1364 = vunpack.c.l.b16 %v632
      %v1365 = vunpack.c.l.b16 %v633
      %v1366 = vunpack.c.l.b16 %v634
      %v1367 = vunpack.c.l.b16 %v635
      %v1368 = vunpack.c.l.b16 %v636
      %v1369 = vunpack.c.l.b16 %v637
      %v1370 = vunpack.c.l.b16 %v638
      %v1371 = vunpack.c.l.b16 %v639
      %v1372 = vunpack.c.l.b16 %v640
      %v1373 = vunpack.c.l.b16 %v641
      %v1374 = vunpack.c.l.b16 %v642
      %v1375 = vunpack.c.l.b16 %v643
      %v1376 = vunpack.c.l.b16 %v644
      %v1377 = vunpack.c.l.b16 %v645
      %v1378 = vunpack.c.l.b16 %v646
      %v1379 = vunpack.c.l.b16 %v647
      %v1380 = vunpack.c.l.b16 %v648
      %v1381 = vunpack.c.l.b16 %v649
      %v1382 = vunpack.c.l.b16 %v650
      %v1383 = vunpack.c.l.b16 %v651
      %v1384 = vunpack.c.l.b16 %v652
      %v1385 = vunpack.c.l.b16 %v653
      %v1386 = vunpack.c.l.b16 %v654
      %v1387 = vunpack.c.l.b16 %v655
      %v1388 = vunpack.c.l.b16 %v656
      %v1389 = vunpack.c.l.b16 %v657
      %v1390 = vunpack.c.l.b16 %v658
      %v1391 = vunpack.c.l.b16 %v659
      %v1392 = vunpack.c.l.b16 %v660
      %v1393 = vunpack.c.l.b16 %v661
      %v1394 = vunpack.c.l.b16 %v662
      %v1395 = vpack.c.b16 %v1364, %v1363
      %v1396 = vpack.c.b16 %v1366, %v1365
      %v1397 = vpack.c.b16 %v1368, %v1367
      %v1398 = vpack.c.b16 %v1370, %v1369
      %v1399 = vpack.c.b16 %v1372, %v1371
      %v1400 = vpack.c.b16 %v1374, %v1373
      %v1401 = vpack.c.b16 %v1376, %v1375
      %v1402 = vpack.c.b16 %v1378, %v1377
      %v1403 = vpack.c.b16 %v1380, %v1379
      %v1404 = vpack.c.b16 %v1382, %v1381
      %v1405 = vpack.c.b16 %v1384, %v1383
      %v1406 = vpack.c.b16 %v1386, %v1385
      %v1407 = vpack.c.b16 %v1388, %v1387
      %v1408 = vpack.c.b16 %v1390, %v1389
      %v1409 = vpack.c.b16 %v1392, %v1391
      %v1410 = vpack.c.b16 %v1394, %v1393
      %v1412 = vsel %vm1117, %v1395, 0
      %v1415 = vsel %vm1117, %v1396, 0
      %v1418 = vsel %vm1117, %v1397, 0
      %v1421 = vsel %vm1117, %v1398, 0
      %v1424 = vsel %vm1117, %v1399, 0
      %v1427 = vsel %vm1117, %v1400, 0
      %v1430 = vsel %vm1117, %v1401, 0
      %v1433 = vsel %vm1117, %v1402, 0
      %v1436 = vsel %vm1117, %v1403, 0
      %v1439 = vsel %vm1117, %v1404, 0
      %v1442 = vsel %vm1117, %v1405, 0
      %v1445 = vsel %vm1117, %v1406, 0
      %v1448 = vsel %vm1117, %v1407, 0
      %v1451 = vsel %vm1117, %v1408, 0
      %v1454 = vsel %vm1117, %v1409, 0
      %v1457 = vsel %vm1117, %v1410, 0
      %v1460 = vsel %vm1166, %v663, 0
      %1462 = vmatprep.subr.bf16.mxu0 0
      %1463 = vmatpush1.bf16.msra.mxu0 0
      %1464 = vmatprep.subr.bf16.mxu0 0
      %1465 = vmatpush1.bf16.msra.mxu0 0
      %1466 = vmatprep.subr.bf16.mxu0 0
      %1467 = vmatpush1.bf16.msra.mxu0 0
      %1468 = vmatprep.subr.bf16.mxu0 0
      %1469 = vmatpush1.bf16.msra.mxu0 0
      %1470 = vmatprep.subr.bf16.mxu0 0
      %1471 = vmatpush1.bf16.msra.mxu0 0
      %1472 = vmatprep.subr.bf16.mxu0 0
      %1473 = vmatpush1.bf16.msra.mxu0 0
      %1474 = vmatprep.subr.bf16.mxu0 0
      %1475 = vmatpush1.bf16.msra.mxu0 0
      %1476 = vmatprep.subr.bf16.mxu0 0
      %1477 = vmatpush1.bf16.msra.mxu0 %v1460
      %1478 = vmatprep.subr.bf16.mxu0 0
      %1479 = vmatpush2.bf16.msra.mxu0 0
      %1480 = vmatprep.subr.bf16.mxu0 0
      %1481 = vmatpush2.bf16.msra.mxu0 0
      %1482 = vmatprep.subr.bf16.mxu0 0
      %1483 = vmatpush2.bf16.msra.mxu0 0
      %1484 = vmatprep.subr.bf16.mxu0 0
      %1485 = vmatpush2.bf16.msra.mxu0 0
      %1486 = vmatprep.subr.bf16.mxu0 0
      %1487 = vmatpush2.bf16.msra.mxu0 0
      %1488 = vmatprep.subr.bf16.mxu0 0
      %1489 = vmatpush2.bf16.msra.mxu0 0
      %1490 = vmatprep.subr.bf16.mxu0 0
      %1491 = vmatpush2.bf16.msra.mxu0 0
      %1492 = vmatprep.subr.bf16.mxu0 0
      %1493 = vmatpush2.bf16.msra.mxu0 0
      %1494 = vmatprep.mubr.bf16.mxu0 0
      %1495 = vmatmul.mubr.bf16.gmra.mxu0 %v1412
      %v1496 = vpop.f32.mrf.mxu0
      %v1497 = vadd.f32 %v1205, %v1496
      %v1498 = vpop.f32.mrf.mxu0
      %v1499 = vpop.f32.mrf.mxu0
      %v1500 = vadd.f32 %v1208, %v1499
      %v1501 = vpop.f32.mrf.mxu0
      %1502 = vmatprep.mubr.bf16.mxu0 0
      %1503 = vmatmul.mubr.bf16.gmra.mxu0 %v1415
      %v1504 = vpop.f32.mrf.mxu0
      %v1505 = vadd.f32 %v1213, %v1504
      %v1506 = vpop.f32.mrf.mxu0
      %v1507 = vpop.f32.mrf.mxu0
      %v1508 = vadd.f32 %v1216, %v1507
      %v1509 = vpop.f32.mrf.mxu0
      %1510 = vmatprep.mubr.bf16.mxu0 0
      %1511 = vmatmul.mubr.bf16.gmra.mxu0 %v1418
      %v1512 = vpop.f32.mrf.mxu0
      %v1513 = vadd.f32 %v1221, %v1512
      %v1514 = vpop.f32.mrf.mxu0
      %v1515 = vpop.f32.mrf.mxu0
      %v1516 = vadd.f32 %v1224, %v1515
      %v1517 = vpop.f32.mrf.mxu0
      %1518 = vmatprep.mubr.bf16.mxu0 0
      %1519 = vmatmul.mubr.bf16.gmra.mxu0 %v1421
      %v1520 = vpop.f32.mrf.mxu0
      %v1521 = vadd.f32 %v1229, %v1520
      %v1522 = vpop.f32.mrf.mxu0
      %v1523 = vpop.f32.mrf.mxu0
      %v1524 = vadd.f32 %v1232, %v1523
      %v1525 = vpop.f32.mrf.mxu0
      %1526 = vmatprep.mubr.bf16.mxu0 0
      %1527 = vmatmul.mubr.bf16.gmra.mxu0 %v1424
      %v1528 = vpop.f32.mrf.mxu0
      %v1529 = vadd.f32 %v1237, %v1528
      %v1530 = vpop.f32.mrf.mxu0
      %v1531 = vpop.f32.mrf.mxu0
      %v1532 = vadd.f32 %v1240, %v1531
      %v1533 = vpop.f32.mrf.mxu0
      %1534 = vmatprep.mubr.bf16.mxu0 0
      %1535 = vmatmul.mubr.bf16.gmra.mxu0 %v1427
      %v1536 = vpop.f32.mrf.mxu0
      %v1537 = vadd.f32 %v1245, %v1536
      %v1538 = vpop.f32.mrf.mxu0
      %v1539 = vpop.f32.mrf.mxu0
      %v1540 = vadd.f32 %v1248, %v1539
      %v1541 = vpop.f32.mrf.mxu0
      %1542 = vmatprep.mubr.bf16.mxu0 0
      %1543 = vmatmul.mubr.bf16.gmra.mxu0 %v1430
      %v1544 = vpop.f32.mrf.mxu0
      %v1545 = vadd.f32 %v1253, %v1544
      %v1546 = vpop.f32.mrf.mxu0
      %v1547 = vpop.f32.mrf.mxu0
      %v1548 = vadd.f32 %v1256, %v1547
      %v1549 = vpop.f32.mrf.mxu0
      %1550 = vmatprep.mubr.bf16.mxu0 0
      %1551 = vmatmul.mubr.bf16.gmra.mxu0 %v1433
      %v1552 = vpop.f32.mrf.mxu0
      %v1553 = vadd.f32 %v1261, %v1552
      %v1554 = vpop.f32.mrf.mxu0
      %v1555 = vpop.f32.mrf.mxu0
      %v1556 = vadd.f32 %v1264, %v1555
      %v1557 = vpop.f32.mrf.mxu0
      %1558 = vmatprep.mubr.bf16.mxu0 0
      %1559 = vmatmul.mubr.bf16.gmra.mxu0 %v1436
      %v1560 = vpop.f32.mrf.mxu0
      %v1561 = vadd.f32 %v1269, %v1560
      %v1562 = vpop.f32.mrf.mxu0
      %v1563 = vpop.f32.mrf.mxu0
      %v1564 = vadd.f32 %v1272, %v1563
      %v1565 = vpop.f32.mrf.mxu0
      %1566 = vmatprep.mubr.bf16.mxu0 0
      %1567 = vmatmul.mubr.bf16.gmra.mxu0 %v1439
      %v1568 = vpop.f32.mrf.mxu0
      %v1569 = vadd.f32 %v1277, %v1568
      %v1570 = vpop.f32.mrf.mxu0
      %v1571 = vpop.f32.mrf.mxu0
      %v1572 = vadd.f32 %v1280, %v1571
      %v1573 = vpop.f32.mrf.mxu0
      %1574 = vmatprep.mubr.bf16.mxu0 0
      %1575 = vmatmul.mubr.bf16.gmra.mxu0 %v1442
      %v1576 = vpop.f32.mrf.mxu0
      %v1577 = vadd.f32 %v1285, %v1576
      %v1578 = vpop.f32.mrf.mxu0
      %v1579 = vpop.f32.mrf.mxu0
      %v1580 = vadd.f32 %v1288, %v1579
      %v1581 = vpop.f32.mrf.mxu0
      %1582 = vmatprep.mubr.bf16.mxu0 0
      %1583 = vmatmul.mubr.bf16.gmra.mxu0 %v1445
      %v1584 = vpop.f32.mrf.mxu0
      %v1585 = vadd.f32 %v1293, %v1584
      %v1586 = vpop.f32.mrf.mxu0
      %v1587 = vpop.f32.mrf.mxu0
      %v1588 = vadd.f32 %v1296, %v1587
      %v1589 = vpop.f32.mrf.mxu0
      %1590 = vmatprep.mubr.bf16.mxu0 0
      %1591 = vmatmul.mubr.bf16.gmra.mxu0 %v1448
      %v1592 = vpop.f32.mrf.mxu0
      %v1593 = vadd.f32 %v1301, %v1592
      %v1594 = vpop.f32.mrf.mxu0
      %v1595 = vpop.f32.mrf.mxu0
      %v1596 = vadd.f32 %v1304, %v1595
      %v1597 = vpop.f32.mrf.mxu0
      %1598 = vmatprep.mubr.bf16.mxu0 0
      %1599 = vmatmul.mubr.bf16.gmra.mxu0 %v1451
      %v1600 = vpop.f32.mrf.mxu0
      %v1601 = vadd.f32 %v1309, %v1600
      %v1602 = vpop.f32.mrf.mxu0
      %v1603 = vpop.f32.mrf.mxu0
      %v1604 = vadd.f32 %v1312, %v1603
      %v1605 = vpop.f32.mrf.mxu0
      %1606 = vmatprep.mubr.bf16.mxu0 0
      %1607 = vmatmul.mubr.bf16.gmra.mxu0 %v1454
      %v1608 = vpop.f32.mrf.mxu0
      %v1609 = vadd.f32 %v1317, %v1608
      %v1610 = vpop.f32.mrf.mxu0
      %v1611 = vpop.f32.mrf.mxu0
      %v1612 = vadd.f32 %v1320, %v1611
      %v1613 = vpop.f32.mrf.mxu0
      %1614 = vmatprep.mubr.bf16.mxu0 0
      %1615 = vmatmul.mubr.bf16.gmra.mxu0 %v1457
      %v1616 = vpop.f32.mrf.mxu0
      %v1617 = vadd.f32 %v1325, %v1616
      %v1618 = vpop.f32.mrf.mxu0
      %v1619 = vpop.f32.mrf.mxu0
      %v1620 = vadd.f32 %v1328, %v1619
      %v1621 = vpop.f32.mrf.mxu0
      %1622 = vdwg.mxu0
      %v1623 = vld [vmem:[#allocation2] sm:$0xe]
      %v1624 = vld [vmem:[#allocation2 + $0xc] sm:$0xe]
      %v1625 = vld [vmem:[#allocation2 + $0x18] sm:$0xe]
      %v1626 = vld [vmem:[#allocation2 + $0x24] sm:$0xe]
      %v1627 = vld [vmem:[#allocation2 + $0x30] sm:$0xe]
      %v1628 = vld [vmem:[#allocation2 + $0x3c] sm:$0xe]
      %v1629 = vld [vmem:[#allocation2 + $0x48] sm:$0xe]
      %v1630 = vld [vmem:[#allocation2 + $0x54] sm:$0xe]
      %v1631 = vld [vmem:[#allocation2 + $0x60] sm:$0xe]
      %v1632 = vld [vmem:[#allocation2 + $0x6c] sm:$0xe]
      %v1633 = vld [vmem:[#allocation2 + $0x78] sm:$0xe]
      %v1634 = vld [vmem:[#allocation2 + $0x84] sm:$0xe]
      %v1635 = vld [vmem:[#allocation2 + $0x90] sm:$0xe]
      %v1636 = vld [vmem:[#allocation2 + $0x9c] sm:$0xe]
      %v1637 = vld [vmem:[#allocation2 + $0xa8] sm:$0xe]
      %v1638 = vld [vmem:[#allocation2 + $0xb4] sm:$0xe]
      %vm1671 = vcmask 1042432
      %vm1672 = vcmask 1046532
      %vm1673 = vmor %vm1671, %vm1672
      %v1674 = vrot.slane %v1623, 5
      %v1675 = vrot.slane %v1674, 4
      %v1676 = vrot.slane %v632, 5
      %v1677 = vsel %vm1673, %v1675, %v1676
      %v1678 = vrot.slane %v1676, 4
      %v1679 = vrot.slane %v664, 5
      %v1680 = vsel %vm1673, %v1678, %v1679
      %v1681 = vrot.slane %v1624, 5
      %v1682 = vrot.slane %v1681, 4
      %v1683 = vrot.slane %v634, 5
      %v1684 = vsel %vm1673, %v1682, %v1683
      %v1685 = vrot.slane %v1683, 4
      %v1686 = vrot.slane %v665, 5
      %v1687 = vsel %vm1673, %v1685, %v1686
      %v1688 = vrot.slane %v1625, 5
      %v1689 = vrot.slane %v1688, 4
      %v1690 = vrot.slane %v636, 5
      %v1691 = vsel %vm1673, %v1689, %v1690
      %v1692 = vrot.slane %v1690, 4
      %v1693 = vrot.slane %v666, 5
      %v1694 = vsel %vm1673, %v1692, %v1693
      %v1695 = vrot.slane %v1626, 5
      %v1696 = vrot.slane %v1695, 4
      %v1697 = vrot.slane %v638, 5
      %v1698 = vsel %vm1673, %v1696, %v1697
      %v1699 = vrot.slane %v1697, 4
      %v1700 = vrot.slane %v667, 5
      %v1701 = vsel %vm1673, %v1699, %v1700
      %v1702 = vrot.slane %v1627, 5
      %v1703 = vrot.slane %v1702, 4
      %v1704 = vrot.slane %v640, 5
      %v1705 = vsel %vm1673, %v1703, %v1704
      %v1706 = vrot.slane %v1704, 4
      %v1707 = vrot.slane %v668, 5
      %v1708 = vsel %vm1673, %v1706, %v1707
      %v1709 = vrot.slane %v1628, 5
      %v1710 = vrot.slane %v1709, 4
      %v1711 = vrot.slane %v642, 5
      %v1712 = vsel %vm1673, %v1710, %v1711
      %v1713 = vrot.slane %v1711, 4
      %v1714 = vrot.slane %v669, 5
      %v1715 = vsel %vm1673, %v1713, %v1714
      %v1716 = vrot.slane %v1629, 5
      %v1717 = vrot.slane %v1716, 4
      %v1718 = vrot.slane %v644, 5
      %v1719 = vsel %vm1673, %v1717, %v1718
      %v1720 = vrot.slane %v1718, 4
      %v1721 = vrot.slane %v670, 5
      %v1722 = vsel %vm1673, %v1720, %v1721
      %v1723 = vrot.slane %v1630, 5
      %v1724 = vrot.slane %v1723, 4
      %v1725 = vrot.slane %v646, 5
      %v1726 = vsel %vm1673, %v1724, %v1725
      %v1727 = vrot.slane %v1725, 4
      %v1728 = vrot.slane %v671, 5
      %v1729 = vsel %vm1673, %v1727, %v1728
      %v1730 = vrot.slane %v1631, 5
      %v1731 = vrot.slane %v1730, 4
      %v1732 = vrot.slane %v648, 5
      %v1733 = vsel %vm1673, %v1731, %v1732
      %v1734 = vrot.slane %v1732, 4
      %v1735 = vrot.slane %v672, 5
      %v1736 = vsel %vm1673, %v1734, %v1735
      %v1737 = vrot.slane %v1632, 5
      %v1738 = vrot.slane %v1737, 4
      %v1739 = vrot.slane %v650, 5
      %v1740 = vsel %vm1673, %v1738, %v1739
      %v1741 = vrot.slane %v1739, 4
      %v1742 = vrot.slane %v673, 5
      %v1743 = vsel %vm1673, %v1741, %v1742
      %v1744 = vrot.slane %v1633, 5
      %v1745 = vrot.slane %v1744, 4
      %v1746 = vrot.slane %v652, 5
      %v1747 = vsel %vm1673, %v1745, %v1746
      %v1748 = vrot.slane %v1746, 4
      %v1749 = vrot.slane %v674, 5
      %v1750 = vsel %vm1673, %v1748, %v1749
      %v1751 = vrot.slane %v1634, 5
      %v1752 = vrot.slane %v1751, 4
      %v1753 = vrot.slane %v654, 5
      %v1754 = vsel %vm1673, %v1752, %v1753
      %v1755 = vrot.slane %v1753, 4
      %v1756 = vrot.slane %v675, 5
      %v1757 = vsel %vm1673, %v1755, %v1756
      %v1758 = vrot.slane %v1635, 5
      %v1759 = vrot.slane %v1758, 4
      %v1760 = vrot.slane %v656, 5
      %v1761 = vsel %vm1673, %v1759, %v1760
      %v1762 = vrot.slane %v1760, 4
      %v1763 = vrot.slane %v676, 5
      %v1764 = vsel %vm1673, %v1762, %v1763
      %v1765 = vrot.slane %v1636, 5
      %v1766 = vrot.slane %v1765, 4
      %v1767 = vrot.slane %v658, 5
      %v1768 = vsel %vm1673, %v1766, %v1767
      %v1769 = vrot.slane %v1767, 4
      %v1770 = vrot.slane %v677, 5
      %v1771 = vsel %vm1673, %v1769, %v1770
      %v1772 = vrot.slane %v1637, 5
      %v1773 = vrot.slane %v1772, 4
      %v1774 = vrot.slane %v660, 5
      %v1775 = vsel %vm1673, %v1773, %v1774
      %v1776 = vrot.slane %v1774, 4
      %v1777 = vrot.slane %v678, 5
      %v1778 = vsel %vm1673, %v1776, %v1777
      %v1779 = vrot.slane %v1638, 5
      %v1780 = vrot.slane %v1779, 4
      %v1781 = vrot.slane %v662, 5
      %v1782 = vsel %vm1673, %v1780, %v1781
      %v1783 = vrot.slane %v1781, 4
      %v1784 = vrot.slane %v679, 5
      %v1785 = vsel %vm1673, %v1783, %v1784
      %s1786 = scalar_lea.vmem %s1, 4
      %v1787 = vld [vmem:[%s1786] sm:$0x3]
      %v1788 = vunpack.c.l.b16 %v1677
      %v1789 = vunpack.c.l.b16 %v1680
      %v1790 = vunpack.c.l.b16 %v1684
      %v1791 = vunpack.c.l.b16 %v1687
      %v1792 = vunpack.c.l.b16 %v1691
      %v1793 = vunpack.c.l.b16 %v1694
      %v1794 = vunpack.c.l.b16 %v1698
      %v1795 = vunpack.c.l.b16 %v1701
      %v1796 = vunpack.c.l.b16 %v1705
      %v1797 = vunpack.c.l.b16 %v1708
      %v1798 = vunpack.c.l.b16 %v1712
      %v1799 = vunpack.c.l.b16 %v1715
      %v1800 = vunpack.c.l.b16 %v1719
      %v1801 = vunpack.c.l.b16 %v1722
      %v1802 = vunpack.c.l.b16 %v1726
      %v1803 = vunpack.c.l.b16 %v1729
      %v1804 = vunpack.c.l.b16 %v1733
      %v1805 = vunpack.c.l.b16 %v1736
      %v1806 = vunpack.c.l.b16 %v1740
      %v1807 = vunpack.c.l.b16 %v1743
      %v1808 = vunpack.c.l.b16 %v1747
      %v1809 = vunpack.c.l.b16 %v1750
      %v1810 = vunpack.c.l.b16 %v1754
      %v1811 = vunpack.c.l.b16 %v1757
      %v1812 = vunpack.c.l.b16 %v1761
      %v1813 = vunpack.c.l.b16 %v1764
      %v1814 = vunpack.c.l.b16 %v1768
      %v1815 = vunpack.c.l.b16 %v1771
      %v1816 = vunpack.c.l.b16 %v1775
      %v1817 = vunpack.c.l.b16 %v1778
      %v1818 = vunpack.c.l.b16 %v1782
      %v1819 = vunpack.c.l.b16 %v1785
      %v1820 = vpack.c.b16 %v1789, %v1788
      %v1821 = vpack.c.b16 %v1791, %v1790
      %v1822 = vpack.c.b16 %v1793, %v1792
      %v1823 = vpack.c.b16 %v1795, %v1794
      %v1824 = vpack.c.b16 %v1797, %v1796
      %v1825 = vpack.c.b16 %v1799, %v1798
      %v1826 = vpack.c.b16 %v1801, %v1800
      %v1827 = vpack.c.b16 %v1803, %v1802
      %v1828 = vpack.c.b16 %v1805, %v1804
      %v1829 = vpack.c.b16 %v1807, %v1806
      %v1830 = vpack.c.b16 %v1809, %v1808
      %v1831 = vpack.c.b16 %v1811, %v1810
      %v1832 = vpack.c.b16 %v1813, %v1812
      %v1833 = vpack.c.b16 %v1815, %v1814
      %v1834 = vpack.c.b16 %v1817, %v1816
      %v1835 = vpack.c.b16 %v1819, %v1818
      %v1837 = vsel %vm1117, %v1820, 0
      %v1840 = vsel %vm1117, %v1821, 0
      %v1843 = vsel %vm1117, %v1822, 0
      %v1846 = vsel %vm1117, %v1823, 0
      %v1849 = vsel %vm1117, %v1824, 0
      %v1852 = vsel %vm1117, %v1825, 0
      %v1855 = vsel %vm1117, %v1826, 0
      %v1858 = vsel %vm1117, %v1827, 0
      %v1861 = vsel %vm1117, %v1828, 0
      %v1864 = vsel %vm1117, %v1829, 0
      %v1867 = vsel %vm1117, %v1830, 0
      %v1870 = vsel %vm1117, %v1831, 0
      %v1873 = vsel %vm1117, %v1832, 0
      %v1876 = vsel %vm1117, %v1833, 0
      %v1879 = vsel %vm1117, %v1834, 0
      %v1882 = vsel %vm1117, %v1835, 0
      %v1885 = vsel %vm1166, %v1787, 0
      %1887 = vmatprep.subr.bf16.mxu0 0
      %1888 = vmatpush1.bf16.msra.mxu0 0
      %1889 = vmatprep.subr.bf16.mxu0 0
      %1890 = vmatpush1.bf16.msra.mxu0 0
      %1891 = vmatprep.subr.bf16.mxu0 0
      %1892 = vmatpush1.bf16.msra.mxu0 0
      %1893 = vmatprep.subr.bf16.mxu0 0
      %1894 = vmatpush1.bf16.msra.mxu0 0
      %1895 = vmatprep.subr.bf16.mxu0 0
      %1896 = vmatpush1.bf16.msra.mxu0 0
      %1897 = vmatprep.subr.bf16.mxu0 0
      %1898 = vmatpush1.bf16.msra.mxu0 0
      %1899 = vmatprep.subr.bf16.mxu0 0
      %1900 = vmatpush1.bf16.msra.mxu0 0
      %1901 = vmatprep.subr.bf16.mxu0 0
      %1902 = vmatpush1.bf16.msra.mxu0 %v1885
      %1903 = vmatprep.subr.bf16.mxu0 0
      %1904 = vmatpush2.bf16.msra.mxu0 0
      %1905 = vmatprep.subr.bf16.mxu0 0
      %1906 = vmatpush2.bf16.msra.mxu0 0
      %1907 = vmatprep.subr.bf16.mxu0 0
      %1908 = vmatpush2.bf16.msra.mxu0 0
      %1909 = vmatprep.subr.bf16.mxu0 0
      %1910 = vmatpush2.bf16.msra.mxu0 0
      %1911 = vmatprep.subr.bf16.mxu0 0
      %1912 = vmatpush2.bf16.msra.mxu0 0
      %1913 = vmatprep.subr.bf16.mxu0 0
      %1914 = vmatpush2.bf16.msra.mxu0 0
      %1915 = vmatprep.subr.bf16.mxu0 0
      %1916 = vmatpush2.bf16.msra.mxu0 0
      %1917 = vmatprep.subr.bf16.mxu0 0
      %1918 = vmatpush2.bf16.msra.mxu0 0
      %1919 = vmatprep.mubr.bf16.mxu0 0
      %1920 = vmatmul.mubr.bf16.gmra.mxu0 %v1837
      %v1921 = vpop.f32.mrf.mxu0
      %v1922 = vadd.f32 0.0, %v1921
      %v1923 = vpop.f32.mrf.mxu0
      %v1924 = vpop.f32.mrf.mxu0
      %v1925 = vadd.f32 0.0, %v1924
      %v1926 = vpop.f32.mrf.mxu0
      %1927 = vmatprep.mubr.bf16.mxu0 0
      %1928 = vmatmul.mubr.bf16.gmra.mxu0 %v1840
      %v1929 = vpop.f32.mrf.mxu0
      %v1930 = vadd.f32 0.0, %v1929
      %v1931 = vpop.f32.mrf.mxu0
      %v1932 = vpop.f32.mrf.mxu0
      %v1933 = vadd.f32 0.0, %v1932
      %v1934 = vpop.f32.mrf.mxu0
      %1935 = vmatprep.mubr.bf16.mxu0 0
      %1936 = vmatmul.mubr.bf16.gmra.mxu0 %v1843
      %v1937 = vpop.f32.mrf.mxu0
      %v1938 = vadd.f32 0.0, %v1937
      %v1939 = vpop.f32.mrf.mxu0
      %v1940 = vpop.f32.mrf.mxu0
      %v1941 = vadd.f32 0.0, %v1940
      %v1942 = vpop.f32.mrf.mxu0
      %1943 = vmatprep.mubr.bf16.mxu0 0
      %1944 = vmatmul.mubr.bf16.gmra.mxu0 %v1846
      %v1945 = vpop.f32.mrf.mxu0
      %v1946 = vadd.f32 0.0, %v1945
      %v1947 = vpop.f32.mrf.mxu0
      %v1948 = vpop.f32.mrf.mxu0
      %v1949 = vadd.f32 0.0, %v1948
      %v1950 = vpop.f32.mrf.mxu0
      %1951 = vmatprep.mubr.bf16.mxu0 0
      %1952 = vmatmul.mubr.bf16.gmra.mxu0 %v1849
      %v1953 = vpop.f32.mrf.mxu0
      %v1954 = vadd.f32 0.0, %v1953
      %v1955 = vpop.f32.mrf.mxu0
      %v1956 = vpop.f32.mrf.mxu0
      %v1957 = vadd.f32 0.0, %v1956
      %v1958 = vpop.f32.mrf.mxu0
      %1959 = vmatprep.mubr.bf16.mxu0 0
      %1960 = vmatmul.mubr.bf16.gmra.mxu0 %v1852
      %v1961 = vpop.f32.mrf.mxu0
      %v1962 = vadd.f32 0.0, %v1961
      %v1963 = vpop.f32.mrf.mxu0
      %v1964 = vpop.f32.mrf.mxu0
      %v1965 = vadd.f32 0.0, %v1964
      %v1966 = vpop.f32.mrf.mxu0
      %1967 = vmatprep.mubr.bf16.mxu0 0
      %1968 = vmatmul.mubr.bf16.gmra.mxu0 %v1855
      %v1969 = vpop.f32.mrf.mxu0
      %v1970 = vadd.f32 0.0, %v1969
      %v1971 = vpop.f32.mrf.mxu0
      %v1972 = vpop.f32.mrf.mxu0
      %v1973 = vadd.f32 0.0, %v1972
      %v1974 = vpop.f32.mrf.mxu0
      %1975 = vmatprep.mubr.bf16.mxu0 0
      %1976 = vmatmul.mubr.bf16.gmra.mxu0 %v1858
      %v1977 = vpop.f32.mrf.mxu0
      %v1978 = vadd.f32 0.0, %v1977
      %v1979 = vpop.f32.mrf.mxu0
      %v1980 = vpop.f32.mrf.mxu0
      %v1981 = vadd.f32 0.0, %v1980
      %v1982 = vpop.f32.mrf.mxu0
      %1983 = vmatprep.mubr.bf16.mxu0 0
      %1984 = vmatmul.mubr.bf16.gmra.mxu0 %v1861
      %v1985 = vpop.f32.mrf.mxu0
      %v1986 = vadd.f32 0.0, %v1985
      %v1987 = vpop.f32.mrf.mxu0
      %v1988 = vpop.f32.mrf.mxu0
      %v1989 = vadd.f32 0.0, %v1988
      %v1990 = vpop.f32.mrf.mxu0
      %1991 = vmatprep.mubr.bf16.mxu0 0
      %1992 = vmatmul.mubr.bf16.gmra.mxu0 %v1864
      %v1993 = vpop.f32.mrf.mxu0
      %v1994 = vadd.f32 0.0, %v1993
      %v1995 = vpop.f32.mrf.mxu0
      %v1996 = vpop.f32.mrf.mxu0
      %v1997 = vadd.f32 0.0, %v1996
      %v1998 = vpop.f32.mrf.mxu0
      %1999 = vmatprep.mubr.bf16.mxu0 0
      %2000 = vmatmul.mubr.bf16.gmra.mxu0 %v1867
      %v2001 = vpop.f32.mrf.mxu0
      %v2002 = vadd.f32 0.0, %v2001
      %v2003 = vpop.f32.mrf.mxu0
      %v2004 = vpop.f32.mrf.mxu0
      %v2005 = vadd.f32 0.0, %v2004
      %v2006 = vpop.f32.mrf.mxu0
      %2007 = vmatprep.mubr.bf16.mxu0 0
      %2008 = vmatmul.mubr.bf16.gmra.mxu0 %v1870
      %v2009 = vpop.f32.mrf.mxu0
      %v2010 = vadd.f32 0.0, %v2009
      %v2011 = vpop.f32.mrf.mxu0
      %v2012 = vpop.f32.mrf.mxu0
      %v2013 = vadd.f32 0.0, %v2012
      %v2014 = vpop.f32.mrf.mxu0
      %2015 = vmatprep.mubr.bf16.mxu0 0
      %2016 = vmatmul.mubr.bf16.gmra.mxu0 %v1873
      %v2017 = vpop.f32.mrf.mxu0
      %v2018 = vadd.f32 0.0, %v2017
      %v2019 = vpop.f32.mrf.mxu0
      %v2020 = vpop.f32.mrf.mxu0
      %v2021 = vadd.f32 0.0, %v2020
      %v2022 = vpop.f32.mrf.mxu0
      %2023 = vmatprep.mubr.bf16.mxu0 0
      %2024 = vmatmul.mubr.bf16.gmra.mxu0 %v1876
      %v2025 = vpop.f32.mrf.mxu0
      %v2026 = vadd.f32 0.0, %v2025
      %v2027 = vpop.f32.mrf.mxu0
      %v2028 = vpop.f32.mrf.mxu0
      %v2029 = vadd.f32 0.0, %v2028
      %v2030 = vpop.f32.mrf.mxu0
      %2031 = vmatprep.mubr.bf16.mxu0 0
      %2032 = vmatmul.mubr.bf16.gmra.mxu0 %v1879
      %v2033 = vpop.f32.mrf.mxu0
      %v2034 = vadd.f32 0.0, %v2033
      %v2035 = vpop.f32.mrf.mxu0
      %v2036 = vpop.f32.mrf.mxu0
      %v2037 = vadd.f32 0.0, %v2036
      %v2038 = vpop.f32.mrf.mxu0
      %2039 = vmatprep.mubr.bf16.mxu0 0
      %2040 = vmatmul.mubr.bf16.gmra.mxu0 %v1882
      %v2041 = vpop.f32.mrf.mxu0
      %v2042 = vadd.f32 0.0, %v2041
      %v2043 = vpop.f32.mrf.mxu0
      %v2044 = vpop.f32.mrf.mxu0
      %v2045 = vadd.f32 0.0, %v2044
      %v2046 = vpop.f32.mrf.mxu0
      %2047 = vdwg.mxu0
      %v2048 = vadd.f32 %v1497, %v1922
      %v2049 = vadd.f32 %v1500, %v1925
      %v2050 = vadd.f32 %v1505, %v1930
      %v2051 = vadd.f32 %v1508, %v1933
      %v2052 = vadd.f32 %v1513, %v1938
      %v2053 = vadd.f32 %v1516, %v1941
      %v2054 = vadd.f32 %v1521, %v1946
      %v2055 = vadd.f32 %v1524, %v1949
      %v2056 = vadd.f32 %v1529, %v1954
      %v2057 = vadd.f32 %v1532, %v1957
      %v2058 = vadd.f32 %v1537, %v1962
      %v2059 = vadd.f32 %v1540, %v1965
      %v2060 = vadd.f32 %v1545, %v1970
      %v2061 = vadd.f32 %v1548, %v1973
      %v2062 = vadd.f32 %v1553, %v1978
      %v2063 = vadd.f32 %v1556, %v1981
      %v2064 = vadd.f32 %v1561, %v1986
      %v2065 = vadd.f32 %v1564, %v1989
      %v2066 = vadd.f32 %v1569, %v1994
      %v2067 = vadd.f32 %v1572, %v1997
      %v2068 = vadd.f32 %v1577, %v2002
      %v2069 = vadd.f32 %v1580, %v2005
      %v2070 = vadd.f32 %v1585, %v2010
      %v2071 = vadd.f32 %v1588, %v2013
      %v2072 = vadd.f32 %v1593, %v2018
      %v2073 = vadd.f32 %v1596, %v2021
      %v2074 = vadd.f32 %v1601, %v2026
      %v2075 = vadd.f32 %v1604, %v2029
      %v2076 = vadd.f32 %v1609, %v2034
      %v2077 = vadd.f32 %v1612, %v2037
      %v2078 = vadd.f32 %v1617, %v2042
      %v2079 = vadd.f32 %v1620, %v2045
      %v2080 = vld [vmem:[%s582] sm:$0xf]
      %v2081 = vld [vmem:[%s582 + $0x4] sm:$0xf]
      %v2082 = vld [vmem:[%s582 + $0xc] sm:$0xf]
      %v2083 = vld [vmem:[%s582 + $0x10] sm:$0xf]
      %v2084 = vld [vmem:[%s582 + $0x18] sm:$0xf]
      %v2085 = vld [vmem:[%s582 + $0x1c] sm:$0xf]
      %v2086 = vld [vmem:[%s582 + $0x24] sm:$0xf]
      %v2087 = vld [vmem:[%s582 + $0x28] sm:$0xf]
      %v2088 = vld [vmem:[%s582 + $0x30] sm:$0xf]
      %v2089 = vld [vmem:[%s582 + $0x34] sm:$0xf]
      %v2090 = vld [vmem:[%s582 + $0x3c] sm:$0xf]
      %v2091 = vld [vmem:[%s582 + $0x40] sm:$0xf]
      %v2092 = vld [vmem:[%s582 + $0x48] sm:$0xf]
      %v2093 = vld [vmem:[%s582 + $0x4c] sm:$0xf]
      %v2094 = vld [vmem:[%s582 + $0x54] sm:$0xf]
      %v2095 = vld [vmem:[%s582 + $0x58] sm:$0xf]
      %v2096 = vld [vmem:[%s582 + $0x60] sm:$0xf]
      %v2097 = vld [vmem:[%s582 + $0x64] sm:$0xf]
      %v2098 = vld [vmem:[%s582 + $0x6c] sm:$0xf]
      %v2099 = vld [vmem:[%s582 + $0x70] sm:$0xf]
      %v2100 = vld [vmem:[%s582 + $0x78] sm:$0xf]
      %v2101 = vld [vmem:[%s582 + $0x7c] sm:$0xf]
      %v2102 = vld [vmem:[%s582 + $0x84] sm:$0xf]
      %v2103 = vld [vmem:[%s582 + $0x88] sm:$0xf]
      %v2104 = vld [vmem:[%s582 + $0x90] sm:$0xf]
      %v2105 = vld [vmem:[%s582 + $0x94] sm:$0xf]
      %v2106 = vld [vmem:[%s582 + $0x9c] sm:$0xf]
      %v2107 = vld [vmem:[%s582 + $0xa0] sm:$0xf]
      %v2108 = vld [vmem:[%s582 + $0xa8] sm:$0xf]
      %v2109 = vld [vmem:[%s582 + $0xac] sm:$0xf]
      %v2110 = vld [vmem:[%s582 + $0xb4] sm:$0xf]
      %v2111 = vld [vmem:[%s582 + $0xb8] sm:$0xf]
      %s2112 = scalar_lea.vmem %s1, 6
      %v2113 = vld [vmem:[%s2112] sm:$0x3]
      %v2146 = vunpack.c.l.b16 %v2080
      %v2147 = vunpack.c.l.b16 %v2081
      %v2148 = vunpack.c.l.b16 %v2082
      %v2149 = vunpack.c.l.b16 %v2083
      %v2150 = vunpack.c.l.b16 %v2084
      %v2151 = vunpack.c.l.b16 %v2085
      %v2152 = vunpack.c.l.b16 %v2086
      %v2153 = vunpack.c.l.b16 %v2087
      %v2154 = vunpack.c.l.b16 %v2088
      %v2155 = vunpack.c.l.b16 %v2089
      %v2156 = vunpack.c.l.b16 %v2090
      %v2157 = vunpack.c.l.b16 %v2091
      %v2158 = vunpack.c.l.b16 %v2092
      %v2159 = vunpack.c.l.b16 %v2093
      %v2160 = vunpack.c.l.b16 %v2094
      %v2161 = vunpack.c.l.b16 %v2095
      %v2162 = vunpack.c.l.b16 %v2096
      %v2163 = vunpack.c.l.b16 %v2097
      %v2164 = vunpack.c.l.b16 %v2098
      %v2165 = vunpack.c.l.b16 %v2099
      %v2166 = vunpack.c.l.b16 %v2100
      %v2167 = vunpack.c.l.b16 %v2101
      %v2168 = vunpack.c.l.b16 %v2102
      %v2169 = vunpack.c.l.b16 %v2103
      %v2170 = vunpack.c.l.b16 %v2104
      %v2171 = vunpack.c.l.b16 %v2105
      %v2172 = vunpack.c.l.b16 %v2106
      %v2173 = vunpack.c.l.b16 %v2107
      %v2174 = vunpack.c.l.b16 %v2108
      %v2175 = vunpack.c.l.b16 %v2109
      %v2176 = vunpack.c.l.b16 %v2110
      %v2177 = vunpack.c.l.b16 %v2111
      %v2178 = vpack.c.b16 %v2147, %v2146
      %v2179 = vpack.c.b16 %v2149, %v2148
      %v2180 = vpack.c.b16 %v2151, %v2150
      %v2181 = vpack.c.b16 %v2153, %v2152
      %v2182 = vpack.c.b16 %v2155, %v2154
      %v2183 = vpack.c.b16 %v2157, %v2156
      %v2184 = vpack.c.b16 %v2159, %v2158
      %v2185 = vpack.c.b16 %v2161, %v2160
      %v2186 = vpack.c.b16 %v2163, %v2162
      %v2187 = vpack.c.b16 %v2165, %v2164
      %v2188 = vpack.c.b16 %v2167, %v2166
      %v2189 = vpack.c.b16 %v2169, %v2168
      %v2190 = vpack.c.b16 %v2171, %v2170
      %v2191 = vpack.c.b16 %v2173, %v2172
      %v2192 = vpack.c.b16 %v2175, %v2174
      %v2193 = vpack.c.b16 %v2177, %v2176
      %v2195 = vsel %vm1117, %v2178, 0
      %v2198 = vsel %vm1117, %v2179, 0
      %v2201 = vsel %vm1117, %v2180, 0
      %v2204 = vsel %vm1117, %v2181, 0
      %v2207 = vsel %vm1117, %v2182, 0
      %v2210 = vsel %vm1117, %v2183, 0
      %v2213 = vsel %vm1117, %v2184, 0
      %v2216 = vsel %vm1117, %v2185, 0
      %v2219 = vsel %vm1117, %v2186, 0
      %v2222 = vsel %vm1117, %v2187, 0
      %v2225 = vsel %vm1117, %v2188, 0
      %v2228 = vsel %vm1117, %v2189, 0
      %v2231 = vsel %vm1117, %v2190, 0
      %v2234 = vsel %vm1117, %v2191, 0
      %v2237 = vsel %vm1117, %v2192, 0
      %v2240 = vsel %vm1117, %v2193, 0
      %v2243 = vsel %vm1166, %v2113, 0
      %2245 = vmatprep.subr.bf16.mxu0 0
      %2246 = vmatpush1.bf16.msra.mxu0 0
      %2247 = vmatprep.subr.bf16.mxu0 0
      %2248 = vmatpush1.bf16.msra.mxu0 0
      %2249 = vmatprep.subr.bf16.mxu0 0
      %2250 = vmatpush1.bf16.msra.mxu0 0
      %2251 = vmatprep.subr.bf16.mxu0 0
      %2252 = vmatpush1.bf16.msra.mxu0 0
      %2253 = vmatprep.subr.bf16.mxu0 0
      %2254 = vmatpush1.bf16.msra.mxu0 0
      %2255 = vmatprep.subr.bf16.mxu0 0
      %2256 = vmatpush1.bf16.msra.mxu0 0
      %2257 = vmatprep.subr.bf16.mxu0 0
      %2258 = vmatpush1.bf16.msra.mxu0 0
      %2259 = vmatprep.subr.bf16.mxu0 0
      %2260 = vmatpush1.bf16.msra.mxu0 %v2243
      %2261 = vmatprep.subr.bf16.mxu0 0
      %2262 = vmatpush2.bf16.msra.mxu0 0
      %2263 = vmatprep.subr.bf16.mxu0 0
      %2264 = vmatpush2.bf16.msra.mxu0 0
      %2265 = vmatprep.subr.bf16.mxu0 0
      %2266 = vmatpush2.bf16.msra.mxu0 0
      %2267 = vmatprep.subr.bf16.mxu0 0
      %2268 = vmatpush2.bf16.msra.mxu0 0
      %2269 = vmatprep.subr.bf16.mxu0 0
      %2270 = vmatpush2.bf16.msra.mxu0 0
      %2271 = vmatprep.subr.bf16.mxu0 0
      %2272 = vmatpush2.bf16.msra.mxu0 0
      %2273 = vmatprep.subr.bf16.mxu0 0
      %2274 = vmatpush2.bf16.msra.mxu0 0
      %2275 = vmatprep.subr.bf16.mxu0 0
      %2276 = vmatpush2.bf16.msra.mxu0 0
      %2277 = vmatprep.mubr.bf16.mxu0 0
      %2278 = vmatmul.mubr.bf16.gmra.mxu0 %v2195
      %v2279 = vpop.f32.mrf.mxu0
      %v2280 = vadd.f32 0.0, %v2279
      %v2281 = vpop.f32.mrf.mxu0
      %v2282 = vpop.f32.mrf.mxu0
      %v2283 = vadd.f32 0.0, %v2282
      %v2284 = vpop.f32.mrf.mxu0
      %2285 = vmatprep.mubr.bf16.mxu0 0
      %2286 = vmatmul.mubr.bf16.gmra.mxu0 %v2198
      %v2287 = vpop.f32.mrf.mxu0
      %v2288 = vadd.f32 0.0, %v2287
      %v2289 = vpop.f32.mrf.mxu0
      %v2290 = vpop.f32.mrf.mxu0
      %v2291 = vadd.f32 0.0, %v2290
      %v2292 = vpop.f32.mrf.mxu0
      %2293 = vmatprep.mubr.bf16.mxu0 0
      %2294 = vmatmul.mubr.bf16.gmra.mxu0 %v2201
      %v2295 = vpop.f32.mrf.mxu0
      %v2296 = vadd.f32 0.0, %v2295
      %v2297 = vpop.f32.mrf.mxu0
      %v2298 = vpop.f32.mrf.mxu0
      %v2299 = vadd.f32 0.0, %v2298
      %v2300 = vpop.f32.mrf.mxu0
      %2301 = vmatprep.mubr.bf16.mxu0 0
      %2302 = vmatmul.mubr.bf16.gmra.mxu0 %v2204
      %v2303 = vpop.f32.mrf.mxu0
      %v2304 = vadd.f32 0.0, %v2303
      %v2305 = vpop.f32.mrf.mxu0
      %v2306 = vpop.f32.mrf.mxu0
      %v2307 = vadd.f32 0.0, %v2306
      %v2308 = vpop.f32.mrf.mxu0
      %2309 = vmatprep.mubr.bf16.mxu0 0
      %2310 = vmatmul.mubr.bf16.gmra.mxu0 %v2207
      %v2311 = vpop.f32.mrf.mxu0
      %v2312 = vadd.f32 0.0, %v2311
      %v2313 = vpop.f32.mrf.mxu0
      %v2314 = vpop.f32.mrf.mxu0
      %v2315 = vadd.f32 0.0, %v2314
      %v2316 = vpop.f32.mrf.mxu0
      %2317 = vmatprep.mubr.bf16.mxu0 0
      %2318 = vmatmul.mubr.bf16.gmra.mxu0 %v2210
      %v2319 = vpop.f32.mrf.mxu0
      %v2320 = vadd.f32 0.0, %v2319
      %v2321 = vpop.f32.mrf.mxu0
      %v2322 = vpop.f32.mrf.mxu0
      %v2323 = vadd.f32 0.0, %v2322
      %v2324 = vpop.f32.mrf.mxu0
      %2325 = vmatprep.mubr.bf16.mxu0 0
      %2326 = vmatmul.mubr.bf16.gmra.mxu0 %v2213
      %v2327 = vpop.f32.mrf.mxu0
      %v2328 = vadd.f32 0.0, %v2327
      %v2329 = vpop.f32.mrf.mxu0
      %v2330 = vpop.f32.mrf.mxu0
      %v2331 = vadd.f32 0.0, %v2330
      %v2332 = vpop.f32.mrf.mxu0
      %2333 = vmatprep.mubr.bf16.mxu0 0
      %2334 = vmatmul.mubr.bf16.gmra.mxu0 %v2216
      %v2335 = vpop.f32.mrf.mxu0
      %v2336 = vadd.f32 0.0, %v2335
      %v2337 = vpop.f32.mrf.mxu0
      %v2338 = vpop.f32.mrf.mxu0
      %v2339 = vadd.f32 0.0, %v2338
      %v2340 = vpop.f32.mrf.mxu0
      %2341 = vmatprep.mubr.bf16.mxu0 0
      %2342 = vmatmul.mubr.bf16.gmra.mxu0 %v2219
      %v2343 = vpop.f32.mrf.mxu0
      %v2344 = vadd.f32 0.0, %v2343
      %v2345 = vpop.f32.mrf.mxu0
      %v2346 = vpop.f32.mrf.mxu0
      %v2347 = vadd.f32 0.0, %v2346
      %v2348 = vpop.f32.mrf.mxu0
      %2349 = vmatprep.mubr.bf16.mxu0 0
      %2350 = vmatmul.mubr.bf16.gmra.mxu0 %v2222
      %v2351 = vpop.f32.mrf.mxu0
      %v2352 = vadd.f32 0.0, %v2351
      %v2353 = vpop.f32.mrf.mxu0
      %v2354 = vpop.f32.mrf.mxu0
      %v2355 = vadd.f32 0.0, %v2354
      %v2356 = vpop.f32.mrf.mxu0
      %2357 = vmatprep.mubr.bf16.mxu0 0
      %2358 = vmatmul.mubr.bf16.gmra.mxu0 %v2225
      %v2359 = vpop.f32.mrf.mxu0
      %v2360 = vadd.f32 0.0, %v2359
      %v2361 = vpop.f32.mrf.mxu0
      %v2362 = vpop.f32.mrf.mxu0
      %v2363 = vadd.f32 0.0, %v2362
      %v2364 = vpop.f32.mrf.mxu0
      %2365 = vmatprep.mubr.bf16.mxu0 0
      %2366 = vmatmul.mubr.bf16.gmra.mxu0 %v2228
      %v2367 = vpop.f32.mrf.mxu0
      %v2368 = vadd.f32 0.0, %v2367
      %v2369 = vpop.f32.mrf.mxu0
      %v2370 = vpop.f32.mrf.mxu0
      %v2371 = vadd.f32 0.0, %v2370
      %v2372 = vpop.f32.mrf.mxu0
      %2373 = vmatprep.mubr.bf16.mxu0 0
      %2374 = vmatmul.mubr.bf16.gmra.mxu0 %v2231
      %v2375 = vpop.f32.mrf.mxu0
      %v2376 = vadd.f32 0.0, %v2375
      %v2377 = vpop.f32.mrf.mxu0
      %v2378 = vpop.f32.mrf.mxu0
      %v2379 = vadd.f32 0.0, %v2378
      %v2380 = vpop.f32.mrf.mxu0
      %2381 = vmatprep.mubr.bf16.mxu0 0
      %2382 = vmatmul.mubr.bf16.gmra.mxu0 %v2234
      %v2383 = vpop.f32.mrf.mxu0
      %v2384 = vadd.f32 0.0, %v2383
      %v2385 = vpop.f32.mrf.mxu0
      %v2386 = vpop.f32.mrf.mxu0
      %v2387 = vadd.f32 0.0, %v2386
      %v2388 = vpop.f32.mrf.mxu0
      %2389 = vmatprep.mubr.bf16.mxu0 0
      %2390 = vmatmul.mubr.bf16.gmra.mxu0 %v2237
      %v2391 = vpop.f32.mrf.mxu0
      %v2392 = vadd.f32 0.0, %v2391
      %v2393 = vpop.f32.mrf.mxu0
      %v2394 = vpop.f32.mrf.mxu0
      %v2395 = vadd.f32 0.0, %v2394
      %v2396 = vpop.f32.mrf.mxu0
      %2397 = vmatprep.mubr.bf16.mxu0 0
      %2398 = vmatmul.mubr.bf16.gmra.mxu0 %v2240
      %v2399 = vpop.f32.mrf.mxu0
      %v2400 = vadd.f32 0.0, %v2399
      %v2401 = vpop.f32.mrf.mxu0
      %v2402 = vpop.f32.mrf.mxu0
      %v2403 = vadd.f32 0.0, %v2402
      %v2404 = vpop.f32.mrf.mxu0
      %2405 = vdwg.mxu0
      %v2406 = vadd.f32 %v2048, %v2280
      %v2407 = vadd.f32 %v2049, %v2283
      %v2408 = vadd.f32 %v2050, %v2288
      %v2409 = vadd.f32 %v2051, %v2291
      %v2410 = vadd.f32 %v2052, %v2296
      %v2411 = vadd.f32 %v2053, %v2299
      %v2412 = vadd.f32 %v2054, %v2304
      %v2413 = vadd.f32 %v2055, %v2307
      %v2414 = vadd.f32 %v2056, %v2312
      %v2415 = vadd.f32 %v2057, %v2315
      %v2416 = vadd.f32 %v2058, %v2320
      %v2417 = vadd.f32 %v2059, %v2323
      %v2418 = vadd.f32 %v2060, %v2328
      %v2419 = vadd.f32 %v2061, %v2331
      %v2420 = vadd.f32 %v2062, %v2336
      %v2421 = vadd.f32 %v2063, %v2339
      %v2422 = vadd.f32 %v2064, %v2344
      %v2423 = vadd.f32 %v2065, %v2347
      %v2424 = vadd.f32 %v2066, %v2352
      %v2425 = vadd.f32 %v2067, %v2355
      %v2426 = vadd.f32 %v2068, %v2360
      %v2427 = vadd.f32 %v2069, %v2363
      %v2428 = vadd.f32 %v2070, %v2368
      %v2429 = vadd.f32 %v2071, %v2371
      %v2430 = vadd.f32 %v2072, %v2376
      %v2431 = vadd.f32 %v2073, %v2379
      %v2432 = vadd.f32 %v2074, %v2384
      %v2433 = vadd.f32 %v2075, %v2387
      %v2434 = vadd.f32 %v2076, %v2392
      %v2435 = vadd.f32 %v2077, %v2395
      %v2436 = vadd.f32 %v2078, %v2400
      %v2437 = vadd.f32 %v2079, %v2403
      %v2438 = vld [vmem:[%s582] sm:$0xf]
      %v2439 = vld [vmem:[%s582 + $0x4] sm:$0xf]
      %v2440 = vld [vmem:[%s582 + $0x8] sm:$0x1]
      %v2441 = vld [vmem:[%s582 + $0xc] sm:$0xf]
      %v2442 = vld [vmem:[%s582 + $0x10] sm:$0xf]
      %v2443 = vld [vmem:[%s582 + $0x14] sm:$0x1]
      %v2444 = vld [vmem:[%s582 + $0x18] sm:$0xf]
      %v2445 = vld [vmem:[%s582 + $0x1c] sm:$0xf]
      %v2446 = vld [vmem:[%s582 + $0x20] sm:$0x1]
      %v2447 = vld [vmem:[%s582 + $0x24] sm:$0xf]
      %v2448 = vld [vmem:[%s582 + $0x28] sm:$0xf]
      %v2449 = vld [vmem:[%s582 + $0x2c] sm:$0x1]
      %v2450 = vld [vmem:[%s582 + $0x30] sm:$0xf]
      %v2451 = vld [vmem:[%s582 + $0x34] sm:$0xf]
      %v2452 = vld [vmem:[%s582 + $0x38] sm:$0x1]
      %v2453 = vld [vmem:[%s582 + $0x3c] sm:$0xf]
      %v2454 = vld [vmem:[%s582 + $0x40] sm:$0xf]
      %v2455 = vld [vmem:[%s582 + $0x44] sm:$0x1]
      %v2456 = vld [vmem:[%s582 + $0x48] sm:$0xf]
      %v2457 = vld [vmem:[%s582 + $0x4c] sm:$0xf]
      %v2458 = vld [vmem:[%s582 + $0x50] sm:$0x1]
      %v2459 = vld [vmem:[%s582 + $0x54] sm:$0xf]
      %v2460 = vld [vmem:[%s582 + $0x58] sm:$0xf]
      %v2461 = vld [vmem:[%s582 + $0x5c] sm:$0x1]
      %v2462 = vld [vmem:[%s582 + $0x60] sm:$0xf]
      %v2463 = vld [vmem:[%s582 + $0x64] sm:$0xf]
      %v2464 = vld [vmem:[%s582 + $0x68] sm:$0x1]
      %v2465 = vld [vmem:[%s582 + $0x6c] sm:$0xf]
      %v2466 = vld [vmem:[%s582 + $0x70] sm:$0xf]
      %v2467 = vld [vmem:[%s582 + $0x74] sm:$0x1]
      %v2468 = vld [vmem:[%s582 + $0x78] sm:$0xf]
      %v2469 = vld [vmem:[%s582 + $0x7c] sm:$0xf]
      %v2470 = vld [vmem:[%s582 + $0x80] sm:$0x1]
      %v2471 = vld [vmem:[%s582 + $0x84] sm:$0xf]
      %v2472 = vld [vmem:[%s582 + $0x88] sm:$0xf]
      %v2473 = vld [vmem:[%s582 + $0x8c] sm:$0x1]
      %v2474 = vld [vmem:[%s582 + $0x90] sm:$0xf]
      %v2475 = vld [vmem:[%s582 + $0x94] sm:$0xf]
      %v2476 = vld [vmem:[%s582 + $0x98] sm:$0x1]
      %v2477 = vld [vmem:[%s582 + $0x9c] sm:$0xf]
      %v2478 = vld [vmem:[%s582 + $0xa0] sm:$0xf]
      %v2479 = vld [vmem:[%s582 + $0xa4] sm:$0x1]
      %v2480 = vld [vmem:[%s582 + $0xa8] sm:$0xf]
      %v2481 = vld [vmem:[%s582 + $0xac] sm:$0xf]
      %v2482 = vld [vmem:[%s582 + $0xb0] sm:$0x1]
      %v2483 = vld [vmem:[%s582 + $0xb4] sm:$0xf]
      %v2484 = vld [vmem:[%s582 + $0xb8] sm:$0xf]
      %v2485 = vld [vmem:[%s582 + $0xbc] sm:$0x1]
      %v2487 = vshrl.u32 %v2438, 16
      %v2489 = vrot.slane %v2487, 4
      %v2490 = vshll.u32 %v2438, 16
      %v2492 = vrot.slane %v2490, 5
      %v2493 = vor.u32 %v2489, %v2492
      %v2494 = vrot.slane %v2493, 4
      %v2496 = vshll.u32 %v2439, 16
      %v2498 = vrot.slane %v2496, 5
      %v2499 = vsel %vm682, %v2494, %v2498
      %v2500 = vshrl.u32 %v2439, 16
      %v2502 = vrot.slane %v2500, 4
      %v2503 = vor.u32 %v2502, %v2498
      %v2504 = vrot.slane %v2503, 4
      %v2506 = vshll.u32 %v2440, 16
      %v2508 = vrot.slane %v2506, 5
      %v2509 = vsel %vm682, %v2504, %v2508
      %v2511 = vshrl.u32 %v2441, 16
      %v2513 = vrot.slane %v2511, 4
      %v2514 = vshll.u32 %v2441, 16
      %v2516 = vrot.slane %v2514, 5
      %v2517 = vor.u32 %v2513, %v2516
      %v2518 = vrot.slane %v2517, 4
      %v2520 = vshll.u32 %v2442, 16
      %v2522 = vrot.slane %v2520, 5
      %v2523 = vsel %vm682, %v2518, %v2522
      %v2524 = vshrl.u32 %v2442, 16
      %v2526 = vrot.slane %v2524, 4
      %v2527 = vor.u32 %v2526, %v2522
      %v2528 = vrot.slane %v2527, 4
      %v2530 = vshll.u32 %v2443, 16
      %v2532 = vrot.slane %v2530, 5
      %v2533 = vsel %vm682, %v2528, %v2532
      %v2535 = vshrl.u32 %v2444, 16
      %v2537 = vrot.slane %v2535, 4
      %v2538 = vshll.u32 %v2444, 16
      %v2540 = vrot.slane %v2538, 5
      %v2541 = vor.u32 %v2537, %v2540
      %v2542 = vrot.slane %v2541, 4
      %v2544 = vshll.u32 %v2445, 16
      %v2546 = vrot.slane %v2544, 5
      %v2547 = vsel %vm682, %v2542, %v2546
      %v2548 = vshrl.u32 %v2445, 16
      %v2550 = vrot.slane %v2548, 4
      %v2551 = vor.u32 %v2550, %v2546
      %v2552 = vrot.slane %v2551, 4
      %v2554 = vshll.u32 %v2446, 16
      %v2556 = vrot.slane %v2554, 5
      %v2557 = vsel %vm682, %v2552, %v2556
      %v2559 = vshrl.u32 %v2447, 16
      %v2561 = vrot.slane %v2559, 4
      %v2562 = vshll.u32 %v2447, 16
      %v2564 = vrot.slane %v2562, 5
      %v2565 = vor.u32 %v2561, %v2564
      %v2566 = vrot.slane %v2565, 4
      %v2568 = vshll.u32 %v2448, 16
      %v2570 = vrot.slane %v2568, 5
      %v2571 = vsel %vm682, %v2566, %v2570
      %v2572 = vshrl.u32 %v2448, 16
      %v2574 = vrot.slane %v2572, 4
      %v2575 = vor.u32 %v2574, %v2570
      %v2576 = vrot.slane %v2575, 4
      %v2578 = vshll.u32 %v2449, 16
      %v2580 = vrot.slane %v2578, 5
      %v2581 = vsel %vm682, %v2576, %v2580
      %v2583 = vshrl.u32 %v2450, 16
      %v2585 = vrot.slane %v2583, 4
      %v2586 = vshll.u32 %v2450, 16
      %v2588 = vrot.slane %v2586, 5
      %v2589 = vor.u32 %v2585, %v2588
      %v2590 = vrot.slane %v2589, 4
      %v2592 = vshll.u32 %v2451, 16
      %v2594 = vrot.slane %v2592, 5
      %v2595 = vsel %vm682, %v2590, %v2594
      %v2596 = vshrl.u32 %v2451, 16
      %v2598 = vrot.slane %v2596, 4
      %v2599 = vor.u32 %v2598, %v2594
      %v2600 = vrot.slane %v2599, 4
      %v2602 = vshll.u32 %v2452, 16
      %v2604 = vrot.slane %v2602, 5
      %v2605 = vsel %vm682, %v2600, %v2604
      %v2607 = vshrl.u32 %v2453, 16
      %v2609 = vrot.slane %v2607, 4
      %v2610 = vshll.u32 %v2453, 16
      %v2612 = vrot.slane %v2610, 5
      %v2613 = vor.u32 %v2609, %v2612
      %v2614 = vrot.slane %v2613, 4
      %v2616 = vshll.u32 %v2454, 16
      %v2618 = vrot.slane %v2616, 5
      %v2619 = vsel %vm682, %v2614, %v2618
      %v2620 = vshrl.u32 %v2454, 16
      %v2622 = vrot.slane %v2620, 4
      %v2623 = vor.u32 %v2622, %v2618
      %v2624 = vrot.slane %v2623, 4
      %v2626 = vshll.u32 %v2455, 16
      %v2628 = vrot.slane %v2626, 5
      %v2629 = vsel %vm682, %v2624, %v2628
      %v2631 = vshrl.u32 %v2456, 16
      %v2633 = vrot.slane %v2631, 4
      %v2634 = vshll.u32 %v2456, 16
      %v2636 = vrot.slane %v2634, 5
      %v2637 = vor.u32 %v2633, %v2636
      %v2638 = vrot.slane %v2637, 4
      %v2640 = vshll.u32 %v2457, 16
      %v2642 = vrot.slane %v2640, 5
      %v2643 = vsel %vm682, %v2638, %v2642
      %v2644 = vshrl.u32 %v2457, 16
      %v2646 = vrot.slane %v2644, 4
      %v2647 = vor.u32 %v2646, %v2642
      %v2648 = vrot.slane %v2647, 4
      %v2650 = vshll.u32 %v2458, 16
      %v2652 = vrot.slane %v2650, 5
      %v2653 = vsel %vm682, %v2648, %v2652
      %v2655 = vshrl.u32 %v2459, 16
      %v2657 = vrot.slane %v2655, 4
      %v2658 = vshll.u32 %v2459, 16
      %v2660 = vrot.slane %v2658, 5
      %v2661 = vor.u32 %v2657, %v2660
      %v2662 = vrot.slane %v2661, 4
      %v2664 = vshll.u32 %v2460, 16
      %v2666 = vrot.slane %v2664, 5
      %v2667 = vsel %vm682, %v2662, %v2666
      %v2668 = vshrl.u32 %v2460, 16
      %v2670 = vrot.slane %v2668, 4
      %v2671 = vor.u32 %v2670, %v2666
      %v2672 = vrot.slane %v2671, 4
      %v2674 = vshll.u32 %v2461, 16
      %v2676 = vrot.slane %v2674, 5
      %v2677 = vsel %vm682, %v2672, %v2676
      %v2679 = vshrl.u32 %v2462, 16
      %v2681 = vrot.slane %v2679, 4
      %v2682 = vshll.u32 %v2462, 16
      %v2684 = vrot.slane %v2682, 5
      %v2685 = vor.u32 %v2681, %v2684
      %v2686 = vrot.slane %v2685, 4
      %v2688 = vshll.u32 %v2463, 16
      %v2690 = vrot.slane %v2688, 5
      %v2691 = vsel %vm682, %v2686, %v2690
      %v2692 = vshrl.u32 %v2463, 16
      %v2694 = vrot.slane %v2692, 4
      %v2695 = vor.u32 %v2694, %v2690
      %v2696 = vrot.slane %v2695, 4
      %v2698 = vshll.u32 %v2464, 16
      %v2700 = vrot.slane %v2698, 5
      %v2701 = vsel %vm682, %v2696, %v2700
      %v2703 = vshrl.u32 %v2465, 16
      %v2705 = vrot.slane %v2703, 4
      %v2706 = vshll.u32 %v2465, 16
      %v2708 = vrot.slane %v2706, 5
      %v2709 = vor.u32 %v2705, %v2708
      %v2710 = vrot.slane %v2709, 4
      %v2712 = vshll.u32 %v2466, 16
      %v2714 = vrot.slane %v2712, 5
      %v2715 = vsel %vm682, %v2710, %v2714
      %v2716 = vshrl.u32 %v2466, 16
      %v2718 = vrot.slane %v2716, 4
      %v2719 = vor.u32 %v2718, %v2714
      %v2720 = vrot.slane %v2719, 4
      %v2722 = vshll.u32 %v2467, 16
      %v2724 = vrot.slane %v2722, 5
      %v2725 = vsel %vm682, %v2720, %v2724
      %v2727 = vshrl.u32 %v2468, 16
      %v2729 = vrot.slane %v2727, 4
      %v2730 = vshll.u32 %v2468, 16
      %v2732 = vrot.slane %v2730, 5
      %v2733 = vor.u32 %v2729, %v2732
      %v2734 = vrot.slane %v2733, 4
      %v2736 = vshll.u32 %v2469, 16
      %v2738 = vrot.slane %v2736, 5
      %v2739 = vsel %vm682, %v2734, %v2738
      %v2740 = vshrl.u32 %v2469, 16
      %v2742 = vrot.slane %v2740, 4
      %v2743 = vor.u32 %v2742, %v2738
      %v2744 = vrot.slane %v2743, 4
      %v2746 = vshll.u32 %v2470, 16
      %v2748 = vrot.slane %v2746, 5
      %v2749 = vsel %vm682, %v2744, %v2748
      %v2751 = vshrl.u32 %v2471, 16
      %v2753 = vrot.slane %v2751, 4
      %v2754 = vshll.u32 %v2471, 16
      %v2756 = vrot.slane %v2754, 5
      %v2757 = vor.u32 %v2753, %v2756
      %v2758 = vrot.slane %v2757, 4
      %v2760 = vshll.u32 %v2472, 16
      %v2762 = vrot.slane %v2760, 5
      %v2763 = vsel %vm682, %v2758, %v2762
      %v2764 = vshrl.u32 %v2472, 16
      %v2766 = vrot.slane %v2764, 4
      %v2767 = vor.u32 %v2766, %v2762
      %v2768 = vrot.slane %v2767, 4
      %v2770 = vshll.u32 %v2473, 16
      %v2772 = vrot.slane %v2770, 5
      %v2773 = vsel %vm682, %v2768, %v2772
      %v2775 = vshrl.u32 %v2474, 16
      %v2777 = vrot.slane %v2775, 4
      %v2778 = vshll.u32 %v2474, 16
      %v2780 = vrot.slane %v2778, 5
      %v2781 = vor.u32 %v2777, %v2780
      %v2782 = vrot.slane %v2781, 4
      %v2784 = vshll.u32 %v2475, 16
      %v2786 = vrot.slane %v2784, 5
      %v2787 = vsel %vm682, %v2782, %v2786
      %v2788 = vshrl.u32 %v2475, 16
      %v2790 = vrot.slane %v2788, 4
      %v2791 = vor.u32 %v2790, %v2786
      %v2792 = vrot.slane %v2791, 4
      %v2794 = vshll.u32 %v2476, 16
      %v2796 = vrot.slane %v2794, 5
      %v2797 = vsel %vm682, %v2792, %v2796
      %v2799 = vshrl.u32 %v2477, 16
      %v2801 = vrot.slane %v2799, 4
      %v2802 = vshll.u32 %v2477, 16
      %v2804 = vrot.slane %v2802, 5
      %v2805 = vor.u32 %v2801, %v2804
      %v2806 = vrot.slane %v2805, 4
      %v2808 = vshll.u32 %v2478, 16
      %v2810 = vrot.slane %v2808, 5
      %v2811 = vsel %vm682, %v2806, %v2810
      %v2812 = vshrl.u32 %v2478, 16
      %v2814 = vrot.slane %v2812, 4
      %v2815 = vor.u32 %v2814, %v2810
      %v2816 = vrot.slane %v2815, 4
      %v2818 = vshll.u32 %v2479, 16
      %v2820 = vrot.slane %v2818, 5
      %v2821 = vsel %vm682, %v2816, %v2820
      %v2823 = vshrl.u32 %v2480, 16
      %v2825 = vrot.slane %v2823, 4
      %v2826 = vshll.u32 %v2480, 16
      %v2828 = vrot.slane %v2826, 5
      %v2829 = vor.u32 %v2825, %v2828
      %v2830 = vrot.slane %v2829, 4
      %v2832 = vshll.u32 %v2481, 16
      %v2834 = vrot.slane %v2832, 5
      %v2835 = vsel %vm682, %v2830, %v2834
      %v2836 = vshrl.u32 %v2481, 16
      %v2838 = vrot.slane %v2836, 4
      %v2839 = vor.u32 %v2838, %v2834
      %v2840 = vrot.slane %v2839, 4
      %v2842 = vshll.u32 %v2482, 16
      %v2844 = vrot.slane %v2842, 5
      %v2845 = vsel %vm682, %v2840, %v2844
      %v2847 = vshrl.u32 %v2483, 16
      %v2849 = vrot.slane %v2847, 4
      %v2850 = vshll.u32 %v2483, 16
      %v2852 = vrot.slane %v2850, 5
      %v2853 = vor.u32 %v2849, %v2852
      %v2854 = vrot.slane %v2853, 4
      %v2856 = vshll.u32 %v2484, 16
      %v2858 = vrot.slane %v2856, 5
      %v2859 = vsel %vm682, %v2854, %v2858
      %v2860 = vshrl.u32 %v2484, 16
      %v2862 = vrot.slane %v2860, 4
      %v2863 = vor.u32 %v2862, %v2858
      %v2864 = vrot.slane %v2863, 4
      %v2866 = vshll.u32 %v2485, 16
      %v2868 = vrot.slane %v2866, 5
      %v2869 = vsel %vm682, %v2864, %v2868
      %s2870 = scalar_lea.vmem %s1, 8
      %v2871 = vld [vmem:[%s2870] sm:$0x3]
      %v2872 = vunpack.c.l.b16 %v2499
      %v2873 = vunpack.c.l.b16 %v2509
      %v2874 = vunpack.c.l.b16 %v2523
      %v2875 = vunpack.c.l.b16 %v2533
      %v2876 = vunpack.c.l.b16 %v2547
      %v2877 = vunpack.c.l.b16 %v2557
      %v2878 = vunpack.c.l.b16 %v2571
      %v2879 = vunpack.c.l.b16 %v2581
      %v2880 = vunpack.c.l.b16 %v2595
      %v2881 = vunpack.c.l.b16 %v2605
      %v2882 = vunpack.c.l.b16 %v2619
      %v2883 = vunpack.c.l.b16 %v2629
      %v2884 = vunpack.c.l.b16 %v2643
      %v2885 = vunpack.c.l.b16 %v2653
      %v2886 = vunpack.c.l.b16 %v2667
      %v2887 = vunpack.c.l.b16 %v2677
      %v2888 = vunpack.c.l.b16 %v2691
      %v2889 = vunpack.c.l.b16 %v2701
      %v2890 = vunpack.c.l.b16 %v2715
      %v2891 = vunpack.c.l.b16 %v2725
      %v2892 = vunpack.c.l.b16 %v2739
      %v2893 = vunpack.c.l.b16 %v2749
      %v2894 = vunpack.c.l.b16 %v2763
      %v2895 = vunpack.c.l.b16 %v2773
      %v2896 = vunpack.c.l.b16 %v2787
      %v2897 = vunpack.c.l.b16 %v2797
      %v2898 = vunpack.c.l.b16 %v2811
      %v2899 = vunpack.c.l.b16 %v2821
      %v2900 = vunpack.c.l.b16 %v2835
      %v2901 = vunpack.c.l.b16 %v2845
      %v2902 = vunpack.c.l.b16 %v2859
      %v2903 = vunpack.c.l.b16 %v2869
      %v2904 = vpack.c.b16 %v2873, %v2872
      %v2905 = vpack.c.b16 %v2875, %v2874
      %v2906 = vpack.c.b16 %v2877, %v2876
      %v2907 = vpack.c.b16 %v2879, %v2878
      %v2908 = vpack.c.b16 %v2881, %v2880
      %v2909 = vpack.c.b16 %v2883, %v2882
      %v2910 = vpack.c.b16 %v2885, %v2884
      %v2911 = vpack.c.b16 %v2887, %v2886
      %v2912 = vpack.c.b16 %v2889, %v2888
      %v2913 = vpack.c.b16 %v2891, %v2890
      %v2914 = vpack.c.b16 %v2893, %v2892
      %v2915 = vpack.c.b16 %v2895, %v2894
      %v2916 = vpack.c.b16 %v2897, %v2896
      %v2917 = vpack.c.b16 %v2899, %v2898
      %v2918 = vpack.c.b16 %v2901, %v2900
      %v2919 = vpack.c.b16 %v2903, %v2902
      %v2921 = vsel %vm1117, %v2904, 0
      %v2924 = vsel %vm1117, %v2905, 0
      %v2927 = vsel %vm1117, %v2906, 0
      %v2930 = vsel %vm1117, %v2907, 0
      %v2933 = vsel %vm1117, %v2908, 0
      %v2936 = vsel %vm1117, %v2909, 0
      %v2939 = vsel %vm1117, %v2910, 0
      %v2942 = vsel %vm1117, %v2911, 0
      %v2945 = vsel %vm1117, %v2912, 0
      %v2948 = vsel %vm1117, %v2913, 0
      %v2951 = vsel %vm1117, %v2914, 0
      %v2954 = vsel %vm1117, %v2915, 0
      %v2957 = vsel %vm1117, %v2916, 0
      %v2960 = vsel %vm1117, %v2917, 0
      %v2963 = vsel %vm1117, %v2918, 0
      %v2966 = vsel %vm1117, %v2919, 0
      %v2969 = vsel %vm1166, %v2871, 0
      %2971 = vmatprep.subr.bf16.mxu0 0
      %2972 = vmatpush1.bf16.msra.mxu0 0
      %2973 = vmatprep.subr.bf16.mxu0 0
      %2974 = vmatpush1.bf16.msra.mxu0 0
      %2975 = vmatprep.subr.bf16.mxu0 0
      %2976 = vmatpush1.bf16.msra.mxu0 0
      %2977 = vmatprep.subr.bf16.mxu0 0
      %2978 = vmatpush1.bf16.msra.mxu0 0
      %2979 = vmatprep.subr.bf16.mxu0 0
      %2980 = vmatpush1.bf16.msra.mxu0 0
      %2981 = vmatprep.subr.bf16.mxu0 0
      %2982 = vmatpush1.bf16.msra.mxu0 0
      %2983 = vmatprep.subr.bf16.mxu0 0
      %2984 = vmatpush1.bf16.msra.mxu0 0
      %2985 = vmatprep.subr.bf16.mxu0 0
      %2986 = vmatpush1.bf16.msra.mxu0 %v2969
      %2987 = vmatprep.subr.bf16.mxu0 0
      %2988 = vmatpush2.bf16.msra.mxu0 0
      %2989 = vmatprep.subr.bf16.mxu0 0
      %2990 = vmatpush2.bf16.msra.mxu0 0
      %2991 = vmatprep.subr.bf16.mxu0 0
      %2992 = vmatpush2.bf16.msra.mxu0 0
      %2993 = vmatprep.subr.bf16.mxu0 0
      %2994 = vmatpush2.bf16.msra.mxu0 0
      %2995 = vmatprep.subr.bf16.mxu0 0
      %2996 = vmatpush2.bf16.msra.mxu0 0
      %2997 = vmatprep.subr.bf16.mxu0 0
      %2998 = vmatpush2.bf16.msra.mxu0 0
      %2999 = vmatprep.subr.bf16.mxu0 0
      %3000 = vmatpush2.bf16.msra.mxu0 0
      %3001 = vmatprep.subr.bf16.mxu0 0
      %3002 = vmatpush2.bf16.msra.mxu0 0
      %3003 = vmatprep.mubr.bf16.mxu0 0
      %3004 = vmatmul.mubr.bf16.gmra.mxu0 %v2921
      %v3005 = vpop.f32.mrf.mxu0
      %v3006 = vadd.f32 0.0, %v3005
      %v3007 = vpop.f32.mrf.mxu0
      %v3008 = vpop.f32.mrf.mxu0
      %v3009 = vadd.f32 0.0, %v3008
      %v3010 = vpop.f32.mrf.mxu0
      %3011 = vmatprep.mubr.bf16.mxu0 0
      %3012 = vmatmul.mubr.bf16.gmra.mxu0 %v2924
      %v3013 = vpop.f32.mrf.mxu0
      %v3014 = vadd.f32 0.0, %v3013
      %v3015 = vpop.f32.mrf.mxu0
      %v3016 = vpop.f32.mrf.mxu0
      %v3017 = vadd.f32 0.0, %v3016
      %v3018 = vpop.f32.mrf.mxu0
      %3019 = vmatprep.mubr.bf16.mxu0 0
      %3020 = vmatmul.mubr.bf16.gmra.mxu0 %v2927
      %v3021 = vpop.f32.mrf.mxu0
      %v3022 = vadd.f32 0.0, %v3021
      %v3023 = vpop.f32.mrf.mxu0
      %v3024 = vpop.f32.mrf.mxu0
      %v3025 = vadd.f32 0.0, %v3024
      %v3026 = vpop.f32.mrf.mxu0
      %3027 = vmatprep.mubr.bf16.mxu0 0
      %3028 = vmatmul.mubr.bf16.gmra.mxu0 %v2930
      %v3029 = vpop.f32.mrf.mxu0
      %v3030 = vadd.f32 0.0, %v3029
      %v3031 = vpop.f32.mrf.mxu0
      %v3032 = vpop.f32.mrf.mxu0
      %v3033 = vadd.f32 0.0, %v3032
      %v3034 = vpop.f32.mrf.mxu0
      %3035 = vmatprep.mubr.bf16.mxu0 0
      %3036 = vmatmul.mubr.bf16.gmra.mxu0 %v2933
      %v3037 = vpop.f32.mrf.mxu0
      %v3038 = vadd.f32 0.0, %v3037
      %v3039 = vpop.f32.mrf.mxu0
      %v3040 = vpop.f32.mrf.mxu0
      %v3041 = vadd.f32 0.0, %v3040
      %v3042 = vpop.f32.mrf.mxu0
      %3043 = vmatprep.mubr.bf16.mxu0 0
      %3044 = vmatmul.mubr.bf16.gmra.mxu0 %v2936
      %v3045 = vpop.f32.mrf.mxu0
      %v3046 = vadd.f32 0.0, %v3045
      %v3047 = vpop.f32.mrf.mxu0
      %v3048 = vpop.f32.mrf.mxu0
      %v3049 = vadd.f32 0.0, %v3048
      %v3050 = vpop.f32.mrf.mxu0
      %3051 = vmatprep.mubr.bf16.mxu0 0
      %3052 = vmatmul.mubr.bf16.gmra.mxu0 %v2939
      %v3053 = vpop.f32.mrf.mxu0
      %v3054 = vadd.f32 0.0, %v3053
      %v3055 = vpop.f32.mrf.mxu0
      %v3056 = vpop.f32.mrf.mxu0
      %v3057 = vadd.f32 0.0, %v3056
      %v3058 = vpop.f32.mrf.mxu0
      %3059 = vmatprep.mubr.bf16.mxu0 0
      %3060 = vmatmul.mubr.bf16.gmra.mxu0 %v2942
      %v3061 = vpop.f32.mrf.mxu0
      %v3062 = vadd.f32 0.0, %v3061
      %v3063 = vpop.f32.mrf.mxu0
      %v3064 = vpop.f32.mrf.mxu0
      %v3065 = vadd.f32 0.0, %v3064
      %v3066 = vpop.f32.mrf.mxu0
      %3067 = vmatprep.mubr.bf16.mxu0 0
      %3068 = vmatmul.mubr.bf16.gmra.mxu0 %v2945
      %v3069 = vpop.f32.mrf.mxu0
      %v3070 = vadd.f32 0.0, %v3069
      %v3071 = vpop.f32.mrf.mxu0
      %v3072 = vpop.f32.mrf.mxu0
      %v3073 = vadd.f32 0.0, %v3072
      %v3074 = vpop.f32.mrf.mxu0
      %3075 = vmatprep.mubr.bf16.mxu0 0
      %3076 = vmatmul.mubr.bf16.gmra.mxu0 %v2948
      %v3077 = vpop.f32.mrf.mxu0
      %v3078 = vadd.f32 0.0, %v3077
      %v3079 = vpop.f32.mrf.mxu0
      %v3080 = vpop.f32.mrf.mxu0
      %v3081 = vadd.f32 0.0, %v3080
      %v3082 = vpop.f32.mrf.mxu0
      %3083 = vmatprep.mubr.bf16.mxu0 0
      %3084 = vmatmul.mubr.bf16.gmra.mxu0 %v2951
      %v3085 = vpop.f32.mrf.mxu0
      %v3086 = vadd.f32 0.0, %v3085
      %v3087 = vpop.f32.mrf.mxu0
      %v3088 = vpop.f32.mrf.mxu0
      %v3089 = vadd.f32 0.0, %v3088
      %v3090 = vpop.f32.mrf.mxu0
      %3091 = vmatprep.mubr.bf16.mxu0 0
      %3092 = vmatmul.mubr.bf16.gmra.mxu0 %v2954
      %v3093 = vpop.f32.mrf.mxu0
      %v3094 = vadd.f32 0.0, %v3093
      %v3095 = vpop.f32.mrf.mxu0
      %v3096 = vpop.f32.mrf.mxu0
      %v3097 = vadd.f32 0.0, %v3096
      %v3098 = vpop.f32.mrf.mxu0
      %3099 = vmatprep.mubr.bf16.mxu0 0
      %3100 = vmatmul.mubr.bf16.gmra.mxu0 %v2957
      %v3101 = vpop.f32.mrf.mxu0
      %v3102 = vadd.f32 0.0, %v3101
      %v3103 = vpop.f32.mrf.mxu0
      %v3104 = vpop.f32.mrf.mxu0
      %v3105 = vadd.f32 0.0, %v3104
      %v3106 = vpop.f32.mrf.mxu0
      %3107 = vmatprep.mubr.bf16.mxu0 0
      %3108 = vmatmul.mubr.bf16.gmra.mxu0 %v2960
      %v3109 = vpop.f32.mrf.mxu0
      %v3110 = vadd.f32 0.0, %v3109
      %v3111 = vpop.f32.mrf.mxu0
      %v3112 = vpop.f32.mrf.mxu0
      %v3113 = vadd.f32 0.0, %v3112
      %v3114 = vpop.f32.mrf.mxu0
      %3115 = vmatprep.mubr.bf16.mxu0 0
      %3116 = vmatmul.mubr.bf16.gmra.mxu0 %v2963
      %v3117 = vpop.f32.mrf.mxu0
      %v3118 = vadd.f32 0.0, %v3117
      %v3119 = vpop.f32.mrf.mxu0
      %v3120 = vpop.f32.mrf.mxu0
      %v3121 = vadd.f32 0.0, %v3120
      %v3122 = vpop.f32.mrf.mxu0
      %3123 = vmatprep.mubr.bf16.mxu0 0
      %3124 = vmatmul.mubr.bf16.gmra.mxu0 %v2966
      %v3125 = vpop.f32.mrf.mxu0
      %v3126 = vadd.f32 0.0, %v3125
      %v3127 = vpop.f32.mrf.mxu0
      %v3128 = vpop.f32.mrf.mxu0
      %v3129 = vadd.f32 0.0, %v3128
      %v3130 = vpop.f32.mrf.mxu0
      %3131 = vdwg.mxu0
      %v3132 = vadd.f32 %v2406, %v3006
      %v3133 = vadd.f32 %v2407, %v3009
      %v3134 = vadd.f32 %v2408, %v3014
      %v3135 = vadd.f32 %v2409, %v3017
      %v3136 = vadd.f32 %v2410, %v3022
      %v3137 = vadd.f32 %v2411, %v3025
      %v3138 = vadd.f32 %v2412, %v3030
      %v3139 = vadd.f32 %v2413, %v3033
      %v3140 = vadd.f32 %v2414, %v3038
      %v3141 = vadd.f32 %v2415, %v3041
      %v3142 = vadd.f32 %v2416, %v3046
      %v3143 = vadd.f32 %v2417, %v3049
      %v3144 = vadd.f32 %v2418, %v3054
      %v3145 = vadd.f32 %v2419, %v3057
      %v3146 = vadd.f32 %v2420, %v3062
      %v3147 = vadd.f32 %v2421, %v3065
      %v3148 = vadd.f32 %v2422, %v3070
      %v3149 = vadd.f32 %v2423, %v3073
      %v3150 = vadd.f32 %v2424, %v3078
      %v3151 = vadd.f32 %v2425, %v3081
      %v3152 = vadd.f32 %v2426, %v3086
      %v3153 = vadd.f32 %v2427, %v3089
      %v3154 = vadd.f32 %v2428, %v3094
      %v3155 = vadd.f32 %v2429, %v3097
      %v3156 = vadd.f32 %v2430, %v3102
      %v3157 = vadd.f32 %v2431, %v3105
      %v3158 = vadd.f32 %v2432, %v3110
      %v3159 = vadd.f32 %v2433, %v3113
      %v3160 = vadd.f32 %v2434, %v3118
      %v3161 = vadd.f32 %v2435, %v3121
      %v3162 = vadd.f32 %v2436, %v3126
      %v3163 = vadd.f32 %v2437, %v3129
      %v3164 = vld [vmem:[%s582] sm:$0xe]
      %v3165 = vld [vmem:[%s582 + $0xc] sm:$0xe]
      %v3166 = vld [vmem:[%s582 + $0x18] sm:$0xe]
      %v3167 = vld [vmem:[%s582 + $0x24] sm:$0xe]
      %v3168 = vld [vmem:[%s582 + $0x30] sm:$0xe]
      %v3169 = vld [vmem:[%s582 + $0x3c] sm:$0xe]
      %v3170 = vld [vmem:[%s582 + $0x48] sm:$0xe]
      %v3171 = vld [vmem:[%s582 + $0x54] sm:$0xe]
      %v3172 = vld [vmem:[%s582 + $0x60] sm:$0xe]
      %v3173 = vld [vmem:[%s582 + $0x6c] sm:$0xe]
      %v3174 = vld [vmem:[%s582 + $0x78] sm:$0xe]
      %v3175 = vld [vmem:[%s582 + $0x84] sm:$0xe]
      %v3176 = vld [vmem:[%s582 + $0x90] sm:$0xe]
      %v3177 = vld [vmem:[%s582 + $0x9c] sm:$0xe]
      %v3178 = vld [vmem:[%s582 + $0xa8] sm:$0xe]
      %v3179 = vld [vmem:[%s582 + $0xb4] sm:$0xe]
      %v3228 = vrot.slane %v3164, 5
      %v3229 = vrot.slane %v3228, 4
      %v3230 = vrot.slane %v2439, 5
      %v3231 = vsel %vm1673, %v3229, %v3230
      %v3232 = vrot.slane %v3230, 4
      %v3233 = vrot.slane %v2440, 5
      %v3234 = vsel %vm1673, %v3232, %v3233
      %v3235 = vrot.slane %v3165, 5
      %v3236 = vrot.slane %v3235, 4
      %v3237 = vrot.slane %v2442, 5
      %v3238 = vsel %vm1673, %v3236, %v3237
      %v3239 = vrot.slane %v3237, 4
      %v3240 = vrot.slane %v2443, 5
      %v3241 = vsel %vm1673, %v3239, %v3240
      %v3242 = vrot.slane %v3166, 5
      %v3243 = vrot.slane %v3242, 4
      %v3244 = vrot.slane %v2445, 5
      %v3245 = vsel %vm1673, %v3243, %v3244
      %v3246 = vrot.slane %v3244, 4
      %v3247 = vrot.slane %v2446, 5
      %v3248 = vsel %vm1673, %v3246, %v3247
      %v3249 = vrot.slane %v3167, 5
      %v3250 = vrot.slane %v3249, 4
      %v3251 = vrot.slane %v2448, 5
      %v3252 = vsel %vm1673, %v3250, %v3251
      %v3253 = vrot.slane %v3251, 4
      %v3254 = vrot.slane %v2449, 5
      %v3255 = vsel %vm1673, %v3253, %v3254
      %v3256 = vrot.slane %v3168, 5
      %v3257 = vrot.slane %v3256, 4
      %v3258 = vrot.slane %v2451, 5
      %v3259 = vsel %vm1673, %v3257, %v3258
      %v3260 = vrot.slane %v3258, 4
      %v3261 = vrot.slane %v2452, 5
      %v3262 = vsel %vm1673, %v3260, %v3261
      %v3263 = vrot.slane %v3169, 5
      %v3264 = vrot.slane %v3263, 4
      %v3265 = vrot.slane %v2454, 5
      %v3266 = vsel %vm1673, %v3264, %v3265
      %v3267 = vrot.slane %v3265, 4
      %v3268 = vrot.slane %v2455, 5
      %v3269 = vsel %vm1673, %v3267, %v3268
      %v3270 = vrot.slane %v3170, 5
      %v3271 = vrot.slane %v3270, 4
      %v3272 = vrot.slane %v2457, 5
      %v3273 = vsel %vm1673, %v3271, %v3272
      %v3274 = vrot.slane %v3272, 4
      %v3275 = vrot.slane %v2458, 5
      %v3276 = vsel %vm1673, %v3274, %v3275
      %v3277 = vrot.slane %v3171, 5
      %v3278 = vrot.slane %v3277, 4
      %v3279 = vrot.slane %v2460, 5
      %v3280 = vsel %vm1673, %v3278, %v3279
      %v3281 = vrot.slane %v3279, 4
      %v3282 = vrot.slane %v2461, 5
      %v3283 = vsel %vm1673, %v3281, %v3282
      %v3284 = vrot.slane %v3172, 5
      %v3285 = vrot.slane %v3284, 4
      %v3286 = vrot.slane %v2463, 5
      %v3287 = vsel %vm1673, %v3285, %v3286
      %v3288 = vrot.slane %v3286, 4
      %v3289 = vrot.slane %v2464, 5
      %v3290 = vsel %vm1673, %v3288, %v3289
      %v3291 = vrot.slane %v3173, 5
      %v3292 = vrot.slane %v3291, 4
      %v3293 = vrot.slane %v2466, 5
      %v3294 = vsel %vm1673, %v3292, %v3293
      %v3295 = vrot.slane %v3293, 4
      %v3296 = vrot.slane %v2467, 5
      %v3297 = vsel %vm1673, %v3295, %v3296
      %v3298 = vrot.slane %v3174, 5
      %v3299 = vrot.slane %v3298, 4
      %v3300 = vrot.slane %v2469, 5
      %v3301 = vsel %vm1673, %v3299, %v3300
      %v3302 = vrot.slane %v3300, 4
      %v3303 = vrot.slane %v2470, 5
      %v3304 = vsel %vm1673, %v3302, %v3303
      %v3305 = vrot.slane %v3175, 5
      %v3306 = vrot.slane %v3305, 4
      %v3307 = vrot.slane %v2472, 5
      %v3308 = vsel %vm1673, %v3306, %v3307
      %v3309 = vrot.slane %v3307, 4
      %v3310 = vrot.slane %v2473, 5
      %v3311 = vsel %vm1673, %v3309, %v3310
      %v3312 = vrot.slane %v3176, 5
      %v3313 = vrot.slane %v3312, 4
      %v3314 = vrot.slane %v2475, 5
      %v3315 = vsel %vm1673, %v3313, %v3314
      %v3316 = vrot.slane %v3314, 4
      %v3317 = vrot.slane %v2476, 5
      %v3318 = vsel %vm1673, %v3316, %v3317
      %v3319 = vrot.slane %v3177, 5
      %v3320 = vrot.slane %v3319, 4
      %v3321 = vrot.slane %v2478, 5
      %v3322 = vsel %vm1673, %v3320, %v3321
      %v3323 = vrot.slane %v3321, 4
      %v3324 = vrot.slane %v2479, 5
      %v3325 = vsel %vm1673, %v3323, %v3324
      %v3326 = vrot.slane %v3178, 5
      %v3327 = vrot.slane %v3326, 4
      %v3328 = vrot.slane %v2481, 5
      %v3329 = vsel %vm1673, %v3327, %v3328
      %v3330 = vrot.slane %v3328, 4
      %v3331 = vrot.slane %v2482, 5
      %v3332 = vsel %vm1673, %v3330, %v3331
      %v3333 = vrot.slane %v3179, 5
      %v3334 = vrot.slane %v3333, 4
      %v3335 = vrot.slane %v2484, 5
      %v3336 = vsel %vm1673, %v3334, %v3335
      %v3337 = vrot.slane %v3335, 4
      %v3338 = vrot.slane %v2485, 5
      %v3339 = vsel %vm1673, %v3337, %v3338
      %s3340 = scalar_lea.vmem %s1, 10
      %v3341 = vld [vmem:[%s3340] sm:$0x3]
      %v3342 = vunpack.c.l.b16 %v3231
      %v3343 = vunpack.c.l.b16 %v3234
      %v3344 = vunpack.c.l.b16 %v3238
      %v3345 = vunpack.c.l.b16 %v3241
      %v3346 = vunpack.c.l.b16 %v3245
      %v3347 = vunpack.c.l.b16 %v3248
      %v3348 = vunpack.c.l.b16 %v3252
      %v3349 = vunpack.c.l.b16 %v3255
      %v3350 = vunpack.c.l.b16 %v3259
      %v3351 = vunpack.c.l.b16 %v3262
      %v3352 = vunpack.c.l.b16 %v3266
      %v3353 = vunpack.c.l.b16 %v3269
      %v3354 = vunpack.c.l.b16 %v3273
      %v3355 = vunpack.c.l.b16 %v3276
      %v3356 = vunpack.c.l.b16 %v3280
      %v3357 = vunpack.c.l.b16 %v3283
      %v3358 = vunpack.c.l.b16 %v3287
      %v3359 = vunpack.c.l.b16 %v3290
      %v3360 = vunpack.c.l.b16 %v3294
      %v3361 = vunpack.c.l.b16 %v3297
      %v3362 = vunpack.c.l.b16 %v3301
      %v3363 = vunpack.c.l.b16 %v3304
      %v3364 = vunpack.c.l.b16 %v3308
      %v3365 = vunpack.c.l.b16 %v3311
      %v3366 = vunpack.c.l.b16 %v3315
      %v3367 = vunpack.c.l.b16 %v3318
      %v3368 = vunpack.c.l.b16 %v3322
      %v3369 = vunpack.c.l.b16 %v3325
      %v3370 = vunpack.c.l.b16 %v3329
      %v3371 = vunpack.c.l.b16 %v3332
      %v3372 = vunpack.c.l.b16 %v3336
      %v3373 = vunpack.c.l.b16 %v3339
      %v3374 = vpack.c.b16 %v3343, %v3342
      %v3375 = vpack.c.b16 %v3345, %v3344
      %v3376 = vpack.c.b16 %v3347, %v3346
      %v3377 = vpack.c.b16 %v3349, %v3348
      %v3378 = vpack.c.b16 %v3351, %v3350
      %v3379 = vpack.c.b16 %v3353, %v3352
      %v3380 = vpack.c.b16 %v3355, %v3354
      %v3381 = vpack.c.b16 %v3357, %v3356
      %v3382 = vpack.c.b16 %v3359, %v3358
      %v3383 = vpack.c.b16 %v3361, %v3360
      %v3384 = vpack.c.b16 %v3363, %v3362
      %v3385 = vpack.c.b16 %v3365, %v3364
      %v3386 = vpack.c.b16 %v3367, %v3366
      %v3387 = vpack.c.b16 %v3369, %v3368
      %v3388 = vpack.c.b16 %v3371, %v3370
      %v3389 = vpack.c.b16 %v3373, %v3372
      %v3391 = vsel %vm1117, %v3374, 0
      %v3394 = vsel %vm1117, %v3375, 0
      %v3397 = vsel %vm1117, %v3376, 0
      %v3400 = vsel %vm1117, %v3377, 0
      %v3403 = vsel %vm1117, %v3378, 0
      %v3406 = vsel %vm1117, %v3379, 0
      %v3409 = vsel %vm1117, %v3380, 0
      %v3412 = vsel %vm1117, %v3381, 0
      %v3415 = vsel %vm1117, %v3382, 0
      %v3418 = vsel %vm1117, %v3383, 0
      %v3421 = vsel %vm1117, %v3384, 0
      %v3424 = vsel %vm1117, %v3385, 0
      %v3427 = vsel %vm1117, %v3386, 0
      %v3430 = vsel %vm1117, %v3387, 0
      %v3433 = vsel %vm1117, %v3388, 0
      %v3436 = vsel %vm1117, %v3389, 0
      %v3439 = vsel %vm1166, %v3341, 0
      %3441 = vmatprep.subr.bf16.mxu0 0
      %3442 = vmatpush1.bf16.msra.mxu0 0
      %3443 = vmatprep.subr.bf16.mxu0 0
      %3444 = vmatpush1.bf16.msra.mxu0 0
      %3445 = vmatprep.subr.bf16.mxu0 0
      %3446 = vmatpush1.bf16.msra.mxu0 0
      %3447 = vmatprep.subr.bf16.mxu0 0
      %3448 = vmatpush1.bf16.msra.mxu0 0
      %3449 = vmatprep.subr.bf16.mxu0 0
      %3450 = vmatpush1.bf16.msra.mxu0 0
      %3451 = vmatprep.subr.bf16.mxu0 0
      %3452 = vmatpush1.bf16.msra.mxu0 0
      %3453 = vmatprep.subr.bf16.mxu0 0
      %3454 = vmatpush1.bf16.msra.mxu0 0
      %3455 = vmatprep.subr.bf16.mxu0 0
      %3456 = vmatpush1.bf16.msra.mxu0 %v3439
      %3457 = vmatprep.subr.bf16.mxu0 0
      %3458 = vmatpush2.bf16.msra.mxu0 0
      %3459 = vmatprep.subr.bf16.mxu0 0
      %3460 = vmatpush2.bf16.msra.mxu0 0
      %3461 = vmatprep.subr.bf16.mxu0 0
      %3462 = vmatpush2.bf16.msra.mxu0 0
      %3463 = vmatprep.subr.bf16.mxu0 0
      %3464 = vmatpush2.bf16.msra.mxu0 0
      %3465 = vmatprep.subr.bf16.mxu0 0
      %3466 = vmatpush2.bf16.msra.mxu0 0
      %3467 = vmatprep.subr.bf16.mxu0 0
      %3468 = vmatpush2.bf16.msra.mxu0 0
      %3469 = vmatprep.subr.bf16.mxu0 0
      %3470 = vmatpush2.bf16.msra.mxu0 0
      %3471 = vmatprep.subr.bf16.mxu0 0
      %3472 = vmatpush2.bf16.msra.mxu0 0
      %3473 = vmatprep.mubr.bf16.mxu0 0
      %3474 = vmatmul.mubr.bf16.gmra.mxu0 %v3391
      %v3475 = vpop.f32.mrf.mxu0
      %v3476 = vadd.f32 0.0, %v3475
      %v3477 = vpop.f32.mrf.mxu0
      %v3478 = vpop.f32.mrf.mxu0
      %v3479 = vadd.f32 0.0, %v3478
      %v3480 = vpop.f32.mrf.mxu0
      %3481 = vmatprep.mubr.bf16.mxu0 0
      %3482 = vmatmul.mubr.bf16.gmra.mxu0 %v3394
      %v3483 = vpop.f32.mrf.mxu0
      %v3484 = vadd.f32 0.0, %v3483
      %v3485 = vpop.f32.mrf.mxu0
      %v3486 = vpop.f32.mrf.mxu0
      %v3487 = vadd.f32 0.0, %v3486
      %v3488 = vpop.f32.mrf.mxu0
      %3489 = vmatprep.mubr.bf16.mxu0 0
      %3490 = vmatmul.mubr.bf16.gmra.mxu0 %v3397
      %v3491 = vpop.f32.mrf.mxu0
      %v3492 = vadd.f32 0.0, %v3491
      %v3493 = vpop.f32.mrf.mxu0
      %v3494 = vpop.f32.mrf.mxu0
      %v3495 = vadd.f32 0.0, %v3494
      %v3496 = vpop.f32.mrf.mxu0
      %3497 = vmatprep.mubr.bf16.mxu0 0
      %3498 = vmatmul.mubr.bf16.gmra.mxu0 %v3400
      %v3499 = vpop.f32.mrf.mxu0
      %v3500 = vadd.f32 0.0, %v3499
      %v3501 = vpop.f32.mrf.mxu0
      %v3502 = vpop.f32.mrf.mxu0
      %v3503 = vadd.f32 0.0, %v3502
      %v3504 = vpop.f32.mrf.mxu0
      %3505 = vmatprep.mubr.bf16.mxu0 0
      %3506 = vmatmul.mubr.bf16.gmra.mxu0 %v3403
      %v3507 = vpop.f32.mrf.mxu0
      %v3508 = vadd.f32 0.0, %v3507
      %v3509 = vpop.f32.mrf.mxu0
      %v3510 = vpop.f32.mrf.mxu0
      %v3511 = vadd.f32 0.0, %v3510
      %v3512 = vpop.f32.mrf.mxu0
      %3513 = vmatprep.mubr.bf16.mxu0 0
      %3514 = vmatmul.mubr.bf16.gmra.mxu0 %v3406
      %v3515 = vpop.f32.mrf.mxu0
      %v3516 = vadd.f32 0.0, %v3515
      %v3517 = vpop.f32.mrf.mxu0
      %v3518 = vpop.f32.mrf.mxu0
      %v3519 = vadd.f32 0.0, %v3518
      %v3520 = vpop.f32.mrf.mxu0
      %3521 = vmatprep.mubr.bf16.mxu0 0
      %3522 = vmatmul.mubr.bf16.gmra.mxu0 %v3409
      %v3523 = vpop.f32.mrf.mxu0
      %v3524 = vadd.f32 0.0, %v3523
      %v3525 = vpop.f32.mrf.mxu0
      %v3526 = vpop.f32.mrf.mxu0
      %v3527 = vadd.f32 0.0, %v3526
      %v3528 = vpop.f32.mrf.mxu0
      %3529 = vmatprep.mubr.bf16.mxu0 0
      %3530 = vmatmul.mubr.bf16.gmra.mxu0 %v3412
      %v3531 = vpop.f32.mrf.mxu0
      %v3532 = vadd.f32 0.0, %v3531
      %v3533 = vpop.f32.mrf.mxu0
      %v3534 = vpop.f32.mrf.mxu0
      %v3535 = vadd.f32 0.0, %v3534
      %v3536 = vpop.f32.mrf.mxu0
      %3537 = vmatprep.mubr.bf16.mxu0 0
      %3538 = vmatmul.mubr.bf16.gmra.mxu0 %v3415
      %v3539 = vpop.f32.mrf.mxu0
      %v3540 = vadd.f32 0.0, %v3539
      %v3541 = vpop.f32.mrf.mxu0
      %v3542 = vpop.f32.mrf.mxu0
      %v3543 = vadd.f32 0.0, %v3542
      %v3544 = vpop.f32.mrf.mxu0
      %3545 = vmatprep.mubr.bf16.mxu0 0
      %3546 = vmatmul.mubr.bf16.gmra.mxu0 %v3418
      %v3547 = vpop.f32.mrf.mxu0
      %v3548 = vadd.f32 0.0, %v3547
      %v3549 = vpop.f32.mrf.mxu0
      %v3550 = vpop.f32.mrf.mxu0
      %v3551 = vadd.f32 0.0, %v3550
      %v3552 = vpop.f32.mrf.mxu0
      %3553 = vmatprep.mubr.bf16.mxu0 0
      %3554 = vmatmul.mubr.bf16.gmra.mxu0 %v3421
      %v3555 = vpop.f32.mrf.mxu0
      %v3556 = vadd.f32 0.0, %v3555
      %v3557 = vpop.f32.mrf.mxu0
      %v3558 = vpop.f32.mrf.mxu0
      %v3559 = vadd.f32 0.0, %v3558
      %v3560 = vpop.f32.mrf.mxu0
      %3561 = vmatprep.mubr.bf16.mxu0 0
      %3562 = vmatmul.mubr.bf16.gmra.mxu0 %v3424
      %v3563 = vpop.f32.mrf.mxu0
      %v3564 = vadd.f32 0.0, %v3563
      %v3565 = vpop.f32.mrf.mxu0
      %v3566 = vpop.f32.mrf.mxu0
      %v3567 = vadd.f32 0.0, %v3566
      %v3568 = vpop.f32.mrf.mxu0
      %3569 = vmatprep.mubr.bf16.mxu0 0
      %3570 = vmatmul.mubr.bf16.gmra.mxu0 %v3427
      %v3571 = vpop.f32.mrf.mxu0
      %v3572 = vadd.f32 0.0, %v3571
      %v3573 = vpop.f32.mrf.mxu0
      %v3574 = vpop.f32.mrf.mxu0
      %v3575 = vadd.f32 0.0, %v3574
      %v3576 = vpop.f32.mrf.mxu0
      %3577 = vmatprep.mubr.bf16.mxu0 0
      %3578 = vmatmul.mubr.bf16.gmra.mxu0 %v3430
      %v3579 = vpop.f32.mrf.mxu0
      %v3580 = vadd.f32 0.0, %v3579
      %v3581 = vpop.f32.mrf.mxu0
      %v3582 = vpop.f32.mrf.mxu0
      %v3583 = vadd.f32 0.0, %v3582
      %v3584 = vpop.f32.mrf.mxu0
      %3585 = vmatprep.mubr.bf16.mxu0 0
      %3586 = vmatmul.mubr.bf16.gmra.mxu0 %v3433
      %v3587 = vpop.f32.mrf.mxu0
      %v3588 = vadd.f32 0.0, %v3587
      %v3589 = vpop.f32.mrf.mxu0
      %v3590 = vpop.f32.mrf.mxu0
      %v3591 = vadd.f32 0.0, %v3590
      %v3592 = vpop.f32.mrf.mxu0
      %3593 = vmatprep.mubr.bf16.mxu0 0
      %3594 = vmatmul.mubr.bf16.gmra.mxu0 %v3436
      %v3595 = vpop.f32.mrf.mxu0
      %v3596 = vadd.f32 0.0, %v3595
      %v3597 = vpop.f32.mrf.mxu0
      %v3598 = vpop.f32.mrf.mxu0
      %v3599 = vadd.f32 0.0, %v3598
      %v3600 = vpop.f32.mrf.mxu0
      %3601 = vdwg.mxu0
      %v3602 = vadd.f32 %v3132, %v3476
      %v3603 = vadd.f32 %v3133, %v3479
      %v3604 = vadd.f32 %v3134, %v3484
      %v3605 = vadd.f32 %v3135, %v3487
      %v3606 = vadd.f32 %v3136, %v3492
      %v3607 = vadd.f32 %v3137, %v3495
      %v3608 = vadd.f32 %v3138, %v3500
      %v3609 = vadd.f32 %v3139, %v3503
      %v3610 = vadd.f32 %v3140, %v3508
      %v3611 = vadd.f32 %v3141, %v3511
      %v3612 = vadd.f32 %v3142, %v3516
      %v3613 = vadd.f32 %v3143, %v3519
      %v3614 = vadd.f32 %v3144, %v3524
      %v3615 = vadd.f32 %v3145, %v3527
      %v3616 = vadd.f32 %v3146, %v3532
      %v3617 = vadd.f32 %v3147, %v3535
      %v3618 = vadd.f32 %v3148, %v3540
      %v3619 = vadd.f32 %v3149, %v3543
      %v3620 = vadd.f32 %v3150, %v3548
      %v3621 = vadd.f32 %v3151, %v3551
      %v3622 = vadd.f32 %v3152, %v3556
      %v3623 = vadd.f32 %v3153, %v3559
      %v3624 = vadd.f32 %v3154, %v3564
      %v3625 = vadd.f32 %v3155, %v3567
      %v3626 = vadd.f32 %v3156, %v3572
      %v3627 = vadd.f32 %v3157, %v3575
      %v3628 = vadd.f32 %v3158, %v3580
      %v3629 = vadd.f32 %v3159, %v3583
      %v3630 = vadd.f32 %v3160, %v3588
      %v3631 = vadd.f32 %v3161, %v3591
      %v3632 = vadd.f32 %v3162, %v3596
      %v3633 = vadd.f32 %v3163, %v3599
      %s3634 = scalar_lea.vmem [#allocation2], 24
      %v3635 = vld [vmem:[%s3634] sm:$0xf]
      %v3636 = vld [vmem:[%s3634 + $0x4] sm:$0xf]
      %v3637 = vld [vmem:[%s3634 + $0xc] sm:$0xf]
      %v3638 = vld [vmem:[%s3634 + $0x10] sm:$0xf]
      %v3639 = vld [vmem:[%s3634 + $0x18] sm:$0xf]
      %v3640 = vld [vmem:[%s3634 + $0x1c] sm:$0xf]
      %v3641 = vld [vmem:[%s3634 + $0x24] sm:$0xf]
      %v3642 = vld [vmem:[%s3634 + $0x28] sm:$0xf]
      %v3643 = vld [vmem:[%s3634 + $0x30] sm:$0xf]
      %v3644 = vld [vmem:[%s3634 + $0x34] sm:$0xf]
      %v3645 = vld [vmem:[%s3634 + $0x3c] sm:$0xf]
      %v3646 = vld [vmem:[%s3634 + $0x40] sm:$0xf]
      %v3647 = vld [vmem:[%s3634 + $0x48] sm:$0xf]
      %v3648 = vld [vmem:[%s3634 + $0x4c] sm:$0xf]
      %v3649 = vld [vmem:[%s3634 + $0x54] sm:$0xf]
      %v3650 = vld [vmem:[%s3634 + $0x58] sm:$0xf]
      %v3651 = vld [vmem:[%s3634 + $0x60] sm:$0xf]
      %v3652 = vld [vmem:[%s3634 + $0x64] sm:$0xf]
      %v3653 = vld [vmem:[%s3634 + $0x6c] sm:$0xf]
      %v3654 = vld [vmem:[%s3634 + $0x70] sm:$0xf]
      %v3655 = vld [vmem:[%s3634 + $0x78] sm:$0xf]
      %v3656 = vld [vmem:[%s3634 + $0x7c] sm:$0xf]
      %v3657 = vld [vmem:[%s3634 + $0x84] sm:$0xf]
      %v3658 = vld [vmem:[%s3634 + $0x88] sm:$0xf]
      %v3659 = vld [vmem:[%s3634 + $0x90] sm:$0xf]
      %v3660 = vld [vmem:[%s3634 + $0x94] sm:$0xf]
      %v3661 = vld [vmem:[%s3634 + $0x9c] sm:$0xf]
      %v3662 = vld [vmem:[%s3634 + $0xa0] sm:$0xf]
      %v3663 = vld [vmem:[%s3634 + $0xa8] sm:$0xf]
      %v3664 = vld [vmem:[%s3634 + $0xac] sm:$0xf]
      %v3665 = vld [vmem:[%s3634 + $0xb4] sm:$0xf]
      %v3666 = vld [vmem:[%s3634 + $0xb8] sm:$0xf]
      %s3667 = scalar_lea.vmem %s1, 12
      %v3668 = vld [vmem:[%s3667] sm:$0x3]
      %v3701 = vunpack.c.l.b16 %v3635
      %v3702 = vunpack.c.l.b16 %v3636
      %v3703 = vunpack.c.l.b16 %v3637
      %v3704 = vunpack.c.l.b16 %v3638
      %v3705 = vunpack.c.l.b16 %v3639
      %v3706 = vunpack.c.l.b16 %v3640
      %v3707 = vunpack.c.l.b16 %v3641
      %v3708 = vunpack.c.l.b16 %v3642
      %v3709 = vunpack.c.l.b16 %v3643
      %v3710 = vunpack.c.l.b16 %v3644
      %v3711 = vunpack.c.l.b16 %v3645
      %v3712 = vunpack.c.l.b16 %v3646
      %v3713 = vunpack.c.l.b16 %v3647
      %v3714 = vunpack.c.l.b16 %v3648
      %v3715 = vunpack.c.l.b16 %v3649
      %v3716 = vunpack.c.l.b16 %v3650
      %v3717 = vunpack.c.l.b16 %v3651
      %v3718 = vunpack.c.l.b16 %v3652
      %v3719 = vunpack.c.l.b16 %v3653
      %v3720 = vunpack.c.l.b16 %v3654
      %v3721 = vunpack.c.l.b16 %v3655
      %v3722 = vunpack.c.l.b16 %v3656
      %v3723 = vunpack.c.l.b16 %v3657
      %v3724 = vunpack.c.l.b16 %v3658
      %v3725 = vunpack.c.l.b16 %v3659
      %v3726 = vunpack.c.l.b16 %v3660
      %v3727 = vunpack.c.l.b16 %v3661
      %v3728 = vunpack.c.l.b16 %v3662
      %v3729 = vunpack.c.l.b16 %v3663
      %v3730 = vunpack.c.l.b16 %v3664
      %v3731 = vunpack.c.l.b16 %v3665
      %v3732 = vunpack.c.l.b16 %v3666
      %v3733 = vpack.c.b16 %v3702, %v3701
      %v3734 = vpack.c.b16 %v3704, %v3703
      %v3735 = vpack.c.b16 %v3706, %v3705
      %v3736 = vpack.c.b16 %v3708, %v3707
      %v3737 = vpack.c.b16 %v3710, %v3709
      %v3738 = vpack.c.b16 %v3712, %v3711
      %v3739 = vpack.c.b16 %v3714, %v3713
      %v3740 = vpack.c.b16 %v3716, %v3715
      %v3741 = vpack.c.b16 %v3718, %v3717
      %v3742 = vpack.c.b16 %v3720, %v3719
      %v3743 = vpack.c.b16 %v3722, %v3721
      %v3744 = vpack.c.b16 %v3724, %v3723
      %v3745 = vpack.c.b16 %v3726, %v3725
      %v3746 = vpack.c.b16 %v3728, %v3727
      %v3747 = vpack.c.b16 %v3730, %v3729
      %v3748 = vpack.c.b16 %v3732, %v3731
      %v3750 = vsel %vm1117, %v3733, 0
      %v3753 = vsel %vm1117, %v3734, 0
      %v3756 = vsel %vm1117, %v3735, 0
      %v3759 = vsel %vm1117, %v3736, 0
      %v3762 = vsel %vm1117, %v3737, 0
      %v3765 = vsel %vm1117, %v3738, 0
      %v3768 = vsel %vm1117, %v3739, 0
      %v3771 = vsel %vm1117, %v3740, 0
      %v3774 = vsel %vm1117, %v3741, 0
      %v3777 = vsel %vm1117, %v3742, 0
      %v3780 = vsel %vm1117, %v3743, 0
      %v3783 = vsel %vm1117, %v3744, 0
      %v3786 = vsel %vm1117, %v3745, 0
      %v3789 = vsel %vm1117, %v3746, 0
      %v3792 = vsel %vm1117, %v3747, 0
      %v3795 = vsel %vm1117, %v3748, 0
      %v3798 = vsel %vm1166, %v3668, 0
      %3800 = vmatprep.subr.bf16.mxu0 0
      %3801 = vmatpush1.bf16.msra.mxu0 0
      %3802 = vmatprep.subr.bf16.mxu0 0
      %3803 = vmatpush1.bf16.msra.mxu0 0
      %3804 = vmatprep.subr.bf16.mxu0 0
      %3805 = vmatpush1.bf16.msra.mxu0 0
      %3806 = vmatprep.subr.bf16.mxu0 0
      %3807 = vmatpush1.bf16.msra.mxu0 0
      %3808 = vmatprep.subr.bf16.mxu0 0
      %3809 = vmatpush1.bf16.msra.mxu0 0
      %3810 = vmatprep.subr.bf16.mxu0 0
      %3811 = vmatpush1.bf16.msra.mxu0 0
      %3812 = vmatprep.subr.bf16.mxu0 0
      %3813 = vmatpush1.bf16.msra.mxu0 0
      %3814 = vmatprep.subr.bf16.mxu0 0
      %3815 = vmatpush1.bf16.msra.mxu0 %v3798
      %3816 = vmatprep.subr.bf16.mxu0 0
      %3817 = vmatpush2.bf16.msra.mxu0 0
      %3818 = vmatprep.subr.bf16.mxu0 0
      %3819 = vmatpush2.bf16.msra.mxu0 0
      %3820 = vmatprep.subr.bf16.mxu0 0
      %3821 = vmatpush2.bf16.msra.mxu0 0
      %3822 = vmatprep.subr.bf16.mxu0 0
      %3823 = vmatpush2.bf16.msra.mxu0 0
      %3824 = vmatprep.subr.bf16.mxu0 0
      %3825 = vmatpush2.bf16.msra.mxu0 0
      %3826 = vmatprep.subr.bf16.mxu0 0
      %3827 = vmatpush2.bf16.msra.mxu0 0
      %3828 = vmatprep.subr.bf16.mxu0 0
      %3829 = vmatpush2.bf16.msra.mxu0 0
      %3830 = vmatprep.subr.bf16.mxu0 0
      %3831 = vmatpush2.bf16.msra.mxu0 0
      %3832 = vmatprep.mubr.bf16.mxu0 0
      %3833 = vmatmul.mubr.bf16.gmra.mxu0 %v3750
      %v3834 = vpop.f32.mrf.mxu0
      %v3835 = vadd.f32 0.0, %v3834
      %v3836 = vpop.f32.mrf.mxu0
      %v3837 = vpop.f32.mrf.mxu0
      %v3838 = vadd.f32 0.0, %v3837
      %v3839 = vpop.f32.mrf.mxu0
      %3840 = vmatprep.mubr.bf16.mxu0 0
      %3841 = vmatmul.mubr.bf16.gmra.mxu0 %v3753
      %v3842 = vpop.f32.mrf.mxu0
      %v3843 = vadd.f32 0.0, %v3842
      %v3844 = vpop.f32.mrf.mxu0
      %v3845 = vpop.f32.mrf.mxu0
      %v3846 = vadd.f32 0.0, %v3845
      %v3847 = vpop.f32.mrf.mxu0
      %3848 = vmatprep.mubr.bf16.mxu0 0
      %3849 = vmatmul.mubr.bf16.gmra.mxu0 %v3756
      %v3850 = vpop.f32.mrf.mxu0
      %v3851 = vadd.f32 0.0, %v3850
      %v3852 = vpop.f32.mrf.mxu0
      %v3853 = vpop.f32.mrf.mxu0
      %v3854 = vadd.f32 0.0, %v3853
      %v3855 = vpop.f32.mrf.mxu0
      %3856 = vmatprep.mubr.bf16.mxu0 0
      %3857 = vmatmul.mubr.bf16.gmra.mxu0 %v3759
      %v3858 = vpop.f32.mrf.mxu0
      %v3859 = vadd.f32 0.0, %v3858
      %v3860 = vpop.f32.mrf.mxu0
      %v3861 = vpop.f32.mrf.mxu0
      %v3862 = vadd.f32 0.0, %v3861
      %v3863 = vpop.f32.mrf.mxu0
      %3864 = vmatprep.mubr.bf16.mxu0 0
      %3865 = vmatmul.mubr.bf16.gmra.mxu0 %v3762
      %v3866 = vpop.f32.mrf.mxu0
      %v3867 = vadd.f32 0.0, %v3866
      %v3868 = vpop.f32.mrf.mxu0
      %v3869 = vpop.f32.mrf.mxu0
      %v3870 = vadd.f32 0.0, %v3869
      %v3871 = vpop.f32.mrf.mxu0
      %3872 = vmatprep.mubr.bf16.mxu0 0
      %3873 = vmatmul.mubr.bf16.gmra.mxu0 %v3765
      %v3874 = vpop.f32.mrf.mxu0
      %v3875 = vadd.f32 0.0, %v3874
      %v3876 = vpop.f32.mrf.mxu0
      %v3877 = vpop.f32.mrf.mxu0
      %v3878 = vadd.f32 0.0, %v3877
      %v3879 = vpop.f32.mrf.mxu0
      %3880 = vmatprep.mubr.bf16.mxu0 0
      %3881 = vmatmul.mubr.bf16.gmra.mxu0 %v3768
      %v3882 = vpop.f32.mrf.mxu0
      %v3883 = vadd.f32 0.0, %v3882
      %v3884 = vpop.f32.mrf.mxu0
      %v3885 = vpop.f32.mrf.mxu0
      %v3886 = vadd.f32 0.0, %v3885
      %v3887 = vpop.f32.mrf.mxu0
      %3888 = vmatprep.mubr.bf16.mxu0 0
      %3889 = vmatmul.mubr.bf16.gmra.mxu0 %v3771
      %v3890 = vpop.f32.mrf.mxu0
      %v3891 = vadd.f32 0.0, %v3890
      %v3892 = vpop.f32.mrf.mxu0
      %v3893 = vpop.f32.mrf.mxu0
      %v3894 = vadd.f32 0.0, %v3893
      %v3895 = vpop.f32.mrf.mxu0
      %3896 = vmatprep.mubr.bf16.mxu0 0
      %3897 = vmatmul.mubr.bf16.gmra.mxu0 %v3774
      %v3898 = vpop.f32.mrf.mxu0
      %v3899 = vadd.f32 0.0, %v3898
      %v3900 = vpop.f32.mrf.mxu0
      %v3901 = vpop.f32.mrf.mxu0
      %v3902 = vadd.f32 0.0, %v3901
      %v3903 = vpop.f32.mrf.mxu0
      %3904 = vmatprep.mubr.bf16.mxu0 0
      %3905 = vmatmul.mubr.bf16.gmra.mxu0 %v3777
      %v3906 = vpop.f32.mrf.mxu0
      %v3907 = vadd.f32 0.0, %v3906
      %v3908 = vpop.f32.mrf.mxu0
      %v3909 = vpop.f32.mrf.mxu0
      %v3910 = vadd.f32 0.0, %v3909
      %v3911 = vpop.f32.mrf.mxu0
      %3912 = vmatprep.mubr.bf16.mxu0 0
      %3913 = vmatmul.mubr.bf16.gmra.mxu0 %v3780
      %v3914 = vpop.f32.mrf.mxu0
      %v3915 = vadd.f32 0.0, %v3914
      %v3916 = vpop.f32.mrf.mxu0
      %v3917 = vpop.f32.mrf.mxu0
      %v3918 = vadd.f32 0.0, %v3917
      %v3919 = vpop.f32.mrf.mxu0
      %3920 = vmatprep.mubr.bf16.mxu0 0
      %3921 = vmatmul.mubr.bf16.gmra.mxu0 %v3783
      %v3922 = vpop.f32.mrf.mxu0
      %v3923 = vadd.f32 0.0, %v3922
      %v3924 = vpop.f32.mrf.mxu0
      %v3925 = vpop.f32.mrf.mxu0
      %v3926 = vadd.f32 0.0, %v3925
      %v3927 = vpop.f32.mrf.mxu0
      %3928 = vmatprep.mubr.bf16.mxu0 0
      %3929 = vmatmul.mubr.bf16.gmra.mxu0 %v3786
      %v3930 = vpop.f32.mrf.mxu0
      %v3931 = vadd.f32 0.0, %v3930
      %v3932 = vpop.f32.mrf.mxu0
      %v3933 = vpop.f32.mrf.mxu0
      %v3934 = vadd.f32 0.0, %v3933
      %v3935 = vpop.f32.mrf.mxu0
      %3936 = vmatprep.mubr.bf16.mxu0 0
      %3937 = vmatmul.mubr.bf16.gmra.mxu0 %v3789
      %v3938 = vpop.f32.mrf.mxu0
      %v3939 = vadd.f32 0.0, %v3938
      %v3940 = vpop.f32.mrf.mxu0
      %v3941 = vpop.f32.mrf.mxu0
      %v3942 = vadd.f32 0.0, %v3941
      %v3943 = vpop.f32.mrf.mxu0
      %3944 = vmatprep.mubr.bf16.mxu0 0
      %3945 = vmatmul.mubr.bf16.gmra.mxu0 %v3792
      %v3946 = vpop.f32.mrf.mxu0
      %v3947 = vadd.f32 0.0, %v3946
      %v3948 = vpop.f32.mrf.mxu0
      %v3949 = vpop.f32.mrf.mxu0
      %v3950 = vadd.f32 0.0, %v3949
      %v3951 = vpop.f32.mrf.mxu0
      %3952 = vmatprep.mubr.bf16.mxu0 0
      %3953 = vmatmul.mubr.bf16.gmra.mxu0 %v3795
      %v3954 = vpop.f32.mrf.mxu0
      %v3955 = vadd.f32 0.0, %v3954
      %v3956 = vpop.f32.mrf.mxu0
      %v3957 = vpop.f32.mrf.mxu0
      %v3958 = vadd.f32 0.0, %v3957
      %v3959 = vpop.f32.mrf.mxu0
      %3960 = vdwg.mxu0
      %v3961 = vadd.f32 %v3602, %v3835
      %v3962 = vadd.f32 %v3603, %v3838
      %v3963 = vadd.f32 %v3604, %v3843
      %v3964 = vadd.f32 %v3605, %v3846
      %v3965 = vadd.f32 %v3606, %v3851
      %v3966 = vadd.f32 %v3607, %v3854
      %v3967 = vadd.f32 %v3608, %v3859
      %v3968 = vadd.f32 %v3609, %v3862
      %v3969 = vadd.f32 %v3610, %v3867
      %v3970 = vadd.f32 %v3611, %v3870
      %v3971 = vadd.f32 %v3612, %v3875
      %v3972 = vadd.f32 %v3613, %v3878
      %v3973 = vadd.f32 %v3614, %v3883
      %v3974 = vadd.f32 %v3615, %v3886
      %v3975 = vadd.f32 %v3616, %v3891
      %v3976 = vadd.f32 %v3617, %v3894
      %v3977 = vadd.f32 %v3618, %v3899
      %v3978 = vadd.f32 %v3619, %v3902
      %v3979 = vadd.f32 %v3620, %v3907
      %v3980 = vadd.f32 %v3621, %v3910
      %v3981 = vadd.f32 %v3622, %v3915
      %v3982 = vadd.f32 %v3623, %v3918
      %v3983 = vadd.f32 %v3624, %v3923
      %v3984 = vadd.f32 %v3625, %v3926
      %v3985 = vadd.f32 %v3626, %v3931
      %v3986 = vadd.f32 %v3627, %v3934
      %v3987 = vadd.f32 %v3628, %v3939
      %v3988 = vadd.f32 %v3629, %v3942
      %v3989 = vadd.f32 %v3630, %v3947
      %v3990 = vadd.f32 %v3631, %v3950
      %v3991 = vadd.f32 %v3632, %v3955
      %v3992 = vadd.f32 %v3633, %v3958
      %v3993 = vld [vmem:[%s3634] sm:$0xf]
      %v3994 = vld [vmem:[%s3634 + $0x4] sm:$0xf]
      %v3995 = vld [vmem:[%s3634 + $0x8] sm:$0x1]
      %v3996 = vld [vmem:[%s3634 + $0xc] sm:$0xf]
      %v3997 = vld [vmem:[%s3634 + $0x10] sm:$0xf]
      %v3998 = vld [vmem:[%s3634 + $0x14] sm:$0x1]
      %v3999 = vld [vmem:[%s3634 + $0x18] sm:$0xf]
      %v4000 = vld [vmem:[%s3634 + $0x1c] sm:$0xf]
      %v4001 = vld [vmem:[%s3634 + $0x20] sm:$0x1]
      %v4002 = vld [vmem:[%s3634 + $0x24] sm:$0xf]
      %v4003 = vld [vmem:[%s3634 + $0x28] sm:$0xf]
      %v4004 = vld [vmem:[%s3634 + $0x2c] sm:$0x1]
      %v4005 = vld [vmem:[%s3634 + $0x30] sm:$0xf]
      %v4006 = vld [vmem:[%s3634 + $0x34] sm:$0xf]
      %v4007 = vld [vmem:[%s3634 + $0x38] sm:$0x1]
      %v4008 = vld [vmem:[%s3634 + $0x3c] sm:$0xf]
      %v4009 = vld [vmem:[%s3634 + $0x40] sm:$0xf]
      %v4010 = vld [vmem:[%s3634 + $0x44] sm:$0x1]
      %v4011 = vld [vmem:[%s3634 + $0x48] sm:$0xf]
      %v4012 = vld [vmem:[%s3634 + $0x4c] sm:$0xf]
      %v4013 = vld [vmem:[%s3634 + $0x50] sm:$0x1]
      %v4014 = vld [vmem:[%s3634 + $0x54] sm:$0xf]
      %v4015 = vld [vmem:[%s3634 + $0x58] sm:$0xf]
      %v4016 = vld [vmem:[%s3634 + $0x5c] sm:$0x1]
      %v4017 = vld [vmem:[%s3634 + $0x60] sm:$0xf]
      %v4018 = vld [vmem:[%s3634 + $0x64] sm:$0xf]
      %v4019 = vld [vmem:[%s3634 + $0x68] sm:$0x1]
      %v4020 = vld [vmem:[%s3634 + $0x6c] sm:$0xf]
      %v4021 = vld [vmem:[%s3634 + $0x70] sm:$0xf]
      %v4022 = vld [vmem:[%s3634 + $0x74] sm:$0x1]
      %v4023 = vld [vmem:[%s3634 + $0x78] sm:$0xf]
      %v4024 = vld [vmem:[%s3634 + $0x7c] sm:$0xf]
      %v4025 = vld [vmem:[%s3634 + $0x80] sm:$0x1]
      %v4026 = vld [vmem:[%s3634 + $0x84] sm:$0xf]
      %v4027 = vld [vmem:[%s3634 + $0x88] sm:$0xf]
      %v4028 = vld [vmem:[%s3634 + $0x8c] sm:$0x1]
      %v4029 = vld [vmem:[%s3634 + $0x90] sm:$0xf]
      %v4030 = vld [vmem:[%s3634 + $0x94] sm:$0xf]
      %v4031 = vld [vmem:[%s3634 + $0x98] sm:$0x1]
      %v4032 = vld [vmem:[%s3634 + $0x9c] sm:$0xf]
      %v4033 = vld [vmem:[%s3634 + $0xa0] sm:$0xf]
      %v4034 = vld [vmem:[%s3634 + $0xa4] sm:$0x1]
      %v4035 = vld [vmem:[%s3634 + $0xa8] sm:$0xf]
      %v4036 = vld [vmem:[%s3634 + $0xac] sm:$0xf]
      %v4037 = vld [vmem:[%s3634 + $0xb0] sm:$0x1]
      %v4038 = vld [vmem:[%s3634 + $0xb4] sm:$0xf]
      %v4039 = vld [vmem:[%s3634 + $0xb8] sm:$0xf]
      %v4040 = vld [vmem:[%s3634 + $0xbc] sm:$0x1]
      %v4042 = vshrl.u32 %v3993, 16
      %v4044 = vrot.slane %v4042, 4
      %v4045 = vshll.u32 %v3993, 16
      %v4047 = vrot.slane %v4045, 5
      %v4048 = vor.u32 %v4044, %v4047
      %v4049 = vrot.slane %v4048, 4
      %v4051 = vshll.u32 %v3994, 16
      %v4053 = vrot.slane %v4051, 5
      %v4054 = vsel %vm682, %v4049, %v4053
      %v4055 = vshrl.u32 %v3994, 16
      %v4057 = vrot.slane %v4055, 4
      %v4058 = vor.u32 %v4057, %v4053
      %v4059 = vrot.slane %v4058, 4
      %v4061 = vshll.u32 %v3995, 16
      %v4063 = vrot.slane %v4061, 5
      %v4064 = vsel %vm682, %v4059, %v4063
      %v4066 = vshrl.u32 %v3996, 16
      %v4068 = vrot.slane %v4066, 4
      %v4069 = vshll.u32 %v3996, 16
      %v4071 = vrot.slane %v4069, 5
      %v4072 = vor.u32 %v4068, %v4071
      %v4073 = vrot.slane %v4072, 4
      %v4075 = vshll.u32 %v3997, 16
      %v4077 = vrot.slane %v4075, 5
      %v4078 = vsel %vm682, %v4073, %v4077
      %v4079 = vshrl.u32 %v3997, 16
      %v4081 = vrot.slane %v4079, 4
      %v4082 = vor.u32 %v4081, %v4077
      %v4083 = vrot.slane %v4082, 4
      %v4085 = vshll.u32 %v3998, 16
      %v4087 = vrot.slane %v4085, 5
      %v4088 = vsel %vm682, %v4083, %v4087
      %v4090 = vshrl.u32 %v3999, 16
      %v4092 = vrot.slane %v4090, 4
      %v4093 = vshll.u32 %v3999, 16
      %v4095 = vrot.slane %v4093, 5
      %v4096 = vor.u32 %v4092, %v4095
      %v4097 = vrot.slane %v4096, 4
      %v4099 = vshll.u32 %v4000, 16
      %v4101 = vrot.slane %v4099, 5
      %v4102 = vsel %vm682, %v4097, %v4101
      %v4103 = vshrl.u32 %v4000, 16
      %v4105 = vrot.slane %v4103, 4
      %v4106 = vor.u32 %v4105, %v4101
      %v4107 = vrot.slane %v4106, 4
      %v4109 = vshll.u32 %v4001, 16
      %v4111 = vrot.slane %v4109, 5
      %v4112 = vsel %vm682, %v4107, %v4111
      %v4114 = vshrl.u32 %v4002, 16
      %v4116 = vrot.slane %v4114, 4
      %v4117 = vshll.u32 %v4002, 16
      %v4119 = vrot.slane %v4117, 5
      %v4120 = vor.u32 %v4116, %v4119
      %v4121 = vrot.slane %v4120, 4
      %v4123 = vshll.u32 %v4003, 16
      %v4125 = vrot.slane %v4123, 5
      %v4126 = vsel %vm682, %v4121, %v4125
      %v4127 = vshrl.u32 %v4003, 16
      %v4129 = vrot.slane %v4127, 4
      %v4130 = vor.u32 %v4129, %v4125
      %v4131 = vrot.slane %v4130, 4
      %v4133 = vshll.u32 %v4004, 16
      %v4135 = vrot.slane %v4133, 5
      %v4136 = vsel %vm682, %v4131, %v4135
      %v4138 = vshrl.u32 %v4005, 16
      %v4140 = vrot.slane %v4138, 4
      %v4141 = vshll.u32 %v4005, 16
      %v4143 = vrot.slane %v4141, 5
      %v4144 = vor.u32 %v4140, %v4143
      %v4145 = vrot.slane %v4144, 4
      %v4147 = vshll.u32 %v4006, 16
      %v4149 = vrot.slane %v4147, 5
      %v4150 = vsel %vm682, %v4145, %v4149
      %v4151 = vshrl.u32 %v4006, 16
      %v4153 = vrot.slane %v4151, 4
      %v4154 = vor.u32 %v4153, %v4149
      %v4155 = vrot.slane %v4154, 4
      %v4157 = vshll.u32 %v4007, 16
      %v4159 = vrot.slane %v4157, 5
      %v4160 = vsel %vm682, %v4155, %v4159
      %v4162 = vshrl.u32 %v4008, 16
      %v4164 = vrot.slane %v4162, 4
      %v4165 = vshll.u32 %v4008, 16
      %v4167 = vrot.slane %v4165, 5
      %v4168 = vor.u32 %v4164, %v4167
      %v4169 = vrot.slane %v4168, 4
      %v4171 = vshll.u32 %v4009, 16
      %v4173 = vrot.slane %v4171, 5
      %v4174 = vsel %vm682, %v4169, %v4173
      %v4175 = vshrl.u32 %v4009, 16
      %v4177 = vrot.slane %v4175, 4
      %v4178 = vor.u32 %v4177, %v4173
      %v4179 = vrot.slane %v4178, 4
      %v4181 = vshll.u32 %v4010, 16
      %v4183 = vrot.slane %v4181, 5
      %v4184 = vsel %vm682, %v4179, %v4183
      %v4186 = vshrl.u32 %v4011, 16
      %v4188 = vrot.slane %v4186, 4
      %v4189 = vshll.u32 %v4011, 16
      %v4191 = vrot.slane %v4189, 5
      %v4192 = vor.u32 %v4188, %v4191
      %v4193 = vrot.slane %v4192, 4
      %v4195 = vshll.u32 %v4012, 16
      %v4197 = vrot.slane %v4195, 5
      %v4198 = vsel %vm682, %v4193, %v4197
      %v4199 = vshrl.u32 %v4012, 16
      %v4201 = vrot.slane %v4199, 4
      %v4202 = vor.u32 %v4201, %v4197
      %v4203 = vrot.slane %v4202, 4
      %v4205 = vshll.u32 %v4013, 16
      %v4207 = vrot.slane %v4205, 5
      %v4208 = vsel %vm682, %v4203, %v4207
      %v4210 = vshrl.u32 %v4014, 16
      %v4212 = vrot.slane %v4210, 4
      %v4213 = vshll.u32 %v4014, 16
      %v4215 = vrot.slane %v4213, 5
      %v4216 = vor.u32 %v4212, %v4215
      %v4217 = vrot.slane %v4216, 4
      %v4219 = vshll.u32 %v4015, 16
      %v4221 = vrot.slane %v4219, 5
      %v4222 = vsel %vm682, %v4217, %v4221
      %v4223 = vshrl.u32 %v4015, 16
      %v4225 = vrot.slane %v4223, 4
      %v4226 = vor.u32 %v4225, %v4221
      %v4227 = vrot.slane %v4226, 4
      %v4229 = vshll.u32 %v4016, 16
      %v4231 = vrot.slane %v4229, 5
      %v4232 = vsel %vm682, %v4227, %v4231
      %v4234 = vshrl.u32 %v4017, 16
      %v4236 = vrot.slane %v4234, 4
      %v4237 = vshll.u32 %v4017, 16
      %v4239 = vrot.slane %v4237, 5
      %v4240 = vor.u32 %v4236, %v4239
      %v4241 = vrot.slane %v4240, 4
      %v4243 = vshll.u32 %v4018, 16
      %v4245 = vrot.slane %v4243, 5
      %v4246 = vsel %vm682, %v4241, %v4245
      %v4247 = vshrl.u32 %v4018, 16
      %v4249 = vrot.slane %v4247, 4
      %v4250 = vor.u32 %v4249, %v4245
      %v4251 = vrot.slane %v4250, 4
      %v4253 = vshll.u32 %v4019, 16
      %v4255 = vrot.slane %v4253, 5
      %v4256 = vsel %vm682, %v4251, %v4255
      %v4258 = vshrl.u32 %v4020, 16
      %v4260 = vrot.slane %v4258, 4
      %v4261 = vshll.u32 %v4020, 16
      %v4263 = vrot.slane %v4261, 5
      %v4264 = vor.u32 %v4260, %v4263
      %v4265 = vrot.slane %v4264, 4
      %v4267 = vshll.u32 %v4021, 16
      %v4269 = vrot.slane %v4267, 5
      %v4270 = vsel %vm682, %v4265, %v4269
      %v4271 = vshrl.u32 %v4021, 16
      %v4273 = vrot.slane %v4271, 4
      %v4274 = vor.u32 %v4273, %v4269
      %v4275 = vrot.slane %v4274, 4
      %v4277 = vshll.u32 %v4022, 16
      %v4279 = vrot.slane %v4277, 5
      %v4280 = vsel %vm682, %v4275, %v4279
      %v4282 = vshrl.u32 %v4023, 16
      %v4284 = vrot.slane %v4282, 4
      %v4285 = vshll.u32 %v4023, 16
      %v4287 = vrot.slane %v4285, 5
      %v4288 = vor.u32 %v4284, %v4287
      %v4289 = vrot.slane %v4288, 4
      %v4291 = vshll.u32 %v4024, 16
      %v4293 = vrot.slane %v4291, 5
      %v4294 = vsel %vm682, %v4289, %v4293
      %v4295 = vshrl.u32 %v4024, 16
      %v4297 = vrot.slane %v4295, 4
      %v4298 = vor.u32 %v4297, %v4293
      %v4299 = vrot.slane %v4298, 4
      %v4301 = vshll.u32 %v4025, 16
      %v4303 = vrot.slane %v4301, 5
      %v4304 = vsel %vm682, %v4299, %v4303
      %v4306 = vshrl.u32 %v4026, 16
      %v4308 = vrot.slane %v4306, 4
      %v4309 = vshll.u32 %v4026, 16
      %v4311 = vrot.slane %v4309, 5
      %v4312 = vor.u32 %v4308, %v4311
      %v4313 = vrot.slane %v4312, 4
      %v4315 = vshll.u32 %v4027, 16
      %v4317 = vrot.slane %v4315, 5
      %v4318 = vsel %vm682, %v4313, %v4317
      %v4319 = vshrl.u32 %v4027, 16
      %v4321 = vrot.slane %v4319, 4
      %v4322 = vor.u32 %v4321, %v4317
      %v4323 = vrot.slane %v4322, 4
      %v4325 = vshll.u32 %v4028, 16
      %v4327 = vrot.slane %v4325, 5
      %v4328 = vsel %vm682, %v4323, %v4327
      %v4330 = vshrl.u32 %v4029, 16
      %v4332 = vrot.slane %v4330, 4
      %v4333 = vshll.u32 %v4029, 16
      %v4335 = vrot.slane %v4333, 5
      %v4336 = vor.u32 %v4332, %v4335
      %v4337 = vrot.slane %v4336, 4
      %v4339 = vshll.u32 %v4030, 16
      %v4341 = vrot.slane %v4339, 5
      %v4342 = vsel %vm682, %v4337, %v4341
      %v4343 = vshrl.u32 %v4030, 16
      %v4345 = vrot.slane %v4343, 4
      %v4346 = vor.u32 %v4345, %v4341
      %v4347 = vrot.slane %v4346, 4
      %v4349 = vshll.u32 %v4031, 16
      %v4351 = vrot.slane %v4349, 5
      %v4352 = vsel %vm682, %v4347, %v4351
      %v4354 = vshrl.u32 %v4032, 16
      %v4356 = vrot.slane %v4354, 4
      %v4357 = vshll.u32 %v4032, 16
      %v4359 = vrot.slane %v4357, 5
      %v4360 = vor.u32 %v4356, %v4359
      %v4361 = vrot.slane %v4360, 4
      %v4363 = vshll.u32 %v4033, 16
      %v4365 = vrot.slane %v4363, 5
      %v4366 = vsel %vm682, %v4361, %v4365
      %v4367 = vshrl.u32 %v4033, 16
      %v4369 = vrot.slane %v4367, 4
      %v4370 = vor.u32 %v4369, %v4365
      %v4371 = vrot.slane %v4370, 4
      %v4373 = vshll.u32 %v4034, 16
      %v4375 = vrot.slane %v4373, 5
      %v4376 = vsel %vm682, %v4371, %v4375
      %v4378 = vshrl.u32 %v4035, 16
      %v4380 = vrot.slane %v4378, 4
      %v4381 = vshll.u32 %v4035, 16
      %v4383 = vrot.slane %v4381, 5
      %v4384 = vor.u32 %v4380, %v4383
      %v4385 = vrot.slane %v4384, 4
      %v4387 = vshll.u32 %v4036, 16
      %v4389 = vrot.slane %v4387, 5
      %v4390 = vsel %vm682, %v4385, %v4389
      %v4391 = vshrl.u32 %v4036, 16
      %v4393 = vrot.slane %v4391, 4
      %v4394 = vor.u32 %v4393, %v4389
      %v4395 = vrot.slane %v4394, 4
      %v4397 = vshll.u32 %v4037, 16
      %v4399 = vrot.slane %v4397, 5
      %v4400 = vsel %vm682, %v4395, %v4399
      %v4402 = vshrl.u32 %v4038, 16
      %v4404 = vrot.slane %v4402, 4
      %v4405 = vshll.u32 %v4038, 16
      %v4407 = vrot.slane %v4405, 5
      %v4408 = vor.u32 %v4404, %v4407
      %v4409 = vrot.slane %v4408, 4
      %v4411 = vshll.u32 %v4039, 16
      %v4413 = vrot.slane %v4411, 5
      %v4414 = vsel %vm682, %v4409, %v4413
      %v4415 = vshrl.u32 %v4039, 16
      %v4417 = vrot.slane %v4415, 4
      %v4418 = vor.u32 %v4417, %v4413
      %v4419 = vrot.slane %v4418, 4
      %v4421 = vshll.u32 %v4040, 16
      %v4423 = vrot.slane %v4421, 5
      %v4424 = vsel %vm682, %v4419, %v4423
      %s4425 = scalar_lea.vmem %s1, 14
      %v4426 = vld [vmem:[%s4425] sm:$0x3]
      %v4427 = vunpack.c.l.b16 %v4054
      %v4428 = vunpack.c.l.b16 %v4064
      %v4429 = vunpack.c.l.b16 %v4078
      %v4430 = vunpack.c.l.b16 %v4088
      %v4431 = vunpack.c.l.b16 %v4102
      %v4432 = vunpack.c.l.b16 %v4112
      %v4433 = vunpack.c.l.b16 %v4126
      %v4434 = vunpack.c.l.b16 %v4136
      %v4435 = vunpack.c.l.b16 %v4150
      %v4436 = vunpack.c.l.b16 %v4160
      %v4437 = vunpack.c.l.b16 %v4174
      %v4438 = vunpack.c.l.b16 %v4184
      %v4439 = vunpack.c.l.b16 %v4198
      %v4440 = vunpack.c.l.b16 %v4208
      %v4441 = vunpack.c.l.b16 %v4222
      %v4442 = vunpack.c.l.b16 %v4232
      %v4443 = vunpack.c.l.b16 %v4246
      %v4444 = vunpack.c.l.b16 %v4256
      %v4445 = vunpack.c.l.b16 %v4270
      %v4446 = vunpack.c.l.b16 %v4280
      %v4447 = vunpack.c.l.b16 %v4294
      %v4448 = vunpack.c.l.b16 %v4304
      %v4449 = vunpack.c.l.b16 %v4318
      %v4450 = vunpack.c.l.b16 %v4328
      %v4451 = vunpack.c.l.b16 %v4342
      %v4452 = vunpack.c.l.b16 %v4352
      %v4453 = vunpack.c.l.b16 %v4366
      %v4454 = vunpack.c.l.b16 %v4376
      %v4455 = vunpack.c.l.b16 %v4390
      %v4456 = vunpack.c.l.b16 %v4400
      %v4457 = vunpack.c.l.b16 %v4414
      %v4458 = vunpack.c.l.b16 %v4424
      %v4459 = vpack.c.b16 %v4428, %v4427
      %v4460 = vpack.c.b16 %v4430, %v4429
      %v4461 = vpack.c.b16 %v4432, %v4431
      %v4462 = vpack.c.b16 %v4434, %v4433
      %v4463 = vpack.c.b16 %v4436, %v4435
      %v4464 = vpack.c.b16 %v4438, %v4437
      %v4465 = vpack.c.b16 %v4440, %v4439
      %v4466 = vpack.c.b16 %v4442, %v4441
      %v4467 = vpack.c.b16 %v4444, %v4443
      %v4468 = vpack.c.b16 %v4446, %v4445
      %v4469 = vpack.c.b16 %v4448, %v4447
      %v4470 = vpack.c.b16 %v4450, %v4449
      %v4471 = vpack.c.b16 %v4452, %v4451
      %v4472 = vpack.c.b16 %v4454, %v4453
      %v4473 = vpack.c.b16 %v4456, %v4455
      %v4474 = vpack.c.b16 %v4458, %v4457
      %v4476 = vsel %vm1117, %v4459, 0
      %v4479 = vsel %vm1117, %v4460, 0
      %v4482 = vsel %vm1117, %v4461, 0
      %v4485 = vsel %vm1117, %v4462, 0
      %v4488 = vsel %vm1117, %v4463, 0
      %v4491 = vsel %vm1117, %v4464, 0
      %v4494 = vsel %vm1117, %v4465, 0
      %v4497 = vsel %vm1117, %v4466, 0
      %v4500 = vsel %vm1117, %v4467, 0
      %v4503 = vsel %vm1117, %v4468, 0
      %v4506 = vsel %vm1117, %v4469, 0
      %v4509 = vsel %vm1117, %v4470, 0
      %v4512 = vsel %vm1117, %v4471, 0
      %v4515 = vsel %vm1117, %v4472, 0
      %v4518 = vsel %vm1117, %v4473, 0
      %v4521 = vsel %vm1117, %v4474, 0
      %v4524 = vsel %vm1166, %v4426, 0
      %4526 = vmatprep.subr.bf16.mxu0 0
      %4527 = vmatpush1.bf16.msra.mxu0 0
      %4528 = vmatprep.subr.bf16.mxu0 0
      %4529 = vmatpush1.bf16.msra.mxu0 0
      %4530 = vmatprep.subr.bf16.mxu0 0
      %4531 = vmatpush1.bf16.msra.mxu0 0
      %4532 = vmatprep.subr.bf16.mxu0 0
      %4533 = vmatpush1.bf16.msra.mxu0 0
      %4534 = vmatprep.subr.bf16.mxu0 0
      %4535 = vmatpush1.bf16.msra.mxu0 0
      %4536 = vmatprep.subr.bf16.mxu0 0
      %4537 = vmatpush1.bf16.msra.mxu0 0
      %4538 = vmatprep.subr.bf16.mxu0 0
      %4539 = vmatpush1.bf16.msra.mxu0 0
      %4540 = vmatprep.subr.bf16.mxu0 0
      %4541 = vmatpush1.bf16.msra.mxu0 %v4524
      %4542 = vmatprep.subr.bf16.mxu0 0
      %4543 = vmatpush2.bf16.msra.mxu0 0
      %4544 = vmatprep.subr.bf16.mxu0 0
      %4545 = vmatpush2.bf16.msra.mxu0 0
      %4546 = vmatprep.subr.bf16.mxu0 0
      %4547 = vmatpush2.bf16.msra.mxu0 0
      %4548 = vmatprep.subr.bf16.mxu0 0
      %4549 = vmatpush2.bf16.msra.mxu0 0
      %4550 = vmatprep.subr.bf16.mxu0 0
      %4551 = vmatpush2.bf16.msra.mxu0 0
      %4552 = vmatprep.subr.bf16.mxu0 0
      %4553 = vmatpush2.bf16.msra.mxu0 0
      %4554 = vmatprep.subr.bf16.mxu0 0
      %4555 = vmatpush2.bf16.msra.mxu0 0
      %4556 = vmatprep.subr.bf16.mxu0 0
      %4557 = vmatpush2.bf16.msra.mxu0 0
      %4558 = vmatprep.mubr.bf16.mxu0 0
      %4559 = vmatmul.mubr.bf16.gmra.mxu0 %v4476
      %v4560 = vpop.f32.mrf.mxu0
      %v4561 = vadd.f32 0.0, %v4560
      %v4562 = vpop.f32.mrf.mxu0
      %v4563 = vpop.f32.mrf.mxu0
      %v4564 = vadd.f32 0.0, %v4563
      %v4565 = vpop.f32.mrf.mxu0
      %4566 = vmatprep.mubr.bf16.mxu0 0
      %4567 = vmatmul.mubr.bf16.gmra.mxu0 %v4479
      %v4568 = vpop.f32.mrf.mxu0
      %v4569 = vadd.f32 0.0, %v4568
      %v4570 = vpop.f32.mrf.mxu0
      %v4571 = vpop.f32.mrf.mxu0
      %v4572 = vadd.f32 0.0, %v4571
      %v4573 = vpop.f32.mrf.mxu0
      %4574 = vmatprep.mubr.bf16.mxu0 0
      %4575 = vmatmul.mubr.bf16.gmra.mxu0 %v4482
      %v4576 = vpop.f32.mrf.mxu0
      %v4577 = vadd.f32 0.0, %v4576
      %v4578 = vpop.f32.mrf.mxu0
      %v4579 = vpop.f32.mrf.mxu0
      %v4580 = vadd.f32 0.0, %v4579
      %v4581 = vpop.f32.mrf.mxu0
      %4582 = vmatprep.mubr.bf16.mxu0 0
      %4583 = vmatmul.mubr.bf16.gmra.mxu0 %v4485
      %v4584 = vpop.f32.mrf.mxu0
      %v4585 = vadd.f32 0.0, %v4584
      %v4586 = vpop.f32.mrf.mxu0
      %v4587 = vpop.f32.mrf.mxu0
      %v4588 = vadd.f32 0.0, %v4587
      %v4589 = vpop.f32.mrf.mxu0
      %4590 = vmatprep.mubr.bf16.mxu0 0
      %4591 = vmatmul.mubr.bf16.gmra.mxu0 %v4488
      %v4592 = vpop.f32.mrf.mxu0
      %v4593 = vadd.f32 0.0, %v4592
      %v4594 = vpop.f32.mrf.mxu0
      %v4595 = vpop.f32.mrf.mxu0
      %v4596 = vadd.f32 0.0, %v4595
      %v4597 = vpop.f32.mrf.mxu0
      %4598 = vmatprep.mubr.bf16.mxu0 0
      %4599 = vmatmul.mubr.bf16.gmra.mxu0 %v4491
      %v4600 = vpop.f32.mrf.mxu0
      %v4601 = vadd.f32 0.0, %v4600
      %v4602 = vpop.f32.mrf.mxu0
      %v4603 = vpop.f32.mrf.mxu0
      %v4604 = vadd.f32 0.0, %v4603
      %v4605 = vpop.f32.mrf.mxu0
      %4606 = vmatprep.mubr.bf16.mxu0 0
      %4607 = vmatmul.mubr.bf16.gmra.mxu0 %v4494
      %v4608 = vpop.f32.mrf.mxu0
      %v4609 = vadd.f32 0.0, %v4608
      %v4610 = vpop.f32.mrf.mxu0
      %v4611 = vpop.f32.mrf.mxu0
      %v4612 = vadd.f32 0.0, %v4611
      %v4613 = vpop.f32.mrf.mxu0
      %4614 = vmatprep.mubr.bf16.mxu0 0
      %4615 = vmatmul.mubr.bf16.gmra.mxu0 %v4497
      %v4616 = vpop.f32.mrf.mxu0
      %v4617 = vadd.f32 0.0, %v4616
      %v4618 = vpop.f32.mrf.mxu0
      %v4619 = vpop.f32.mrf.mxu0
      %v4620 = vadd.f32 0.0, %v4619
      %v4621 = vpop.f32.mrf.mxu0
      %4622 = vmatprep.mubr.bf16.mxu0 0
      %4623 = vmatmul.mubr.bf16.gmra.mxu0 %v4500
      %v4624 = vpop.f32.mrf.mxu0
      %v4625 = vadd.f32 0.0, %v4624
      %v4626 = vpop.f32.mrf.mxu0
      %v4627 = vpop.f32.mrf.mxu0
      %v4628 = vadd.f32 0.0, %v4627
      %v4629 = vpop.f32.mrf.mxu0
      %4630 = vmatprep.mubr.bf16.mxu0 0
      %4631 = vmatmul.mubr.bf16.gmra.mxu0 %v4503
      %v4632 = vpop.f32.mrf.mxu0
      %v4633 = vadd.f32 0.0, %v4632
      %v4634 = vpop.f32.mrf.mxu0
      %v4635 = vpop.f32.mrf.mxu0
      %v4636 = vadd.f32 0.0, %v4635
      %v4637 = vpop.f32.mrf.mxu0
      %4638 = vmatprep.mubr.bf16.mxu0 0
      %4639 = vmatmul.mubr.bf16.gmra.mxu0 %v4506
      %v4640 = vpop.f32.mrf.mxu0
      %v4641 = vadd.f32 0.0, %v4640
      %v4642 = vpop.f32.mrf.mxu0
      %v4643 = vpop.f32.mrf.mxu0
      %v4644 = vadd.f32 0.0, %v4643
      %v4645 = vpop.f32.mrf.mxu0
      %4646 = vmatprep.mubr.bf16.mxu0 0
      %4647 = vmatmul.mubr.bf16.gmra.mxu0 %v4509
      %v4648 = vpop.f32.mrf.mxu0
      %v4649 = vadd.f32 0.0, %v4648
      %v4650 = vpop.f32.mrf.mxu0
      %v4651 = vpop.f32.mrf.mxu0
      %v4652 = vadd.f32 0.0, %v4651
      %v4653 = vpop.f32.mrf.mxu0
      %4654 = vmatprep.mubr.bf16.mxu0 0
      %4655 = vmatmul.mubr.bf16.gmra.mxu0 %v4512
      %v4656 = vpop.f32.mrf.mxu0
      %v4657 = vadd.f32 0.0, %v4656
      %v4658 = vpop.f32.mrf.mxu0
      %v4659 = vpop.f32.mrf.mxu0
      %v4660 = vadd.f32 0.0, %v4659
      %v4661 = vpop.f32.mrf.mxu0
      %4662 = vmatprep.mubr.bf16.mxu0 0
      %4663 = vmatmul.mubr.bf16.gmra.mxu0 %v4515
      %v4664 = vpop.f32.mrf.mxu0
      %v4665 = vadd.f32 0.0, %v4664
      %v4666 = vpop.f32.mrf.mxu0
      %v4667 = vpop.f32.mrf.mxu0
      %v4668 = vadd.f32 0.0, %v4667
      %v4669 = vpop.f32.mrf.mxu0
      %4670 = vmatprep.mubr.bf16.mxu0 0
      %4671 = vmatmul.mubr.bf16.gmra.mxu0 %v4518
      %v4672 = vpop.f32.mrf.mxu0
      %v4673 = vadd.f32 0.0, %v4672
      %v4674 = vpop.f32.mrf.mxu0
      %v4675 = vpop.f32.mrf.mxu0
      %v4676 = vadd.f32 0.0, %v4675
      %v4677 = vpop.f32.mrf.mxu0
      %4678 = vmatprep.mubr.bf16.mxu0 0
      %4679 = vmatmul.mubr.bf16.gmra.mxu0 %v4521
      %v4680 = vpop.f32.mrf.mxu0
      %v4681 = vadd.f32 0.0, %v4680
      %v4682 = vpop.f32.mrf.mxu0
      %v4683 = vpop.f32.mrf.mxu0
      %v4684 = vadd.f32 0.0, %v4683
      %v4685 = vpop.f32.mrf.mxu0
      %4686 = vdwg.mxu0
      %v4687 = vadd.f32 %v3961, %v4561
      %v4688 = vadd.f32 %v3962, %v4564
      %v4689 = vadd.f32 %v3963, %v4569
      %v4690 = vadd.f32 %v3964, %v4572
      %v4691 = vadd.f32 %v3965, %v4577
      %v4692 = vadd.f32 %v3966, %v4580
      %v4693 = vadd.f32 %v3967, %v4585
      %v4694 = vadd.f32 %v3968, %v4588
      %v4695 = vadd.f32 %v3969, %v4593
      %v4696 = vadd.f32 %v3970, %v4596
      %v4697 = vadd.f32 %v3971, %v4601
      %v4698 = vadd.f32 %v3972, %v4604
      %v4699 = vadd.f32 %v3973, %v4609
      %v4700 = vadd.f32 %v3974, %v4612
      %v4701 = vadd.f32 %v3975, %v4617
      %v4702 = vadd.f32 %v3976, %v4620
      %v4703 = vadd.f32 %v3977, %v4625
      %v4704 = vadd.f32 %v3978, %v4628
      %v4705 = vadd.f32 %v3979, %v4633
      %v4706 = vadd.f32 %v3980, %v4636
      %v4707 = vadd.f32 %v3981, %v4641
      %v4708 = vadd.f32 %v3982, %v4644
      %v4709 = vadd.f32 %v3983, %v4649
      %v4710 = vadd.f32 %v3984, %v4652
      %v4711 = vadd.f32 %v3985, %v4657
      %v4712 = vadd.f32 %v3986, %v4660
      %v4713 = vadd.f32 %v3987, %v4665
      %v4714 = vadd.f32 %v3988, %v4668
      %v4715 = vadd.f32 %v3989, %v4673
      %v4716 = vadd.f32 %v3990, %v4676
      %v4717 = vadd.f32 %v3991, %v4681
      %v4718 = vadd.f32 %v3992, %v4684
      %v4719 = vld [vmem:[%s3634] sm:$0xe]
      %v4720 = vld [vmem:[%s3634 + $0xc] sm:$0xe]
      %v4721 = vld [vmem:[%s3634 + $0x18] sm:$0xe]
      %v4722 = vld [vmem:[%s3634 + $0x24] sm:$0xe]
      %v4723 = vld [vmem:[%s3634 + $0x30] sm:$0xe]
      %v4724 = vld [vmem:[%s3634 + $0x3c] sm:$0xe]
      %v4725 = vld [vmem:[%s3634 + $0x48] sm:$0xe]
      %v4726 = vld [vmem:[%s3634 + $0x54] sm:$0xe]
      %v4727 = vld [vmem:[%s3634 + $0x60] sm:$0xe]
      %v4728 = vld [vmem:[%s3634 + $0x6c] sm:$0xe]
      %v4729 = vld [vmem:[%s3634 + $0x78] sm:$0xe]
      %v4730 = vld [vmem:[%s3634 + $0x84] sm:$0xe]
      %v4731 = vld [vmem:[%s3634 + $0x90] sm:$0xe]
      %v4732 = vld [vmem:[%s3634 + $0x9c] sm:$0xe]
      %v4733 = vld [vmem:[%s3634 + $0xa8] sm:$0xe]
      %v4734 = vld [vmem:[%s3634 + $0xb4] sm:$0xe]
      %v4783 = vrot.slane %v4719, 5
      %v4784 = vrot.slane %v4783, 4
      %v4785 = vrot.slane %v3994, 5
      %v4786 = vsel %vm1673, %v4784, %v4785
      %v4787 = vrot.slane %v4785, 4
      %v4788 = vrot.slane %v3995, 5
      %v4789 = vsel %vm1673, %v4787, %v4788
      %v4790 = vrot.slane %v4720, 5
      %v4791 = vrot.slane %v4790, 4
      %v4792 = vrot.slane %v3997, 5
      %v4793 = vsel %vm1673, %v4791, %v4792
      %v4794 = vrot.slane %v4792, 4
      %v4795 = vrot.slane %v3998, 5
      %v4796 = vsel %vm1673, %v4794, %v4795
      %v4797 = vrot.slane %v4721, 5
      %v4798 = vrot.slane %v4797, 4
      %v4799 = vrot.slane %v4000, 5
      %v4800 = vsel %vm1673, %v4798, %v4799
      %v4801 = vrot.slane %v4799, 4
      %v4802 = vrot.slane %v4001, 5
      %v4803 = vsel %vm1673, %v4801, %v4802
      %v4804 = vrot.slane %v4722, 5
      %v4805 = vrot.slane %v4804, 4
      %v4806 = vrot.slane %v4003, 5
      %v4807 = vsel %vm1673, %v4805, %v4806
      %v4808 = vrot.slane %v4806, 4
      %v4809 = vrot.slane %v4004, 5
      %v4810 = vsel %vm1673, %v4808, %v4809
      %v4811 = vrot.slane %v4723, 5
      %v4812 = vrot.slane %v4811, 4
      %v4813 = vrot.slane %v4006, 5
      %v4814 = vsel %vm1673, %v4812, %v4813
      %v4815 = vrot.slane %v4813, 4
      %v4816 = vrot.slane %v4007, 5
      %v4817 = vsel %vm1673, %v4815, %v4816
      %v4818 = vrot.slane %v4724, 5
      %v4819 = vrot.slane %v4818, 4
      %v4820 = vrot.slane %v4009, 5
      %v4821 = vsel %vm1673, %v4819, %v4820
      %v4822 = vrot.slane %v4820, 4
      %v4823 = vrot.slane %v4010, 5
      %v4824 = vsel %vm1673, %v4822, %v4823
      %v4825 = vrot.slane %v4725, 5
      %v4826 = vrot.slane %v4825, 4
      %v4827 = vrot.slane %v4012, 5
      %v4828 = vsel %vm1673, %v4826, %v4827
      %v4829 = vrot.slane %v4827, 4
      %v4830 = vrot.slane %v4013, 5
      %v4831 = vsel %vm1673, %v4829, %v4830
      %v4832 = vrot.slane %v4726, 5
      %v4833 = vrot.slane %v4832, 4
      %v4834 = vrot.slane %v4015, 5
      %v4835 = vsel %vm1673, %v4833, %v4834
      %v4836 = vrot.slane %v4834, 4
      %v4837 = vrot.slane %v4016, 5
      %v4838 = vsel %vm1673, %v4836, %v4837
      %v4839 = vrot.slane %v4727, 5
      %v4840 = vrot.slane %v4839, 4
      %v4841 = vrot.slane %v4018, 5
      %v4842 = vsel %vm1673, %v4840, %v4841
      %v4843 = vrot.slane %v4841, 4
      %v4844 = vrot.slane %v4019, 5
      %v4845 = vsel %vm1673, %v4843, %v4844
      %v4846 = vrot.slane %v4728, 5
      %v4847 = vrot.slane %v4846, 4
      %v4848 = vrot.slane %v4021, 5
      %v4849 = vsel %vm1673, %v4847, %v4848
      %v4850 = vrot.slane %v4848, 4
      %v4851 = vrot.slane %v4022, 5
      %v4852 = vsel %vm1673, %v4850, %v4851
      %v4853 = vrot.slane %v4729, 5
      %v4854 = vrot.slane %v4853, 4
      %v4855 = vrot.slane %v4024, 5
      %v4856 = vsel %vm1673, %v4854, %v4855
      %v4857 = vrot.slane %v4855, 4
      %v4858 = vrot.slane %v4025, 5
      %v4859 = vsel %vm1673, %v4857, %v4858
      %v4860 = vrot.slane %v4730, 5
      %v4861 = vrot.slane %v4860, 4
      %v4862 = vrot.slane %v4027, 5
      %v4863 = vsel %vm1673, %v4861, %v4862
      %v4864 = vrot.slane %v4862, 4
      %v4865 = vrot.slane %v4028, 5
      %v4866 = vsel %vm1673, %v4864, %v4865
      %v4867 = vrot.slane %v4731, 5
      %v4868 = vrot.slane %v4867, 4
      %v4869 = vrot.slane %v4030, 5
      %v4870 = vsel %vm1673, %v4868, %v4869
      %v4871 = vrot.slane %v4869, 4
      %v4872 = vrot.slane %v4031, 5
      %v4873 = vsel %vm1673, %v4871, %v4872
      %v4874 = vrot.slane %v4732, 5
      %v4875 = vrot.slane %v4874, 4
      %v4876 = vrot.slane %v4033, 5
      %v4877 = vsel %vm1673, %v4875, %v4876
      %v4878 = vrot.slane %v4876, 4
      %v4879 = vrot.slane %v4034, 5
      %v4880 = vsel %vm1673, %v4878, %v4879
      %v4881 = vrot.slane %v4733, 5
      %v4882 = vrot.slane %v4881, 4
      %v4883 = vrot.slane %v4036, 5
      %v4884 = vsel %vm1673, %v4882, %v4883
      %v4885 = vrot.slane %v4883, 4
      %v4886 = vrot.slane %v4037, 5
      %v4887 = vsel %vm1673, %v4885, %v4886
      %v4888 = vrot.slane %v4734, 5
      %v4889 = vrot.slane %v4888, 4
      %v4890 = vrot.slane %v4039, 5
      %v4891 = vsel %vm1673, %v4889, %v4890
      %v4892 = vrot.slane %v4890, 4
      %v4893 = vrot.slane %v4040, 5
      %v4894 = vsel %vm1673, %v4892, %v4893
      %s4895 = scalar_lea.vmem %s1, 16
      %v4896 = vld [vmem:[%s4895] sm:$0x3]
      %v4897 = vunpack.c.l.b16 %v4786
      %v4898 = vunpack.c.l.b16 %v4789
      %v4899 = vunpack.c.l.b16 %v4793
      %v4900 = vunpack.c.l.b16 %v4796
      %v4901 = vunpack.c.l.b16 %v4800
      %v4902 = vunpack.c.l.b16 %v4803
      %v4903 = vunpack.c.l.b16 %v4807
      %v4904 = vunpack.c.l.b16 %v4810
      %v4905 = vunpack.c.l.b16 %v4814
      %v4906 = vunpack.c.l.b16 %v4817
      %v4907 = vunpack.c.l.b16 %v4821
      %v4908 = vunpack.c.l.b16 %v4824
      %v4909 = vunpack.c.l.b16 %v4828
      %v4910 = vunpack.c.l.b16 %v4831
      %v4911 = vunpack.c.l.b16 %v4835
      %v4912 = vunpack.c.l.b16 %v4838
      %v4913 = vunpack.c.l.b16 %v4842
      %v4914 = vunpack.c.l.b16 %v4845
      %v4915 = vunpack.c.l.b16 %v4849
      %v4916 = vunpack.c.l.b16 %v4852
      %v4917 = vunpack.c.l.b16 %v4856
      %v4918 = vunpack.c.l.b16 %v4859
      %v4919 = vunpack.c.l.b16 %v4863
      %v4920 = vunpack.c.l.b16 %v4866
      %v4921 = vunpack.c.l.b16 %v4870
      %v4922 = vunpack.c.l.b16 %v4873
      %v4923 = vunpack.c.l.b16 %v4877
      %v4924 = vunpack.c.l.b16 %v4880
      %v4925 = vunpack.c.l.b16 %v4884
      %v4926 = vunpack.c.l.b16 %v4887
      %v4927 = vunpack.c.l.b16 %v4891
      %v4928 = vunpack.c.l.b16 %v4894
      %v4929 = vpack.c.b16 %v4898, %v4897
      %v4930 = vpack.c.b16 %v4900, %v4899
      %v4931 = vpack.c.b16 %v4902, %v4901
      %v4932 = vpack.c.b16 %v4904, %v4903
      %v4933 = vpack.c.b16 %v4906, %v4905
      %v4934 = vpack.c.b16 %v4908, %v4907
      %v4935 = vpack.c.b16 %v4910, %v4909
      %v4936 = vpack.c.b16 %v4912, %v4911
      %v4937 = vpack.c.b16 %v4914, %v4913
      %v4938 = vpack.c.b16 %v4916, %v4915
      %v4939 = vpack.c.b16 %v4918, %v4917
      %v4940 = vpack.c.b16 %v4920, %v4919
      %v4941 = vpack.c.b16 %v4922, %v4921
      %v4942 = vpack.c.b16 %v4924, %v4923
      %v4943 = vpack.c.b16 %v4926, %v4925
      %v4944 = vpack.c.b16 %v4928, %v4927
      %v4946 = vsel %vm1117, %v4929, 0
      %v4949 = vsel %vm1117, %v4930, 0
      %v4952 = vsel %vm1117, %v4931, 0
      %v4955 = vsel %vm1117, %v4932, 0
      %v4958 = vsel %vm1117, %v4933, 0
      %v4961 = vsel %vm1117, %v4934, 0
      %v4964 = vsel %vm1117, %v4935, 0
      %v4967 = vsel %vm1117, %v4936, 0
      %v4970 = vsel %vm1117, %v4937, 0
      %v4973 = vsel %vm1117, %v4938, 0
      %v4976 = vsel %vm1117, %v4939, 0
      %v4979 = vsel %vm1117, %v4940, 0
      %v4982 = vsel %vm1117, %v4941, 0
      %v4985 = vsel %vm1117, %v4942, 0
      %v4988 = vsel %vm1117, %v4943, 0
      %v4991 = vsel %vm1117, %v4944, 0
      %v4994 = vsel %vm1166, %v4896, 0
      %4996 = vmatprep.subr.bf16.mxu0 0
      %4997 = vmatpush1.bf16.msra.mxu0 0
      %4998 = vmatprep.subr.bf16.mxu0 0
      %4999 = vmatpush1.bf16.msra.mxu0 0
      %5000 = vmatprep.subr.bf16.mxu0 0
      %5001 = vmatpush1.bf16.msra.mxu0 0
      %5002 = vmatprep.subr.bf16.mxu0 0
      %5003 = vmatpush1.bf16.msra.mxu0 0
      %5004 = vmatprep.subr.bf16.mxu0 0
      %5005 = vmatpush1.bf16.msra.mxu0 0
      %5006 = vmatprep.subr.bf16.mxu0 0
      %5007 = vmatpush1.bf16.msra.mxu0 0
      %5008 = vmatprep.subr.bf16.mxu0 0
      %5009 = vmatpush1.bf16.msra.mxu0 0
      %5010 = vmatprep.subr.bf16.mxu0 0
      %5011 = vmatpush1.bf16.msra.mxu0 %v4994
      %5012 = vmatprep.subr.bf16.mxu0 0
      %5013 = vmatpush2.bf16.msra.mxu0 0
      %5014 = vmatprep.subr.bf16.mxu0 0
      %5015 = vmatpush2.bf16.msra.mxu0 0
      %5016 = vmatprep.subr.bf16.mxu0 0
      %5017 = vmatpush2.bf16.msra.mxu0 0
      %5018 = vmatprep.subr.bf16.mxu0 0
      %5019 = vmatpush2.bf16.msra.mxu0 0
      %5020 = vmatprep.subr.bf16.mxu0 0
      %5021 = vmatpush2.bf16.msra.mxu0 0
      %5022 = vmatprep.subr.bf16.mxu0 0
      %5023 = vmatpush2.bf16.msra.mxu0 0
      %5024 = vmatprep.subr.bf16.mxu0 0
      %5025 = vmatpush2.bf16.msra.mxu0 0
      %5026 = vmatprep.subr.bf16.mxu0 0
      %5027 = vmatpush2.bf16.msra.mxu0 0
      %5028 = vmatprep.mubr.bf16.mxu0 0
      %5029 = vmatmul.mubr.bf16.gmra.mxu0 %v4946
      %v5030 = vpop.f32.mrf.mxu0
      %v5031 = vadd.f32 0.0, %v5030
      %v5032 = vpop.f32.mrf.mxu0
      %v5033 = vpop.f32.mrf.mxu0
      %v5034 = vadd.f32 0.0, %v5033
      %v5035 = vpop.f32.mrf.mxu0
      %5036 = vmatprep.mubr.bf16.mxu0 0
      %5037 = vmatmul.mubr.bf16.gmra.mxu0 %v4949
      %v5038 = vpop.f32.mrf.mxu0
      %v5039 = vadd.f32 0.0, %v5038
      %v5040 = vpop.f32.mrf.mxu0
      %v5041 = vpop.f32.mrf.mxu0
      %v5042 = vadd.f32 0.0, %v5041
      %v5043 = vpop.f32.mrf.mxu0
      %5044 = vmatprep.mubr.bf16.mxu0 0
      %5045 = vmatmul.mubr.bf16.gmra.mxu0 %v4952
      %v5046 = vpop.f32.mrf.mxu0
      %v5047 = vadd.f32 0.0, %v5046
      %v5048 = vpop.f32.mrf.mxu0
      %v5049 = vpop.f32.mrf.mxu0
      %v5050 = vadd.f32 0.0, %v5049
      %v5051 = vpop.f32.mrf.mxu0
      %5052 = vmatprep.mubr.bf16.mxu0 0
      %5053 = vmatmul.mubr.bf16.gmra.mxu0 %v4955
      %v5054 = vpop.f32.mrf.mxu0
      %v5055 = vadd.f32 0.0, %v5054
      %v5056 = vpop.f32.mrf.mxu0
      %v5057 = vpop.f32.mrf.mxu0
      %v5058 = vadd.f32 0.0, %v5057
      %v5059 = vpop.f32.mrf.mxu0
      %5060 = vmatprep.mubr.bf16.mxu0 0
      %5061 = vmatmul.mubr.bf16.gmra.mxu0 %v4958
      %v5062 = vpop.f32.mrf.mxu0
      %v5063 = vadd.f32 0.0, %v5062
      %v5064 = vpop.f32.mrf.mxu0
      %v5065 = vpop.f32.mrf.mxu0
      %v5066 = vadd.f32 0.0, %v5065
      %v5067 = vpop.f32.mrf.mxu0
      %5068 = vmatprep.mubr.bf16.mxu0 0
      %5069 = vmatmul.mubr.bf16.gmra.mxu0 %v4961
      %v5070 = vpop.f32.mrf.mxu0
      %v5071 = vadd.f32 0.0, %v5070
      %v5072 = vpop.f32.mrf.mxu0
      %v5073 = vpop.f32.mrf.mxu0
      %v5074 = vadd.f32 0.0, %v5073
      %v5075 = vpop.f32.mrf.mxu0
      %5076 = vmatprep.mubr.bf16.mxu0 0
      %5077 = vmatmul.mubr.bf16.gmra.mxu0 %v4964
      %v5078 = vpop.f32.mrf.mxu0
      %v5079 = vadd.f32 0.0, %v5078
      %v5080 = vpop.f32.mrf.mxu0
      %v5081 = vpop.f32.mrf.mxu0
      %v5082 = vadd.f32 0.0, %v5081
      %v5083 = vpop.f32.mrf.mxu0
      %5084 = vmatprep.mubr.bf16.mxu0 0
      %5085 = vmatmul.mubr.bf16.gmra.mxu0 %v4967
      %v5086 = vpop.f32.mrf.mxu0
      %v5087 = vadd.f32 0.0, %v5086
      %v5088 = vpop.f32.mrf.mxu0
      %v5089 = vpop.f32.mrf.mxu0
      %v5090 = vadd.f32 0.0, %v5089
      %v5091 = vpop.f32.mrf.mxu0
      %5092 = vmatprep.mubr.bf16.mxu0 0
      %5093 = vmatmul.mubr.bf16.gmra.mxu0 %v4970
      %v5094 = vpop.f32.mrf.mxu0
      %v5095 = vadd.f32 0.0, %v5094
      %v5096 = vpop.f32.mrf.mxu0
      %v5097 = vpop.f32.mrf.mxu0
      %v5098 = vadd.f32 0.0, %v5097
      %v5099 = vpop.f32.mrf.mxu0
      %5100 = vmatprep.mubr.bf16.mxu0 0
      %5101 = vmatmul.mubr.bf16.gmra.mxu0 %v4973
      %v5102 = vpop.f32.mrf.mxu0
      %v5103 = vadd.f32 0.0, %v5102
      %v5104 = vpop.f32.mrf.mxu0
      %v5105 = vpop.f32.mrf.mxu0
      %v5106 = vadd.f32 0.0, %v5105
      %v5107 = vpop.f32.mrf.mxu0
      %5108 = vmatprep.mubr.bf16.mxu0 0
      %5109 = vmatmul.mubr.bf16.gmra.mxu0 %v4976
      %v5110 = vpop.f32.mrf.mxu0
      %v5111 = vadd.f32 0.0, %v5110
      %v5112 = vpop.f32.mrf.mxu0
      %v5113 = vpop.f32.mrf.mxu0
      %v5114 = vadd.f32 0.0, %v5113
      %v5115 = vpop.f32.mrf.mxu0
      %5116 = vmatprep.mubr.bf16.mxu0 0
      %5117 = vmatmul.mubr.bf16.gmra.mxu0 %v4979
      %v5118 = vpop.f32.mrf.mxu0
      %v5119 = vadd.f32 0.0, %v5118
      %v5120 = vpop.f32.mrf.mxu0
      %v5121 = vpop.f32.mrf.mxu0
      %v5122 = vadd.f32 0.0, %v5121
      %v5123 = vpop.f32.mrf.mxu0
      %5124 = vmatprep.mubr.bf16.mxu0 0
      %5125 = vmatmul.mubr.bf16.gmra.mxu0 %v4982
      %v5126 = vpop.f32.mrf.mxu0
      %v5127 = vadd.f32 0.0, %v5126
      %v5128 = vpop.f32.mrf.mxu0
      %v5129 = vpop.f32.mrf.mxu0
      %v5130 = vadd.f32 0.0, %v5129
      %v5131 = vpop.f32.mrf.mxu0
      %5132 = vmatprep.mubr.bf16.mxu0 0
      %5133 = vmatmul.mubr.bf16.gmra.mxu0 %v4985
      %v5134 = vpop.f32.mrf.mxu0
      %v5135 = vadd.f32 0.0, %v5134
      %v5136 = vpop.f32.mrf.mxu0
      %v5137 = vpop.f32.mrf.mxu0
      %v5138 = vadd.f32 0.0, %v5137
      %v5139 = vpop.f32.mrf.mxu0
      %5140 = vmatprep.mubr.bf16.mxu0 0
      %5141 = vmatmul.mubr.bf16.gmra.mxu0 %v4988
      %v5142 = vpop.f32.mrf.mxu0
      %v5143 = vadd.f32 0.0, %v5142
      %v5144 = vpop.f32.mrf.mxu0
      %v5145 = vpop.f32.mrf.mxu0
      %v5146 = vadd.f32 0.0, %v5145
      %v5147 = vpop.f32.mrf.mxu0
      %5148 = vmatprep.mubr.bf16.mxu0 0
      %5149 = vmatmul.mubr.bf16.gmra.mxu0 %v4991
      %v5150 = vpop.f32.mrf.mxu0
      %v5151 = vadd.f32 0.0, %v5150
      %v5152 = vpop.f32.mrf.mxu0
      %v5153 = vpop.f32.mrf.mxu0
      %v5154 = vadd.f32 0.0, %v5153
      %v5155 = vpop.f32.mrf.mxu0
      %5156 = vdwg.mxu0
      %v5157 = vadd.f32 %v4687, %v5031
      %v5158 = vadd.f32 %v4688, %v5034
      %v5159 = vadd.f32 %v4689, %v5039
      %v5160 = vadd.f32 %v4690, %v5042
      %v5161 = vadd.f32 %v4691, %v5047
      %v5162 = vadd.f32 %v4692, %v5050
      %v5163 = vadd.f32 %v4693, %v5055
      %v5164 = vadd.f32 %v4694, %v5058
      %v5165 = vadd.f32 %v4695, %v5063
      %v5166 = vadd.f32 %v4696, %v5066
      %v5167 = vadd.f32 %v4697, %v5071
      %v5168 = vadd.f32 %v4698, %v5074
      %v5169 = vadd.f32 %v4699, %v5079
      %v5170 = vadd.f32 %v4700, %v5082
      %v5171 = vadd.f32 %v4701, %v5087
      %v5172 = vadd.f32 %v4702, %v5090
      %v5173 = vadd.f32 %v4703, %v5095
      %v5174 = vadd.f32 %v4704, %v5098
      %v5175 = vadd.f32 %v4705, %v5103
      %v5176 = vadd.f32 %v4706, %v5106
      %v5177 = vadd.f32 %v4707, %v5111
      %v5178 = vadd.f32 %v4708, %v5114
      %v5179 = vadd.f32 %v4709, %v5119
      %v5180 = vadd.f32 %v4710, %v5122
      %v5181 = vadd.f32 %v4711, %v5127
      %v5182 = vadd.f32 %v4712, %v5130
      %v5183 = vadd.f32 %v4713, %v5135
      %v5184 = vadd.f32 %v4714, %v5138
      %v5185 = vadd.f32 %v4715, %v5143
      %v5186 = vadd.f32 %v4716, %v5146
      %v5187 = vadd.f32 %v4717, %v5151
      %v5188 = vadd.f32 %v4718, %v5154
      %p5189 = scmp.eq.s32.totalorder %s15, 0
      // Predicated region
      $region29: #{double_conv_block_forward.3} parent=27 // pred_check
        %p5190 = pneg %p5189
      $region30: #{double_conv_block_forward.3} parent=27 // pred_check_branch
        %5192 = sbr.rel (%p5190) target = $region32
      $region31: #{double_conv_block_forward.3} parent=27 // pred_region
        %vm5193 = vcmask 58368
        %5194 = vst.msk [vmem:[%s3] sm:$0x3] %vm5193, 0.0
      $region32: #{double_conv_block_forward.3} parent=27 // pred_fallthru
        _
      %vm5195 = vcmask 64512
      %v5196 = vsel %vm5195, %v5157, 0.0
      %v5197 = vsel %vm5195, %v5158, 0.0
      %v5198 = vadd.f32 %v5196, %v5197
      %v5199 = vsel %vm5195, %v5159, 0.0
      %v5200 = vadd.f32 %v5198, %v5199
      %v5201 = vsel %vm5195, %v5160, 0.0
      %v5202 = vadd.f32 %v5200, %v5201
      %v5203 = vsel %vm5195, %v5161, 0.0
      %v5204 = vadd.f32 %v5202, %v5203
      %v5205 = vsel %vm5195, %v5162, 0.0
      %v5206 = vadd.f32 %v5204, %v5205
      %v5207 = vsel %vm5195, %v5163, 0.0
      %v5208 = vadd.f32 %v5206, %v5207
      %v5209 = vsel %vm5195, %v5164, 0.0
      %v5210 = vadd.f32 %v5208, %v5209
      %v5211 = vsel %vm5195, %v5165, 0.0
      %v5212 = vadd.f32 %v5210, %v5211
      %v5213 = vsel %vm5195, %v5166, 0.0
      %v5214 = vadd.f32 %v5212, %v5213
      %v5215 = vsel %vm5195, %v5167, 0.0
      %v5216 = vadd.f32 %v5214, %v5215
      %v5217 = vsel %vm5195, %v5168, 0.0
      %v5218 = vadd.f32 %v5216, %v5217
      %v5219 = vsel %vm5195, %v5169, 0.0
      %v5220 = vadd.f32 %v5218, %v5219
      %v5221 = vsel %vm5195, %v5170, 0.0
      %v5222 = vadd.f32 %v5220, %v5221
      %v5223 = vsel %vm5195, %v5171, 0.0
      %v5224 = vadd.f32 %v5222, %v5223
      %v5225 = vsel %vm5195, %v5172, 0.0
      %v5226 = vadd.f32 %v5224, %v5225
      %v5227 = vsel %vm5195, %v5173, 0.0
      %v5228 = vadd.f32 %v5226, %v5227
      %v5229 = vsel %vm5195, %v5174, 0.0
      %v5230 = vadd.f32 %v5228, %v5229
      %v5231 = vsel %vm5195, %v5175, 0.0
      %v5232 = vadd.f32 %v5230, %v5231
      %v5233 = vsel %vm5195, %v5176, 0.0
      %v5234 = vadd.f32 %v5232, %v5233
      %v5235 = vsel %vm5195, %v5177, 0.0
      %v5236 = vadd.f32 %v5234, %v5235
      %v5237 = vsel %vm5195, %v5178, 0.0
      %v5238 = vadd.f32 %v5236, %v5237
      %v5239 = vsel %vm5195, %v5179, 0.0
      %v5240 = vadd.f32 %v5238, %v5239
      %v5241 = vsel %vm5195, %v5180, 0.0
      %v5242 = vadd.f32 %v5240, %v5241
      %v5243 = vsel %vm5195, %v5181, 0.0
      %v5244 = vadd.f32 %v5242, %v5243
      %v5245 = vsel %vm5195, %v5182, 0.0
      %v5246 = vadd.f32 %v5244, %v5245
      %v5247 = vsel %vm5195, %v5183, 0.0
      %v5248 = vadd.f32 %v5246, %v5247
      %v5249 = vsel %vm5195, %v5184, 0.0
      %v5250 = vadd.f32 %v5248, %v5249
      %v5251 = vsel %vm5195, %v5185, 0.0
      %v5252 = vadd.f32 %v5250, %v5251
      %v5253 = vsel %vm5195, %v5186, 0.0
      %v5254 = vadd.f32 %v5252, %v5253
      %v5255 = vsel %vm5195, %v5187, 0.0
      %v5256 = vadd.f32 %v5254, %v5255
      %v5257 = vsel %vm5195, %v5188, 0.0
      %v5258 = vadd.f32 %v5256, %v5257
      %v5259 = vrot.slane %v5258, 4
      %v5260 = vadd.f32 %v5258, %v5259
      %v5261 = vrot.slane %v5260, 2
      %v5262 = vadd.f32 %v5260, %v5261
      %v5263 = vrot.slane %v5262, 1
      %v5264 = vadd.f32 %v5262, %v5263
      %v5265 = vmul.f32 %v5157, %v5157
      %v5266 = vmul.f32 %v5158, %v5158
      %v5267 = vmul.f32 %v5159, %v5159
      %v5268 = vmul.f32 %v5160, %v5160
      %v5269 = vmul.f32 %v5161, %v5161
      %v5270 = vmul.f32 %v5162, %v5162
      %v5271 = vmul.f32 %v5163, %v5163
      %v5272 = vmul.f32 %v5164, %v5164
      %v5273 = vmul.f32 %v5165, %v5165
      %v5274 = vmul.f32 %v5166, %v5166
      %v5275 = vmul.f32 %v5167, %v5167
      %v5276 = vmul.f32 %v5168, %v5168
      %v5277 = vmul.f32 %v5169, %v5169
      %v5278 = vmul.f32 %v5170, %v5170
      %v5279 = vmul.f32 %v5171, %v5171
      %v5280 = vmul.f32 %v5172, %v5172
      %v5281 = vmul.f32 %v5173, %v5173
      %v5282 = vmul.f32 %v5174, %v5174
      %v5283 = vmul.f32 %v5175, %v5175
      %v5284 = vmul.f32 %v5176, %v5176
      %v5285 = vmul.f32 %v5177, %v5177
      %v5286 = vmul.f32 %v5178, %v5178
      %v5287 = vmul.f32 %v5179, %v5179
      %v5288 = vmul.f32 %v5180, %v5180
      %v5289 = vmul.f32 %v5181, %v5181
      %v5290 = vmul.f32 %v5182, %v5182
      %v5291 = vmul.f32 %v5183, %v5183
      %v5292 = vmul.f32 %v5184, %v5184
      %v5293 = vmul.f32 %v5185, %v5185
      %v5294 = vmul.f32 %v5186, %v5186
      %v5295 = vmul.f32 %v5187, %v5187
      %v5296 = vmul.f32 %v5188, %v5188
      %v5297 = vsel %vm5195, %v5265, 0.0
      %v5298 = vsel %vm5195, %v5266, 0.0
      %v5299 = vadd.f32 %v5297, %v5298
      %v5300 = vsel %vm5195, %v5267, 0.0
      %v5301 = vadd.f32 %v5299, %v5300
      %v5302 = vsel %vm5195, %v5268, 0.0
      %v5303 = vadd.f32 %v5301, %v5302
      %v5304 = vsel %vm5195, %v5269, 0.0
      %v5305 = vadd.f32 %v5303, %v5304
      %v5306 = vsel %vm5195, %v5270, 0.0
      %v5307 = vadd.f32 %v5305, %v5306
      %v5308 = vsel %vm5195, %v5271, 0.0
      %v5309 = vadd.f32 %v5307, %v5308
      %v5310 = vsel %vm5195, %v5272, 0.0
      %v5311 = vadd.f32 %v5309, %v5310
      %v5312 = vsel %vm5195, %v5273, 0.0
      %v5313 = vadd.f32 %v5311, %v5312
      %v5314 = vsel %vm5195, %v5274, 0.0
      %v5315 = vadd.f32 %v5313, %v5314
      %v5316 = vsel %vm5195, %v5275, 0.0
      %v5317 = vadd.f32 %v5315, %v5316
      %v5318 = vsel %vm5195, %v5276, 0.0
      %v5319 = vadd.f32 %v5317, %v5318
      %v5320 = vsel %vm5195, %v5277, 0.0
      %v5321 = vadd.f32 %v5319, %v5320
      %v5322 = vsel %vm5195, %v5278, 0.0
      %v5323 = vadd.f32 %v5321, %v5322
      %v5324 = vsel %vm5195, %v5279, 0.0
      %v5325 = vadd.f32 %v5323, %v5324
      %v5326 = vsel %vm5195, %v5280, 0.0
      %v5327 = vadd.f32 %v5325, %v5326
      %v5328 = vsel %vm5195, %v5281, 0.0
      %v5329 = vadd.f32 %v5327, %v5328
      %v5330 = vsel %vm5195, %v5282, 0.0
      %v5331 = vadd.f32 %v5329, %v5330
      %v5332 = vsel %vm5195, %v5283, 0.0
      %v5333 = vadd.f32 %v5331, %v5332
      %v5334 = vsel %vm5195, %v5284, 0.0
      %v5335 = vadd.f32 %v5333, %v5334
      %v5336 = vsel %vm5195, %v5285, 0.0
      %v5337 = vadd.f32 %v5335, %v5336
      %v5338 = vsel %vm5195, %v5286, 0.0
      %v5339 = vadd.f32 %v5337, %v5338
      %v5340 = vsel %vm5195, %v5287, 0.0
      %v5341 = vadd.f32 %v5339, %v5340
      %v5342 = vsel %vm5195, %v5288, 0.0
      %v5343 = vadd.f32 %v5341, %v5342
      %v5344 = vsel %vm5195, %v5289, 0.0
      %v5345 = vadd.f32 %v5343, %v5344
      %v5346 = vsel %vm5195, %v5290, 0.0
      %v5347 = vadd.f32 %v5345, %v5346
      %v5348 = vsel %vm5195, %v5291, 0.0
      %v5349 = vadd.f32 %v5347, %v5348
      %v5350 = vsel %vm5195, %v5292, 0.0
      %v5351 = vadd.f32 %v5349, %v5350
      %v5352 = vsel %vm5195, %v5293, 0.0
      %v5353 = vadd.f32 %v5351, %v5352
      %v5354 = vsel %vm5195, %v5294, 0.0
      %v5355 = vadd.f32 %v5353, %v5354
      %v5356 = vsel %vm5195, %v5295, 0.0
      %v5357 = vadd.f32 %v5355, %v5356
      %v5358 = vsel %vm5195, %v5296, 0.0
      %v5359 = vadd.f32 %v5357, %v5358
      %v5360 = vrot.slane %v5359, 4
      %v5361 = vadd.f32 %v5359, %v5360
      %v5362 = vrot.slane %v5361, 2
      %v5363 = vadd.f32 %v5361, %v5362
      %v5364 = vrot.slane %v5363, 1
      %v5365 = vadd.f32 %v5363, %v5364
      %v5366 = vld [vmem:[%s3] sm:$0x3]
      %vm5367 = vcmask 1040384
      %v5368 = vsel %vm5367, %v5264, %v5365
      %v5369 = vadd.f32 %v5366, %v5368
      %vm5370 = vcmask 58368
      %5371 = vst.msk [vmem:[%s3] sm:$0x3] %vm5370, %v5369
      %v5372 = vpack.c.bf16 %v5158, %v5157
      %v5373 = vpack.c.bf16 %v5160, %v5159
      %v5374 = vpack.c.bf16 %v5162, %v5161
      %v5375 = vpack.c.bf16 %v5164, %v5163
      %v5376 = vpack.c.bf16 %v5166, %v5165
      %v5377 = vpack.c.bf16 %v5168, %v5167
      %v5378 = vpack.c.bf16 %v5170, %v5169
      %v5379 = vpack.c.bf16 %v5172, %v5171
      %v5380 = vpack.c.bf16 %v5174, %v5173
      %v5381 = vpack.c.bf16 %v5176, %v5175
      %v5382 = vpack.c.bf16 %v5178, %v5177
      %v5383 = vpack.c.bf16 %v5180, %v5179
      %v5384 = vpack.c.bf16 %v5182, %v5181
      %v5385 = vpack.c.bf16 %v5184, %v5183
      %v5386 = vpack.c.bf16 %v5186, %v5185
      %v5387 = vpack.c.bf16 %v5188, %v5187
      %v5404 = vunpack.c.l.b16 %v5372
      %v5405 = vunpack.c.h.b16 %v5372
      %v5406 = vunpack.c.l.b16 %v5373
      %v5407 = vunpack.c.h.b16 %v5373
      %v5408 = vunpack.c.l.b16 %v5374
      %v5409 = vunpack.c.h.b16 %v5374
      %v5410 = vunpack.c.l.b16 %v5375
      %v5411 = vunpack.c.h.b16 %v5375
      %v5412 = vunpack.c.l.b16 %v5376
      %v5413 = vunpack.c.h.b16 %v5376
      %v5414 = vunpack.c.l.b16 %v5377
      %v5415 = vunpack.c.h.b16 %v5377
      %v5416 = vunpack.c.l.b16 %v5378
      %v5417 = vunpack.c.h.b16 %v5378
      %v5418 = vunpack.c.l.b16 %v5379
      %v5419 = vunpack.c.h.b16 %v5379
      %v5420 = vunpack.c.l.b16 %v5380
      %v5421 = vunpack.c.h.b16 %v5380
      %v5422 = vunpack.c.l.b16 %v5381
      %v5423 = vunpack.c.h.b16 %v5381
      %v5424 = vunpack.c.l.b16 %v5382
      %v5425 = vunpack.c.h.b16 %v5382
      %v5426 = vunpack.c.l.b16 %v5383
      %v5427 = vunpack.c.h.b16 %v5383
      %v5428 = vunpack.c.l.b16 %v5384
      %v5429 = vunpack.c.h.b16 %v5384
      %v5430 = vunpack.c.l.b16 %v5385
      %v5431 = vunpack.c.h.b16 %v5385
      %v5432 = vunpack.c.l.b16 %v5386
      %v5433 = vunpack.c.h.b16 %v5386
      %v5434 = vunpack.c.l.b16 %v5387
      %v5435 = vunpack.c.h.b16 %v5387
      %v5436 = vpack.c.b16 %v5404, %v5404
      %v5437 = vpack.c.b16 %v5405, %v5405
      %v5438 = vpack.c.b16 %v5406, %v5406
      %v5439 = vpack.c.b16 %v5407, %v5407
      %v5440 = vpack.c.b16 %v5408, %v5408
      %v5441 = vpack.c.b16 %v5409, %v5409
      %v5442 = vpack.c.b16 %v5410, %v5410
      %v5443 = vpack.c.b16 %v5411, %v5411
      %v5444 = vpack.c.b16 %v5412, %v5412
      %v5445 = vpack.c.b16 %v5413, %v5413
      %v5446 = vpack.c.b16 %v5414, %v5414
      %v5447 = vpack.c.b16 %v5415, %v5415
      %v5448 = vpack.c.b16 %v5416, %v5416
      %v5449 = vpack.c.b16 %v5417, %v5417
      %v5450 = vpack.c.b16 %v5418, %v5418
      %v5451 = vpack.c.b16 %v5419, %v5419
      %v5452 = vpack.c.b16 %v5420, %v5420
      %v5453 = vpack.c.b16 %v5421, %v5421
      %v5454 = vpack.c.b16 %v5422, %v5422
      %v5455 = vpack.c.b16 %v5423, %v5423
      %v5456 = vpack.c.b16 %v5424, %v5424
      %v5457 = vpack.c.b16 %v5425, %v5425
      %v5458 = vpack.c.b16 %v5426, %v5426
      %v5459 = vpack.c.b16 %v5427, %v5427
      %v5460 = vpack.c.b16 %v5428, %v5428
      %v5461 = vpack.c.b16 %v5429, %v5429
      %v5462 = vpack.c.b16 %v5430, %v5430
      %v5463 = vpack.c.b16 %v5431, %v5431
      %v5464 = vpack.c.b16 %v5432, %v5432
      %v5465 = vpack.c.b16 %v5433, %v5433
      %v5466 = vpack.c.b16 %v5434, %v5434
      %v5467 = vpack.c.b16 %v5435, %v5435
      %vm5500 = vcmask 60416
      %5501 = vst.msk [vmem:[%s168] sm:$0xf] %vm5500, %v5436
      %5502 = vst.msk [vmem:[%s168 + $0x4] sm:$0xf] %vm5500, %v5437
      %5503 = vst.msk [vmem:[%s168 + $0x8] sm:$0xf] %vm5500, %v5438
      %5504 = vst.msk [vmem:[%s168 + $0xc] sm:$0xf] %vm5500, %v5439
      %5505 = vst.msk [vmem:[%s168 + $0x10] sm:$0xf] %vm5500, %v5440
      %5506 = vst.msk [vmem:[%s168 + $0x14] sm:$0xf] %vm5500, %v5441
      %5507 = vst.msk [vmem:[%s168 + $0x18] sm:$0xf] %vm5500, %v5442
      %5508 = vst.msk [vmem:[%s168 + $0x1c] sm:$0xf] %vm5500, %v5443
      %5509 = vst.msk [vmem:[%s168 + $0x20] sm:$0xf] %vm5500, %v5444
      %5510 = vst.msk [vmem:[%s168 + $0x24] sm:$0xf] %vm5500, %v5445
      %5511 = vst.msk [vmem:[%s168 + $0x28] sm:$0xf] %vm5500, %v5446
      %5512 = vst.msk [vmem:[%s168 + $0x2c] sm:$0xf] %vm5500, %v5447
      %5513 = vst.msk [vmem:[%s168 + $0x30] sm:$0xf] %vm5500, %v5448
      %5514 = vst.msk [vmem:[%s168 + $0x34] sm:$0xf] %vm5500, %v5449
      %5515 = vst.msk [vmem:[%s168 + $0x38] sm:$0xf] %vm5500, %v5450
      %5516 = vst.msk [vmem:[%s168 + $0x3c] sm:$0xf] %vm5500, %v5451
      %5517 = vst.msk [vmem:[%s168 + $0x40] sm:$0xf] %vm5500, %v5452
      %5518 = vst.msk [vmem:[%s168 + $0x44] sm:$0xf] %vm5500, %v5453
      %5519 = vst.msk [vmem:[%s168 + $0x48] sm:$0xf] %vm5500, %v5454
      %5520 = vst.msk [vmem:[%s168 + $0x4c] sm:$0xf] %vm5500, %v5455
      %5521 = vst.msk [vmem:[%s168 + $0x50] sm:$0xf] %vm5500, %v5456
      %5522 = vst.msk [vmem:[%s168 + $0x54] sm:$0xf] %vm5500, %v5457
      %5523 = vst.msk [vmem:[%s168 + $0x58] sm:$0xf] %vm5500, %v5458
      %5524 = vst.msk [vmem:[%s168 + $0x5c] sm:$0xf] %vm5500, %v5459
      %5525 = vst.msk [vmem:[%s168 + $0x60] sm:$0xf] %vm5500, %v5460
      %5526 = vst.msk [vmem:[%s168 + $0x64] sm:$0xf] %vm5500, %v5461
      %5527 = vst.msk [vmem:[%s168 + $0x68] sm:$0xf] %vm5500, %v5462
      %5528 = vst.msk [vmem:[%s168 + $0x6c] sm:$0xf] %vm5500, %v5463
      %5529 = vst.msk [vmem:[%s168 + $0x70] sm:$0xf] %vm5500, %v5464
      %5530 = vst.msk [vmem:[%s168 + $0x74] sm:$0xf] %vm5500, %v5465
      %5531 = vst.msk [vmem:[%s168 + $0x78] sm:$0xf] %vm5500, %v5466
      %5532 = vst.msk [vmem:[%s168 + $0x7c] sm:$0xf] %vm5500, %v5467
      %p5533 = scmp.lt.s32.totalorder %s15, 1
      %s5534 = scalar_select %p5533, %s15, 1
      %s5535 = smul.addr %s5534, 32
      %s5536 = smul.addr %s5535, 4
      %s5537 = scalar_lea.vmem %s2, %s5536
      // Predicated region
      $region33: #{double_conv_block_forward.3} parent=27 // pred_check
        %p5538 = pneg %p80
      $region34: #{double_conv_block_forward.3} parent=27 // pred_check_branch
        %5540 = sbr.rel (%p5538) target = $region36
      $region35: #{double_conv_block_forward.3} parent=27 // pred_region
        _
      $region36: #{double_conv_block_forward.3} parent=27 // pred_fallthru
        _
      // Predicated region
      $region37: #{double_conv_block_forward.3} parent=27 // pred_check
        %p5541 = pneg %p101
      $region38: #{double_conv_block_forward.3} parent=27 // pred_check_branch
        %5543 = sbr.rel (%p5541) target = $region40
      $region39: #{double_conv_block_forward.3} parent=27 // pred_region
        _
      $region40: #{double_conv_block_forward.3} parent=27 // pred_fallthru
        _
      // Predicated region
      $region41: #{double_conv_block_forward.3} parent=27 // pred_check
        %p5544 = pneg %p101
      $region42: #{double_conv_block_forward.3} parent=27 // pred_check_branch
        %5546 = sbr.rel (%p5544) target = $region44
      $region43: #{double_conv_block_forward.3} parent=27 // pred_region
        _
      $region44: #{double_conv_block_forward.3} parent=27 // pred_fallthru
        _
    $region28: #{double_conv_block_forward.3} parent=5 // pred_fallthru
      _
    %p5547 = scmp.le.s32.totalorder 2, %s10
    // Predicated region
    $region45: #{double_conv_block_forward.3} parent=5 // pred_check
      %p5548 = pneg %p5547
    $region46: #{double_conv_block_forward.3} parent=5 // pred_check_branch
      %5550 = sbr.rel (%p5548) target = $region48
    $region47: #{double_conv_block_forward.3} parent=5 // pred_region
      %s5551 = ssub.s32 %s10, 2
      // Predicated region
      $region49: #{double_conv_block_forward.3} parent=47 // pred_check
        %p5552 = pneg %p86
      $region50: #{double_conv_block_forward.3} parent=47 // pred_check_branch
        %5554 = sbr.rel (%p5552) target = $region52
      $region51: #{double_conv_block_forward.3} parent=47 // pred_region
        %p5555 = scmp.lt.s32.totalorder %s16, 1
        %s5556 = scalar_select %p5555, %s16, 1
        %s5557 = smul.addr %s5556, 32
        %s5558 = smul.addr %s5557, 4
        %s5559 = scalar_lea.vmem %s2, %s5558
      $region52: #{double_conv_block_forward.3} parent=47 // pred_fallthru
        _
    $region48: #{double_conv_block_forward.3} parent=5 // pred_fallthru
      _
  $region6: #{double_conv_block_forward.3} parent=0 // loop_footer
    %s14 = sadd.s32 1, %s10
  $region7: #{double_conv_block_forward.3} parent=0 // loop_footer_branch
    %9 = sbr.rel target = $region3
  $region8: #{double_conv_block_forward.3} parent=0 // loop_exit
    _

// kernel: double_conv_block_forward.4
$region0: #{double_conv_block_forward.4}
  #allocation0 [shape = 'u32[]', space=smem, size = 0x4, offset = 0x4, fixed_abs, tag = 'smem constant byte address 0x4 - core index']
  #allocation1 [shape = 'u32[144,128]{1,0:T(1,128)}', space=vmem, size = 0x12000, scoped, tag = 'internal scratch']
  #allocation2 [shape = 'bf16[18,18,8]{2,1,0:T(8,128)(2,1)}', space=vmem, size = 0x1b000, scoped, tag = 'scratch operand']
  %s0 = inlined_call_operand.vmem [shape: f32[2,8], index: 0, kind: input, shape index: {}]
  %s1 = inlined_call_operand.vmem [shape: f32[1,8], index: 1, kind: input, shape index: {}]
  %s2 = inlined_call_operand.vmem [shape: f32[1,8], index: 2, kind: input, shape index: {}]
  %s3 = inlined_call_operand.vmem [shape: bf16[2,256,8], index: 3, kind: input, shape index: {}]
  %s4 = inlined_call_operand.vmem [shape: bf16[3,3,8,8], index: 4, kind: input, shape index: {}]
  %s5 = inlined_call_operand.vmem [shape: bf16[2,256,8], index: 5, kind: output, shape index: {0}]
  %s6 = inlined_call_operand.vmem [shape: f32[2,8], index: 6, kind: output, shape index: {1}]
  %7 = xla_tuple %s5, %s6
  %s8 = sld [smem:[#allocation0]]
  $region65: #{double_conv_block_forward.4} parent=0
    _
  %s10 = ssub.s32 1, %s8
  %s11 = scalar_select 0, %s10, %s8
  loop: start=0, step=1, limit=4
  $region2: #{double_conv_block_forward.4} parent=0 // loop_pre_header
    _
  $region3: #{double_conv_block_forward.4} parent=0 // loop_header
    %s13 = sphi 0, %s17
    %p14 = scmp.ge.s32.totalorder %s13, 4
    %s21 = sphi 0, %s21
    %s23 = sphi 0, %s21
    %s24 = sphi 0, %s23
    %s38 = sphi 0, %s24
    %s42 = sphi 0, %s42
    %s44 = sphi 0, %s42
    %s45 = sphi 0, %s44
    %s59 = sphi 0, %s45
    %s63 = sphi 0, %s63
    %s65 = sphi 0, %s63
    %s66 = sphi 0, %s65
    %s80 = sphi 0, %s66
    %s86 = sphi 0, %s88
    %s89 = sphi 0, %s86
    %s90 = sphi 0, %s89
    %s106 = sphi 0, %s90
    %s110 = sphi 0, %s110
    %s112 = sphi 0, %s110
    %s113 = sphi 0, %s112
    %s127 = sphi 0, %s113
    %s133 = sphi 0, %s135
    %s136 = sphi 0, %s133
    %s137 = sphi 0, %s136
    %s153 = sphi 0, %s137
    %s157 = sphi 0, %s157
    %s159 = sphi 0, %s157
    %s160 = sphi 0, %s159
    %s174 = sphi 0, %s160
  $region4: #{double_conv_block_forward.4} parent=0 // loop_header_branch
    %16 = sbr.rel (%p14) target = $region8
  $region5: #{double_conv_block_forward.4} parent=0 // loop_body
    %s18 = ssub.s32 %s13, 1
    %s19 = ssub.s32 %s13, 2
    %s20 = sadd.s32 %s13, 1
    %s22 = sadd.s32 %s21, 1
    %p25 = scmp.eq.s32.totalorder %s13, 1
    %p26 = scmp.ne.s32.totalorder %s21, %s23
    %p27 = scmp.eq.s32.totalorder %s13, 0
    %p28 = por %p26, %p27
    %p29 = scmp.ne.s32.totalorder %s21, %s23
    %p30 = scmp.eq.s32.totalorder %s18, 1
    %p31 = por %p29, %p30
    %p32 = scmp.ne.s32.totalorder %s23, %s24
    %p33 = scmp.eq.s32.totalorder %s18, 0
    %p34 = por %p32, %p33
    %p35 = scmp.ne.s32.totalorder %s23, %s24
    %p36 = scmp.eq.s32.totalorder %s19, 1
    %p37 = por %p35, %p36
    %p39 = scmp.ne.s32.totalorder %s24, %s38
    %p40 = scmp.eq.s32.totalorder %s19, 0
    %p41 = por %p39, %p40
    %s43 = sadd.s32 %s42, 1
    %p46 = scmp.eq.s32.totalorder %s13, 1
    %p47 = scmp.ne.s32.totalorder %s42, %s44
    %p48 = scmp.eq.s32.totalorder %s13, 0
    %p49 = por %p47, %p48
    %p50 = scmp.ne.s32.totalorder %s42, %s44
    %p51 = scmp.eq.s32.totalorder %s18, 1
    %p52 = por %p50, %p51
    %p53 = scmp.ne.s32.totalorder %s44, %s45
    %p54 = scmp.eq.s32.totalorder %s18, 0
    %p55 = por %p53, %p54
    %p56 = scmp.ne.s32.totalorder %s44, %s45
    %p57 = scmp.eq.s32.totalorder %s19, 1
    %p58 = por %p56, %p57
    %p60 = scmp.ne.s32.totalorder %s45, %s59
    %p61 = scmp.eq.s32.totalorder %s19, 0
    %p62 = por %p60, %p61
    %s64 = sadd.s32 %s63, 1
    %p67 = scmp.eq.s32.totalorder %s13, 1
    %p68 = scmp.ne.s32.totalorder %s63, %s65
    %p69 = scmp.eq.s32.totalorder %s13, 0
    %p70 = por %p68, %p69
    %p71 = scmp.ne.s32.totalorder %s63, %s65
    %p72 = scmp.eq.s32.totalorder %s18, 1
    %p73 = por %p71, %p72
    %p74 = scmp.ne.s32.totalorder %s65, %s66
    %p75 = scmp.eq.s32.totalorder %s18, 0
    %p76 = por %p74, %p75
    %p77 = scmp.ne.s32.totalorder %s65, %s66
    %p78 = scmp.eq.s32.totalorder %s19, 1
    %p79 = por %p77, %p78
    %p81 = scmp.ne.s32.totalorder %s66, %s80
    %p82 = scmp.eq.s32.totalorder %s19, 0
    %p83 = por %p81, %p82
    %s84 = ssub.s32 %s13, %s20
    %p85 = scmp.eq.s32.totalorder %s84, 0
    %s87 = sadd.s32 %s86, 1
    %s88 = scalar_select %p85, %s86, %s87
    %p91 = pneg %p85
    %p92 = scmp.eq.s32.totalorder %s13, 1
    %p93 = por %p91, %p92
    %p94 = scmp.ne.s32.totalorder %s86, %s89
    %p95 = scmp.eq.s32.totalorder %s13, 0
    %p96 = por %p94, %p95
    %p97 = scmp.ne.s32.totalorder %s86, %s89
    %p98 = scmp.eq.s32.totalorder %s18, 1
    %p99 = por %p97, %p98
    %p100 = scmp.ne.s32.totalorder %s89, %s90
    %p101 = scmp.eq.s32.totalorder %s18, 0
    %p102 = por %p100, %p101
    %p103 = scmp.ne.s32.totalorder %s89, %s90
    %p104 = scmp.eq.s32.totalorder %s19, 1
    %p105 = por %p103, %p104
    %p107 = scmp.ne.s32.totalorder %s90, %s106
    %p108 = scmp.eq.s32.totalorder %s19, 0
    %p109 = por %p107, %p108
    %s111 = sadd.s32 %s110, 1
    %p114 = scmp.eq.s32.totalorder %s13, 1
    %p115 = scmp.ne.s32.totalorder %s110, %s112
    %p116 = scmp.eq.s32.totalorder %s13, 0
    %p117 = por %p115, %p116
    %p118 = scmp.ne.s32.totalorder %s110, %s112
    %p119 = scmp.eq.s32.totalorder %s18, 1
    %p120 = por %p118, %p119
    %p121 = scmp.ne.s32.totalorder %s112, %s113
    %p122 = scmp.eq.s32.totalorder %s18, 0
    %p123 = por %p121, %p122
    %p124 = scmp.ne.s32.totalorder %s112, %s113
    %p125 = scmp.eq.s32.totalorder %s19, 1
    %p126 = por %p124, %p125
    %p128 = scmp.ne.s32.totalorder %s113, %s127
    %p129 = scmp.eq.s32.totalorder %s19, 0
    %p130 = por %p128, %p129
    %s131 = ssub.s32 %s13, %s20
    %p132 = scmp.eq.s32.totalorder %s131, 0
    %s134 = sadd.s32 %s133, 1
    %s135 = scalar_select %p132, %s133, %s134
    %p138 = pneg %p132
    %p139 = scmp.eq.s32.totalorder %s13, 1
    %p140 = por %p138, %p139
    %p141 = scmp.ne.s32.totalorder %s133, %s136
    %p142 = scmp.eq.s32.totalorder %s13, 0
    %p143 = por %p141, %p142
    %p144 = scmp.ne.s32.totalorder %s133, %s136
    %p145 = scmp.eq.s32.totalorder %s18, 1
    %p146 = por %p144, %p145
    %p147 = scmp.ne.s32.totalorder %s136, %s137
    %p148 = scmp.eq.s32.totalorder %s18, 0
    %p149 = por %p147, %p148
    %p150 = scmp.ne.s32.totalorder %s136, %s137
    %p151 = scmp.eq.s32.totalorder %s19, 1
    %p152 = por %p150, %p151
    %p154 = scmp.ne.s32.totalorder %s137, %s153
    %p155 = scmp.eq.s32.totalorder %s19, 0
    %p156 = por %p154, %p155
    %s158 = sadd.s32 %s157, 1
    %p161 = scmp.eq.s32.totalorder %s13, 1
    %p162 = scmp.ne.s32.totalorder %s157, %s159
    %p163 = scmp.eq.s32.totalorder %s13, 0
    %p164 = por %p162, %p163
    %p165 = scmp.ne.s32.totalorder %s157, %s159
    %p166 = scmp.eq.s32.totalorder %s18, 1
    %p167 = por %p165, %p166
    %p168 = scmp.ne.s32.totalorder %s159, %s160
    %p169 = scmp.eq.s32.totalorder %s18, 0
    %p170 = por %p168, %p169
    %p171 = scmp.ne.s32.totalorder %s159, %s160
    %p172 = scmp.eq.s32.totalorder %s19, 1
    %p173 = por %p171, %p172
    %p175 = scmp.ne.s32.totalorder %s160, %s174
    %p176 = scmp.eq.s32.totalorder %s19, 0
    %p177 = por %p175, %p176
    %p178 = scmp.le.s32.totalorder 1, %s13
    %p179 = scmp.lt.s32.totalorder %s13, 3
    %p180 = pnand %p178, %p179
    %p181 = pneg %p180
    // Predicated region
    $region9: #{double_conv_block_forward.4} parent=5 // pred_check
      _
    $region10: #{double_conv_block_forward.4} parent=5 // pred_check_branch
      %183 = sbr.rel (%p180) target = $region12
    $region11: #{double_conv_block_forward.4} parent=5 // pred_region
      %s184 = ssub.s32 %s13, 1
      // Predicated region
      $region13: #{double_conv_block_forward.4} parent=11 // pred_check
        %p185 = pneg %p34
      $region14: #{double_conv_block_forward.4} parent=11 // pred_check_branch
        %187 = sbr.rel (%p185) target = $region16
      $region15: #{double_conv_block_forward.4} parent=11 // pred_region
        _
      $region16: #{double_conv_block_forward.4} parent=11 // pred_fallthru
        _
      // Predicated region
      $region17: #{double_conv_block_forward.4} parent=11 // pred_check
        %p188 = pneg %p55
      $region18: #{double_conv_block_forward.4} parent=11 // pred_check_branch
        %190 = sbr.rel (%p188) target = $region20
      $region19: #{double_conv_block_forward.4} parent=11 // pred_region
        _
      $region20: #{double_conv_block_forward.4} parent=11 // pred_fallthru
        _
      // Predicated region
      $region21: #{double_conv_block_forward.4} parent=11 // pred_check
        %p191 = pneg %p76
      $region22: #{double_conv_block_forward.4} parent=11 // pred_check_branch
        %193 = sbr.rel (%p191) target = $region24
      $region23: #{double_conv_block_forward.4} parent=11 // pred_region
        _
      $region24: #{double_conv_block_forward.4} parent=11 // pred_fallthru
        _
      // Predicated region
      $region25: #{double_conv_block_forward.4} parent=11 // pred_check
        %p194 = pneg %p123
      $region26: #{double_conv_block_forward.4} parent=11 // pred_check_branch
        %196 = sbr.rel (%p194) target = $region28
      $region27: #{double_conv_block_forward.4} parent=11 // pred_region
        _
      $region28: #{double_conv_block_forward.4} parent=11 // pred_fallthru
        _
    $region12: #{double_conv_block_forward.4} parent=5 // pred_fallthru
      _
    %p197 = scmp.lt.s32.totalorder %s13, 2
    // Predicated region
    $region29: #{double_conv_block_forward.4} parent=5 // pred_check
      %p198 = pneg %p197
    $region30: #{double_conv_block_forward.4} parent=5 // pred_check_branch
      %200 = sbr.rel (%p198) target = $region32
    $region31: #{double_conv_block_forward.4} parent=5 // pred_region
      // Predicated region
      $region33: #{double_conv_block_forward.4} parent=31 // pred_check
        %p201 = pneg %p96
      $region34: #{double_conv_block_forward.4} parent=31 // pred_check_branch
        %203 = sbr.rel (%p201) target = $region36
      $region35: #{double_conv_block_forward.4} parent=31 // pred_region
        %p204 = scmp.lt.s32.totalorder %s13, 1
        %s205 = scalar_select %p204, %s13, 1
        %s206 = smul.addr %s205, 32
        %s207 = smul.addr %s206, 4
        %s208 = scalar_lea.vmem %s3, %s207
      $region36: #{double_conv_block_forward.4} parent=31 // pred_fallthru
        _
    $region32: #{double_conv_block_forward.4} parent=5 // pred_fallthru
      _
    %p209 = scmp.le.s32.totalorder 1, %s13
    %p210 = scmp.lt.s32.totalorder %s13, 3
    %p211 = pnand %p209, %p210
    %p212 = pneg %p211
    // Predicated region
    $region37: #{double_conv_block_forward.4} parent=5 // pred_check
      _
    $region38: #{double_conv_block_forward.4} parent=5 // pred_check_branch
      %214 = sbr.rel (%p211) target = $region40
    $region39: #{double_conv_block_forward.4} parent=5 // pred_region
      %s215 = ssub.s32 %s13, 1
      %p216 = pneg %p34
      %p217 = pneg %p31
      %p218 = pneg %p55
      %p219 = pneg %p52
      %p220 = pneg %p76
      %p221 = pneg %p73
      %p222 = scmp.lt.s32.totalorder %s18, 1
      %s223 = scalar_select %p222, %s18, 1
      %s224 = smul.addr %s223, 32
      %s225 = smul.addr %s224, 4
      %s226 = scalar_lea.vmem %s3, %s225
      %p227 = pneg %p102
      %p228 = pneg %p99
      %p229 = pneg %p123
      %p230 = pneg %p120
      %p231 = pneg %p149
      %p232 = pneg %p146
      %p233 = scmp.lt.s32.totalorder %s18, 1
      %s234 = scalar_select %p233, %s18, 1
      %s235 = smul.addr %s234, 32
      %s236 = smul.addr %s235, 4
      %s237 = scalar_lea.vmem %s5, %s236
      %p238 = pneg %p170
      %p239 = pneg %p167
      %p240 = scmp.lt.s32.totalorder %s18, 1
      %s241 = scalar_select %p240, %s18, 1
      %s242 = smul.addr %s241, 32
      %s243 = smul.addr %s242, 4
      %s244 = scalar_lea.vmem %s3, %s243
      %p245 = scmp.lt.s32.totalorder %s18, 1
      %s246 = scalar_select %p245, %s18, 1
      %s247 = smul.addr %s246, 32
      %s248 = smul.addr %s247, 4
      %s249 = scalar_lea.vmem %s5, %s248
      %v251 = vld [vmem:[%s0] sm:$0x1]
      %v252 = vmul.f32 %v251, 0.001953125
      %v253 = vld [vmem:[%s0 + $0x1] sm:$0x1]
      %v254 = vmul.f32 %v253, 0.001953125
      %v255 = vmul.f32 %v252, %v252
      %v256 = vsub.f32 %v254, %v255
      %v257 = vld [vmem:[%s1] sm:$0x1]
      %v258 = vadd.f32 %v256, 1e-05
      %v259 = vrsqrt.pop %v258
      %v260 = vmul.f32 %v257, %v259
      %v261 = vld [vmem:[%s2] sm:$0x1]
      %v262 = vmul.f32 %v252, %v260
      %v263 = vsub.f32 %v261, %v262
      %v264 = vld [vmem:[%s244] sm:$0xf]
      %v265 = vld [vmem:[%s244 + $0x4] sm:$0xf]
      %v266 = vld [vmem:[%s244 + $0x8] sm:$0xf]
      %v267 = vld [vmem:[%s244 + $0xc] sm:$0xf]
      %v268 = vld [vmem:[%s244 + $0x10] sm:$0xf]
      %v269 = vld [vmem:[%s244 + $0x14] sm:$0xf]
      %v270 = vld [vmem:[%s244 + $0x18] sm:$0xf]
      %v271 = vld [vmem:[%s244 + $0x1c] sm:$0xf]
      %v272 = vld [vmem:[%s244 + $0x20] sm:$0xf]
      %v273 = vld [vmem:[%s244 + $0x24] sm:$0xf]
      %v274 = vld [vmem:[%s244 + $0x28] sm:$0xf]
      %v275 = vld [vmem:[%s244 + $0x2c] sm:$0xf]
      %v276 = vld [vmem:[%s244 + $0x30] sm:$0xf]
      %v277 = vld [vmem:[%s244 + $0x34] sm:$0xf]
      %v278 = vld [vmem:[%s244 + $0x38] sm:$0xf]
      %v279 = vld [vmem:[%s244 + $0x3c] sm:$0xf]
      %v280 = vld [vmem:[%s244 + $0x40] sm:$0xf]
      %v281 = vld [vmem:[%s244 + $0x44] sm:$0xf]
      %v282 = vld [vmem:[%s244 + $0x48] sm:$0xf]
      %v283 = vld [vmem:[%s244 + $0x4c] sm:$0xf]
      %v284 = vld [vmem:[%s244 + $0x50] sm:$0xf]
      %v285 = vld [vmem:[%s244 + $0x54] sm:$0xf]
      %v286 = vld [vmem:[%s244 + $0x58] sm:$0xf]
      %v287 = vld [vmem:[%s244 + $0x5c] sm:$0xf]
      %v288 = vld [vmem:[%s244 + $0x60] sm:$0xf]
      %v289 = vld [vmem:[%s244 + $0x64] sm:$0xf]
      %v290 = vld [vmem:[%s244 + $0x68] sm:$0xf]
      %v291 = vld [vmem:[%s244 + $0x6c] sm:$0xf]
      %v292 = vld [vmem:[%s244 + $0x70] sm:$0xf]
      %v293 = vld [vmem:[%s244 + $0x74] sm:$0xf]
      %v294 = vld [vmem:[%s244 + $0x78] sm:$0xf]
      %v295 = vld [vmem:[%s244 + $0x7c] sm:$0xf]
      %v296 = vunpack.c.l.bf16 %v264
      %v297 = vunpack.c.l.bf16 %v265
      %v298 = vunpack.c.l.bf16 %v266
      %v299 = vunpack.c.l.bf16 %v267
      %v300 = vunpack.c.l.bf16 %v268
      %v301 = vunpack.c.l.bf16 %v269
      %v302 = vunpack.c.l.bf16 %v270
      %v303 = vunpack.c.l.bf16 %v271
      %v304 = vunpack.c.l.bf16 %v272
      %v305 = vunpack.c.l.bf16 %v273
      %v306 = vunpack.c.l.bf16 %v274
      %v307 = vunpack.c.l.bf16 %v275
      %v308 = vunpack.c.l.bf16 %v276
      %v309 = vunpack.c.l.bf16 %v277
      %v310 = vunpack.c.l.bf16 %v278
      %v311 = vunpack.c.l.bf16 %v279
      %v312 = vunpack.c.l.bf16 %v280
      %v313 = vunpack.c.l.bf16 %v281
      %v314 = vunpack.c.l.bf16 %v282
      %v315 = vunpack.c.l.bf16 %v283
      %v316 = vunpack.c.l.bf16 %v284
      %v317 = vunpack.c.l.bf16 %v285
      %v318 = vunpack.c.l.bf16 %v286
      %v319 = vunpack.c.l.bf16 %v287
      %v320 = vunpack.c.l.bf16 %v288
      %v321 = vunpack.c.l.bf16 %v289
      %v322 = vunpack.c.l.bf16 %v290
      %v323 = vunpack.c.l.bf16 %v291
      %v324 = vunpack.c.l.bf16 %v292
      %v325 = vunpack.c.l.bf16 %v293
      %v326 = vunpack.c.l.bf16 %v294
      %v327 = vunpack.c.l.bf16 %v295
      %v329 = vlaneseq
      %v330 = vshrl.u32 %v329, 7
      %v331 = vsub.s32 0, %v330
      %v332 = vrot.slane %v260, %v331
      %v334 = vmul.f32 %v296, %v332
      %v335 = vmul.f32 %v297, %v332
      %v336 = vmul.f32 %v298, %v332
      %v337 = vmul.f32 %v299, %v332
      %v338 = vmul.f32 %v300, %v332
      %v339 = vmul.f32 %v301, %v332
      %v340 = vmul.f32 %v302, %v332
      %v341 = vmul.f32 %v303, %v332
      %v342 = vmul.f32 %v304, %v332
      %v343 = vmul.f32 %v305, %v332
      %v344 = vmul.f32 %v306, %v332
      %v345 = vmul.f32 %v307, %v332
      %v346 = vmul.f32 %v308, %v332
      %v347 = vmul.f32 %v309, %v332
      %v348 = vmul.f32 %v310, %v332
      %v349 = vmul.f32 %v311, %v332
      %v350 = vmul.f32 %v312, %v332
      %v351 = vmul.f32 %v313, %v332
      %v352 = vmul.f32 %v314, %v332
      %v353 = vmul.f32 %v315, %v332
      %v354 = vmul.f32 %v316, %v332
      %v355 = vmul.f32 %v317, %v332
      %v356 = vmul.f32 %v318, %v332
      %v357 = vmul.f32 %v319, %v332
      %v358 = vmul.f32 %v320, %v332
      %v359 = vmul.f32 %v321, %v332
      %v360 = vmul.f32 %v322, %v332
      %v361 = vmul.f32 %v323, %v332
      %v362 = vmul.f32 %v324, %v332
      %v363 = vmul.f32 %v325, %v332
      %v364 = vmul.f32 %v326, %v332
      %v365 = vmul.f32 %v327, %v332
      %v367 = vlaneseq
      %v368 = vshrl.u32 %v367, 7
      %v369 = vsub.s32 0, %v368
      %v370 = vrot.slane %v263, %v369
      %v372 = vadd.f32 %v334, %v370
      %v373 = vadd.f32 %v335, %v370
      %v374 = vadd.f32 %v336, %v370
      %v375 = vadd.f32 %v337, %v370
      %v376 = vadd.f32 %v338, %v370
      %v377 = vadd.f32 %v339, %v370
      %v378 = vadd.f32 %v340, %v370
      %v379 = vadd.f32 %v341, %v370
      %v380 = vadd.f32 %v342, %v370
      %v381 = vadd.f32 %v343, %v370
      %v382 = vadd.f32 %v344, %v370
      %v383 = vadd.f32 %v345, %v370
      %v384 = vadd.f32 %v346, %v370
      %v385 = vadd.f32 %v347, %v370
      %v386 = vadd.f32 %v348, %v370
      %v387 = vadd.f32 %v349, %v370
      %v388 = vadd.f32 %v350, %v370
      %v389 = vadd.f32 %v351, %v370
      %v390 = vadd.f32 %v352, %v370
      %v391 = vadd.f32 %v353, %v370
      %v392 = vadd.f32 %v354, %v370
      %v393 = vadd.f32 %v355, %v370
      %v394 = vadd.f32 %v356, %v370
      %v395 = vadd.f32 %v357, %v370
      %v396 = vadd.f32 %v358, %v370
      %v397 = vadd.f32 %v359, %v370
      %v398 = vadd.f32 %v360, %v370
      %v399 = vadd.f32 %v361, %v370
      %v400 = vadd.f32 %v362, %v370
      %v401 = vadd.f32 %v363, %v370
      %v402 = vadd.f32 %v364, %v370
      %v403 = vadd.f32 %v365, %v370
      %v404 = vmax.f32 %v372, 0.0
      %v405 = vmax.f32 %v373, 0.0
      %v406 = vmax.f32 %v374, 0.0
      %v407 = vmax.f32 %v375, 0.0
      %v408 = vmax.f32 %v376, 0.0
      %v409 = vmax.f32 %v377, 0.0
      %v410 = vmax.f32 %v378, 0.0
      %v411 = vmax.f32 %v379, 0.0
      %v412 = vmax.f32 %v380, 0.0
      %v413 = vmax.f32 %v381, 0.0
      %v414 = vmax.f32 %v382, 0.0
      %v415 = vmax.f32 %v383, 0.0
      %v416 = vmax.f32 %v384, 0.0
      %v417 = vmax.f32 %v385, 0.0
      %v418 = vmax.f32 %v386, 0.0
      %v419 = vmax.f32 %v387, 0.0
      %v420 = vmax.f32 %v388, 0.0
      %v421 = vmax.f32 %v389, 0.0
      %v422 = vmax.f32 %v390, 0.0
      %v423 = vmax.f32 %v391, 0.0
      %v424 = vmax.f32 %v392, 0.0
      %v425 = vmax.f32 %v393, 0.0
      %v426 = vmax.f32 %v394, 0.0
      %v427 = vmax.f32 %v395, 0.0
      %v428 = vmax.f32 %v396, 0.0
      %v429 = vmax.f32 %v397, 0.0
      %v430 = vmax.f32 %v398, 0.0
      %v431 = vmax.f32 %v399, 0.0
      %v432 = vmax.f32 %v400, 0.0
      %v433 = vmax.f32 %v401, 0.0
      %v434 = vmax.f32 %v402, 0.0
      %v435 = vmax.f32 %v403, 0.0
      %v436 = vpack.c.bf16 %v405, %v404
      %v437 = vpack.c.bf16 %v407, %v406
      %v438 = vpack.c.bf16 %v409, %v408
      %v439 = vpack.c.bf16 %v411, %v410
      %v440 = vpack.c.bf16 %v413, %v412
      %v441 = vpack.c.bf16 %v415, %v414
      %v442 = vpack.c.bf16 %v417, %v416
      %v443 = vpack.c.bf16 %v419, %v418
      %v444 = vpack.c.bf16 %v421, %v420
      %v445 = vpack.c.bf16 %v423, %v422
      %v446 = vpack.c.bf16 %v425, %v424
      %v447 = vpack.c.bf16 %v427, %v426
      %v448 = vpack.c.bf16 %v429, %v428
      %v449 = vpack.c.bf16 %v431, %v430
      %v450 = vpack.c.bf16 %v433, %v432
      %v451 = vpack.c.bf16 %v435, %v434
      %vm452 = vcmask 60416
      %453 = vst.msk [vmem:[#allocation2] sm:$0xf] %vm452, 0
      %454 = vst.msk [vmem:[#allocation2 + $0x4] sm:$0xf] %vm452, 0
      %vm455 = vcmask 57344
      %456 = vst.msk [vmem:[#allocation2 + $0x8] sm:$0x1] %vm455, 0
      %s457 = scalar_lea.vmem [#allocation2], 204
      %458 = vst.msk [vmem:[%s457] sm:$0xf] %vm452, 0
      %459 = vst.msk [vmem:[%s457 + $0x4] sm:$0xf] %vm452, 0
      %460 = vst.msk [vmem:[%s457 + $0x8] sm:$0x1] %vm455, 0
      %v462 = vshrl.u32 %v436, 16
      %v464 = vrot.slane %v462, 7
      %v465 = vshll.u32 %v436, 16
      %v467 = vor.u32 %v464, %v465
      %v469 = vshrl.u32 %v437, 16
      %v471 = vrot.slane %v469, 7
      %v472 = vshll.u32 %v437, 16
      %v474 = vor.u32 %v471, %v472
      %v476 = vshrl.u32 %v438, 16
      %v478 = vrot.slane %v476, 7
      %v479 = vshll.u32 %v438, 16
      %v481 = vor.u32 %v478, %v479
      %v483 = vshrl.u32 %v439, 16
      %v485 = vrot.slane %v483, 7
      %v486 = vshll.u32 %v439, 16
      %v488 = vor.u32 %v485, %v486
      %v490 = vshrl.u32 %v440, 16
      %v492 = vrot.slane %v490, 7
      %v493 = vshll.u32 %v440, 16
      %v495 = vor.u32 %v492, %v493
      %v497 = vshrl.u32 %v441, 16
      %v499 = vrot.slane %v497, 7
      %v500 = vshll.u32 %v441, 16
      %v502 = vor.u32 %v499, %v500
      %v504 = vshrl.u32 %v442, 16
      %v506 = vrot.slane %v504, 7
      %v507 = vshll.u32 %v442, 16
      %v509 = vor.u32 %v506, %v507
      %v511 = vshrl.u32 %v443, 16
      %v513 = vrot.slane %v511, 7
      %v514 = vshll.u32 %v443, 16
      %v516 = vor.u32 %v513, %v514
      %v518 = vshrl.u32 %v444, 16
      %v520 = vrot.slane %v518, 7
      %v521 = vshll.u32 %v444, 16
      %v523 = vor.u32 %v520, %v521
      %v525 = vshrl.u32 %v445, 16
      %v527 = vrot.slane %v525, 7
      %v528 = vshll.u32 %v445, 16
      %v530 = vor.u32 %v527, %v528
      %v532 = vshrl.u32 %v446, 16
      %v534 = vrot.slane %v532, 7
      %v535 = vshll.u32 %v446, 16
      %v537 = vor.u32 %v534, %v535
      %v539 = vshrl.u32 %v447, 16
      %v541 = vrot.slane %v539, 7
      %v542 = vshll.u32 %v447, 16
      %v544 = vor.u32 %v541, %v542
      %v546 = vshrl.u32 %v448, 16
      %v548 = vrot.slane %v546, 7
      %v549 = vshll.u32 %v448, 16
      %v551 = vor.u32 %v548, %v549
      %v553 = vshrl.u32 %v449, 16
      %v555 = vrot.slane %v553, 7
      %v556 = vshll.u32 %v449, 16
      %v558 = vor.u32 %v555, %v556
      %v560 = vshrl.u32 %v450, 16
      %v562 = vrot.slane %v560, 7
      %v563 = vshll.u32 %v450, 16
      %v565 = vor.u32 %v562, %v563
      %v567 = vshrl.u32 %v451, 16
      %v569 = vrot.slane %v567, 7
      %v570 = vshll.u32 %v451, 16
      %v572 = vor.u32 %v569, %v570
      %vm605 = vcmask 1040384
      %vm606 = vsmask.f32 256
      %vm607 = vmand %vm605, %vm606
      %v608 = vsel %vm607, 0, %v467
      %v609 = vsel %vm607, 0, %v474
      %v610 = vsel %vm607, 0, %v481
      %v611 = vsel %vm607, 0, %v488
      %v612 = vsel %vm607, 0, %v495
      %v613 = vsel %vm607, 0, %v502
      %v614 = vsel %vm607, 0, %v509
      %v615 = vsel %vm607, 0, %v516
      %v616 = vsel %vm607, 0, %v523
      %v617 = vsel %vm607, 0, %v530
      %v618 = vsel %vm607, 0, %v537
      %v619 = vsel %vm607, 0, %v544
      %v620 = vsel %vm607, 0, %v551
      %v621 = vsel %vm607, 0, %v558
      %v622 = vsel %vm607, 0, %v565
      %v623 = vsel %vm607, 0, %v572
      %v624 = vsel %vm607, %v464, 0
      %v625 = vsel %vm607, %v471, 0
      %v626 = vsel %vm607, %v478, 0
      %v627 = vsel %vm607, %v485, 0
      %v628 = vsel %vm607, %v492, 0
      %v629 = vsel %vm607, %v499, 0
      %v630 = vsel %vm607, %v506, 0
      %v631 = vsel %vm607, %v513, 0
      %v632 = vsel %vm607, %v520, 0
      %v633 = vsel %vm607, %v527, 0
      %v634 = vsel %vm607, %v534, 0
      %v635 = vsel %vm607, %v541, 0
      %v636 = vsel %vm607, %v548, 0
      %v637 = vsel %vm607, %v555, 0
      %v638 = vsel %vm607, %v562, 0
      %v639 = vsel %vm607, %v569, 0
      %v672 = vunpack.c.l.b16 %v608
      %v673 = vunpack.c.h.b16 %v608
      %v674 = vunpack.c.l.b16 %v624
      %v675 = vunpack.c.l.b16 %v609
      %v676 = vunpack.c.h.b16 %v609
      %v677 = vunpack.c.l.b16 %v625
      %v678 = vunpack.c.l.b16 %v610
      %v679 = vunpack.c.h.b16 %v610
      %v680 = vunpack.c.l.b16 %v626
      %v681 = vunpack.c.l.b16 %v611
      %v682 = vunpack.c.h.b16 %v611
      %v683 = vunpack.c.l.b16 %v627
      %v684 = vunpack.c.l.b16 %v612
      %v685 = vunpack.c.h.b16 %v612
      %v686 = vunpack.c.l.b16 %v628
      %v687 = vunpack.c.l.b16 %v613
      %v688 = vunpack.c.h.b16 %v613
      %v689 = vunpack.c.l.b16 %v629
      %v690 = vunpack.c.l.b16 %v614
      %v691 = vunpack.c.h.b16 %v614
      %v692 = vunpack.c.l.b16 %v630
      %v693 = vunpack.c.l.b16 %v615
      %v694 = vunpack.c.h.b16 %v615
      %v695 = vunpack.c.l.b16 %v631
      %v696 = vunpack.c.l.b16 %v616
      %v697 = vunpack.c.h.b16 %v616
      %v698 = vunpack.c.l.b16 %v632
      %v699 = vunpack.c.l.b16 %v617
      %v700 = vunpack.c.h.b16 %v617
      %v701 = vunpack.c.l.b16 %v633
      %v702 = vunpack.c.l.b16 %v618
      %v703 = vunpack.c.h.b16 %v618
      %v704 = vunpack.c.l.b16 %v634
      %v705 = vunpack.c.l.b16 %v619
      %v706 = vunpack.c.h.b16 %v619
      %v707 = vunpack.c.l.b16 %v635
      %v708 = vunpack.c.l.b16 %v620
      %v709 = vunpack.c.h.b16 %v620
      %v710 = vunpack.c.l.b16 %v636
      %v711 = vunpack.c.l.b16 %v621
      %v712 = vunpack.c.h.b16 %v621
      %v713 = vunpack.c.l.b16 %v637
      %v714 = vunpack.c.l.b16 %v622
      %v715 = vunpack.c.h.b16 %v622
      %v716 = vunpack.c.l.b16 %v638
      %v717 = vunpack.c.l.b16 %v623
      %v718 = vunpack.c.h.b16 %v623
      %v719 = vunpack.c.l.b16 %v639
      %v720 = vpack.c.b16 %v672, %v672
      %v721 = vpack.c.b16 %v673, %v673
      %v722 = vpack.c.b16 %v674, %v674
      %v723 = vpack.c.b16 %v675, %v675
      %v724 = vpack.c.b16 %v676, %v676
      %v725 = vpack.c.b16 %v677, %v677
      %v726 = vpack.c.b16 %v678, %v678
      %v727 = vpack.c.b16 %v679, %v679
      %v728 = vpack.c.b16 %v680, %v680
      %v729 = vpack.c.b16 %v681, %v681
      %v730 = vpack.c.b16 %v682, %v682
      %v731 = vpack.c.b16 %v683, %v683
      %v732 = vpack.c.b16 %v684, %v684
      %v733 = vpack.c.b16 %v685, %v685
      %v734 = vpack.c.b16 %v686, %v686
      %v735 = vpack.c.b16 %v687, %v687
      %v736 = vpack.c.b16 %v688, %v688
      %v737 = vpack.c.b16 %v689, %v689
      %v738 = vpack.c.b16 %v690, %v690
      %v739 = vpack.c.b16 %v691, %v691
      %v740 = vpack.c.b16 %v692, %v692
      %v741 = vpack.c.b16 %v693, %v693
      %v742 = vpack.c.b16 %v694, %v694
      %v743 = vpack.c.b16 %v695, %v695
      %v744 = vpack.c.b16 %v696, %v696
      %v745 = vpack.c.b16 %v697, %v697
      %v746 = vpack.c.b16 %v698, %v698
      %v747 = vpack.c.b16 %v699, %v699
      %v748 = vpack.c.b16 %v700, %v700
      %v749 = vpack.c.b16 %v701, %v701
      %v750 = vpack.c.b16 %v702, %v702
      %v751 = vpack.c.b16 %v703, %v703
      %v752 = vpack.c.b16 %v704, %v704
      %v753 = vpack.c.b16 %v705, %v705
      %v754 = vpack.c.b16 %v706, %v706
      %v755 = vpack.c.b16 %v707, %v707
      %v756 = vpack.c.b16 %v708, %v708
      %v757 = vpack.c.b16 %v709, %v709
      %v758 = vpack.c.b16 %v710, %v710
      %v759 = vpack.c.b16 %v711, %v711
      %v760 = vpack.c.b16 %v712, %v712
      %v761 = vpack.c.b16 %v713, %v713
      %v762 = vpack.c.b16 %v714, %v714
      %v763 = vpack.c.b16 %v715, %v715
      %v764 = vpack.c.b16 %v716, %v716
      %v765 = vpack.c.b16 %v717, %v717
      %v766 = vpack.c.b16 %v718, %v718
      %v767 = vpack.c.b16 %v719, %v719
      %s816 = scalar_lea.vmem [#allocation2], 12
      %817 = vst.msk [vmem:[%s816] sm:$0xf] %vm452, %v720
      %818 = vst.msk [vmem:[%s816 + $0x4] sm:$0xf] %vm452, %v721
      %819 = vst.msk [vmem:[%s816 + $0x8] sm:$0x1] %vm455, %v722
      %820 = vst.msk [vmem:[%s816 + $0xc] sm:$0xf] %vm452, %v723
      %821 = vst.msk [vmem:[%s816 + $0x10] sm:$0xf] %vm452, %v724
      %822 = vst.msk [vmem:[%s816 + $0x14] sm:$0x1] %vm455, %v725
      %823 = vst.msk [vmem:[%s816 + $0x18] sm:$0xf] %vm452, %v726
      %824 = vst.msk [vmem:[%s816 + $0x1c] sm:$0xf] %vm452, %v727
      %825 = vst.msk [vmem:[%s816 + $0x20] sm:$0x1] %vm455, %v728
      %826 = vst.msk [vmem:[%s816 + $0x24] sm:$0xf] %vm452, %v729
      %827 = vst.msk [vmem:[%s816 + $0x28] sm:$0xf] %vm452, %v730
      %828 = vst.msk [vmem:[%s816 + $0x2c] sm:$0x1] %vm455, %v731
      %829 = vst.msk [vmem:[%s816 + $0x30] sm:$0xf] %vm452, %v732
      %830 = vst.msk [vmem:[%s816 + $0x34] sm:$0xf] %vm452, %v733
      %831 = vst.msk [vmem:[%s816 + $0x38] sm:$0x1] %vm455, %v734
      %832 = vst.msk [vmem:[%s816 + $0x3c] sm:$0xf] %vm452, %v735
      %833 = vst.msk [vmem:[%s816 + $0x40] sm:$0xf] %vm452, %v736
      %834 = vst.msk [vmem:[%s816 + $0x44] sm:$0x1] %vm455, %v737
      %835 = vst.msk [vmem:[%s816 + $0x48] sm:$0xf] %vm452, %v738
      %836 = vst.msk [vmem:[%s816 + $0x4c] sm:$0xf] %vm452, %v739
      %837 = vst.msk [vmem:[%s816 + $0x50] sm:$0x1] %vm455, %v740
      %838 = vst.msk [vmem:[%s816 + $0x54] sm:$0xf] %vm452, %v741
      %839 = vst.msk [vmem:[%s816 + $0x58] sm:$0xf] %vm452, %v742
      %840 = vst.msk [vmem:[%s816 + $0x5c] sm:$0x1] %vm455, %v743
      %841 = vst.msk [vmem:[%s816 + $0x60] sm:$0xf] %vm452, %v744
      %842 = vst.msk [vmem:[%s816 + $0x64] sm:$0xf] %vm452, %v745
      %843 = vst.msk [vmem:[%s816 + $0x68] sm:$0x1] %vm455, %v746
      %844 = vst.msk [vmem:[%s816 + $0x6c] sm:$0xf] %vm452, %v747
      %845 = vst.msk [vmem:[%s816 + $0x70] sm:$0xf] %vm452, %v748
      %846 = vst.msk [vmem:[%s816 + $0x74] sm:$0x1] %vm455, %v749
      %847 = vst.msk [vmem:[%s816 + $0x78] sm:$0xf] %vm452, %v750
      %848 = vst.msk [vmem:[%s816 + $0x7c] sm:$0xf] %vm452, %v751
      %849 = vst.msk [vmem:[%s816 + $0x80] sm:$0x1] %vm455, %v752
      %850 = vst.msk [vmem:[%s816 + $0x84] sm:$0xf] %vm452, %v753
      %851 = vst.msk [vmem:[%s816 + $0x88] sm:$0xf] %vm452, %v754
      %852 = vst.msk [vmem:[%s816 + $0x8c] sm:$0x1] %vm455, %v755
      %853 = vst.msk [vmem:[%s816 + $0x90] sm:$0xf] %vm452, %v756
      %854 = vst.msk [vmem:[%s816 + $0x94] sm:$0xf] %vm452, %v757
      %855 = vst.msk [vmem:[%s816 + $0x98] sm:$0x1] %vm455, %v758
      %856 = vst.msk [vmem:[%s816 + $0x9c] sm:$0xf] %vm452, %v759
      %857 = vst.msk [vmem:[%s816 + $0xa0] sm:$0xf] %vm452, %v760
      %858 = vst.msk [vmem:[%s816 + $0xa4] sm:$0x1] %vm455, %v761
      %859 = vst.msk [vmem:[%s816 + $0xa8] sm:$0xf] %vm452, %v762
      %860 = vst.msk [vmem:[%s816 + $0xac] sm:$0xf] %vm452, %v763
      %861 = vst.msk [vmem:[%s816 + $0xb0] sm:$0x1] %vm455, %v764
      %862 = vst.msk [vmem:[%s816 + $0xb4] sm:$0xf] %vm452, %v765
      %863 = vst.msk [vmem:[%s816 + $0xb8] sm:$0xf] %vm452, %v766
      %864 = vst.msk [vmem:[%s816 + $0xbc] sm:$0x1] %vm455, %v767
      %v865 = vld [vmem:[#allocation2] sm:$0xf]
      %v866 = vld [vmem:[#allocation2 + $0x4] sm:$0xf]
      %v867 = vld [vmem:[#allocation2 + $0xc] sm:$0xf]
      %v868 = vld [vmem:[#allocation2 + $0x10] sm:$0xf]
      %v869 = vld [vmem:[#allocation2 + $0x18] sm:$0xf]
      %v870 = vld [vmem:[#allocation2 + $0x1c] sm:$0xf]
      %v871 = vld [vmem:[#allocation2 + $0x24] sm:$0xf]
      %v872 = vld [vmem:[#allocation2 + $0x28] sm:$0xf]
      %v873 = vld [vmem:[#allocation2 + $0x30] sm:$0xf]
      %v874 = vld [vmem:[#allocation2 + $0x34] sm:$0xf]
      %v875 = vld [vmem:[#allocation2 + $0x3c] sm:$0xf]
      %v876 = vld [vmem:[#allocation2 + $0x40] sm:$0xf]
      %v877 = vld [vmem:[#allocation2 + $0x48] sm:$0xf]
      %v878 = vld [vmem:[#allocation2 + $0x4c] sm:$0xf]
      %v879 = vld [vmem:[#allocation2 + $0x54] sm:$0xf]
      %v880 = vld [vmem:[#allocation2 + $0x58] sm:$0xf]
      %v881 = vld [vmem:[#allocation2 + $0x60] sm:$0xf]
      %v882 = vld [vmem:[#allocation2 + $0x64] sm:$0xf]
      %v883 = vld [vmem:[#allocation2 + $0x6c] sm:$0xf]
      %v884 = vld [vmem:[#allocation2 + $0x70] sm:$0xf]
      %v885 = vld [vmem:[#allocation2 + $0x78] sm:$0xf]
      %v886 = vld [vmem:[#allocation2 + $0x7c] sm:$0xf]
      %v887 = vld [vmem:[#allocation2 + $0x84] sm:$0xf]
      %v888 = vld [vmem:[#allocation2 + $0x88] sm:$0xf]
      %v889 = vld [vmem:[#allocation2 + $0x90] sm:$0xf]
      %v890 = vld [vmem:[#allocation2 + $0x94] sm:$0xf]
      %v891 = vld [vmem:[#allocation2 + $0x9c] sm:$0xf]
      %v892 = vld [vmem:[#allocation2 + $0xa0] sm:$0xf]
      %v893 = vld [vmem:[#allocation2 + $0xa8] sm:$0xf]
      %v894 = vld [vmem:[#allocation2 + $0xac] sm:$0xf]
      %v895 = vld [vmem:[#allocation2 + $0xb4] sm:$0xf]
      %v896 = vld [vmem:[#allocation2 + $0xb8] sm:$0xf]
      %v897 = vld [vmem:[%s4] sm:$0xf]
      %v898 = vld [vmem:[#allocation2 + $0x8] sm:$0x1]
      %v899 = vld [vmem:[#allocation2 + $0x14] sm:$0x1]
      %v900 = vld [vmem:[#allocation2 + $0x20] sm:$0x1]
      %v901 = vld [vmem:[#allocation2 + $0x2c] sm:$0x1]
      %v902 = vld [vmem:[#allocation2 + $0x38] sm:$0x1]
      %v903 = vld [vmem:[#allocation2 + $0x44] sm:$0x1]
      %v904 = vld [vmem:[#allocation2 + $0x50] sm:$0x1]
      %v905 = vld [vmem:[#allocation2 + $0x5c] sm:$0x1]
      %v906 = vld [vmem:[#allocation2 + $0x68] sm:$0x1]
      %v907 = vld [vmem:[#allocation2 + $0x74] sm:$0x1]
      %v908 = vld [vmem:[#allocation2 + $0x80] sm:$0x1]
      %v909 = vld [vmem:[#allocation2 + $0x8c] sm:$0x1]
      %v910 = vld [vmem:[#allocation2 + $0x98] sm:$0x1]
      %v911 = vld [vmem:[#allocation2 + $0xa4] sm:$0x1]
      %v912 = vld [vmem:[#allocation2 + $0xb0] sm:$0x1]
      %v913 = vld [vmem:[#allocation2 + $0xbc] sm:$0x1]
      %vm914 = vsmask.f32 3328
      %vm915 = vsmask.f32 7440
      %vm916 = vmor %vm914, %vm915
      %v918 = vshrl.u32 %v865, 16
      %v920 = vrot.slane %v918, 4
      %v921 = vshll.u32 %v865, 16
      %v923 = vrot.slane %v921, 5
      %v924 = vor.u32 %v920, %v923
      %v925 = vrot.slane %v924, 4
      %v927 = vshll.u32 %v866, 16
      %v929 = vrot.slane %v927, 5
      %v930 = vsel %vm916, %v925, %v929
      %v931 = vshrl.u32 %v866, 16
      %v933 = vrot.slane %v931, 4
      %v934 = vor.u32 %v933, %v929
      %v935 = vrot.slane %v934, 4
      %v937 = vshll.u32 %v898, 16
      %v939 = vrot.slane %v937, 5
      %v940 = vsel %vm916, %v935, %v939
      %v942 = vshrl.u32 %v867, 16
      %v944 = vrot.slane %v942, 4
      %v945 = vshll.u32 %v867, 16
      %v947 = vrot.slane %v945, 5
      %v948 = vor.u32 %v944, %v947
      %v949 = vrot.slane %v948, 4
      %v951 = vshll.u32 %v868, 16
      %v953 = vrot.slane %v951, 5
      %v954 = vsel %vm916, %v949, %v953
      %v955 = vshrl.u32 %v868, 16
      %v957 = vrot.slane %v955, 4
      %v958 = vor.u32 %v957, %v953
      %v959 = vrot.slane %v958, 4
      %v961 = vshll.u32 %v899, 16
      %v963 = vrot.slane %v961, 5
      %v964 = vsel %vm916, %v959, %v963
      %v966 = vshrl.u32 %v869, 16
      %v968 = vrot.slane %v966, 4
      %v969 = vshll.u32 %v869, 16
      %v971 = vrot.slane %v969, 5
      %v972 = vor.u32 %v968, %v971
      %v973 = vrot.slane %v972, 4
      %v975 = vshll.u32 %v870, 16
      %v977 = vrot.slane %v975, 5
      %v978 = vsel %vm916, %v973, %v977
      %v979 = vshrl.u32 %v870, 16
      %v981 = vrot.slane %v979, 4
      %v982 = vor.u32 %v981, %v977
      %v983 = vrot.slane %v982, 4
      %v985 = vshll.u32 %v900, 16
      %v987 = vrot.slane %v985, 5
      %v988 = vsel %vm916, %v983, %v987
      %v990 = vshrl.u32 %v871, 16
      %v992 = vrot.slane %v990, 4
      %v993 = vshll.u32 %v871, 16
      %v995 = vrot.slane %v993, 5
      %v996 = vor.u32 %v992, %v995
      %v997 = vrot.slane %v996, 4
      %v999 = vshll.u32 %v872, 16
      %v1001 = vrot.slane %v999, 5
      %v1002 = vsel %vm916, %v997, %v1001
      %v1003 = vshrl.u32 %v872, 16
      %v1005 = vrot.slane %v1003, 4
      %v1006 = vor.u32 %v1005, %v1001
      %v1007 = vrot.slane %v1006, 4
      %v1009 = vshll.u32 %v901, 16
      %v1011 = vrot.slane %v1009, 5
      %v1012 = vsel %vm916, %v1007, %v1011
      %v1014 = vshrl.u32 %v873, 16
      %v1016 = vrot.slane %v1014, 4
      %v1017 = vshll.u32 %v873, 16
      %v1019 = vrot.slane %v1017, 5
      %v1020 = vor.u32 %v1016, %v1019
      %v1021 = vrot.slane %v1020, 4
      %v1023 = vshll.u32 %v874, 16
      %v1025 = vrot.slane %v1023, 5
      %v1026 = vsel %vm916, %v1021, %v1025
      %v1027 = vshrl.u32 %v874, 16
      %v1029 = vrot.slane %v1027, 4
      %v1030 = vor.u32 %v1029, %v1025
      %v1031 = vrot.slane %v1030, 4
      %v1033 = vshll.u32 %v902, 16
      %v1035 = vrot.slane %v1033, 5
      %v1036 = vsel %vm916, %v1031, %v1035
      %v1038 = vshrl.u32 %v875, 16
      %v1040 = vrot.slane %v1038, 4
      %v1041 = vshll.u32 %v875, 16
      %v1043 = vrot.slane %v1041, 5
      %v1044 = vor.u32 %v1040, %v1043
      %v1045 = vrot.slane %v1044, 4
      %v1047 = vshll.u32 %v876, 16
      %v1049 = vrot.slane %v1047, 5
      %v1050 = vsel %vm916, %v1045, %v1049
      %v1051 = vshrl.u32 %v876, 16
      %v1053 = vrot.slane %v1051, 4
      %v1054 = vor.u32 %v1053, %v1049
      %v1055 = vrot.slane %v1054, 4
      %v1057 = vshll.u32 %v903, 16
      %v1059 = vrot.slane %v1057, 5
      %v1060 = vsel %vm916, %v1055, %v1059
      %v1062 = vshrl.u32 %v877, 16
      %v1064 = vrot.slane %v1062, 4
      %v1065 = vshll.u32 %v877, 16
      %v1067 = vrot.slane %v1065, 5
      %v1068 = vor.u32 %v1064, %v1067
      %v1069 = vrot.slane %v1068, 4
      %v1071 = vshll.u32 %v878, 16
      %v1073 = vrot.slane %v1071, 5
      %v1074 = vsel %vm916, %v1069, %v1073
      %v1075 = vshrl.u32 %v878, 16
      %v1077 = vrot.slane %v1075, 4
      %v1078 = vor.u32 %v1077, %v1073
      %v1079 = vrot.slane %v1078, 4
      %v1081 = vshll.u32 %v904, 16
      %v1083 = vrot.slane %v1081, 5
      %v1084 = vsel %vm916, %v1079, %v1083
      %v1086 = vshrl.u32 %v879, 16
      %v1088 = vrot.slane %v1086, 4
      %v1089 = vshll.u32 %v879, 16
      %v1091 = vrot.slane %v1089, 5
      %v1092 = vor.u32 %v1088, %v1091
      %v1093 = vrot.slane %v1092, 4
      %v1095 = vshll.u32 %v880, 16
      %v1097 = vrot.slane %v1095, 5
      %v1098 = vsel %vm916, %v1093, %v1097
      %v1099 = vshrl.u32 %v880, 16
      %v1101 = vrot.slane %v1099, 4
      %v1102 = vor.u32 %v1101, %v1097
      %v1103 = vrot.slane %v1102, 4
      %v1105 = vshll.u32 %v905, 16
      %v1107 = vrot.slane %v1105, 5
      %v1108 = vsel %vm916, %v1103, %v1107
      %v1110 = vshrl.u32 %v881, 16
      %v1112 = vrot.slane %v1110, 4
      %v1113 = vshll.u32 %v881, 16
      %v1115 = vrot.slane %v1113, 5
      %v1116 = vor.u32 %v1112, %v1115
      %v1117 = vrot.slane %v1116, 4
      %v1119 = vshll.u32 %v882, 16
      %v1121 = vrot.slane %v1119, 5
      %v1122 = vsel %vm916, %v1117, %v1121
      %v1123 = vshrl.u32 %v882, 16
      %v1125 = vrot.slane %v1123, 4
      %v1126 = vor.u32 %v1125, %v1121
      %v1127 = vrot.slane %v1126, 4
      %v1129 = vshll.u32 %v906, 16
      %v1131 = vrot.slane %v1129, 5
      %v1132 = vsel %vm916, %v1127, %v1131
      %v1134 = vshrl.u32 %v883, 16
      %v1136 = vrot.slane %v1134, 4
      %v1137 = vshll.u32 %v883, 16
      %v1139 = vrot.slane %v1137, 5
      %v1140 = vor.u32 %v1136, %v1139
      %v1141 = vrot.slane %v1140, 4
      %v1143 = vshll.u32 %v884, 16
      %v1145 = vrot.slane %v1143, 5
      %v1146 = vsel %vm916, %v1141, %v1145
      %v1147 = vshrl.u32 %v884, 16
      %v1149 = vrot.slane %v1147, 4
      %v1150 = vor.u32 %v1149, %v1145
      %v1151 = vrot.slane %v1150, 4
      %v1153 = vshll.u32 %v907, 16
      %v1155 = vrot.slane %v1153, 5
      %v1156 = vsel %vm916, %v1151, %v1155
      %v1158 = vshrl.u32 %v885, 16
      %v1160 = vrot.slane %v1158, 4
      %v1161 = vshll.u32 %v885, 16
      %v1163 = vrot.slane %v1161, 5
      %v1164 = vor.u32 %v1160, %v1163
      %v1165 = vrot.slane %v1164, 4
      %v1167 = vshll.u32 %v886, 16
      %v1169 = vrot.slane %v1167, 5
      %v1170 = vsel %vm916, %v1165, %v1169
      %v1171 = vshrl.u32 %v886, 16
      %v1173 = vrot.slane %v1171, 4
      %v1174 = vor.u32 %v1173, %v1169
      %v1175 = vrot.slane %v1174, 4
      %v1177 = vshll.u32 %v908, 16
      %v1179 = vrot.slane %v1177, 5
      %v1180 = vsel %vm916, %v1175, %v1179
      %v1182 = vshrl.u32 %v887, 16
      %v1184 = vrot.slane %v1182, 4
      %v1185 = vshll.u32 %v887, 16
      %v1187 = vrot.slane %v1185, 5
      %v1188 = vor.u32 %v1184, %v1187
      %v1189 = vrot.slane %v1188, 4
      %v1191 = vshll.u32 %v888, 16
      %v1193 = vrot.slane %v1191, 5
      %v1194 = vsel %vm916, %v1189, %v1193
      %v1195 = vshrl.u32 %v888, 16
      %v1197 = vrot.slane %v1195, 4
      %v1198 = vor.u32 %v1197, %v1193
      %v1199 = vrot.slane %v1198, 4
      %v1201 = vshll.u32 %v909, 16
      %v1203 = vrot.slane %v1201, 5
      %v1204 = vsel %vm916, %v1199, %v1203
      %v1206 = vshrl.u32 %v889, 16
      %v1208 = vrot.slane %v1206, 4
      %v1209 = vshll.u32 %v889, 16
      %v1211 = vrot.slane %v1209, 5
      %v1212 = vor.u32 %v1208, %v1211
      %v1213 = vrot.slane %v1212, 4
      %v1215 = vshll.u32 %v890, 16
      %v1217 = vrot.slane %v1215, 5
      %v1218 = vsel %vm916, %v1213, %v1217
      %v1219 = vshrl.u32 %v890, 16
      %v1221 = vrot.slane %v1219, 4
      %v1222 = vor.u32 %v1221, %v1217
      %v1223 = vrot.slane %v1222, 4
      %v1225 = vshll.u32 %v910, 16
      %v1227 = vrot.slane %v1225, 5
      %v1228 = vsel %vm916, %v1223, %v1227
      %v1230 = vshrl.u32 %v891, 16
      %v1232 = vrot.slane %v1230, 4
      %v1233 = vshll.u32 %v891, 16
      %v1235 = vrot.slane %v1233, 5
      %v1236 = vor.u32 %v1232, %v1235
      %v1237 = vrot.slane %v1236, 4
      %v1239 = vshll.u32 %v892, 16
      %v1241 = vrot.slane %v1239, 5
      %v1242 = vsel %vm916, %v1237, %v1241
      %v1243 = vshrl.u32 %v892, 16
      %v1245 = vrot.slane %v1243, 4
      %v1246 = vor.u32 %v1245, %v1241
      %v1247 = vrot.slane %v1246, 4
      %v1249 = vshll.u32 %v911, 16
      %v1251 = vrot.slane %v1249, 5
      %v1252 = vsel %vm916, %v1247, %v1251
      %v1254 = vshrl.u32 %v893, 16
      %v1256 = vrot.slane %v1254, 4
      %v1257 = vshll.u32 %v893, 16
      %v1259 = vrot.slane %v1257, 5
      %v1260 = vor.u32 %v1256, %v1259
      %v1261 = vrot.slane %v1260, 4
      %v1263 = vshll.u32 %v894, 16
      %v1265 = vrot.slane %v1263, 5
      %v1266 = vsel %vm916, %v1261, %v1265
      %v1267 = vshrl.u32 %v894, 16
      %v1269 = vrot.slane %v1267, 4
      %v1270 = vor.u32 %v1269, %v1265
      %v1271 = vrot.slane %v1270, 4
      %v1273 = vshll.u32 %v912, 16
      %v1275 = vrot.slane %v1273, 5
      %v1276 = vsel %vm916, %v1271, %v1275
      %v1278 = vshrl.u32 %v895, 16
      %v1280 = vrot.slane %v1278, 4
      %v1281 = vshll.u32 %v895, 16
      %v1283 = vrot.slane %v1281, 5
      %v1284 = vor.u32 %v1280, %v1283
      %v1285 = vrot.slane %v1284, 4
      %v1287 = vshll.u32 %v896, 16
      %v1289 = vrot.slane %v1287, 5
      %v1290 = vsel %vm916, %v1285, %v1289
      %v1291 = vshrl.u32 %v896, 16
      %v1293 = vrot.slane %v1291, 4
      %v1294 = vor.u32 %v1293, %v1289
      %v1295 = vrot.slane %v1294, 4
      %v1297 = vshll.u32 %v913, 16
      %v1299 = vrot.slane %v1297, 5
      %v1300 = vsel %vm916, %v1295, %v1299
      %s1301 = scalar_lea.vmem %s4, 4
      %v1302 = vld [vmem:[%s1301] sm:$0xf]
      %v1303 = vunpack.c.l.b16 %v930
      %v1304 = vunpack.c.l.b16 %v940
      %v1305 = vunpack.c.l.b16 %v954
      %v1306 = vunpack.c.l.b16 %v964
      %v1307 = vunpack.c.l.b16 %v978
      %v1308 = vunpack.c.l.b16 %v988
      %v1309 = vunpack.c.l.b16 %v1002
      %v1310 = vunpack.c.l.b16 %v1012
      %v1311 = vunpack.c.l.b16 %v1026
      %v1312 = vunpack.c.l.b16 %v1036
      %v1313 = vunpack.c.l.b16 %v1050
      %v1314 = vunpack.c.l.b16 %v1060
      %v1315 = vunpack.c.l.b16 %v1074
      %v1316 = vunpack.c.l.b16 %v1084
      %v1317 = vunpack.c.l.b16 %v1098
      %v1318 = vunpack.c.l.b16 %v1108
      %v1319 = vunpack.c.l.b16 %v1122
      %v1320 = vunpack.c.l.b16 %v1132
      %v1321 = vunpack.c.l.b16 %v1146
      %v1322 = vunpack.c.l.b16 %v1156
      %v1323 = vunpack.c.l.b16 %v1170
      %v1324 = vunpack.c.l.b16 %v1180
      %v1325 = vunpack.c.l.b16 %v1194
      %v1326 = vunpack.c.l.b16 %v1204
      %v1327 = vunpack.c.l.b16 %v1218
      %v1328 = vunpack.c.l.b16 %v1228
      %v1329 = vunpack.c.l.b16 %v1242
      %v1330 = vunpack.c.l.b16 %v1252
      %v1331 = vunpack.c.l.b16 %v1266
      %v1332 = vunpack.c.l.b16 %v1276
      %v1333 = vunpack.c.l.b16 %v1290
      %v1334 = vunpack.c.l.b16 %v1300
      %v1335 = vpack.c.b16 %v1304, %v1303
      %v1336 = vpack.c.b16 %v1306, %v1305
      %v1337 = vpack.c.b16 %v1308, %v1307
      %v1338 = vpack.c.b16 %v1310, %v1309
      %v1339 = vpack.c.b16 %v1312, %v1311
      %v1340 = vpack.c.b16 %v1314, %v1313
      %v1341 = vpack.c.b16 %v1316, %v1315
      %v1342 = vpack.c.b16 %v1318, %v1317
      %v1343 = vpack.c.b16 %v1320, %v1319
      %v1344 = vpack.c.b16 %v1322, %v1321
      %v1345 = vpack.c.b16 %v1324, %v1323
      %v1346 = vpack.c.b16 %v1326, %v1325
      %v1347 = vpack.c.b16 %v1328, %v1327
      %v1348 = vpack.c.b16 %v1330, %v1329
      %v1349 = vpack.c.b16 %v1332, %v1331
      %v1350 = vpack.c.b16 %v1334, %v1333
      %vm1351 = vcmask 64512
      %v1353 = vsel %vm1351, %v1335, 0
      %v1356 = vsel %vm1351, %v1336, 0
      %v1359 = vsel %vm1351, %v1337, 0
      %v1362 = vsel %vm1351, %v1338, 0
      %v1365 = vsel %vm1351, %v1339, 0
      %v1368 = vsel %vm1351, %v1340, 0
      %v1371 = vsel %vm1351, %v1341, 0
      %v1374 = vsel %vm1351, %v1342, 0
      %v1377 = vsel %vm1351, %v1343, 0
      %v1380 = vsel %vm1351, %v1344, 0
      %v1383 = vsel %vm1351, %v1345, 0
      %v1386 = vsel %vm1351, %v1346, 0
      %v1389 = vsel %vm1351, %v1347, 0
      %v1392 = vsel %vm1351, %v1348, 0
      %v1395 = vsel %vm1351, %v1349, 0
      %v1398 = vsel %vm1351, %v1350, 0
      %vm1400 = vcmask 1043456
      %v1402 = vsel %vm1400, %v1302, 0
      %1404 = vmatprep.subr.bf16.mxu0 0
      %1405 = vmatpush1.bf16.msra.mxu0 0
      %1406 = vmatprep.subr.bf16.mxu0 0
      %1407 = vmatpush1.bf16.msra.mxu0 0
      %1408 = vmatprep.subr.bf16.mxu0 0
      %1409 = vmatpush1.bf16.msra.mxu0 0
      %1410 = vmatprep.subr.bf16.mxu0 0
      %1411 = vmatpush1.bf16.msra.mxu0 0
      %1412 = vmatprep.subr.bf16.mxu0 0
      %1413 = vmatpush1.bf16.msra.mxu0 0
      %1414 = vmatprep.subr.bf16.mxu0 0
      %1415 = vmatpush1.bf16.msra.mxu0 0
      %1416 = vmatprep.subr.bf16.mxu0 0
      %1417 = vmatpush1.bf16.msra.mxu0 0
      %1418 = vmatprep.subr.bf16.mxu0 0
      %1419 = vmatpush1.bf16.msra.mxu0 %v1402
      %1420 = vmatprep.subr.bf16.mxu0 0
      %1421 = vmatpush2.bf16.msra.mxu0 0
      %1422 = vmatprep.subr.bf16.mxu0 0
      %1423 = vmatpush2.bf16.msra.mxu0 0
      %1424 = vmatprep.subr.bf16.mxu0 0
      %1425 = vmatpush2.bf16.msra.mxu0 0
      %1426 = vmatprep.subr.bf16.mxu0 0
      %1427 = vmatpush2.bf16.msra.mxu0 0
      %1428 = vmatprep.subr.bf16.mxu0 0
      %1429 = vmatpush2.bf16.msra.mxu0 0
      %1430 = vmatprep.subr.bf16.mxu0 0
      %1431 = vmatpush2.bf16.msra.mxu0 0
      %1432 = vmatprep.subr.bf16.mxu0 0
      %1433 = vmatpush2.bf16.msra.mxu0 0
      %1434 = vmatprep.subr.bf16.mxu0 0
      %1435 = vmatpush2.bf16.msra.mxu0 0
      %1436 = vmatprep.mubr.bf16.mxu0 0
      %1437 = vmatmul.mubr.bf16.gmra.mxu0 %v1353
      %v1438 = vpop.f32.mrf.mxu0
      %v1439 = vadd.f32 0.0, %v1438
      %v1440 = vpop.f32.mrf.mxu0
      %v1441 = vpop.f32.mrf.mxu0
      %v1442 = vadd.f32 0.0, %v1441
      %v1443 = vpop.f32.mrf.mxu0
      %1444 = vmatprep.mubr.bf16.mxu0 0
      %1445 = vmatmul.mubr.bf16.gmra.mxu0 %v1356
      %v1446 = vpop.f32.mrf.mxu0
      %v1447 = vadd.f32 0.0, %v1446
      %v1448 = vpop.f32.mrf.mxu0
      %v1449 = vpop.f32.mrf.mxu0
      %v1450 = vadd.f32 0.0, %v1449
      %v1451 = vpop.f32.mrf.mxu0
      %1452 = vmatprep.mubr.bf16.mxu0 0
      %1453 = vmatmul.mubr.bf16.gmra.mxu0 %v1359
      %v1454 = vpop.f32.mrf.mxu0
      %v1455 = vadd.f32 0.0, %v1454
      %v1456 = vpop.f32.mrf.mxu0
      %v1457 = vpop.f32.mrf.mxu0
      %v1458 = vadd.f32 0.0, %v1457
      %v1459 = vpop.f32.mrf.mxu0
      %1460 = vmatprep.mubr.bf16.mxu0 0
      %1461 = vmatmul.mubr.bf16.gmra.mxu0 %v1362
      %v1462 = vpop.f32.mrf.mxu0
      %v1463 = vadd.f32 0.0, %v1462
      %v1464 = vpop.f32.mrf.mxu0
      %v1465 = vpop.f32.mrf.mxu0
      %v1466 = vadd.f32 0.0, %v1465
      %v1467 = vpop.f32.mrf.mxu0
      %1468 = vmatprep.mubr.bf16.mxu0 0
      %1469 = vmatmul.mubr.bf16.gmra.mxu0 %v1365
      %v1470 = vpop.f32.mrf.mxu0
      %v1471 = vadd.f32 0.0, %v1470
      %v1472 = vpop.f32.mrf.mxu0
      %v1473 = vpop.f32.mrf.mxu0
      %v1474 = vadd.f32 0.0, %v1473
      %v1475 = vpop.f32.mrf.mxu0
      %1476 = vmatprep.mubr.bf16.mxu0 0
      %1477 = vmatmul.mubr.bf16.gmra.mxu0 %v1368
      %v1478 = vpop.f32.mrf.mxu0
      %v1479 = vadd.f32 0.0, %v1478
      %v1480 = vpop.f32.mrf.mxu0
      %v1481 = vpop.f32.mrf.mxu0
      %v1482 = vadd.f32 0.0, %v1481
      %v1483 = vpop.f32.mrf.mxu0
      %1484 = vmatprep.mubr.bf16.mxu0 0
      %1485 = vmatmul.mubr.bf16.gmra.mxu0 %v1371
      %v1486 = vpop.f32.mrf.mxu0
      %v1487 = vadd.f32 0.0, %v1486
      %v1488 = vpop.f32.mrf.mxu0
      %v1489 = vpop.f32.mrf.mxu0
      %v1490 = vadd.f32 0.0, %v1489
      %v1491 = vpop.f32.mrf.mxu0
      %1492 = vmatprep.mubr.bf16.mxu0 0
      %1493 = vmatmul.mubr.bf16.gmra.mxu0 %v1374
      %v1494 = vpop.f32.mrf.mxu0
      %v1495 = vadd.f32 0.0, %v1494
      %v1496 = vpop.f32.mrf.mxu0
      %v1497 = vpop.f32.mrf.mxu0
      %v1498 = vadd.f32 0.0, %v1497
      %v1499 = vpop.f32.mrf.mxu0
      %1500 = vmatprep.mubr.bf16.mxu0 0
      %1501 = vmatmul.mubr.bf16.gmra.mxu0 %v1377
      %v1502 = vpop.f32.mrf.mxu0
      %v1503 = vadd.f32 0.0, %v1502
      %v1504 = vpop.f32.mrf.mxu0
      %v1505 = vpop.f32.mrf.mxu0
      %v1506 = vadd.f32 0.0, %v1505
      %v1507 = vpop.f32.mrf.mxu0
      %1508 = vmatprep.mubr.bf16.mxu0 0
      %1509 = vmatmul.mubr.bf16.gmra.mxu0 %v1380
      %v1510 = vpop.f32.mrf.mxu0
      %v1511 = vadd.f32 0.0, %v1510
      %v1512 = vpop.f32.mrf.mxu0
      %v1513 = vpop.f32.mrf.mxu0
      %v1514 = vadd.f32 0.0, %v1513
      %v1515 = vpop.f32.mrf.mxu0
      %1516 = vmatprep.mubr.bf16.mxu0 0
      %1517 = vmatmul.mubr.bf16.gmra.mxu0 %v1383
      %v1518 = vpop.f32.mrf.mxu0
      %v1519 = vadd.f32 0.0, %v1518
      %v1520 = vpop.f32.mrf.mxu0
      %v1521 = vpop.f32.mrf.mxu0
      %v1522 = vadd.f32 0.0, %v1521
      %v1523 = vpop.f32.mrf.mxu0
      %1524 = vmatprep.mubr.bf16.mxu0 0
      %1525 = vmatmul.mubr.bf16.gmra.mxu0 %v1386
      %v1526 = vpop.f32.mrf.mxu0
      %v1527 = vadd.f32 0.0, %v1526
      %v1528 = vpop.f32.mrf.mxu0
      %v1529 = vpop.f32.mrf.mxu0
      %v1530 = vadd.f32 0.0, %v1529
      %v1531 = vpop.f32.mrf.mxu0
      %1532 = vmatprep.mubr.bf16.mxu0 0
      %1533 = vmatmul.mubr.bf16.gmra.mxu0 %v1389
      %v1534 = vpop.f32.mrf.mxu0
      %v1535 = vadd.f32 0.0, %v1534
      %v1536 = vpop.f32.mrf.mxu0
      %v1537 = vpop.f32.mrf.mxu0
      %v1538 = vadd.f32 0.0, %v1537
      %v1539 = vpop.f32.mrf.mxu0
      %1540 = vmatprep.mubr.bf16.mxu0 0
      %1541 = vmatmul.mubr.bf16.gmra.mxu0 %v1392
      %v1542 = vpop.f32.mrf.mxu0
      %v1543 = vadd.f32 0.0, %v1542
      %v1544 = vpop.f32.mrf.mxu0
      %v1545 = vpop.f32.mrf.mxu0
      %v1546 = vadd.f32 0.0, %v1545
      %v1547 = vpop.f32.mrf.mxu0
      %1548 = vmatprep.mubr.bf16.mxu0 0
      %1549 = vmatmul.mubr.bf16.gmra.mxu0 %v1395
      %v1550 = vpop.f32.mrf.mxu0
      %v1551 = vadd.f32 0.0, %v1550
      %v1552 = vpop.f32.mrf.mxu0
      %v1553 = vpop.f32.mrf.mxu0
      %v1554 = vadd.f32 0.0, %v1553
      %v1555 = vpop.f32.mrf.mxu0
      %1556 = vmatprep.mubr.bf16.mxu0 0
      %1557 = vmatmul.mubr.bf16.gmra.mxu0 %v1398
      %v1558 = vpop.f32.mrf.mxu0
      %v1559 = vadd.f32 0.0, %v1558
      %v1560 = vpop.f32.mrf.mxu0
      %v1561 = vpop.f32.mrf.mxu0
      %v1562 = vadd.f32 0.0, %v1561
      %v1563 = vpop.f32.mrf.mxu0
      %1564 = vdwg.mxu0
      %v1597 = vunpack.c.l.b16 %v865
      %v1598 = vunpack.c.l.b16 %v866
      %v1599 = vunpack.c.l.b16 %v867
      %v1600 = vunpack.c.l.b16 %v868
      %v1601 = vunpack.c.l.b16 %v869
      %v1602 = vunpack.c.l.b16 %v870
      %v1603 = vunpack.c.l.b16 %v871
      %v1604 = vunpack.c.l.b16 %v872
      %v1605 = vunpack.c.l.b16 %v873
      %v1606 = vunpack.c.l.b16 %v874
      %v1607 = vunpack.c.l.b16 %v875
      %v1608 = vunpack.c.l.b16 %v876
      %v1609 = vunpack.c.l.b16 %v877
      %v1610 = vunpack.c.l.b16 %v878
      %v1611 = vunpack.c.l.b16 %v879
      %v1612 = vunpack.c.l.b16 %v880
      %v1613 = vunpack.c.l.b16 %v881
      %v1614 = vunpack.c.l.b16 %v882
      %v1615 = vunpack.c.l.b16 %v883
      %v1616 = vunpack.c.l.b16 %v884
      %v1617 = vunpack.c.l.b16 %v885
      %v1618 = vunpack.c.l.b16 %v886
      %v1619 = vunpack.c.l.b16 %v887
      %v1620 = vunpack.c.l.b16 %v888
      %v1621 = vunpack.c.l.b16 %v889
      %v1622 = vunpack.c.l.b16 %v890
      %v1623 = vunpack.c.l.b16 %v891
      %v1624 = vunpack.c.l.b16 %v892
      %v1625 = vunpack.c.l.b16 %v893
      %v1626 = vunpack.c.l.b16 %v894
      %v1627 = vunpack.c.l.b16 %v895
      %v1628 = vunpack.c.l.b16 %v896
      %v1629 = vpack.c.b16 %v1598, %v1597
      %v1630 = vpack.c.b16 %v1600, %v1599
      %v1631 = vpack.c.b16 %v1602, %v1601
      %v1632 = vpack.c.b16 %v1604, %v1603
      %v1633 = vpack.c.b16 %v1606, %v1605
      %v1634 = vpack.c.b16 %v1608, %v1607
      %v1635 = vpack.c.b16 %v1610, %v1609
      %v1636 = vpack.c.b16 %v1612, %v1611
      %v1637 = vpack.c.b16 %v1614, %v1613
      %v1638 = vpack.c.b16 %v1616, %v1615
      %v1639 = vpack.c.b16 %v1618, %v1617
      %v1640 = vpack.c.b16 %v1620, %v1619
      %v1641 = vpack.c.b16 %v1622, %v1621
      %v1642 = vpack.c.b16 %v1624, %v1623
      %v1643 = vpack.c.b16 %v1626, %v1625
      %v1644 = vpack.c.b16 %v1628, %v1627
      %v1646 = vsel %vm1351, %v1629, 0
      %v1649 = vsel %vm1351, %v1630, 0
      %v1652 = vsel %vm1351, %v1631, 0
      %v1655 = vsel %vm1351, %v1632, 0
      %v1658 = vsel %vm1351, %v1633, 0
      %v1661 = vsel %vm1351, %v1634, 0
      %v1664 = vsel %vm1351, %v1635, 0
      %v1667 = vsel %vm1351, %v1636, 0
      %v1670 = vsel %vm1351, %v1637, 0
      %v1673 = vsel %vm1351, %v1638, 0
      %v1676 = vsel %vm1351, %v1639, 0
      %v1679 = vsel %vm1351, %v1640, 0
      %v1682 = vsel %vm1351, %v1641, 0
      %v1685 = vsel %vm1351, %v1642, 0
      %v1688 = vsel %vm1351, %v1643, 0
      %v1691 = vsel %vm1351, %v1644, 0
      %v1694 = vsel %vm1400, %v897, 0
      %1696 = vmatprep.subr.bf16.mxu0 0
      %1697 = vmatpush1.bf16.msra.mxu0 0
      %1698 = vmatprep.subr.bf16.mxu0 0
      %1699 = vmatpush1.bf16.msra.mxu0 0
      %1700 = vmatprep.subr.bf16.mxu0 0
      %1701 = vmatpush1.bf16.msra.mxu0 0
      %1702 = vmatprep.subr.bf16.mxu0 0
      %1703 = vmatpush1.bf16.msra.mxu0 0
      %1704 = vmatprep.subr.bf16.mxu0 0
      %1705 = vmatpush1.bf16.msra.mxu0 0
      %1706 = vmatprep.subr.bf16.mxu0 0
      %1707 = vmatpush1.bf16.msra.mxu0 0
      %1708 = vmatprep.subr.bf16.mxu0 0
      %1709 = vmatpush1.bf16.msra.mxu0 0
      %1710 = vmatprep.subr.bf16.mxu0 0
      %1711 = vmatpush1.bf16.msra.mxu0 %v1694
      %1712 = vmatprep.subr.bf16.mxu0 0
      %1713 = vmatpush2.bf16.msra.mxu0 0
      %1714 = vmatprep.subr.bf16.mxu0 0
      %1715 = vmatpush2.bf16.msra.mxu0 0
      %1716 = vmatprep.subr.bf16.mxu0 0
      %1717 = vmatpush2.bf16.msra.mxu0 0
      %1718 = vmatprep.subr.bf16.mxu0 0
      %1719 = vmatpush2.bf16.msra.mxu0 0
      %1720 = vmatprep.subr.bf16.mxu0 0
      %1721 = vmatpush2.bf16.msra.mxu0 0
      %1722 = vmatprep.subr.bf16.mxu0 0
      %1723 = vmatpush2.bf16.msra.mxu0 0
      %1724 = vmatprep.subr.bf16.mxu0 0
      %1725 = vmatpush2.bf16.msra.mxu0 0
      %1726 = vmatprep.subr.bf16.mxu0 0
      %1727 = vmatpush2.bf16.msra.mxu0 0
      %1728 = vmatprep.mubr.bf16.mxu0 0
      %1729 = vmatmul.mubr.bf16.gmra.mxu0 %v1646
      %v1730 = vpop.f32.mrf.mxu0
      %v1731 = vadd.f32 %v1439, %v1730
      %v1732 = vpop.f32.mrf.mxu0
      %v1733 = vpop.f32.mrf.mxu0
      %v1734 = vadd.f32 %v1442, %v1733
      %v1735 = vpop.f32.mrf.mxu0
      %1736 = vmatprep.mubr.bf16.mxu0 0
      %1737 = vmatmul.mubr.bf16.gmra.mxu0 %v1649
      %v1738 = vpop.f32.mrf.mxu0
      %v1739 = vadd.f32 %v1447, %v1738
      %v1740 = vpop.f32.mrf.mxu0
      %v1741 = vpop.f32.mrf.mxu0
      %v1742 = vadd.f32 %v1450, %v1741
      %v1743 = vpop.f32.mrf.mxu0
      %1744 = vmatprep.mubr.bf16.mxu0 0
      %1745 = vmatmul.mubr.bf16.gmra.mxu0 %v1652
      %v1746 = vpop.f32.mrf.mxu0
      %v1747 = vadd.f32 %v1455, %v1746
      %v1748 = vpop.f32.mrf.mxu0
      %v1749 = vpop.f32.mrf.mxu0
      %v1750 = vadd.f32 %v1458, %v1749
      %v1751 = vpop.f32.mrf.mxu0
      %1752 = vmatprep.mubr.bf16.mxu0 0
      %1753 = vmatmul.mubr.bf16.gmra.mxu0 %v1655
      %v1754 = vpop.f32.mrf.mxu0
      %v1755 = vadd.f32 %v1463, %v1754
      %v1756 = vpop.f32.mrf.mxu0
      %v1757 = vpop.f32.mrf.mxu0
      %v1758 = vadd.f32 %v1466, %v1757
      %v1759 = vpop.f32.mrf.mxu0
      %1760 = vmatprep.mubr.bf16.mxu0 0
      %1761 = vmatmul.mubr.bf16.gmra.mxu0 %v1658
      %v1762 = vpop.f32.mrf.mxu0
      %v1763 = vadd.f32 %v1471, %v1762
      %v1764 = vpop.f32.mrf.mxu0
      %v1765 = vpop.f32.mrf.mxu0
      %v1766 = vadd.f32 %v1474, %v1765
      %v1767 = vpop.f32.mrf.mxu0
      %1768 = vmatprep.mubr.bf16.mxu0 0
      %1769 = vmatmul.mubr.bf16.gmra.mxu0 %v1661
      %v1770 = vpop.f32.mrf.mxu0
      %v1771 = vadd.f32 %v1479, %v1770
      %v1772 = vpop.f32.mrf.mxu0
      %v1773 = vpop.f32.mrf.mxu0
      %v1774 = vadd.f32 %v1482, %v1773
      %v1775 = vpop.f32.mrf.mxu0
      %1776 = vmatprep.mubr.bf16.mxu0 0
      %1777 = vmatmul.mubr.bf16.gmra.mxu0 %v1664
      %v1778 = vpop.f32.mrf.mxu0
      %v1779 = vadd.f32 %v1487, %v1778
      %v1780 = vpop.f32.mrf.mxu0
      %v1781 = vpop.f32.mrf.mxu0
      %v1782 = vadd.f32 %v1490, %v1781
      %v1783 = vpop.f32.mrf.mxu0
      %1784 = vmatprep.mubr.bf16.mxu0 0
      %1785 = vmatmul.mubr.bf16.gmra.mxu0 %v1667
      %v1786 = vpop.f32.mrf.mxu0
      %v1787 = vadd.f32 %v1495, %v1786
      %v1788 = vpop.f32.mrf.mxu0
      %v1789 = vpop.f32.mrf.mxu0
      %v1790 = vadd.f32 %v1498, %v1789
      %v1791 = vpop.f32.mrf.mxu0
      %1792 = vmatprep.mubr.bf16.mxu0 0
      %1793 = vmatmul.mubr.bf16.gmra.mxu0 %v1670
      %v1794 = vpop.f32.mrf.mxu0
      %v1795 = vadd.f32 %v1503, %v1794
      %v1796 = vpop.f32.mrf.mxu0
      %v1797 = vpop.f32.mrf.mxu0
      %v1798 = vadd.f32 %v1506, %v1797
      %v1799 = vpop.f32.mrf.mxu0
      %1800 = vmatprep.mubr.bf16.mxu0 0
      %1801 = vmatmul.mubr.bf16.gmra.mxu0 %v1673
      %v1802 = vpop.f32.mrf.mxu0
      %v1803 = vadd.f32 %v1511, %v1802
      %v1804 = vpop.f32.mrf.mxu0
      %v1805 = vpop.f32.mrf.mxu0
      %v1806 = vadd.f32 %v1514, %v1805
      %v1807 = vpop.f32.mrf.mxu0
      %1808 = vmatprep.mubr.bf16.mxu0 0
      %1809 = vmatmul.mubr.bf16.gmra.mxu0 %v1676
      %v1810 = vpop.f32.mrf.mxu0
      %v1811 = vadd.f32 %v1519, %v1810
      %v1812 = vpop.f32.mrf.mxu0
      %v1813 = vpop.f32.mrf.mxu0
      %v1814 = vadd.f32 %v1522, %v1813
      %v1815 = vpop.f32.mrf.mxu0
      %1816 = vmatprep.mubr.bf16.mxu0 0
      %1817 = vmatmul.mubr.bf16.gmra.mxu0 %v1679
      %v1818 = vpop.f32.mrf.mxu0
      %v1819 = vadd.f32 %v1527, %v1818
      %v1820 = vpop.f32.mrf.mxu0
      %v1821 = vpop.f32.mrf.mxu0
      %v1822 = vadd.f32 %v1530, %v1821
      %v1823 = vpop.f32.mrf.mxu0
      %1824 = vmatprep.mubr.bf16.mxu0 0
      %1825 = vmatmul.mubr.bf16.gmra.mxu0 %v1682
      %v1826 = vpop.f32.mrf.mxu0
      %v1827 = vadd.f32 %v1535, %v1826
      %v1828 = vpop.f32.mrf.mxu0
      %v1829 = vpop.f32.mrf.mxu0
      %v1830 = vadd.f32 %v1538, %v1829
      %v1831 = vpop.f32.mrf.mxu0
      %1832 = vmatprep.mubr.bf16.mxu0 0
      %1833 = vmatmul.mubr.bf16.gmra.mxu0 %v1685
      %v1834 = vpop.f32.mrf.mxu0
      %v1835 = vadd.f32 %v1543, %v1834
      %v1836 = vpop.f32.mrf.mxu0
      %v1837 = vpop.f32.mrf.mxu0
      %v1838 = vadd.f32 %v1546, %v1837
      %v1839 = vpop.f32.mrf.mxu0
      %1840 = vmatprep.mubr.bf16.mxu0 0
      %1841 = vmatmul.mubr.bf16.gmra.mxu0 %v1688
      %v1842 = vpop.f32.mrf.mxu0
      %v1843 = vadd.f32 %v1551, %v1842
      %v1844 = vpop.f32.mrf.mxu0
      %v1845 = vpop.f32.mrf.mxu0
      %v1846 = vadd.f32 %v1554, %v1845
      %v1847 = vpop.f32.mrf.mxu0
      %1848 = vmatprep.mubr.bf16.mxu0 0
      %1849 = vmatmul.mubr.bf16.gmra.mxu0 %v1691
      %v1850 = vpop.f32.mrf.mxu0
      %v1851 = vadd.f32 %v1559, %v1850
      %v1852 = vpop.f32.mrf.mxu0
      %v1853 = vpop.f32.mrf.mxu0
      %v1854 = vadd.f32 %v1562, %v1853
      %v1855 = vpop.f32.mrf.mxu0
      %1856 = vdwg.mxu0
      %v1857 = vld [vmem:[#allocation2] sm:$0xe]
      %v1858 = vld [vmem:[#allocation2 + $0xc] sm:$0xe]
      %v1859 = vld [vmem:[#allocation2 + $0x18] sm:$0xe]
      %v1860 = vld [vmem:[#allocation2 + $0x24] sm:$0xe]
      %v1861 = vld [vmem:[#allocation2 + $0x30] sm:$0xe]
      %v1862 = vld [vmem:[#allocation2 + $0x3c] sm:$0xe]
      %v1863 = vld [vmem:[#allocation2 + $0x48] sm:$0xe]
      %v1864 = vld [vmem:[#allocation2 + $0x54] sm:$0xe]
      %v1865 = vld [vmem:[#allocation2 + $0x60] sm:$0xe]
      %v1866 = vld [vmem:[#allocation2 + $0x6c] sm:$0xe]
      %v1867 = vld [vmem:[#allocation2 + $0x78] sm:$0xe]
      %v1868 = vld [vmem:[#allocation2 + $0x84] sm:$0xe]
      %v1869 = vld [vmem:[#allocation2 + $0x90] sm:$0xe]
      %v1870 = vld [vmem:[#allocation2 + $0x9c] sm:$0xe]
      %v1871 = vld [vmem:[#allocation2 + $0xa8] sm:$0xe]
      %v1872 = vld [vmem:[#allocation2 + $0xb4] sm:$0xe]
      %vm1905 = vcmask 1042432
      %vm1906 = vcmask 1046532
      %vm1907 = vmor %vm1905, %vm1906
      %v1908 = vrot.slane %v1857, 5
      %v1909 = vrot.slane %v1908, 4
      %v1910 = vrot.slane %v866, 5
      %v1911 = vsel %vm1907, %v1909, %v1910
      %v1912 = vrot.slane %v1910, 4
      %v1913 = vrot.slane %v898, 5
      %v1914 = vsel %vm1907, %v1912, %v1913
      %v1915 = vrot.slane %v1858, 5
      %v1916 = vrot.slane %v1915, 4
      %v1917 = vrot.slane %v868, 5
      %v1918 = vsel %vm1907, %v1916, %v1917
      %v1919 = vrot.slane %v1917, 4
      %v1920 = vrot.slane %v899, 5
      %v1921 = vsel %vm1907, %v1919, %v1920
      %v1922 = vrot.slane %v1859, 5
      %v1923 = vrot.slane %v1922, 4
      %v1924 = vrot.slane %v870, 5
      %v1925 = vsel %vm1907, %v1923, %v1924
      %v1926 = vrot.slane %v1924, 4
      %v1927 = vrot.slane %v900, 5
      %v1928 = vsel %vm1907, %v1926, %v1927
      %v1929 = vrot.slane %v1860, 5
      %v1930 = vrot.slane %v1929, 4
      %v1931 = vrot.slane %v872, 5
      %v1932 = vsel %vm1907, %v1930, %v1931
      %v1933 = vrot.slane %v1931, 4
      %v1934 = vrot.slane %v901, 5
      %v1935 = vsel %vm1907, %v1933, %v1934
      %v1936 = vrot.slane %v1861, 5
      %v1937 = vrot.slane %v1936, 4
      %v1938 = vrot.slane %v874, 5
      %v1939 = vsel %vm1907, %v1937, %v1938
      %v1940 = vrot.slane %v1938, 4
      %v1941 = vrot.slane %v902, 5
      %v1942 = vsel %vm1907, %v1940, %v1941
      %v1943 = vrot.slane %v1862, 5
      %v1944 = vrot.slane %v1943, 4
      %v1945 = vrot.slane %v876, 5
      %v1946 = vsel %vm1907, %v1944, %v1945
      %v1947 = vrot.slane %v1945, 4
      %v1948 = vrot.slane %v903, 5
      %v1949 = vsel %vm1907, %v1947, %v1948
      %v1950 = vrot.slane %v1863, 5
      %v1951 = vrot.slane %v1950, 4
      %v1952 = vrot.slane %v878, 5
      %v1953 = vsel %vm1907, %v1951, %v1952
      %v1954 = vrot.slane %v1952, 4
      %v1955 = vrot.slane %v904, 5
      %v1956 = vsel %vm1907, %v1954, %v1955
      %v1957 = vrot.slane %v1864, 5
      %v1958 = vrot.slane %v1957, 4
      %v1959 = vrot.slane %v880, 5
      %v1960 = vsel %vm1907, %v1958, %v1959
      %v1961 = vrot.slane %v1959, 4
      %v1962 = vrot.slane %v905, 5
      %v1963 = vsel %vm1907, %v1961, %v1962
      %v1964 = vrot.slane %v1865, 5
      %v1965 = vrot.slane %v1964, 4
      %v1966 = vrot.slane %v882, 5
      %v1967 = vsel %vm1907, %v1965, %v1966
      %v1968 = vrot.slane %v1966, 4
      %v1969 = vrot.slane %v906, 5
      %v1970 = vsel %vm1907, %v1968, %v1969
      %v1971 = vrot.slane %v1866, 5
      %v1972 = vrot.slane %v1971, 4
      %v1973 = vrot.slane %v884, 5
      %v1974 = vsel %vm1907, %v1972, %v1973
      %v1975 = vrot.slane %v1973, 4
      %v1976 = vrot.slane %v907, 5
      %v1977 = vsel %vm1907, %v1975, %v1976
      %v1978 = vrot.slane %v1867, 5
      %v1979 = vrot.slane %v1978, 4
      %v1980 = vrot.slane %v886, 5
      %v1981 = vsel %vm1907, %v1979, %v1980
      %v1982 = vrot.slane %v1980, 4
      %v1983 = vrot.slane %v908, 5
      %v1984 = vsel %vm1907, %v1982, %v1983
      %v1985 = vrot.slane %v1868, 5
      %v1986 = vrot.slane %v1985, 4
      %v1987 = vrot.slane %v888, 5
      %v1988 = vsel %vm1907, %v1986, %v1987
      %v1989 = vrot.slane %v1987, 4
      %v1990 = vrot.slane %v909, 5
      %v1991 = vsel %vm1907, %v1989, %v1990
      %v1992 = vrot.slane %v1869, 5
      %v1993 = vrot.slane %v1992, 4
      %v1994 = vrot.slane %v890, 5
      %v1995 = vsel %vm1907, %v1993, %v1994
      %v1996 = vrot.slane %v1994, 4
      %v1997 = vrot.slane %v910, 5
      %v1998 = vsel %vm1907, %v1996, %v1997
      %v1999 = vrot.slane %v1870, 5
      %v2000 = vrot.slane %v1999, 4
      %v2001 = vrot.slane %v892, 5
      %v2002 = vsel %vm1907, %v2000, %v2001
      %v2003 = vrot.slane %v2001, 4
      %v2004 = vrot.slane %v911, 5
      %v2005 = vsel %vm1907, %v2003, %v2004
      %v2006 = vrot.slane %v1871, 5
      %v2007 = vrot.slane %v2006, 4
      %v2008 = vrot.slane %v894, 5
      %v2009 = vsel %vm1907, %v2007, %v2008
      %v2010 = vrot.slane %v2008, 4
      %v2011 = vrot.slane %v912, 5
      %v2012 = vsel %vm1907, %v2010, %v2011
      %v2013 = vrot.slane %v1872, 5
      %v2014 = vrot.slane %v2013, 4
      %v2015 = vrot.slane %v896, 5
      %v2016 = vsel %vm1907, %v2014, %v2015
      %v2017 = vrot.slane %v2015, 4
      %v2018 = vrot.slane %v913, 5
      %v2019 = vsel %vm1907, %v2017, %v2018
      %s2020 = scalar_lea.vmem %s4, 8
      %v2021 = vld [vmem:[%s2020] sm:$0xf]
      %v2022 = vunpack.c.l.b16 %v1911
      %v2023 = vunpack.c.l.b16 %v1914
      %v2024 = vunpack.c.l.b16 %v1918
      %v2025 = vunpack.c.l.b16 %v1921
      %v2026 = vunpack.c.l.b16 %v1925
      %v2027 = vunpack.c.l.b16 %v1928
      %v2028 = vunpack.c.l.b16 %v1932
      %v2029 = vunpack.c.l.b16 %v1935
      %v2030 = vunpack.c.l.b16 %v1939
      %v2031 = vunpack.c.l.b16 %v1942
      %v2032 = vunpack.c.l.b16 %v1946
      %v2033 = vunpack.c.l.b16 %v1949
      %v2034 = vunpack.c.l.b16 %v1953
      %v2035 = vunpack.c.l.b16 %v1956
      %v2036 = vunpack.c.l.b16 %v1960
      %v2037 = vunpack.c.l.b16 %v1963
      %v2038 = vunpack.c.l.b16 %v1967
      %v2039 = vunpack.c.l.b16 %v1970
      %v2040 = vunpack.c.l.b16 %v1974
      %v2041 = vunpack.c.l.b16 %v1977
      %v2042 = vunpack.c.l.b16 %v1981
      %v2043 = vunpack.c.l.b16 %v1984
      %v2044 = vunpack.c.l.b16 %v1988
      %v2045 = vunpack.c.l.b16 %v1991
      %v2046 = vunpack.c.l.b16 %v1995
      %v2047 = vunpack.c.l.b16 %v1998
      %v2048 = vunpack.c.l.b16 %v2002
      %v2049 = vunpack.c.l.b16 %v2005
      %v2050 = vunpack.c.l.b16 %v2009
      %v2051 = vunpack.c.l.b16 %v2012
      %v2052 = vunpack.c.l.b16 %v2016
      %v2053 = vunpack.c.l.b16 %v2019
      %v2054 = vpack.c.b16 %v2023, %v2022
      %v2055 = vpack.c.b16 %v2025, %v2024
      %v2056 = vpack.c.b16 %v2027, %v2026
      %v2057 = vpack.c.b16 %v2029, %v2028
      %v2058 = vpack.c.b16 %v2031, %v2030
      %v2059 = vpack.c.b16 %v2033, %v2032
      %v2060 = vpack.c.b16 %v2035, %v2034
      %v2061 = vpack.c.b16 %v2037, %v2036
      %v2062 = vpack.c.b16 %v2039, %v2038
      %v2063 = vpack.c.b16 %v2041, %v2040
      %v2064 = vpack.c.b16 %v2043, %v2042
      %v2065 = vpack.c.b16 %v2045, %v2044
      %v2066 = vpack.c.b16 %v2047, %v2046
      %v2067 = vpack.c.b16 %v2049, %v2048
      %v2068 = vpack.c.b16 %v2051, %v2050
      %v2069 = vpack.c.b16 %v2053, %v2052
      %v2071 = vsel %vm1351, %v2054, 0
      %v2074 = vsel %vm1351, %v2055, 0
      %v2077 = vsel %vm1351, %v2056, 0
      %v2080 = vsel %vm1351, %v2057, 0
      %v2083 = vsel %vm1351, %v2058, 0
      %v2086 = vsel %vm1351, %v2059, 0
      %v2089 = vsel %vm1351, %v2060, 0
      %v2092 = vsel %vm1351, %v2061, 0
      %v2095 = vsel %vm1351, %v2062, 0
      %v2098 = vsel %vm1351, %v2063, 0
      %v2101 = vsel %vm1351, %v2064, 0
      %v2104 = vsel %vm1351, %v2065, 0
      %v2107 = vsel %vm1351, %v2066, 0
      %v2110 = vsel %vm1351, %v2067, 0
      %v2113 = vsel %vm1351, %v2068, 0
      %v2116 = vsel %vm1351, %v2069, 0
      %v2119 = vsel %vm1400, %v2021, 0
      %2121 = vmatprep.subr.bf16.mxu0 0
      %2122 = vmatpush1.bf16.msra.mxu0 0
      %2123 = vmatprep.subr.bf16.mxu0 0
      %2124 = vmatpush1.bf16.msra.mxu0 0
      %2125 = vmatprep.subr.bf16.mxu0 0
      %2126 = vmatpush1.bf16.msra.mxu0 0
      %2127 = vmatprep.subr.bf16.mxu0 0
      %2128 = vmatpush1.bf16.msra.mxu0 0
      %2129 = vmatprep.subr.bf16.mxu0 0
      %2130 = vmatpush1.bf16.msra.mxu0 0
      %2131 = vmatprep.subr.bf16.mxu0 0
      %2132 = vmatpush1.bf16.msra.mxu0 0
      %2133 = vmatprep.subr.bf16.mxu0 0
      %2134 = vmatpush1.bf16.msra.mxu0 0
      %2135 = vmatprep.subr.bf16.mxu0 0
      %2136 = vmatpush1.bf16.msra.mxu0 %v2119
      %2137 = vmatprep.subr.bf16.mxu0 0
      %2138 = vmatpush2.bf16.msra.mxu0 0
      %2139 = vmatprep.subr.bf16.mxu0 0
      %2140 = vmatpush2.bf16.msra.mxu0 0
      %2141 = vmatprep.subr.bf16.mxu0 0
      %2142 = vmatpush2.bf16.msra.mxu0 0
      %2143 = vmatprep.subr.bf16.mxu0 0
      %2144 = vmatpush2.bf16.msra.mxu0 0
      %2145 = vmatprep.subr.bf16.mxu0 0
      %2146 = vmatpush2.bf16.msra.mxu0 0
      %2147 = vmatprep.subr.bf16.mxu0 0
      %2148 = vmatpush2.bf16.msra.mxu0 0
      %2149 = vmatprep.subr.bf16.mxu0 0
      %2150 = vmatpush2.bf16.msra.mxu0 0
      %2151 = vmatprep.subr.bf16.mxu0 0
      %2152 = vmatpush2.bf16.msra.mxu0 0
      %2153 = vmatprep.mubr.bf16.mxu0 0
      %2154 = vmatmul.mubr.bf16.gmra.mxu0 %v2071
      %v2155 = vpop.f32.mrf.mxu0
      %v2156 = vadd.f32 0.0, %v2155
      %v2157 = vpop.f32.mrf.mxu0
      %v2158 = vpop.f32.mrf.mxu0
      %v2159 = vadd.f32 0.0, %v2158
      %v2160 = vpop.f32.mrf.mxu0
      %2161 = vmatprep.mubr.bf16.mxu0 0
      %2162 = vmatmul.mubr.bf16.gmra.mxu0 %v2074
      %v2163 = vpop.f32.mrf.mxu0
      %v2164 = vadd.f32 0.0, %v2163
      %v2165 = vpop.f32.mrf.mxu0
      %v2166 = vpop.f32.mrf.mxu0
      %v2167 = vadd.f32 0.0, %v2166
      %v2168 = vpop.f32.mrf.mxu0
      %2169 = vmatprep.mubr.bf16.mxu0 0
      %2170 = vmatmul.mubr.bf16.gmra.mxu0 %v2077
      %v2171 = vpop.f32.mrf.mxu0
      %v2172 = vadd.f32 0.0, %v2171
      %v2173 = vpop.f32.mrf.mxu0
      %v2174 = vpop.f32.mrf.mxu0
      %v2175 = vadd.f32 0.0, %v2174
      %v2176 = vpop.f32.mrf.mxu0
      %2177 = vmatprep.mubr.bf16.mxu0 0
      %2178 = vmatmul.mubr.bf16.gmra.mxu0 %v2080
      %v2179 = vpop.f32.mrf.mxu0
      %v2180 = vadd.f32 0.0, %v2179
      %v2181 = vpop.f32.mrf.mxu0
      %v2182 = vpop.f32.mrf.mxu0
      %v2183 = vadd.f32 0.0, %v2182
      %v2184 = vpop.f32.mrf.mxu0
      %2185 = vmatprep.mubr.bf16.mxu0 0
      %2186 = vmatmul.mubr.bf16.gmra.mxu0 %v2083
      %v2187 = vpop.f32.mrf.mxu0
      %v2188 = vadd.f32 0.0, %v2187
      %v2189 = vpop.f32.mrf.mxu0
      %v2190 = vpop.f32.mrf.mxu0
      %v2191 = vadd.f32 0.0, %v2190
      %v2192 = vpop.f32.mrf.mxu0
      %2193 = vmatprep.mubr.bf16.mxu0 0
      %2194 = vmatmul.mubr.bf16.gmra.mxu0 %v2086
      %v2195 = vpop.f32.mrf.mxu0
      %v2196 = vadd.f32 0.0, %v2195
      %v2197 = vpop.f32.mrf.mxu0
      %v2198 = vpop.f32.mrf.mxu0
      %v2199 = vadd.f32 0.0, %v2198
      %v2200 = vpop.f32.mrf.mxu0
      %2201 = vmatprep.mubr.bf16.mxu0 0
      %2202 = vmatmul.mubr.bf16.gmra.mxu0 %v2089
      %v2203 = vpop.f32.mrf.mxu0
      %v2204 = vadd.f32 0.0, %v2203
      %v2205 = vpop.f32.mrf.mxu0
      %v2206 = vpop.f32.mrf.mxu0
      %v2207 = vadd.f32 0.0, %v2206
      %v2208 = vpop.f32.mrf.mxu0
      %2209 = vmatprep.mubr.bf16.mxu0 0
      %2210 = vmatmul.mubr.bf16.gmra.mxu0 %v2092
      %v2211 = vpop.f32.mrf.mxu0
      %v2212 = vadd.f32 0.0, %v2211
      %v2213 = vpop.f32.mrf.mxu0
      %v2214 = vpop.f32.mrf.mxu0
      %v2215 = vadd.f32 0.0, %v2214
      %v2216 = vpop.f32.mrf.mxu0
      %2217 = vmatprep.mubr.bf16.mxu0 0
      %2218 = vmatmul.mubr.bf16.gmra.mxu0 %v2095
      %v2219 = vpop.f32.mrf.mxu0
      %v2220 = vadd.f32 0.0, %v2219
      %v2221 = vpop.f32.mrf.mxu0
      %v2222 = vpop.f32.mrf.mxu0
      %v2223 = vadd.f32 0.0, %v2222
      %v2224 = vpop.f32.mrf.mxu0
      %2225 = vmatprep.mubr.bf16.mxu0 0
      %2226 = vmatmul.mubr.bf16.gmra.mxu0 %v2098
      %v2227 = vpop.f32.mrf.mxu0
      %v2228 = vadd.f32 0.0, %v2227
      %v2229 = vpop.f32.mrf.mxu0
      %v2230 = vpop.f32.mrf.mxu0
      %v2231 = vadd.f32 0.0, %v2230
      %v2232 = vpop.f32.mrf.mxu0
      %2233 = vmatprep.mubr.bf16.mxu0 0
      %2234 = vmatmul.mubr.bf16.gmra.mxu0 %v2101
      %v2235 = vpop.f32.mrf.mxu0
      %v2236 = vadd.f32 0.0, %v2235
      %v2237 = vpop.f32.mrf.mxu0
      %v2238 = vpop.f32.mrf.mxu0
      %v2239 = vadd.f32 0.0, %v2238
      %v2240 = vpop.f32.mrf.mxu0
      %2241 = vmatprep.mubr.bf16.mxu0 0
      %2242 = vmatmul.mubr.bf16.gmra.mxu0 %v2104
      %v2243 = vpop.f32.mrf.mxu0
      %v2244 = vadd.f32 0.0, %v2243
      %v2245 = vpop.f32.mrf.mxu0
      %v2246 = vpop.f32.mrf.mxu0
      %v2247 = vadd.f32 0.0, %v2246
      %v2248 = vpop.f32.mrf.mxu0
      %2249 = vmatprep.mubr.bf16.mxu0 0
      %2250 = vmatmul.mubr.bf16.gmra.mxu0 %v2107
      %v2251 = vpop.f32.mrf.mxu0
      %v2252 = vadd.f32 0.0, %v2251
      %v2253 = vpop.f32.mrf.mxu0
      %v2254 = vpop.f32.mrf.mxu0
      %v2255 = vadd.f32 0.0, %v2254
      %v2256 = vpop.f32.mrf.mxu0
      %2257 = vmatprep.mubr.bf16.mxu0 0
      %2258 = vmatmul.mubr.bf16.gmra.mxu0 %v2110
      %v2259 = vpop.f32.mrf.mxu0
      %v2260 = vadd.f32 0.0, %v2259
      %v2261 = vpop.f32.mrf.mxu0
      %v2262 = vpop.f32.mrf.mxu0
      %v2263 = vadd.f32 0.0, %v2262
      %v2264 = vpop.f32.mrf.mxu0
      %2265 = vmatprep.mubr.bf16.mxu0 0
      %2266 = vmatmul.mubr.bf16.gmra.mxu0 %v2113
      %v2267 = vpop.f32.mrf.mxu0
      %v2268 = vadd.f32 0.0, %v2267
      %v2269 = vpop.f32.mrf.mxu0
      %v2270 = vpop.f32.mrf.mxu0
      %v2271 = vadd.f32 0.0, %v2270
      %v2272 = vpop.f32.mrf.mxu0
      %2273 = vmatprep.mubr.bf16.mxu0 0
      %2274 = vmatmul.mubr.bf16.gmra.mxu0 %v2116
      %v2275 = vpop.f32.mrf.mxu0
      %v2276 = vadd.f32 0.0, %v2275
      %v2277 = vpop.f32.mrf.mxu0
      %v2278 = vpop.f32.mrf.mxu0
      %v2279 = vadd.f32 0.0, %v2278
      %v2280 = vpop.f32.mrf.mxu0
      %2281 = vdwg.mxu0
      %v2282 = vadd.f32 %v1731, %v2156
      %v2283 = vadd.f32 %v1734, %v2159
      %v2284 = vadd.f32 %v1739, %v2164
      %v2285 = vadd.f32 %v1742, %v2167
      %v2286 = vadd.f32 %v1747, %v2172
      %v2287 = vadd.f32 %v1750, %v2175
      %v2288 = vadd.f32 %v1755, %v2180
      %v2289 = vadd.f32 %v1758, %v2183
      %v2290 = vadd.f32 %v1763, %v2188
      %v2291 = vadd.f32 %v1766, %v2191
      %v2292 = vadd.f32 %v1771, %v2196
      %v2293 = vadd.f32 %v1774, %v2199
      %v2294 = vadd.f32 %v1779, %v2204
      %v2295 = vadd.f32 %v1782, %v2207
      %v2296 = vadd.f32 %v1787, %v2212
      %v2297 = vadd.f32 %v1790, %v2215
      %v2298 = vadd.f32 %v1795, %v2220
      %v2299 = vadd.f32 %v1798, %v2223
      %v2300 = vadd.f32 %v1803, %v2228
      %v2301 = vadd.f32 %v1806, %v2231
      %v2302 = vadd.f32 %v1811, %v2236
      %v2303 = vadd.f32 %v1814, %v2239
      %v2304 = vadd.f32 %v1819, %v2244
      %v2305 = vadd.f32 %v1822, %v2247
      %v2306 = vadd.f32 %v1827, %v2252
      %v2307 = vadd.f32 %v1830, %v2255
      %v2308 = vadd.f32 %v1835, %v2260
      %v2309 = vadd.f32 %v1838, %v2263
      %v2310 = vadd.f32 %v1843, %v2268
      %v2311 = vadd.f32 %v1846, %v2271
      %v2312 = vadd.f32 %v1851, %v2276
      %v2313 = vadd.f32 %v1854, %v2279
      %v2314 = vld [vmem:[%s816] sm:$0xf]
      %v2315 = vld [vmem:[%s816 + $0x4] sm:$0xf]
      %v2316 = vld [vmem:[%s816 + $0xc] sm:$0xf]
      %v2317 = vld [vmem:[%s816 + $0x10] sm:$0xf]
      %v2318 = vld [vmem:[%s816 + $0x18] sm:$0xf]
      %v2319 = vld [vmem:[%s816 + $0x1c] sm:$0xf]
      %v2320 = vld [vmem:[%s816 + $0x24] sm:$0xf]
      %v2321 = vld [vmem:[%s816 + $0x28] sm:$0xf]
      %v2322 = vld [vmem:[%s816 + $0x30] sm:$0xf]
      %v2323 = vld [vmem:[%s816 + $0x34] sm:$0xf]
      %v2324 = vld [vmem:[%s816 + $0x3c] sm:$0xf]
      %v2325 = vld [vmem:[%s816 + $0x40] sm:$0xf]
      %v2326 = vld [vmem:[%s816 + $0x48] sm:$0xf]
      %v2327 = vld [vmem:[%s816 + $0x4c] sm:$0xf]
      %v2328 = vld [vmem:[%s816 + $0x54] sm:$0xf]
      %v2329 = vld [vmem:[%s816 + $0x58] sm:$0xf]
      %v2330 = vld [vmem:[%s816 + $0x60] sm:$0xf]
      %v2331 = vld [vmem:[%s816 + $0x64] sm:$0xf]
      %v2332 = vld [vmem:[%s816 + $0x6c] sm:$0xf]
      %v2333 = vld [vmem:[%s816 + $0x70] sm:$0xf]
      %v2334 = vld [vmem:[%s816 + $0x78] sm:$0xf]
      %v2335 = vld [vmem:[%s816 + $0x7c] sm:$0xf]
      %v2336 = vld [vmem:[%s816 + $0x84] sm:$0xf]
      %v2337 = vld [vmem:[%s816 + $0x88] sm:$0xf]
      %v2338 = vld [vmem:[%s816 + $0x90] sm:$0xf]
      %v2339 = vld [vmem:[%s816 + $0x94] sm:$0xf]
      %v2340 = vld [vmem:[%s816 + $0x9c] sm:$0xf]
      %v2341 = vld [vmem:[%s816 + $0xa0] sm:$0xf]
      %v2342 = vld [vmem:[%s816 + $0xa8] sm:$0xf]
      %v2343 = vld [vmem:[%s816 + $0xac] sm:$0xf]
      %v2344 = vld [vmem:[%s816 + $0xb4] sm:$0xf]
      %v2345 = vld [vmem:[%s816 + $0xb8] sm:$0xf]
      %s2346 = scalar_lea.vmem %s4, 12
      %v2347 = vld [vmem:[%s2346] sm:$0xf]
      %v2380 = vunpack.c.l.b16 %v2314
      %v2381 = vunpack.c.l.b16 %v2315
      %v2382 = vunpack.c.l.b16 %v2316
      %v2383 = vunpack.c.l.b16 %v2317
      %v2384 = vunpack.c.l.b16 %v2318
      %v2385 = vunpack.c.l.b16 %v2319
      %v2386 = vunpack.c.l.b16 %v2320
      %v2387 = vunpack.c.l.b16 %v2321
      %v2388 = vunpack.c.l.b16 %v2322
      %v2389 = vunpack.c.l.b16 %v2323
      %v2390 = vunpack.c.l.b16 %v2324
      %v2391 = vunpack.c.l.b16 %v2325
      %v2392 = vunpack.c.l.b16 %v2326
      %v2393 = vunpack.c.l.b16 %v2327
      %v2394 = vunpack.c.l.b16 %v2328
      %v2395 = vunpack.c.l.b16 %v2329
      %v2396 = vunpack.c.l.b16 %v2330
      %v2397 = vunpack.c.l.b16 %v2331
      %v2398 = vunpack.c.l.b16 %v2332
      %v2399 = vunpack.c.l.b16 %v2333
      %v2400 = vunpack.c.l.b16 %v2334
      %v2401 = vunpack.c.l.b16 %v2335
      %v2402 = vunpack.c.l.b16 %v2336
      %v2403 = vunpack.c.l.b16 %v2337
      %v2404 = vunpack.c.l.b16 %v2338
      %v2405 = vunpack.c.l.b16 %v2339
      %v2406 = vunpack.c.l.b16 %v2340
      %v2407 = vunpack.c.l.b16 %v2341
      %v2408 = vunpack.c.l.b16 %v2342
      %v2409 = vunpack.c.l.b16 %v2343
      %v2410 = vunpack.c.l.b16 %v2344
      %v2411 = vunpack.c.l.b16 %v2345
      %v2412 = vpack.c.b16 %v2381, %v2380
      %v2413 = vpack.c.b16 %v2383, %v2382
      %v2414 = vpack.c.b16 %v2385, %v2384
      %v2415 = vpack.c.b16 %v2387, %v2386
      %v2416 = vpack.c.b16 %v2389, %v2388
      %v2417 = vpack.c.b16 %v2391, %v2390
      %v2418 = vpack.c.b16 %v2393, %v2392
      %v2419 = vpack.c.b16 %v2395, %v2394
      %v2420 = vpack.c.b16 %v2397, %v2396
      %v2421 = vpack.c.b16 %v2399, %v2398
      %v2422 = vpack.c.b16 %v2401, %v2400
      %v2423 = vpack.c.b16 %v2403, %v2402
      %v2424 = vpack.c.b16 %v2405, %v2404
      %v2425 = vpack.c.b16 %v2407, %v2406
      %v2426 = vpack.c.b16 %v2409, %v2408
      %v2427 = vpack.c.b16 %v2411, %v2410
      %v2429 = vsel %vm1351, %v2412, 0
      %v2432 = vsel %vm1351, %v2413, 0
      %v2435 = vsel %vm1351, %v2414, 0
      %v2438 = vsel %vm1351, %v2415, 0
      %v2441 = vsel %vm1351, %v2416, 0
      %v2444 = vsel %vm1351, %v2417, 0
      %v2447 = vsel %vm1351, %v2418, 0
      %v2450 = vsel %vm1351, %v2419, 0
      %v2453 = vsel %vm1351, %v2420, 0
      %v2456 = vsel %vm1351, %v2421, 0
      %v2459 = vsel %vm1351, %v2422, 0
      %v2462 = vsel %vm1351, %v2423, 0
      %v2465 = vsel %vm1351, %v2424, 0
      %v2468 = vsel %vm1351, %v2425, 0
      %v2471 = vsel %vm1351, %v2426, 0
      %v2474 = vsel %vm1351, %v2427, 0
      %v2477 = vsel %vm1400, %v2347, 0
      %2479 = vmatprep.subr.bf16.mxu0 0
      %2480 = vmatpush1.bf16.msra.mxu0 0
      %2481 = vmatprep.subr.bf16.mxu0 0
      %2482 = vmatpush1.bf16.msra.mxu0 0
      %2483 = vmatprep.subr.bf16.mxu0 0
      %2484 = vmatpush1.bf16.msra.mxu0 0
      %2485 = vmatprep.subr.bf16.mxu0 0
      %2486 = vmatpush1.bf16.msra.mxu0 0
      %2487 = vmatprep.subr.bf16.mxu0 0
      %2488 = vmatpush1.bf16.msra.mxu0 0
      %2489 = vmatprep.subr.bf16.mxu0 0
      %2490 = vmatpush1.bf16.msra.mxu0 0
      %2491 = vmatprep.subr.bf16.mxu0 0
      %2492 = vmatpush1.bf16.msra.mxu0 0
      %2493 = vmatprep.subr.bf16.mxu0 0
      %2494 = vmatpush1.bf16.msra.mxu0 %v2477
      %2495 = vmatprep.subr.bf16.mxu0 0
      %2496 = vmatpush2.bf16.msra.mxu0 0
      %2497 = vmatprep.subr.bf16.mxu0 0
      %2498 = vmatpush2.bf16.msra.mxu0 0
      %2499 = vmatprep.subr.bf16.mxu0 0
      %2500 = vmatpush2.bf16.msra.mxu0 0
      %2501 = vmatprep.subr.bf16.mxu0 0
      %2502 = vmatpush2.bf16.msra.mxu0 0
      %2503 = vmatprep.subr.bf16.mxu0 0
      %2504 = vmatpush2.bf16.msra.mxu0 0
      %2505 = vmatprep.subr.bf16.mxu0 0
      %2506 = vmatpush2.bf16.msra.mxu0 0
      %2507 = vmatprep.subr.bf16.mxu0 0
      %2508 = vmatpush2.bf16.msra.mxu0 0
      %2509 = vmatprep.subr.bf16.mxu0 0
      %2510 = vmatpush2.bf16.msra.mxu0 0
      %2511 = vmatprep.mubr.bf16.mxu0 0
      %2512 = vmatmul.mubr.bf16.gmra.mxu0 %v2429
      %v2513 = vpop.f32.mrf.mxu0
      %v2514 = vadd.f32 0.0, %v2513
      %v2515 = vpop.f32.mrf.mxu0
      %v2516 = vpop.f32.mrf.mxu0
      %v2517 = vadd.f32 0.0, %v2516
      %v2518 = vpop.f32.mrf.mxu0
      %2519 = vmatprep.mubr.bf16.mxu0 0
      %2520 = vmatmul.mubr.bf16.gmra.mxu0 %v2432
      %v2521 = vpop.f32.mrf.mxu0
      %v2522 = vadd.f32 0.0, %v2521
      %v2523 = vpop.f32.mrf.mxu0
      %v2524 = vpop.f32.mrf.mxu0
      %v2525 = vadd.f32 0.0, %v2524
      %v2526 = vpop.f32.mrf.mxu0
      %2527 = vmatprep.mubr.bf16.mxu0 0
      %2528 = vmatmul.mubr.bf16.gmra.mxu0 %v2435
      %v2529 = vpop.f32.mrf.mxu0
      %v2530 = vadd.f32 0.0, %v2529
      %v2531 = vpop.f32.mrf.mxu0
      %v2532 = vpop.f32.mrf.mxu0
      %v2533 = vadd.f32 0.0, %v2532
      %v2534 = vpop.f32.mrf.mxu0
      %2535 = vmatprep.mubr.bf16.mxu0 0
      %2536 = vmatmul.mubr.bf16.gmra.mxu0 %v2438
      %v2537 = vpop.f32.mrf.mxu0
      %v2538 = vadd.f32 0.0, %v2537
      %v2539 = vpop.f32.mrf.mxu0
      %v2540 = vpop.f32.mrf.mxu0
      %v2541 = vadd.f32 0.0, %v2540
      %v2542 = vpop.f32.mrf.mxu0
      %2543 = vmatprep.mubr.bf16.mxu0 0
      %2544 = vmatmul.mubr.bf16.gmra.mxu0 %v2441
      %v2545 = vpop.f32.mrf.mxu0
      %v2546 = vadd.f32 0.0, %v2545
      %v2547 = vpop.f32.mrf.mxu0
      %v2548 = vpop.f32.mrf.mxu0
      %v2549 = vadd.f32 0.0, %v2548
      %v2550 = vpop.f32.mrf.mxu0
      %2551 = vmatprep.mubr.bf16.mxu0 0
      %2552 = vmatmul.mubr.bf16.gmra.mxu0 %v2444
      %v2553 = vpop.f32.mrf.mxu0
      %v2554 = vadd.f32 0.0, %v2553
      %v2555 = vpop.f32.mrf.mxu0
      %v2556 = vpop.f32.mrf.mxu0
      %v2557 = vadd.f32 0.0, %v2556
      %v2558 = vpop.f32.mrf.mxu0
      %2559 = vmatprep.mubr.bf16.mxu0 0
      %2560 = vmatmul.mubr.bf16.gmra.mxu0 %v2447
      %v2561 = vpop.f32.mrf.mxu0
      %v2562 = vadd.f32 0.0, %v2561
      %v2563 = vpop.f32.mrf.mxu0
      %v2564 = vpop.f32.mrf.mxu0
      %v2565 = vadd.f32 0.0, %v2564
      %v2566 = vpop.f32.mrf.mxu0
      %2567 = vmatprep.mubr.bf16.mxu0 0
      %2568 = vmatmul.mubr.bf16.gmra.mxu0 %v2450
      %v2569 = vpop.f32.mrf.mxu0
      %v2570 = vadd.f32 0.0, %v2569
      %v2571 = vpop.f32.mrf.mxu0
      %v2572 = vpop.f32.mrf.mxu0
      %v2573 = vadd.f32 0.0, %v2572
      %v2574 = vpop.f32.mrf.mxu0
      %2575 = vmatprep.mubr.bf16.mxu0 0
      %2576 = vmatmul.mubr.bf16.gmra.mxu0 %v2453
      %v2577 = vpop.f32.mrf.mxu0
      %v2578 = vadd.f32 0.0, %v2577
      %v2579 = vpop.f32.mrf.mxu0
      %v2580 = vpop.f32.mrf.mxu0
      %v2581 = vadd.f32 0.0, %v2580
      %v2582 = vpop.f32.mrf.mxu0
      %2583 = vmatprep.mubr.bf16.mxu0 0
      %2584 = vmatmul.mubr.bf16.gmra.mxu0 %v2456
      %v2585 = vpop.f32.mrf.mxu0
      %v2586 = vadd.f32 0.0, %v2585
      %v2587 = vpop.f32.mrf.mxu0
      %v2588 = vpop.f32.mrf.mxu0
      %v2589 = vadd.f32 0.0, %v2588
      %v2590 = vpop.f32.mrf.mxu0
      %2591 = vmatprep.mubr.bf16.mxu0 0
      %2592 = vmatmul.mubr.bf16.gmra.mxu0 %v2459
      %v2593 = vpop.f32.mrf.mxu0
      %v2594 = vadd.f32 0.0, %v2593
      %v2595 = vpop.f32.mrf.mxu0
      %v2596 = vpop.f32.mrf.mxu0
      %v2597 = vadd.f32 0.0, %v2596
      %v2598 = vpop.f32.mrf.mxu0
      %2599 = vmatprep.mubr.bf16.mxu0 0
      %2600 = vmatmul.mubr.bf16.gmra.mxu0 %v2462
      %v2601 = vpop.f32.mrf.mxu0
      %v2602 = vadd.f32 0.0, %v2601
      %v2603 = vpop.f32.mrf.mxu0
      %v2604 = vpop.f32.mrf.mxu0
      %v2605 = vadd.f32 0.0, %v2604
      %v2606 = vpop.f32.mrf.mxu0
      %2607 = vmatprep.mubr.bf16.mxu0 0
      %2608 = vmatmul.mubr.bf16.gmra.mxu0 %v2465
      %v2609 = vpop.f32.mrf.mxu0
      %v2610 = vadd.f32 0.0, %v2609
      %v2611 = vpop.f32.mrf.mxu0
      %v2612 = vpop.f32.mrf.mxu0
      %v2613 = vadd.f32 0.0, %v2612
      %v2614 = vpop.f32.mrf.mxu0
      %2615 = vmatprep.mubr.bf16.mxu0 0
      %2616 = vmatmul.mubr.bf16.gmra.mxu0 %v2468
      %v2617 = vpop.f32.mrf.mxu0
      %v2618 = vadd.f32 0.0, %v2617
      %v2619 = vpop.f32.mrf.mxu0
      %v2620 = vpop.f32.mrf.mxu0
      %v2621 = vadd.f32 0.0, %v2620
      %v2622 = vpop.f32.mrf.mxu0
      %2623 = vmatprep.mubr.bf16.mxu0 0
      %2624 = vmatmul.mubr.bf16.gmra.mxu0 %v2471
      %v2625 = vpop.f32.mrf.mxu0
      %v2626 = vadd.f32 0.0, %v2625
      %v2627 = vpop.f32.mrf.mxu0
      %v2628 = vpop.f32.mrf.mxu0
      %v2629 = vadd.f32 0.0, %v2628
      %v2630 = vpop.f32.mrf.mxu0
      %2631 = vmatprep.mubr.bf16.mxu0 0
      %2632 = vmatmul.mubr.bf16.gmra.mxu0 %v2474
      %v2633 = vpop.f32.mrf.mxu0
      %v2634 = vadd.f32 0.0, %v2633
      %v2635 = vpop.f32.mrf.mxu0
      %v2636 = vpop.f32.mrf.mxu0
      %v2637 = vadd.f32 0.0, %v2636
      %v2638 = vpop.f32.mrf.mxu0
      %2639 = vdwg.mxu0
      %v2640 = vadd.f32 %v2282, %v2514
      %v2641 = vadd.f32 %v2283, %v2517
      %v2642 = vadd.f32 %v2284, %v2522
      %v2643 = vadd.f32 %v2285, %v2525
      %v2644 = vadd.f32 %v2286, %v2530
      %v2645 = vadd.f32 %v2287, %v2533
      %v2646 = vadd.f32 %v2288, %v2538
      %v2647 = vadd.f32 %v2289, %v2541
      %v2648 = vadd.f32 %v2290, %v2546
      %v2649 = vadd.f32 %v2291, %v2549
      %v2650 = vadd.f32 %v2292, %v2554
      %v2651 = vadd.f32 %v2293, %v2557
      %v2652 = vadd.f32 %v2294, %v2562
      %v2653 = vadd.f32 %v2295, %v2565
      %v2654 = vadd.f32 %v2296, %v2570
      %v2655 = vadd.f32 %v2297, %v2573
      %v2656 = vadd.f32 %v2298, %v2578
      %v2657 = vadd.f32 %v2299, %v2581
      %v2658 = vadd.f32 %v2300, %v2586
      %v2659 = vadd.f32 %v2301, %v2589
      %v2660 = vadd.f32 %v2302, %v2594
      %v2661 = vadd.f32 %v2303, %v2597
      %v2662 = vadd.f32 %v2304, %v2602
      %v2663 = vadd.f32 %v2305, %v2605
      %v2664 = vadd.f32 %v2306, %v2610
      %v2665 = vadd.f32 %v2307, %v2613
      %v2666 = vadd.f32 %v2308, %v2618
      %v2667 = vadd.f32 %v2309, %v2621
      %v2668 = vadd.f32 %v2310, %v2626
      %v2669 = vadd.f32 %v2311, %v2629
      %v2670 = vadd.f32 %v2312, %v2634
      %v2671 = vadd.f32 %v2313, %v2637
      %v2672 = vld [vmem:[%s816] sm:$0xf]
      %v2673 = vld [vmem:[%s816 + $0x4] sm:$0xf]
      %v2674 = vld [vmem:[%s816 + $0x8] sm:$0x1]
      %v2675 = vld [vmem:[%s816 + $0xc] sm:$0xf]
      %v2676 = vld [vmem:[%s816 + $0x10] sm:$0xf]
      %v2677 = vld [vmem:[%s816 + $0x14] sm:$0x1]
      %v2678 = vld [vmem:[%s816 + $0x18] sm:$0xf]
      %v2679 = vld [vmem:[%s816 + $0x1c] sm:$0xf]
      %v2680 = vld [vmem:[%s816 + $0x20] sm:$0x1]
      %v2681 = vld [vmem:[%s816 + $0x24] sm:$0xf]
      %v2682 = vld [vmem:[%s816 + $0x28] sm:$0xf]
      %v2683 = vld [vmem:[%s816 + $0x2c] sm:$0x1]
      %v2684 = vld [vmem:[%s816 + $0x30] sm:$0xf]
      %v2685 = vld [vmem:[%s816 + $0x34] sm:$0xf]
      %v2686 = vld [vmem:[%s816 + $0x38] sm:$0x1]
      %v2687 = vld [vmem:[%s816 + $0x3c] sm:$0xf]
      %v2688 = vld [vmem:[%s816 + $0x40] sm:$0xf]
      %v2689 = vld [vmem:[%s816 + $0x44] sm:$0x1]
      %v2690 = vld [vmem:[%s816 + $0x48] sm:$0xf]
      %v2691 = vld [vmem:[%s816 + $0x4c] sm:$0xf]
      %v2692 = vld [vmem:[%s816 + $0x50] sm:$0x1]
      %v2693 = vld [vmem:[%s816 + $0x54] sm:$0xf]
      %v2694 = vld [vmem:[%s816 + $0x58] sm:$0xf]
      %v2695 = vld [vmem:[%s816 + $0x5c] sm:$0x1]
      %v2696 = vld [vmem:[%s816 + $0x60] sm:$0xf]
      %v2697 = vld [vmem:[%s816 + $0x64] sm:$0xf]
      %v2698 = vld [vmem:[%s816 + $0x68] sm:$0x1]
      %v2699 = vld [vmem:[%s816 + $0x6c] sm:$0xf]
      %v2700 = vld [vmem:[%s816 + $0x70] sm:$0xf]
      %v2701 = vld [vmem:[%s816 + $0x74] sm:$0x1]
      %v2702 = vld [vmem:[%s816 + $0x78] sm:$0xf]
      %v2703 = vld [vmem:[%s816 + $0x7c] sm:$0xf]
      %v2704 = vld [vmem:[%s816 + $0x80] sm:$0x1]
      %v2705 = vld [vmem:[%s816 + $0x84] sm:$0xf]
      %v2706 = vld [vmem:[%s816 + $0x88] sm:$0xf]
      %v2707 = vld [vmem:[%s816 + $0x8c] sm:$0x1]
      %v2708 = vld [vmem:[%s816 + $0x90] sm:$0xf]
      %v2709 = vld [vmem:[%s816 + $0x94] sm:$0xf]
      %v2710 = vld [vmem:[%s816 + $0x98] sm:$0x1]
      %v2711 = vld [vmem:[%s816 + $0x9c] sm:$0xf]
      %v2712 = vld [vmem:[%s816 + $0xa0] sm:$0xf]
      %v2713 = vld [vmem:[%s816 + $0xa4] sm:$0x1]
      %v2714 = vld [vmem:[%s816 + $0xa8] sm:$0xf]
      %v2715 = vld [vmem:[%s816 + $0xac] sm:$0xf]
      %v2716 = vld [vmem:[%s816 + $0xb0] sm:$0x1]
      %v2717 = vld [vmem:[%s816 + $0xb4] sm:$0xf]
      %v2718 = vld [vmem:[%s816 + $0xb8] sm:$0xf]
      %v2719 = vld [vmem:[%s816 + $0xbc] sm:$0x1]
      %v2721 = vshrl.u32 %v2672, 16
      %v2723 = vrot.slane %v2721, 4
      %v2724 = vshll.u32 %v2672, 16
      %v2726 = vrot.slane %v2724, 5
      %v2727 = vor.u32 %v2723, %v2726
      %v2728 = vrot.slane %v2727, 4
      %v2730 = vshll.u32 %v2673, 16
      %v2732 = vrot.slane %v2730, 5
      %v2733 = vsel %vm916, %v2728, %v2732
      %v2734 = vshrl.u32 %v2673, 16
      %v2736 = vrot.slane %v2734, 4
      %v2737 = vor.u32 %v2736, %v2732
      %v2738 = vrot.slane %v2737, 4
      %v2740 = vshll.u32 %v2674, 16
      %v2742 = vrot.slane %v2740, 5
      %v2743 = vsel %vm916, %v2738, %v2742
      %v2745 = vshrl.u32 %v2675, 16
      %v2747 = vrot.slane %v2745, 4
      %v2748 = vshll.u32 %v2675, 16
      %v2750 = vrot.slane %v2748, 5
      %v2751 = vor.u32 %v2747, %v2750
      %v2752 = vrot.slane %v2751, 4
      %v2754 = vshll.u32 %v2676, 16
      %v2756 = vrot.slane %v2754, 5
      %v2757 = vsel %vm916, %v2752, %v2756
      %v2758 = vshrl.u32 %v2676, 16
      %v2760 = vrot.slane %v2758, 4
      %v2761 = vor.u32 %v2760, %v2756
      %v2762 = vrot.slane %v2761, 4
      %v2764 = vshll.u32 %v2677, 16
      %v2766 = vrot.slane %v2764, 5
      %v2767 = vsel %vm916, %v2762, %v2766
      %v2769 = vshrl.u32 %v2678, 16
      %v2771 = vrot.slane %v2769, 4
      %v2772 = vshll.u32 %v2678, 16
      %v2774 = vrot.slane %v2772, 5
      %v2775 = vor.u32 %v2771, %v2774
      %v2776 = vrot.slane %v2775, 4
      %v2778 = vshll.u32 %v2679, 16
      %v2780 = vrot.slane %v2778, 5
      %v2781 = vsel %vm916, %v2776, %v2780
      %v2782 = vshrl.u32 %v2679, 16
      %v2784 = vrot.slane %v2782, 4
      %v2785 = vor.u32 %v2784, %v2780
      %v2786 = vrot.slane %v2785, 4
      %v2788 = vshll.u32 %v2680, 16
      %v2790 = vrot.slane %v2788, 5
      %v2791 = vsel %vm916, %v2786, %v2790
      %v2793 = vshrl.u32 %v2681, 16
      %v2795 = vrot.slane %v2793, 4
      %v2796 = vshll.u32 %v2681, 16
      %v2798 = vrot.slane %v2796, 5
      %v2799 = vor.u32 %v2795, %v2798
      %v2800 = vrot.slane %v2799, 4
      %v2802 = vshll.u32 %v2682, 16
      %v2804 = vrot.slane %v2802, 5
      %v2805 = vsel %vm916, %v2800, %v2804
      %v2806 = vshrl.u32 %v2682, 16
      %v2808 = vrot.slane %v2806, 4
      %v2809 = vor.u32 %v2808, %v2804
      %v2810 = vrot.slane %v2809, 4
      %v2812 = vshll.u32 %v2683, 16
      %v2814 = vrot.slane %v2812, 5
      %v2815 = vsel %vm916, %v2810, %v2814
      %v2817 = vshrl.u32 %v2684, 16
      %v2819 = vrot.slane %v2817, 4
      %v2820 = vshll.u32 %v2684, 16
      %v2822 = vrot.slane %v2820, 5
      %v2823 = vor.u32 %v2819, %v2822
      %v2824 = vrot.slane %v2823, 4
      %v2826 = vshll.u32 %v2685, 16
      %v2828 = vrot.slane %v2826, 5
      %v2829 = vsel %vm916, %v2824, %v2828
      %v2830 = vshrl.u32 %v2685, 16
      %v2832 = vrot.slane %v2830, 4
      %v2833 = vor.u32 %v2832, %v2828
      %v2834 = vrot.slane %v2833, 4
      %v2836 = vshll.u32 %v2686, 16
      %v2838 = vrot.slane %v2836, 5
      %v2839 = vsel %vm916, %v2834, %v2838
      %v2841 = vshrl.u32 %v2687, 16
      %v2843 = vrot.slane %v2841, 4
      %v2844 = vshll.u32 %v2687, 16
      %v2846 = vrot.slane %v2844, 5
      %v2847 = vor.u32 %v2843, %v2846
      %v2848 = vrot.slane %v2847, 4
      %v2850 = vshll.u32 %v2688, 16
      %v2852 = vrot.slane %v2850, 5
      %v2853 = vsel %vm916, %v2848, %v2852
      %v2854 = vshrl.u32 %v2688, 16
      %v2856 = vrot.slane %v2854, 4
      %v2857 = vor.u32 %v2856, %v2852
      %v2858 = vrot.slane %v2857, 4
      %v2860 = vshll.u32 %v2689, 16
      %v2862 = vrot.slane %v2860, 5
      %v2863 = vsel %vm916, %v2858, %v2862
      %v2865 = vshrl.u32 %v2690, 16
      %v2867 = vrot.slane %v2865, 4
      %v2868 = vshll.u32 %v2690, 16
      %v2870 = vrot.slane %v2868, 5
      %v2871 = vor.u32 %v2867, %v2870
      %v2872 = vrot.slane %v2871, 4
      %v2874 = vshll.u32 %v2691, 16
      %v2876 = vrot.slane %v2874, 5
      %v2877 = vsel %vm916, %v2872, %v2876
      %v2878 = vshrl.u32 %v2691, 16
      %v2880 = vrot.slane %v2878, 4
      %v2881 = vor.u32 %v2880, %v2876
      %v2882 = vrot.slane %v2881, 4
      %v2884 = vshll.u32 %v2692, 16
      %v2886 = vrot.slane %v2884, 5
      %v2887 = vsel %vm916, %v2882, %v2886
      %v2889 = vshrl.u32 %v2693, 16
      %v2891 = vrot.slane %v2889, 4
      %v2892 = vshll.u32 %v2693, 16
      %v2894 = vrot.slane %v2892, 5
      %v2895 = vor.u32 %v2891, %v2894
      %v2896 = vrot.slane %v2895, 4
      %v2898 = vshll.u32 %v2694, 16
      %v2900 = vrot.slane %v2898, 5
      %v2901 = vsel %vm916, %v2896, %v2900
      %v2902 = vshrl.u32 %v2694, 16
      %v2904 = vrot.slane %v2902, 4
      %v2905 = vor.u32 %v2904, %v2900
      %v2906 = vrot.slane %v2905, 4
      %v2908 = vshll.u32 %v2695, 16
      %v2910 = vrot.slane %v2908, 5
      %v2911 = vsel %vm916, %v2906, %v2910
      %v2913 = vshrl.u32 %v2696, 16
      %v2915 = vrot.slane %v2913, 4
      %v2916 = vshll.u32 %v2696, 16
      %v2918 = vrot.slane %v2916, 5
      %v2919 = vor.u32 %v2915, %v2918
      %v2920 = vrot.slane %v2919, 4
      %v2922 = vshll.u32 %v2697, 16
      %v2924 = vrot.slane %v2922, 5
      %v2925 = vsel %vm916, %v2920, %v2924
      %v2926 = vshrl.u32 %v2697, 16
      %v2928 = vrot.slane %v2926, 4
      %v2929 = vor.u32 %v2928, %v2924
      %v2930 = vrot.slane %v2929, 4
      %v2932 = vshll.u32 %v2698, 16
      %v2934 = vrot.slane %v2932, 5
      %v2935 = vsel %vm916, %v2930, %v2934
      %v2937 = vshrl.u32 %v2699, 16
      %v2939 = vrot.slane %v2937, 4
      %v2940 = vshll.u32 %v2699, 16
      %v2942 = vrot.slane %v2940, 5
      %v2943 = vor.u32 %v2939, %v2942
      %v2944 = vrot.slane %v2943, 4
      %v2946 = vshll.u32 %v2700, 16
      %v2948 = vrot.slane %v2946, 5
      %v2949 = vsel %vm916, %v2944, %v2948
      %v2950 = vshrl.u32 %v2700, 16
      %v2952 = vrot.slane %v2950, 4
      %v2953 = vor.u32 %v2952, %v2948
      %v2954 = vrot.slane %v2953, 4
      %v2956 = vshll.u32 %v2701, 16
      %v2958 = vrot.slane %v2956, 5
      %v2959 = vsel %vm916, %v2954, %v2958
      %v2961 = vshrl.u32 %v2702, 16
      %v2963 = vrot.slane %v2961, 4
      %v2964 = vshll.u32 %v2702, 16
      %v2966 = vrot.slane %v2964, 5
      %v2967 = vor.u32 %v2963, %v2966
      %v2968 = vrot.slane %v2967, 4
      %v2970 = vshll.u32 %v2703, 16
      %v2972 = vrot.slane %v2970, 5
      %v2973 = vsel %vm916, %v2968, %v2972
      %v2974 = vshrl.u32 %v2703, 16
      %v2976 = vrot.slane %v2974, 4
      %v2977 = vor.u32 %v2976, %v2972
      %v2978 = vrot.slane %v2977, 4
      %v2980 = vshll.u32 %v2704, 16
      %v2982 = vrot.slane %v2980, 5
      %v2983 = vsel %vm916, %v2978, %v2982
      %v2985 = vshrl.u32 %v2705, 16
      %v2987 = vrot.slane %v2985, 4
      %v2988 = vshll.u32 %v2705, 16
      %v2990 = vrot.slane %v2988, 5
      %v2991 = vor.u32 %v2987, %v2990
      %v2992 = vrot.slane %v2991, 4
      %v2994 = vshll.u32 %v2706, 16
      %v2996 = vrot.slane %v2994, 5
      %v2997 = vsel %vm916, %v2992, %v2996
      %v2998 = vshrl.u32 %v2706, 16
      %v3000 = vrot.slane %v2998, 4
      %v3001 = vor.u32 %v3000, %v2996
      %v3002 = vrot.slane %v3001, 4
      %v3004 = vshll.u32 %v2707, 16
      %v3006 = vrot.slane %v3004, 5
      %v3007 = vsel %vm916, %v3002, %v3006
      %v3009 = vshrl.u32 %v2708, 16
      %v3011 = vrot.slane %v3009, 4
      %v3012 = vshll.u32 %v2708, 16
      %v3014 = vrot.slane %v3012, 5
      %v3015 = vor.u32 %v3011, %v3014
      %v3016 = vrot.slane %v3015, 4
      %v3018 = vshll.u32 %v2709, 16
      %v3020 = vrot.slane %v3018, 5
      %v3021 = vsel %vm916, %v3016, %v3020
      %v3022 = vshrl.u32 %v2709, 16
      %v3024 = vrot.slane %v3022, 4
      %v3025 = vor.u32 %v3024, %v3020
      %v3026 = vrot.slane %v3025, 4
      %v3028 = vshll.u32 %v2710, 16
      %v3030 = vrot.slane %v3028, 5
      %v3031 = vsel %vm916, %v3026, %v3030
      %v3033 = vshrl.u32 %v2711, 16
      %v3035 = vrot.slane %v3033, 4
      %v3036 = vshll.u32 %v2711, 16
      %v3038 = vrot.slane %v3036, 5
      %v3039 = vor.u32 %v3035, %v3038
      %v3040 = vrot.slane %v3039, 4
      %v3042 = vshll.u32 %v2712, 16
      %v3044 = vrot.slane %v3042, 5
      %v3045 = vsel %vm916, %v3040, %v3044
      %v3046 = vshrl.u32 %v2712, 16
      %v3048 = vrot.slane %v3046, 4
      %v3049 = vor.u32 %v3048, %v3044
      %v3050 = vrot.slane %v3049, 4
      %v3052 = vshll.u32 %v2713, 16
      %v3054 = vrot.slane %v3052, 5
      %v3055 = vsel %vm916, %v3050, %v3054
      %v3057 = vshrl.u32 %v2714, 16
      %v3059 = vrot.slane %v3057, 4
      %v3060 = vshll.u32 %v2714, 16
      %v3062 = vrot.slane %v3060, 5
      %v3063 = vor.u32 %v3059, %v3062
      %v3064 = vrot.slane %v3063, 4
      %v3066 = vshll.u32 %v2715, 16
      %v3068 = vrot.slane %v3066, 5
      %v3069 = vsel %vm916, %v3064, %v3068
      %v3070 = vshrl.u32 %v2715, 16
      %v3072 = vrot.slane %v3070, 4
      %v3073 = vor.u32 %v3072, %v3068
      %v3074 = vrot.slane %v3073, 4
      %v3076 = vshll.u32 %v2716, 16
      %v3078 = vrot.slane %v3076, 5
      %v3079 = vsel %vm916, %v3074, %v3078
      %v3081 = vshrl.u32 %v2717, 16
      %v3083 = vrot.slane %v3081, 4
      %v3084 = vshll.u32 %v2717, 16
      %v3086 = vrot.slane %v3084, 5
      %v3087 = vor.u32 %v3083, %v3086
      %v3088 = vrot.slane %v3087, 4
      %v3090 = vshll.u32 %v2718, 16
      %v3092 = vrot.slane %v3090, 5
      %v3093 = vsel %vm916, %v3088, %v3092
      %v3094 = vshrl.u32 %v2718, 16
      %v3096 = vrot.slane %v3094, 4
      %v3097 = vor.u32 %v3096, %v3092
      %v3098 = vrot.slane %v3097, 4
      %v3100 = vshll.u32 %v2719, 16
      %v3102 = vrot.slane %v3100, 5
      %v3103 = vsel %vm916, %v3098, %v3102
      %s3104 = scalar_lea.vmem %s4, 16
      %v3105 = vld [vmem:[%s3104] sm:$0xf]
      %v3106 = vunpack.c.l.b16 %v2733
      %v3107 = vunpack.c.l.b16 %v2743
      %v3108 = vunpack.c.l.b16 %v2757
      %v3109 = vunpack.c.l.b16 %v2767
      %v3110 = vunpack.c.l.b16 %v2781
      %v3111 = vunpack.c.l.b16 %v2791
      %v3112 = vunpack.c.l.b16 %v2805
      %v3113 = vunpack.c.l.b16 %v2815
      %v3114 = vunpack.c.l.b16 %v2829
      %v3115 = vunpack.c.l.b16 %v2839
      %v3116 = vunpack.c.l.b16 %v2853
      %v3117 = vunpack.c.l.b16 %v2863
      %v3118 = vunpack.c.l.b16 %v2877
      %v3119 = vunpack.c.l.b16 %v2887
      %v3120 = vunpack.c.l.b16 %v2901
      %v3121 = vunpack.c.l.b16 %v2911
      %v3122 = vunpack.c.l.b16 %v2925
      %v3123 = vunpack.c.l.b16 %v2935
      %v3124 = vunpack.c.l.b16 %v2949
      %v3125 = vunpack.c.l.b16 %v2959
      %v3126 = vunpack.c.l.b16 %v2973
      %v3127 = vunpack.c.l.b16 %v2983
      %v3128 = vunpack.c.l.b16 %v2997
      %v3129 = vunpack.c.l.b16 %v3007
      %v3130 = vunpack.c.l.b16 %v3021
      %v3131 = vunpack.c.l.b16 %v3031
      %v3132 = vunpack.c.l.b16 %v3045
      %v3133 = vunpack.c.l.b16 %v3055
      %v3134 = vunpack.c.l.b16 %v3069
      %v3135 = vunpack.c.l.b16 %v3079
      %v3136 = vunpack.c.l.b16 %v3093
      %v3137 = vunpack.c.l.b16 %v3103
      %v3138 = vpack.c.b16 %v3107, %v3106
      %v3139 = vpack.c.b16 %v3109, %v3108
      %v3140 = vpack.c.b16 %v3111, %v3110
      %v3141 = vpack.c.b16 %v3113, %v3112
      %v3142 = vpack.c.b16 %v3115, %v3114
      %v3143 = vpack.c.b16 %v3117, %v3116
      %v3144 = vpack.c.b16 %v3119, %v3118
      %v3145 = vpack.c.b16 %v3121, %v3120
      %v3146 = vpack.c.b16 %v3123, %v3122
      %v3147 = vpack.c.b16 %v3125, %v3124
      %v3148 = vpack.c.b16 %v3127, %v3126
      %v3149 = vpack.c.b16 %v3129, %v3128
      %v3150 = vpack.c.b16 %v3131, %v3130
      %v3151 = vpack.c.b16 %v3133, %v3132
      %v3152 = vpack.c.b16 %v3135, %v3134
      %v3153 = vpack.c.b16 %v3137, %v3136
      %v3155 = vsel %vm1351, %v3138, 0
      %v3158 = vsel %vm1351, %v3139, 0
      %v3161 = vsel %vm1351, %v3140, 0
      %v3164 = vsel %vm1351, %v3141, 0
      %v3167 = vsel %vm1351, %v3142, 0
      %v3170 = vsel %vm1351, %v3143, 0
      %v3173 = vsel %vm1351, %v3144, 0
      %v3176 = vsel %vm1351, %v3145, 0
      %v3179 = vsel %vm1351, %v3146, 0
      %v3182 = vsel %vm1351, %v3147, 0
      %v3185 = vsel %vm1351, %v3148, 0
      %v3188 = vsel %vm1351, %v3149, 0
      %v3191 = vsel %vm1351, %v3150, 0
      %v3194 = vsel %vm1351, %v3151, 0
      %v3197 = vsel %vm1351, %v3152, 0
      %v3200 = vsel %vm1351, %v3153, 0
      %v3203 = vsel %vm1400, %v3105, 0
      %3205 = vmatprep.subr.bf16.mxu0 0
      %3206 = vmatpush1.bf16.msra.mxu0 0
      %3207 = vmatprep.subr.bf16.mxu0 0
      %3208 = vmatpush1.bf16.msra.mxu0 0
      %3209 = vmatprep.subr.bf16.mxu0 0
      %3210 = vmatpush1.bf16.msra.mxu0 0
      %3211 = vmatprep.subr.bf16.mxu0 0
      %3212 = vmatpush1.bf16.msra.mxu0 0
      %3213 = vmatprep.subr.bf16.mxu0 0
      %3214 = vmatpush1.bf16.msra.mxu0 0
      %3215 = vmatprep.subr.bf16.mxu0 0
      %3216 = vmatpush1.bf16.msra.mxu0 0
      %3217 = vmatprep.subr.bf16.mxu0 0
      %3218 = vmatpush1.bf16.msra.mxu0 0
      %3219 = vmatprep.subr.bf16.mxu0 0
      %3220 = vmatpush1.bf16.msra.mxu0 %v3203
      %3221 = vmatprep.subr.bf16.mxu0 0
      %3222 = vmatpush2.bf16.msra.mxu0 0
      %3223 = vmatprep.subr.bf16.mxu0 0
      %3224 = vmatpush2.bf16.msra.mxu0 0
      %3225 = vmatprep.subr.bf16.mxu0 0
      %3226 = vmatpush2.bf16.msra.mxu0 0
      %3227 = vmatprep.subr.bf16.mxu0 0
      %3228 = vmatpush2.bf16.msra.mxu0 0
      %3229 = vmatprep.subr.bf16.mxu0 0
      %3230 = vmatpush2.bf16.msra.mxu0 0
      %3231 = vmatprep.subr.bf16.mxu0 0
      %3232 = vmatpush2.bf16.msra.mxu0 0
      %3233 = vmatprep.subr.bf16.mxu0 0
      %3234 = vmatpush2.bf16.msra.mxu0 0
      %3235 = vmatprep.subr.bf16.mxu0 0
      %3236 = vmatpush2.bf16.msra.mxu0 0
      %3237 = vmatprep.mubr.bf16.mxu0 0
      %3238 = vmatmul.mubr.bf16.gmra.mxu0 %v3155
      %v3239 = vpop.f32.mrf.mxu0
      %v3240 = vadd.f32 0.0, %v3239
      %v3241 = vpop.f32.mrf.mxu0
      %v3242 = vpop.f32.mrf.mxu0
      %v3243 = vadd.f32 0.0, %v3242
      %v3244 = vpop.f32.mrf.mxu0
      %3245 = vmatprep.mubr.bf16.mxu0 0
      %3246 = vmatmul.mubr.bf16.gmra.mxu0 %v3158
      %v3247 = vpop.f32.mrf.mxu0
      %v3248 = vadd.f32 0.0, %v3247
      %v3249 = vpop.f32.mrf.mxu0
      %v3250 = vpop.f32.mrf.mxu0
      %v3251 = vadd.f32 0.0, %v3250
      %v3252 = vpop.f32.mrf.mxu0
      %3253 = vmatprep.mubr.bf16.mxu0 0
      %3254 = vmatmul.mubr.bf16.gmra.mxu0 %v3161
      %v3255 = vpop.f32.mrf.mxu0
      %v3256 = vadd.f32 0.0, %v3255
      %v3257 = vpop.f32.mrf.mxu0
      %v3258 = vpop.f32.mrf.mxu0
      %v3259 = vadd.f32 0.0, %v3258
      %v3260 = vpop.f32.mrf.mxu0
      %3261 = vmatprep.mubr.bf16.mxu0 0
      %3262 = vmatmul.mubr.bf16.gmra.mxu0 %v3164
      %v3263 = vpop.f32.mrf.mxu0
      %v3264 = vadd.f32 0.0, %v3263
      %v3265 = vpop.f32.mrf.mxu0
      %v3266 = vpop.f32.mrf.mxu0
      %v3267 = vadd.f32 0.0, %v3266
      %v3268 = vpop.f32.mrf.mxu0
      %3269 = vmatprep.mubr.bf16.mxu0 0
      %3270 = vmatmul.mubr.bf16.gmra.mxu0 %v3167
      %v3271 = vpop.f32.mrf.mxu0
      %v3272 = vadd.f32 0.0, %v3271
      %v3273 = vpop.f32.mrf.mxu0
      %v3274 = vpop.f32.mrf.mxu0
      %v3275 = vadd.f32 0.0, %v3274
      %v3276 = vpop.f32.mrf.mxu0
      %3277 = vmatprep.mubr.bf16.mxu0 0
      %3278 = vmatmul.mubr.bf16.gmra.mxu0 %v3170
      %v3279 = vpop.f32.mrf.mxu0
      %v3280 = vadd.f32 0.0, %v3279
      %v3281 = vpop.f32.mrf.mxu0
      %v3282 = vpop.f32.mrf.mxu0
      %v3283 = vadd.f32 0.0, %v3282
      %v3284 = vpop.f32.mrf.mxu0
      %3285 = vmatprep.mubr.bf16.mxu0 0
      %3286 = vmatmul.mubr.bf16.gmra.mxu0 %v3173
      %v3287 = vpop.f32.mrf.mxu0
      %v3288 = vadd.f32 0.0, %v3287
      %v3289 = vpop.f32.mrf.mxu0
      %v3290 = vpop.f32.mrf.mxu0
      %v3291 = vadd.f32 0.0, %v3290
      %v3292 = vpop.f32.mrf.mxu0
      %3293 = vmatprep.mubr.bf16.mxu0 0
      %3294 = vmatmul.mubr.bf16.gmra.mxu0 %v3176
      %v3295 = vpop.f32.mrf.mxu0
      %v3296 = vadd.f32 0.0, %v3295
      %v3297 = vpop.f32.mrf.mxu0
      %v3298 = vpop.f32.mrf.mxu0
      %v3299 = vadd.f32 0.0, %v3298
      %v3300 = vpop.f32.mrf.mxu0
      %3301 = vmatprep.mubr.bf16.mxu0 0
      %3302 = vmatmul.mubr.bf16.gmra.mxu0 %v3179
      %v3303 = vpop.f32.mrf.mxu0
      %v3304 = vadd.f32 0.0, %v3303
      %v3305 = vpop.f32.mrf.mxu0
      %v3306 = vpop.f32.mrf.mxu0
      %v3307 = vadd.f32 0.0, %v3306
      %v3308 = vpop.f32.mrf.mxu0
      %3309 = vmatprep.mubr.bf16.mxu0 0
      %3310 = vmatmul.mubr.bf16.gmra.mxu0 %v3182
      %v3311 = vpop.f32.mrf.mxu0
      %v3312 = vadd.f32 0.0, %v3311
      %v3313 = vpop.f32.mrf.mxu0
      %v3314 = vpop.f32.mrf.mxu0
      %v3315 = vadd.f32 0.0, %v3314
      %v3316 = vpop.f32.mrf.mxu0
      %3317 = vmatprep.mubr.bf16.mxu0 0
      %3318 = vmatmul.mubr.bf16.gmra.mxu0 %v3185
      %v3319 = vpop.f32.mrf.mxu0
      %v3320 = vadd.f32 0.0, %v3319
      %v3321 = vpop.f32.mrf.mxu0
      %v3322 = vpop.f32.mrf.mxu0
      %v3323 = vadd.f32 0.0, %v3322
      %v3324 = vpop.f32.mrf.mxu0
      %3325 = vmatprep.mubr.bf16.mxu0 0
      %3326 = vmatmul.mubr.bf16.gmra.mxu0 %v3188
      %v3327 = vpop.f32.mrf.mxu0
      %v3328 = vadd.f32 0.0, %v3327
      %v3329 = vpop.f32.mrf.mxu0
      %v3330 = vpop.f32.mrf.mxu0
      %v3331 = vadd.f32 0.0, %v3330
      %v3332 = vpop.f32.mrf.mxu0
      %3333 = vmatprep.mubr.bf16.mxu0 0
      %3334 = vmatmul.mubr.bf16.gmra.mxu0 %v3191
      %v3335 = vpop.f32.mrf.mxu0
      %v3336 = vadd.f32 0.0, %v3335
      %v3337 = vpop.f32.mrf.mxu0
      %v3338 = vpop.f32.mrf.mxu0
      %v3339 = vadd.f32 0.0, %v3338
      %v3340 = vpop.f32.mrf.mxu0
      %3341 = vmatprep.mubr.bf16.mxu0 0
      %3342 = vmatmul.mubr.bf16.gmra.mxu0 %v3194
      %v3343 = vpop.f32.mrf.mxu0
      %v3344 = vadd.f32 0.0, %v3343
      %v3345 = vpop.f32.mrf.mxu0
      %v3346 = vpop.f32.mrf.mxu0
      %v3347 = vadd.f32 0.0, %v3346
      %v3348 = vpop.f32.mrf.mxu0
      %3349 = vmatprep.mubr.bf16.mxu0 0
      %3350 = vmatmul.mubr.bf16.gmra.mxu0 %v3197
      %v3351 = vpop.f32.mrf.mxu0
      %v3352 = vadd.f32 0.0, %v3351
      %v3353 = vpop.f32.mrf.mxu0
      %v3354 = vpop.f32.mrf.mxu0
      %v3355 = vadd.f32 0.0, %v3354
      %v3356 = vpop.f32.mrf.mxu0
      %3357 = vmatprep.mubr.bf16.mxu0 0
      %3358 = vmatmul.mubr.bf16.gmra.mxu0 %v3200
      %v3359 = vpop.f32.mrf.mxu0
      %v3360 = vadd.f32 0.0, %v3359
      %v3361 = vpop.f32.mrf.mxu0
      %v3362 = vpop.f32.mrf.mxu0
      %v3363 = vadd.f32 0.0, %v3362
      %v3364 = vpop.f32.mrf.mxu0
      %3365 = vdwg.mxu0
      %v3366 = vadd.f32 %v2640, %v3240
      %v3367 = vadd.f32 %v2641, %v3243
      %v3368 = vadd.f32 %v2642, %v3248
      %v3369 = vadd.f32 %v2643, %v3251
      %v3370 = vadd.f32 %v2644, %v3256
      %v3371 = vadd.f32 %v2645, %v3259
      %v3372 = vadd.f32 %v2646, %v3264
      %v3373 = vadd.f32 %v2647, %v3267
      %v3374 = vadd.f32 %v2648, %v3272
      %v3375 = vadd.f32 %v2649, %v3275
      %v3376 = vadd.f32 %v2650, %v3280
      %v3377 = vadd.f32 %v2651, %v3283
      %v3378 = vadd.f32 %v2652, %v3288
      %v3379 = vadd.f32 %v2653, %v3291
      %v3380 = vadd.f32 %v2654, %v3296
      %v3381 = vadd.f32 %v2655, %v3299
      %v3382 = vadd.f32 %v2656, %v3304
      %v3383 = vadd.f32 %v2657, %v3307
      %v3384 = vadd.f32 %v2658, %v3312
      %v3385 = vadd.f32 %v2659, %v3315
      %v3386 = vadd.f32 %v2660, %v3320
      %v3387 = vadd.f32 %v2661, %v3323
      %v3388 = vadd.f32 %v2662, %v3328
      %v3389 = vadd.f32 %v2663, %v3331
      %v3390 = vadd.f32 %v2664, %v3336
      %v3391 = vadd.f32 %v2665, %v3339
      %v3392 = vadd.f32 %v2666, %v3344
      %v3393 = vadd.f32 %v2667, %v3347
      %v3394 = vadd.f32 %v2668, %v3352
      %v3395 = vadd.f32 %v2669, %v3355
      %v3396 = vadd.f32 %v2670, %v3360
      %v3397 = vadd.f32 %v2671, %v3363
      %v3398 = vld [vmem:[%s816] sm:$0xe]
      %v3399 = vld [vmem:[%s816 + $0xc] sm:$0xe]
      %v3400 = vld [vmem:[%s816 + $0x18] sm:$0xe]
      %v3401 = vld [vmem:[%s816 + $0x24] sm:$0xe]
      %v3402 = vld [vmem:[%s816 + $0x30] sm:$0xe]
      %v3403 = vld [vmem:[%s816 + $0x3c] sm:$0xe]
      %v3404 = vld [vmem:[%s816 + $0x48] sm:$0xe]
      %v3405 = vld [vmem:[%s816 + $0x54] sm:$0xe]
      %v3406 = vld [vmem:[%s816 + $0x60] sm:$0xe]
      %v3407 = vld [vmem:[%s816 + $0x6c] sm:$0xe]
      %v3408 = vld [vmem:[%s816 + $0x78] sm:$0xe]
      %v3409 = vld [vmem:[%s816 + $0x84] sm:$0xe]
      %v3410 = vld [vmem:[%s816 + $0x90] sm:$0xe]
      %v3411 = vld [vmem:[%s816 + $0x9c] sm:$0xe]
      %v3412 = vld [vmem:[%s816 + $0xa8] sm:$0xe]
      %v3413 = vld [vmem:[%s816 + $0xb4] sm:$0xe]
      %v3462 = vrot.slane %v3398, 5
      %v3463 = vrot.slane %v3462, 4
      %v3464 = vrot.slane %v2673, 5
      %v3465 = vsel %vm1907, %v3463, %v3464
      %v3466 = vrot.slane %v3464, 4
      %v3467 = vrot.slane %v2674, 5
      %v3468 = vsel %vm1907, %v3466, %v3467
      %v3469 = vrot.slane %v3399, 5
      %v3470 = vrot.slane %v3469, 4
      %v3471 = vrot.slane %v2676, 5
      %v3472 = vsel %vm1907, %v3470, %v3471
      %v3473 = vrot.slane %v3471, 4
      %v3474 = vrot.slane %v2677, 5
      %v3475 = vsel %vm1907, %v3473, %v3474
      %v3476 = vrot.slane %v3400, 5
      %v3477 = vrot.slane %v3476, 4
      %v3478 = vrot.slane %v2679, 5
      %v3479 = vsel %vm1907, %v3477, %v3478
      %v3480 = vrot.slane %v3478, 4
      %v3481 = vrot.slane %v2680, 5
      %v3482 = vsel %vm1907, %v3480, %v3481
      %v3483 = vrot.slane %v3401, 5
      %v3484 = vrot.slane %v3483, 4
      %v3485 = vrot.slane %v2682, 5
      %v3486 = vsel %vm1907, %v3484, %v3485
      %v3487 = vrot.slane %v3485, 4
      %v3488 = vrot.slane %v2683, 5
      %v3489 = vsel %vm1907, %v3487, %v3488
      %v3490 = vrot.slane %v3402, 5
      %v3491 = vrot.slane %v3490, 4
      %v3492 = vrot.slane %v2685, 5
      %v3493 = vsel %vm1907, %v3491, %v3492
      %v3494 = vrot.slane %v3492, 4
      %v3495 = vrot.slane %v2686, 5
      %v3496 = vsel %vm1907, %v3494, %v3495
      %v3497 = vrot.slane %v3403, 5
      %v3498 = vrot.slane %v3497, 4
      %v3499 = vrot.slane %v2688, 5
      %v3500 = vsel %vm1907, %v3498, %v3499
      %v3501 = vrot.slane %v3499, 4
      %v3502 = vrot.slane %v2689, 5
      %v3503 = vsel %vm1907, %v3501, %v3502
      %v3504 = vrot.slane %v3404, 5
      %v3505 = vrot.slane %v3504, 4
      %v3506 = vrot.slane %v2691, 5
      %v3507 = vsel %vm1907, %v3505, %v3506
      %v3508 = vrot.slane %v3506, 4
      %v3509 = vrot.slane %v2692, 5
      %v3510 = vsel %vm1907, %v3508, %v3509
      %v3511 = vrot.slane %v3405, 5
      %v3512 = vrot.slane %v3511, 4
      %v3513 = vrot.slane %v2694, 5
      %v3514 = vsel %vm1907, %v3512, %v3513
      %v3515 = vrot.slane %v3513, 4
      %v3516 = vrot.slane %v2695, 5
      %v3517 = vsel %vm1907, %v3515, %v3516
      %v3518 = vrot.slane %v3406, 5
      %v3519 = vrot.slane %v3518, 4
      %v3520 = vrot.slane %v2697, 5
      %v3521 = vsel %vm1907, %v3519, %v3520
      %v3522 = vrot.slane %v3520, 4
      %v3523 = vrot.slane %v2698, 5
      %v3524 = vsel %vm1907, %v3522, %v3523
      %v3525 = vrot.slane %v3407, 5
      %v3526 = vrot.slane %v3525, 4
      %v3527 = vrot.slane %v2700, 5
      %v3528 = vsel %vm1907, %v3526, %v3527
      %v3529 = vrot.slane %v3527, 4
      %v3530 = vrot.slane %v2701, 5
      %v3531 = vsel %vm1907, %v3529, %v3530
      %v3532 = vrot.slane %v3408, 5
      %v3533 = vrot.slane %v3532, 4
      %v3534 = vrot.slane %v2703, 5
      %v3535 = vsel %vm1907, %v3533, %v3534
      %v3536 = vrot.slane %v3534, 4
      %v3537 = vrot.slane %v2704, 5
      %v3538 = vsel %vm1907, %v3536, %v3537
      %v3539 = vrot.slane %v3409, 5
      %v3540 = vrot.slane %v3539, 4
      %v3541 = vrot.slane %v2706, 5
      %v3542 = vsel %vm1907, %v3540, %v3541
      %v3543 = vrot.slane %v3541, 4
      %v3544 = vrot.slane %v2707, 5
      %v3545 = vsel %vm1907, %v3543, %v3544
      %v3546 = vrot.slane %v3410, 5
      %v3547 = vrot.slane %v3546, 4
      %v3548 = vrot.slane %v2709, 5
      %v3549 = vsel %vm1907, %v3547, %v3548
      %v3550 = vrot.slane %v3548, 4
      %v3551 = vrot.slane %v2710, 5
      %v3552 = vsel %vm1907, %v3550, %v3551
      %v3553 = vrot.slane %v3411, 5
      %v3554 = vrot.slane %v3553, 4
      %v3555 = vrot.slane %v2712, 5
      %v3556 = vsel %vm1907, %v3554, %v3555
      %v3557 = vrot.slane %v3555, 4
      %v3558 = vrot.slane %v2713, 5
      %v3559 = vsel %vm1907, %v3557, %v3558
      %v3560 = vrot.slane %v3412, 5
      %v3561 = vrot.slane %v3560, 4
      %v3562 = vrot.slane %v2715, 5
      %v3563 = vsel %vm1907, %v3561, %v3562
      %v3564 = vrot.slane %v3562, 4
      %v3565 = vrot.slane %v2716, 5
      %v3566 = vsel %vm1907, %v3564, %v3565
      %v3567 = vrot.slane %v3413, 5
      %v3568 = vrot.slane %v3567, 4
      %v3569 = vrot.slane %v2718, 5
      %v3570 = vsel %vm1907, %v3568, %v3569
      %v3571 = vrot.slane %v3569, 4
      %v3572 = vrot.slane %v2719, 5
      %v3573 = vsel %vm1907, %v3571, %v3572
      %s3574 = scalar_lea.vmem %s4, 20
      %v3575 = vld [vmem:[%s3574] sm:$0xf]
      %v3576 = vunpack.c.l.b16 %v3465
      %v3577 = vunpack.c.l.b16 %v3468
      %v3578 = vunpack.c.l.b16 %v3472
      %v3579 = vunpack.c.l.b16 %v3475
      %v3580 = vunpack.c.l.b16 %v3479
      %v3581 = vunpack.c.l.b16 %v3482
      %v3582 = vunpack.c.l.b16 %v3486
      %v3583 = vunpack.c.l.b16 %v3489
      %v3584 = vunpack.c.l.b16 %v3493
      %v3585 = vunpack.c.l.b16 %v3496
      %v3586 = vunpack.c.l.b16 %v3500
      %v3587 = vunpack.c.l.b16 %v3503
      %v3588 = vunpack.c.l.b16 %v3507
      %v3589 = vunpack.c.l.b16 %v3510
      %v3590 = vunpack.c.l.b16 %v3514
      %v3591 = vunpack.c.l.b16 %v3517
      %v3592 = vunpack.c.l.b16 %v3521
      %v3593 = vunpack.c.l.b16 %v3524
      %v3594 = vunpack.c.l.b16 %v3528
      %v3595 = vunpack.c.l.b16 %v3531
      %v3596 = vunpack.c.l.b16 %v3535
      %v3597 = vunpack.c.l.b16 %v3538
      %v3598 = vunpack.c.l.b16 %v3542
      %v3599 = vunpack.c.l.b16 %v3545
      %v3600 = vunpack.c.l.b16 %v3549
      %v3601 = vunpack.c.l.b16 %v3552
      %v3602 = vunpack.c.l.b16 %v3556
      %v3603 = vunpack.c.l.b16 %v3559
      %v3604 = vunpack.c.l.b16 %v3563
      %v3605 = vunpack.c.l.b16 %v3566
      %v3606 = vunpack.c.l.b16 %v3570
      %v3607 = vunpack.c.l.b16 %v3573
      %v3608 = vpack.c.b16 %v3577, %v3576
      %v3609 = vpack.c.b16 %v3579, %v3578
      %v3610 = vpack.c.b16 %v3581, %v3580
      %v3611 = vpack.c.b16 %v3583, %v3582
      %v3612 = vpack.c.b16 %v3585, %v3584
      %v3613 = vpack.c.b16 %v3587, %v3586
      %v3614 = vpack.c.b16 %v3589, %v3588
      %v3615 = vpack.c.b16 %v3591, %v3590
      %v3616 = vpack.c.b16 %v3593, %v3592
      %v3617 = vpack.c.b16 %v3595, %v3594
      %v3618 = vpack.c.b16 %v3597, %v3596
      %v3619 = vpack.c.b16 %v3599, %v3598
      %v3620 = vpack.c.b16 %v3601, %v3600
      %v3621 = vpack.c.b16 %v3603, %v3602
      %v3622 = vpack.c.b16 %v3605, %v3604
      %v3623 = vpack.c.b16 %v3607, %v3606
      %v3625 = vsel %vm1351, %v3608, 0
      %v3628 = vsel %vm1351, %v3609, 0
      %v3631 = vsel %vm1351, %v3610, 0
      %v3634 = vsel %vm1351, %v3611, 0
      %v3637 = vsel %vm1351, %v3612, 0
      %v3640 = vsel %vm1351, %v3613, 0
      %v3643 = vsel %vm1351, %v3614, 0
      %v3646 = vsel %vm1351, %v3615, 0
      %v3649 = vsel %vm1351, %v3616, 0
      %v3652 = vsel %vm1351, %v3617, 0
      %v3655 = vsel %vm1351, %v3618, 0
      %v3658 = vsel %vm1351, %v3619, 0
      %v3661 = vsel %vm1351, %v3620, 0
      %v3664 = vsel %vm1351, %v3621, 0
      %v3667 = vsel %vm1351, %v3622, 0
      %v3670 = vsel %vm1351, %v3623, 0
      %v3673 = vsel %vm1400, %v3575, 0
      %3675 = vmatprep.subr.bf16.mxu0 0
      %3676 = vmatpush1.bf16.msra.mxu0 0
      %3677 = vmatprep.subr.bf16.mxu0 0
      %3678 = vmatpush1.bf16.msra.mxu0 0
      %3679 = vmatprep.subr.bf16.mxu0 0
      %3680 = vmatpush1.bf16.msra.mxu0 0
      %3681 = vmatprep.subr.bf16.mxu0 0
      %3682 = vmatpush1.bf16.msra.mxu0 0
      %3683 = vmatprep.subr.bf16.mxu0 0
      %3684 = vmatpush1.bf16.msra.mxu0 0
      %3685 = vmatprep.subr.bf16.mxu0 0
      %3686 = vmatpush1.bf16.msra.mxu0 0
      %3687 = vmatprep.subr.bf16.mxu0 0
      %3688 = vmatpush1.bf16.msra.mxu0 0
      %3689 = vmatprep.subr.bf16.mxu0 0
      %3690 = vmatpush1.bf16.msra.mxu0 %v3673
      %3691 = vmatprep.subr.bf16.mxu0 0
      %3692 = vmatpush2.bf16.msra.mxu0 0
      %3693 = vmatprep.subr.bf16.mxu0 0
      %3694 = vmatpush2.bf16.msra.mxu0 0
      %3695 = vmatprep.subr.bf16.mxu0 0
      %3696 = vmatpush2.bf16.msra.mxu0 0
      %3697 = vmatprep.subr.bf16.mxu0 0
      %3698 = vmatpush2.bf16.msra.mxu0 0
      %3699 = vmatprep.subr.bf16.mxu0 0
      %3700 = vmatpush2.bf16.msra.mxu0 0
      %3701 = vmatprep.subr.bf16.mxu0 0
      %3702 = vmatpush2.bf16.msra.mxu0 0
      %3703 = vmatprep.subr.bf16.mxu0 0
      %3704 = vmatpush2.bf16.msra.mxu0 0
      %3705 = vmatprep.subr.bf16.mxu0 0
      %3706 = vmatpush2.bf16.msra.mxu0 0
      %3707 = vmatprep.mubr.bf16.mxu0 0
      %3708 = vmatmul.mubr.bf16.gmra.mxu0 %v3625
      %v3709 = vpop.f32.mrf.mxu0
      %v3710 = vadd.f32 0.0, %v3709
      %v3711 = vpop.f32.mrf.mxu0
      %v3712 = vpop.f32.mrf.mxu0
      %v3713 = vadd.f32 0.0, %v3712
      %v3714 = vpop.f32.mrf.mxu0
      %3715 = vmatprep.mubr.bf16.mxu0 0
      %3716 = vmatmul.mubr.bf16.gmra.mxu0 %v3628
      %v3717 = vpop.f32.mrf.mxu0
      %v3718 = vadd.f32 0.0, %v3717
      %v3719 = vpop.f32.mrf.mxu0
      %v3720 = vpop.f32.mrf.mxu0
      %v3721 = vadd.f32 0.0, %v3720
      %v3722 = vpop.f32.mrf.mxu0
      %3723 = vmatprep.mubr.bf16.mxu0 0
      %3724 = vmatmul.mubr.bf16.gmra.mxu0 %v3631
      %v3725 = vpop.f32.mrf.mxu0
      %v3726 = vadd.f32 0.0, %v3725
      %v3727 = vpop.f32.mrf.mxu0
      %v3728 = vpop.f32.mrf.mxu0
      %v3729 = vadd.f32 0.0, %v3728
      %v3730 = vpop.f32.mrf.mxu0
      %3731 = vmatprep.mubr.bf16.mxu0 0
      %3732 = vmatmul.mubr.bf16.gmra.mxu0 %v3634
      %v3733 = vpop.f32.mrf.mxu0
      %v3734 = vadd.f32 0.0, %v3733
      %v3735 = vpop.f32.mrf.mxu0
      %v3736 = vpop.f32.mrf.mxu0
      %v3737 = vadd.f32 0.0, %v3736
      %v3738 = vpop.f32.mrf.mxu0
      %3739 = vmatprep.mubr.bf16.mxu0 0
      %3740 = vmatmul.mubr.bf16.gmra.mxu0 %v3637
      %v3741 = vpop.f32.mrf.mxu0
      %v3742 = vadd.f32 0.0, %v3741
      %v3743 = vpop.f32.mrf.mxu0
      %v3744 = vpop.f32.mrf.mxu0
      %v3745 = vadd.f32 0.0, %v3744
      %v3746 = vpop.f32.mrf.mxu0
      %3747 = vmatprep.mubr.bf16.mxu0 0
      %3748 = vmatmul.mubr.bf16.gmra.mxu0 %v3640
      %v3749 = vpop.f32.mrf.mxu0
      %v3750 = vadd.f32 0.0, %v3749
      %v3751 = vpop.f32.mrf.mxu0
      %v3752 = vpop.f32.mrf.mxu0
      %v3753 = vadd.f32 0.0, %v3752
      %v3754 = vpop.f32.mrf.mxu0
      %3755 = vmatprep.mubr.bf16.mxu0 0
      %3756 = vmatmul.mubr.bf16.gmra.mxu0 %v3643
      %v3757 = vpop.f32.mrf.mxu0
      %v3758 = vadd.f32 0.0, %v3757
      %v3759 = vpop.f32.mrf.mxu0
      %v3760 = vpop.f32.mrf.mxu0
      %v3761 = vadd.f32 0.0, %v3760
      %v3762 = vpop.f32.mrf.mxu0
      %3763 = vmatprep.mubr.bf16.mxu0 0
      %3764 = vmatmul.mubr.bf16.gmra.mxu0 %v3646
      %v3765 = vpop.f32.mrf.mxu0
      %v3766 = vadd.f32 0.0, %v3765
      %v3767 = vpop.f32.mrf.mxu0
      %v3768 = vpop.f32.mrf.mxu0
      %v3769 = vadd.f32 0.0, %v3768
      %v3770 = vpop.f32.mrf.mxu0
      %3771 = vmatprep.mubr.bf16.mxu0 0
      %3772 = vmatmul.mubr.bf16.gmra.mxu0 %v3649
      %v3773 = vpop.f32.mrf.mxu0
      %v3774 = vadd.f32 0.0, %v3773
      %v3775 = vpop.f32.mrf.mxu0
      %v3776 = vpop.f32.mrf.mxu0
      %v3777 = vadd.f32 0.0, %v3776
      %v3778 = vpop.f32.mrf.mxu0
      %3779 = vmatprep.mubr.bf16.mxu0 0
      %3780 = vmatmul.mubr.bf16.gmra.mxu0 %v3652
      %v3781 = vpop.f32.mrf.mxu0
      %v3782 = vadd.f32 0.0, %v3781
      %v3783 = vpop.f32.mrf.mxu0
      %v3784 = vpop.f32.mrf.mxu0
      %v3785 = vadd.f32 0.0, %v3784
      %v3786 = vpop.f32.mrf.mxu0
      %3787 = vmatprep.mubr.bf16.mxu0 0
      %3788 = vmatmul.mubr.bf16.gmra.mxu0 %v3655
      %v3789 = vpop.f32.mrf.mxu0
      %v3790 = vadd.f32 0.0, %v3789
      %v3791 = vpop.f32.mrf.mxu0
      %v3792 = vpop.f32.mrf.mxu0
      %v3793 = vadd.f32 0.0, %v3792
      %v3794 = vpop.f32.mrf.mxu0
      %3795 = vmatprep.mubr.bf16.mxu0 0
      %3796 = vmatmul.mubr.bf16.gmra.mxu0 %v3658
      %v3797 = vpop.f32.mrf.mxu0
      %v3798 = vadd.f32 0.0, %v3797
      %v3799 = vpop.f32.mrf.mxu0
      %v3800 = vpop.f32.mrf.mxu0
      %v3801 = vadd.f32 0.0, %v3800
      %v3802 = vpop.f32.mrf.mxu0
      %3803 = vmatprep.mubr.bf16.mxu0 0
      %3804 = vmatmul.mubr.bf16.gmra.mxu0 %v3661
      %v3805 = vpop.f32.mrf.mxu0
      %v3806 = vadd.f32 0.0, %v3805
      %v3807 = vpop.f32.mrf.mxu0
      %v3808 = vpop.f32.mrf.mxu0
      %v3809 = vadd.f32 0.0, %v3808
      %v3810 = vpop.f32.mrf.mxu0
      %3811 = vmatprep.mubr.bf16.mxu0 0
      %3812 = vmatmul.mubr.bf16.gmra.mxu0 %v3664
      %v3813 = vpop.f32.mrf.mxu0
      %v3814 = vadd.f32 0.0, %v3813
      %v3815 = vpop.f32.mrf.mxu0
      %v3816 = vpop.f32.mrf.mxu0
      %v3817 = vadd.f32 0.0, %v3816
      %v3818 = vpop.f32.mrf.mxu0
      %3819 = vmatprep.mubr.bf16.mxu0 0
      %3820 = vmatmul.mubr.bf16.gmra.mxu0 %v3667
      %v3821 = vpop.f32.mrf.mxu0
      %v3822 = vadd.f32 0.0, %v3821
      %v3823 = vpop.f32.mrf.mxu0
      %v3824 = vpop.f32.mrf.mxu0
      %v3825 = vadd.f32 0.0, %v3824
      %v3826 = vpop.f32.mrf.mxu0
      %3827 = vmatprep.mubr.bf16.mxu0 0
      %3828 = vmatmul.mubr.bf16.gmra.mxu0 %v3670
      %v3829 = vpop.f32.mrf.mxu0
      %v3830 = vadd.f32 0.0, %v3829
      %v3831 = vpop.f32.mrf.mxu0
      %v3832 = vpop.f32.mrf.mxu0
      %v3833 = vadd.f32 0.0, %v3832
      %v3834 = vpop.f32.mrf.mxu0
      %3835 = vdwg.mxu0
      %v3836 = vadd.f32 %v3366, %v3710
      %v3837 = vadd.f32 %v3367, %v3713
      %v3838 = vadd.f32 %v3368, %v3718
      %v3839 = vadd.f32 %v3369, %v3721
      %v3840 = vadd.f32 %v3370, %v3726
      %v3841 = vadd.f32 %v3371, %v3729
      %v3842 = vadd.f32 %v3372, %v3734
      %v3843 = vadd.f32 %v3373, %v3737
      %v3844 = vadd.f32 %v3374, %v3742
      %v3845 = vadd.f32 %v3375, %v3745
      %v3846 = vadd.f32 %v3376, %v3750
      %v3847 = vadd.f32 %v3377, %v3753
      %v3848 = vadd.f32 %v3378, %v3758
      %v3849 = vadd.f32 %v3379, %v3761
      %v3850 = vadd.f32 %v3380, %v3766
      %v3851 = vadd.f32 %v3381, %v3769
      %v3852 = vadd.f32 %v3382, %v3774
      %v3853 = vadd.f32 %v3383, %v3777
      %v3854 = vadd.f32 %v3384, %v3782
      %v3855 = vadd.f32 %v3385, %v3785
      %v3856 = vadd.f32 %v3386, %v3790
      %v3857 = vadd.f32 %v3387, %v3793
      %v3858 = vadd.f32 %v3388, %v3798
      %v3859 = vadd.f32 %v3389, %v3801
      %v3860 = vadd.f32 %v3390, %v3806
      %v3861 = vadd.f32 %v3391, %v3809
      %v3862 = vadd.f32 %v3392, %v3814
      %v3863 = vadd.f32 %v3393, %v3817
      %v3864 = vadd.f32 %v3394, %v3822
      %v3865 = vadd.f32 %v3395, %v3825
      %v3866 = vadd.f32 %v3396, %v3830
      %v3867 = vadd.f32 %v3397, %v3833
      %s3868 = scalar_lea.vmem [#allocation2], 24
      %v3869 = vld [vmem:[%s3868] sm:$0xf]
      %v3870 = vld [vmem:[%s3868 + $0x4] sm:$0xf]
      %v3871 = vld [vmem:[%s3868 + $0xc] sm:$0xf]
      %v3872 = vld [vmem:[%s3868 + $0x10] sm:$0xf]
      %v3873 = vld [vmem:[%s3868 + $0x18] sm:$0xf]
      %v3874 = vld [vmem:[%s3868 + $0x1c] sm:$0xf]
      %v3875 = vld [vmem:[%s3868 + $0x24] sm:$0xf]
      %v3876 = vld [vmem:[%s3868 + $0x28] sm:$0xf]
      %v3877 = vld [vmem:[%s3868 + $0x30] sm:$0xf]
      %v3878 = vld [vmem:[%s3868 + $0x34] sm:$0xf]
      %v3879 = vld [vmem:[%s3868 + $0x3c] sm:$0xf]
      %v3880 = vld [vmem:[%s3868 + $0x40] sm:$0xf]
      %v3881 = vld [vmem:[%s3868 + $0x48] sm:$0xf]
      %v3882 = vld [vmem:[%s3868 + $0x4c] sm:$0xf]
      %v3883 = vld [vmem:[%s3868 + $0x54] sm:$0xf]
      %v3884 = vld [vmem:[%s3868 + $0x58] sm:$0xf]
      %v3885 = vld [vmem:[%s3868 + $0x60] sm:$0xf]
      %v3886 = vld [vmem:[%s3868 + $0x64] sm:$0xf]
      %v3887 = vld [vmem:[%s3868 + $0x6c] sm:$0xf]
      %v3888 = vld [vmem:[%s3868 + $0x70] sm:$0xf]
      %v3889 = vld [vmem:[%s3868 + $0x78] sm:$0xf]
      %v3890 = vld [vmem:[%s3868 + $0x7c] sm:$0xf]
      %v3891 = vld [vmem:[%s3868 + $0x84] sm:$0xf]
      %v3892 = vld [vmem:[%s3868 + $0x88] sm:$0xf]
      %v3893 = vld [vmem:[%s3868 + $0x90] sm:$0xf]
      %v3894 = vld [vmem:[%s3868 + $0x94] sm:$0xf]
      %v3895 = vld [vmem:[%s3868 + $0x9c] sm:$0xf]
      %v3896 = vld [vmem:[%s3868 + $0xa0] sm:$0xf]
      %v3897 = vld [vmem:[%s3868 + $0xa8] sm:$0xf]
      %v3898 = vld [vmem:[%s3868 + $0xac] sm:$0xf]
      %v3899 = vld [vmem:[%s3868 + $0xb4] sm:$0xf]
      %v3900 = vld [vmem:[%s3868 + $0xb8] sm:$0xf]
      %s3901 = scalar_lea.vmem %s4, 24
      %v3902 = vld [vmem:[%s3901] sm:$0xf]
      %v3935 = vunpack.c.l.b16 %v3869
      %v3936 = vunpack.c.l.b16 %v3870
      %v3937 = vunpack.c.l.b16 %v3871
      %v3938 = vunpack.c.l.b16 %v3872
      %v3939 = vunpack.c.l.b16 %v3873
      %v3940 = vunpack.c.l.b16 %v3874
      %v3941 = vunpack.c.l.b16 %v3875
      %v3942 = vunpack.c.l.b16 %v3876
      %v3943 = vunpack.c.l.b16 %v3877
      %v3944 = vunpack.c.l.b16 %v3878
      %v3945 = vunpack.c.l.b16 %v3879
      %v3946 = vunpack.c.l.b16 %v3880
      %v3947 = vunpack.c.l.b16 %v3881
      %v3948 = vunpack.c.l.b16 %v3882
      %v3949 = vunpack.c.l.b16 %v3883
      %v3950 = vunpack.c.l.b16 %v3884
      %v3951 = vunpack.c.l.b16 %v3885
      %v3952 = vunpack.c.l.b16 %v3886
      %v3953 = vunpack.c.l.b16 %v3887
      %v3954 = vunpack.c.l.b16 %v3888
      %v3955 = vunpack.c.l.b16 %v3889
      %v3956 = vunpack.c.l.b16 %v3890
      %v3957 = vunpack.c.l.b16 %v3891
      %v3958 = vunpack.c.l.b16 %v3892
      %v3959 = vunpack.c.l.b16 %v3893
      %v3960 = vunpack.c.l.b16 %v3894
      %v3961 = vunpack.c.l.b16 %v3895
      %v3962 = vunpack.c.l.b16 %v3896
      %v3963 = vunpack.c.l.b16 %v3897
      %v3964 = vunpack.c.l.b16 %v3898
      %v3965 = vunpack.c.l.b16 %v3899
      %v3966 = vunpack.c.l.b16 %v3900
      %v3967 = vpack.c.b16 %v3936, %v3935
      %v3968 = vpack.c.b16 %v3938, %v3937
      %v3969 = vpack.c.b16 %v3940, %v3939
      %v3970 = vpack.c.b16 %v3942, %v3941
      %v3971 = vpack.c.b16 %v3944, %v3943
      %v3972 = vpack.c.b16 %v3946, %v3945
      %v3973 = vpack.c.b16 %v3948, %v3947
      %v3974 = vpack.c.b16 %v3950, %v3949
      %v3975 = vpack.c.b16 %v3952, %v3951
      %v3976 = vpack.c.b16 %v3954, %v3953
      %v3977 = vpack.c.b16 %v3956, %v3955
      %v3978 = vpack.c.b16 %v3958, %v3957
      %v3979 = vpack.c.b16 %v3960, %v3959
      %v3980 = vpack.c.b16 %v3962, %v3961
      %v3981 = vpack.c.b16 %v3964, %v3963
      %v3982 = vpack.c.b16 %v3966, %v3965
      %v3984 = vsel %vm1351, %v3967, 0
      %v3987 = vsel %vm1351, %v3968, 0
      %v3990 = vsel %vm1351, %v3969, 0
      %v3993 = vsel %vm1351, %v3970, 0
      %v3996 = vsel %vm1351, %v3971, 0
      %v3999 = vsel %vm1351, %v3972, 0
      %v4002 = vsel %vm1351, %v3973, 0
      %v4005 = vsel %vm1351, %v3974, 0
      %v4008 = vsel %vm1351, %v3975, 0
      %v4011 = vsel %vm1351, %v3976, 0
      %v4014 = vsel %vm1351, %v3977, 0
      %v4017 = vsel %vm1351, %v3978, 0
      %v4020 = vsel %vm1351, %v3979, 0
      %v4023 = vsel %vm1351, %v3980, 0
      %v4026 = vsel %vm1351, %v3981, 0
      %v4029 = vsel %vm1351, %v3982, 0
      %v4032 = vsel %vm1400, %v3902, 0
      %4034 = vmatprep.subr.bf16.mxu0 0
      %4035 = vmatpush1.bf16.msra.mxu0 0
      %4036 = vmatprep.subr.bf16.mxu0 0
      %4037 = vmatpush1.bf16.msra.mxu0 0
      %4038 = vmatprep.subr.bf16.mxu0 0
      %4039 = vmatpush1.bf16.msra.mxu0 0
      %4040 = vmatprep.subr.bf16.mxu0 0
      %4041 = vmatpush1.bf16.msra.mxu0 0
      %4042 = vmatprep.subr.bf16.mxu0 0
      %4043 = vmatpush1.bf16.msra.mxu0 0
      %4044 = vmatprep.subr.bf16.mxu0 0
      %4045 = vmatpush1.bf16.msra.mxu0 0
      %4046 = vmatprep.subr.bf16.mxu0 0
      %4047 = vmatpush1.bf16.msra.mxu0 0
      %4048 = vmatprep.subr.bf16.mxu0 0
      %4049 = vmatpush1.bf16.msra.mxu0 %v4032
      %4050 = vmatprep.subr.bf16.mxu0 0
      %4051 = vmatpush2.bf16.msra.mxu0 0
      %4052 = vmatprep.subr.bf16.mxu0 0
      %4053 = vmatpush2.bf16.msra.mxu0 0
      %4054 = vmatprep.subr.bf16.mxu0 0
      %4055 = vmatpush2.bf16.msra.mxu0 0
      %4056 = vmatprep.subr.bf16.mxu0 0
      %4057 = vmatpush2.bf16.msra.mxu0 0
      %4058 = vmatprep.subr.bf16.mxu0 0
      %4059 = vmatpush2.bf16.msra.mxu0 0
      %4060 = vmatprep.subr.bf16.mxu0 0
      %4061 = vmatpush2.bf16.msra.mxu0 0
      %4062 = vmatprep.subr.bf16.mxu0 0
      %4063 = vmatpush2.bf16.msra.mxu0 0
      %4064 = vmatprep.subr.bf16.mxu0 0
      %4065 = vmatpush2.bf16.msra.mxu0 0
      %4066 = vmatprep.mubr.bf16.mxu0 0
      %4067 = vmatmul.mubr.bf16.gmra.mxu0 %v3984
      %v4068 = vpop.f32.mrf.mxu0
      %v4069 = vadd.f32 0.0, %v4068
      %v4070 = vpop.f32.mrf.mxu0
      %v4071 = vpop.f32.mrf.mxu0
      %v4072 = vadd.f32 0.0, %v4071
      %v4073 = vpop.f32.mrf.mxu0
      %4074 = vmatprep.mubr.bf16.mxu0 0
      %4075 = vmatmul.mubr.bf16.gmra.mxu0 %v3987
      %v4076 = vpop.f32.mrf.mxu0
      %v4077 = vadd.f32 0.0, %v4076
      %v4078 = vpop.f32.mrf.mxu0
      %v4079 = vpop.f32.mrf.mxu0
      %v4080 = vadd.f32 0.0, %v4079
      %v4081 = vpop.f32.mrf.mxu0
      %4082 = vmatprep.mubr.bf16.mxu0 0
      %4083 = vmatmul.mubr.bf16.gmra.mxu0 %v3990
      %v4084 = vpop.f32.mrf.mxu0
      %v4085 = vadd.f32 0.0, %v4084
      %v4086 = vpop.f32.mrf.mxu0
      %v4087 = vpop.f32.mrf.mxu0
      %v4088 = vadd.f32 0.0, %v4087
      %v4089 = vpop.f32.mrf.mxu0
      %4090 = vmatprep.mubr.bf16.mxu0 0
      %4091 = vmatmul.mubr.bf16.gmra.mxu0 %v3993
      %v4092 = vpop.f32.mrf.mxu0
      %v4093 = vadd.f32 0.0, %v4092
      %v4094 = vpop.f32.mrf.mxu0
      %v4095 = vpop.f32.mrf.mxu0
      %v4096 = vadd.f32 0.0, %v4095
      %v4097 = vpop.f32.mrf.mxu0
      %4098 = vmatprep.mubr.bf16.mxu0 0
      %4099 = vmatmul.mubr.bf16.gmra.mxu0 %v3996
      %v4100 = vpop.f32.mrf.mxu0
      %v4101 = vadd.f32 0.0, %v4100
      %v4102 = vpop.f32.mrf.mxu0
      %v4103 = vpop.f32.mrf.mxu0
      %v4104 = vadd.f32 0.0, %v4103
      %v4105 = vpop.f32.mrf.mxu0
      %4106 = vmatprep.mubr.bf16.mxu0 0
      %4107 = vmatmul.mubr.bf16.gmra.mxu0 %v3999
      %v4108 = vpop.f32.mrf.mxu0
      %v4109 = vadd.f32 0.0, %v4108
      %v4110 = vpop.f32.mrf.mxu0
      %v4111 = vpop.f32.mrf.mxu0
      %v4112 = vadd.f32 0.0, %v4111
      %v4113 = vpop.f32.mrf.mxu0
      %4114 = vmatprep.mubr.bf16.mxu0 0
      %4115 = vmatmul.mubr.bf16.gmra.mxu0 %v4002
      %v4116 = vpop.f32.mrf.mxu0
      %v4117 = vadd.f32 0.0, %v4116
      %v4118 = vpop.f32.mrf.mxu0
      %v4119 = vpop.f32.mrf.mxu0
      %v4120 = vadd.f32 0.0, %v4119
      %v4121 = vpop.f32.mrf.mxu0
      %4122 = vmatprep.mubr.bf16.mxu0 0
      %4123 = vmatmul.mubr.bf16.gmra.mxu0 %v4005
      %v4124 = vpop.f32.mrf.mxu0
      %v4125 = vadd.f32 0.0, %v4124
      %v4126 = vpop.f32.mrf.mxu0
      %v4127 = vpop.f32.mrf.mxu0
      %v4128 = vadd.f32 0.0, %v4127
      %v4129 = vpop.f32.mrf.mxu0
      %4130 = vmatprep.mubr.bf16.mxu0 0
      %4131 = vmatmul.mubr.bf16.gmra.mxu0 %v4008
      %v4132 = vpop.f32.mrf.mxu0
      %v4133 = vadd.f32 0.0, %v4132
      %v4134 = vpop.f32.mrf.mxu0
      %v4135 = vpop.f32.mrf.mxu0
      %v4136 = vadd.f32 0.0, %v4135
      %v4137 = vpop.f32.mrf.mxu0
      %4138 = vmatprep.mubr.bf16.mxu0 0
      %4139 = vmatmul.mubr.bf16.gmra.mxu0 %v4011
      %v4140 = vpop.f32.mrf.mxu0
      %v4141 = vadd.f32 0.0, %v4140
      %v4142 = vpop.f32.mrf.mxu0
      %v4143 = vpop.f32.mrf.mxu0
      %v4144 = vadd.f32 0.0, %v4143
      %v4145 = vpop.f32.mrf.mxu0
      %4146 = vmatprep.mubr.bf16.mxu0 0
      %4147 = vmatmul.mubr.bf16.gmra.mxu0 %v4014
      %v4148 = vpop.f32.mrf.mxu0
      %v4149 = vadd.f32 0.0, %v4148
      %v4150 = vpop.f32.mrf.mxu0
      %v4151 = vpop.f32.mrf.mxu0
      %v4152 = vadd.f32 0.0, %v4151
      %v4153 = vpop.f32.mrf.mxu0
      %4154 = vmatprep.mubr.bf16.mxu0 0
      %4155 = vmatmul.mubr.bf16.gmra.mxu0 %v4017
      %v4156 = vpop.f32.mrf.mxu0
      %v4157 = vadd.f32 0.0, %v4156
      %v4158 = vpop.f32.mrf.mxu0
      %v4159 = vpop.f32.mrf.mxu0
      %v4160 = vadd.f32 0.0, %v4159
      %v4161 = vpop.f32.mrf.mxu0
      %4162 = vmatprep.mubr.bf16.mxu0 0
      %4163 = vmatmul.mubr.bf16.gmra.mxu0 %v4020
      %v4164 = vpop.f32.mrf.mxu0
      %v4165 = vadd.f32 0.0, %v4164
      %v4166 = vpop.f32.mrf.mxu0
      %v4167 = vpop.f32.mrf.mxu0
      %v4168 = vadd.f32 0.0, %v4167
      %v4169 = vpop.f32.mrf.mxu0
      %4170 = vmatprep.mubr.bf16.mxu0 0
      %4171 = vmatmul.mubr.bf16.gmra.mxu0 %v4023
      %v4172 = vpop.f32.mrf.mxu0
      %v4173 = vadd.f32 0.0, %v4172
      %v4174 = vpop.f32.mrf.mxu0
      %v4175 = vpop.f32.mrf.mxu0
      %v4176 = vadd.f32 0.0, %v4175
      %v4177 = vpop.f32.mrf.mxu0
      %4178 = vmatprep.mubr.bf16.mxu0 0
      %4179 = vmatmul.mubr.bf16.gmra.mxu0 %v4026
      %v4180 = vpop.f32.mrf.mxu0
      %v4181 = vadd.f32 0.0, %v4180
      %v4182 = vpop.f32.mrf.mxu0
      %v4183 = vpop.f32.mrf.mxu0
      %v4184 = vadd.f32 0.0, %v4183
      %v4185 = vpop.f32.mrf.mxu0
      %4186 = vmatprep.mubr.bf16.mxu0 0
      %4187 = vmatmul.mubr.bf16.gmra.mxu0 %v4029
      %v4188 = vpop.f32.mrf.mxu0
      %v4189 = vadd.f32 0.0, %v4188
      %v4190 = vpop.f32.mrf.mxu0
      %v4191 = vpop.f32.mrf.mxu0
      %v4192 = vadd.f32 0.0, %v4191
      %v4193 = vpop.f32.mrf.mxu0
      %4194 = vdwg.mxu0
      %v4195 = vadd.f32 %v3836, %v4069
      %v4196 = vadd.f32 %v3837, %v4072
      %v4197 = vadd.f32 %v3838, %v4077
      %v4198 = vadd.f32 %v3839, %v4080
      %v4199 = vadd.f32 %v3840, %v4085
      %v4200 = vadd.f32 %v3841, %v4088
      %v4201 = vadd.f32 %v3842, %v4093
      %v4202 = vadd.f32 %v3843, %v4096
      %v4203 = vadd.f32 %v3844, %v4101
      %v4204 = vadd.f32 %v3845, %v4104
      %v4205 = vadd.f32 %v3846, %v4109
      %v4206 = vadd.f32 %v3847, %v4112
      %v4207 = vadd.f32 %v3848, %v4117
      %v4208 = vadd.f32 %v3849, %v4120
      %v4209 = vadd.f32 %v3850, %v4125
      %v4210 = vadd.f32 %v3851, %v4128
      %v4211 = vadd.f32 %v3852, %v4133
      %v4212 = vadd.f32 %v3853, %v4136
      %v4213 = vadd.f32 %v3854, %v4141
      %v4214 = vadd.f32 %v3855, %v4144
      %v4215 = vadd.f32 %v3856, %v4149
      %v4216 = vadd.f32 %v3857, %v4152
      %v4217 = vadd.f32 %v3858, %v4157
      %v4218 = vadd.f32 %v3859, %v4160
      %v4219 = vadd.f32 %v3860, %v4165
      %v4220 = vadd.f32 %v3861, %v4168
      %v4221 = vadd.f32 %v3862, %v4173
      %v4222 = vadd.f32 %v3863, %v4176
      %v4223 = vadd.f32 %v3864, %v4181
      %v4224 = vadd.f32 %v3865, %v4184
      %v4225 = vadd.f32 %v3866, %v4189
      %v4226 = vadd.f32 %v3867, %v4192
      %v4227 = vld [vmem:[%s3868] sm:$0xf]
      %v4228 = vld [vmem:[%s3868 + $0x4] sm:$0xf]
      %v4229 = vld [vmem:[%s3868 + $0x8] sm:$0x1]
      %v4230 = vld [vmem:[%s3868 + $0xc] sm:$0xf]
      %v4231 = vld [vmem:[%s3868 + $0x10] sm:$0xf]
      %v4232 = vld [vmem:[%s3868 + $0x14] sm:$0x1]
      %v4233 = vld [vmem:[%s3868 + $0x18] sm:$0xf]
      %v4234 = vld [vmem:[%s3868 + $0x1c] sm:$0xf]
      %v4235 = vld [vmem:[%s3868 + $0x20] sm:$0x1]
      %v4236 = vld [vmem:[%s3868 + $0x24] sm:$0xf]
      %v4237 = vld [vmem:[%s3868 + $0x28] sm:$0xf]
      %v4238 = vld [vmem:[%s3868 + $0x2c] sm:$0x1]
      %v4239 = vld [vmem:[%s3868 + $0x30] sm:$0xf]
      %v4240 = vld [vmem:[%s3868 + $0x34] sm:$0xf]
      %v4241 = vld [vmem:[%s3868 + $0x38] sm:$0x1]
      %v4242 = vld [vmem:[%s3868 + $0x3c] sm:$0xf]
      %v4243 = vld [vmem:[%s3868 + $0x40] sm:$0xf]
      %v4244 = vld [vmem:[%s3868 + $0x44] sm:$0x1]
      %v4245 = vld [vmem:[%s3868 + $0x48] sm:$0xf]
      %v4246 = vld [vmem:[%s3868 + $0x4c] sm:$0xf]
      %v4247 = vld [vmem:[%s3868 + $0x50] sm:$0x1]
      %v4248 = vld [vmem:[%s3868 + $0x54] sm:$0xf]
      %v4249 = vld [vmem:[%s3868 + $0x58] sm:$0xf]
      %v4250 = vld [vmem:[%s3868 + $0x5c] sm:$0x1]
      %v4251 = vld [vmem:[%s3868 + $0x60] sm:$0xf]
      %v4252 = vld [vmem:[%s3868 + $0x64] sm:$0xf]
      %v4253 = vld [vmem:[%s3868 + $0x68] sm:$0x1]
      %v4254 = vld [vmem:[%s3868 + $0x6c] sm:$0xf]
      %v4255 = vld [vmem:[%s3868 + $0x70] sm:$0xf]
      %v4256 = vld [vmem:[%s3868 + $0x74] sm:$0x1]
      %v4257 = vld [vmem:[%s3868 + $0x78] sm:$0xf]
      %v4258 = vld [vmem:[%s3868 + $0x7c] sm:$0xf]
      %v4259 = vld [vmem:[%s3868 + $0x80] sm:$0x1]
      %v4260 = vld [vmem:[%s3868 + $0x84] sm:$0xf]
      %v4261 = vld [vmem:[%s3868 + $0x88] sm:$0xf]
      %v4262 = vld [vmem:[%s3868 + $0x8c] sm:$0x1]
      %v4263 = vld [vmem:[%s3868 + $0x90] sm:$0xf]
      %v4264 = vld [vmem:[%s3868 + $0x94] sm:$0xf]
      %v4265 = vld [vmem:[%s3868 + $0x98] sm:$0x1]
      %v4266 = vld [vmem:[%s3868 + $0x9c] sm:$0xf]
      %v4267 = vld [vmem:[%s3868 + $0xa0] sm:$0xf]
      %v4268 = vld [vmem:[%s3868 + $0xa4] sm:$0x1]
      %v4269 = vld [vmem:[%s3868 + $0xa8] sm:$0xf]
      %v4270 = vld [vmem:[%s3868 + $0xac] sm:$0xf]
      %v4271 = vld [vmem:[%s3868 + $0xb0] sm:$0x1]
      %v4272 = vld [vmem:[%s3868 + $0xb4] sm:$0xf]
      %v4273 = vld [vmem:[%s3868 + $0xb8] sm:$0xf]
      %v4274 = vld [vmem:[%s3868 + $0xbc] sm:$0x1]
      %v4276 = vshrl.u32 %v4227, 16
      %v4278 = vrot.slane %v4276, 4
      %v4279 = vshll.u32 %v4227, 16
      %v4281 = vrot.slane %v4279, 5
      %v4282 = vor.u32 %v4278, %v4281
      %v4283 = vrot.slane %v4282, 4
      %v4285 = vshll.u32 %v4228, 16
      %v4287 = vrot.slane %v4285, 5
      %v4288 = vsel %vm916, %v4283, %v4287
      %v4289 = vshrl.u32 %v4228, 16
      %v4291 = vrot.slane %v4289, 4
      %v4292 = vor.u32 %v4291, %v4287
      %v4293 = vrot.slane %v4292, 4
      %v4295 = vshll.u32 %v4229, 16
      %v4297 = vrot.slane %v4295, 5
      %v4298 = vsel %vm916, %v4293, %v4297
      %v4300 = vshrl.u32 %v4230, 16
      %v4302 = vrot.slane %v4300, 4
      %v4303 = vshll.u32 %v4230, 16
      %v4305 = vrot.slane %v4303, 5
      %v4306 = vor.u32 %v4302, %v4305
      %v4307 = vrot.slane %v4306, 4
      %v4309 = vshll.u32 %v4231, 16
      %v4311 = vrot.slane %v4309, 5
      %v4312 = vsel %vm916, %v4307, %v4311
      %v4313 = vshrl.u32 %v4231, 16
      %v4315 = vrot.slane %v4313, 4
      %v4316 = vor.u32 %v4315, %v4311
      %v4317 = vrot.slane %v4316, 4
      %v4319 = vshll.u32 %v4232, 16
      %v4321 = vrot.slane %v4319, 5
      %v4322 = vsel %vm916, %v4317, %v4321
      %v4324 = vshrl.u32 %v4233, 16
      %v4326 = vrot.slane %v4324, 4
      %v4327 = vshll.u32 %v4233, 16
      %v4329 = vrot.slane %v4327, 5
      %v4330 = vor.u32 %v4326, %v4329
      %v4331 = vrot.slane %v4330, 4
      %v4333 = vshll.u32 %v4234, 16
      %v4335 = vrot.slane %v4333, 5
      %v4336 = vsel %vm916, %v4331, %v4335
      %v4337 = vshrl.u32 %v4234, 16
      %v4339 = vrot.slane %v4337, 4
      %v4340 = vor.u32 %v4339, %v4335
      %v4341 = vrot.slane %v4340, 4
      %v4343 = vshll.u32 %v4235, 16
      %v4345 = vrot.slane %v4343, 5
      %v4346 = vsel %vm916, %v4341, %v4345
      %v4348 = vshrl.u32 %v4236, 16
      %v4350 = vrot.slane %v4348, 4
      %v4351 = vshll.u32 %v4236, 16
      %v4353 = vrot.slane %v4351, 5
      %v4354 = vor.u32 %v4350, %v4353
      %v4355 = vrot.slane %v4354, 4
      %v4357 = vshll.u32 %v4237, 16
      %v4359 = vrot.slane %v4357, 5
      %v4360 = vsel %vm916, %v4355, %v4359
      %v4361 = vshrl.u32 %v4237, 16
      %v4363 = vrot.slane %v4361, 4
      %v4364 = vor.u32 %v4363, %v4359
      %v4365 = vrot.slane %v4364, 4
      %v4367 = vshll.u32 %v4238, 16
      %v4369 = vrot.slane %v4367, 5
      %v4370 = vsel %vm916, %v4365, %v4369
      %v4372 = vshrl.u32 %v4239, 16
      %v4374 = vrot.slane %v4372, 4
      %v4375 = vshll.u32 %v4239, 16
      %v4377 = vrot.slane %v4375, 5
      %v4378 = vor.u32 %v4374, %v4377
      %v4379 = vrot.slane %v4378, 4
      %v4381 = vshll.u32 %v4240, 16
      %v4383 = vrot.slane %v4381, 5
      %v4384 = vsel %vm916, %v4379, %v4383
      %v4385 = vshrl.u32 %v4240, 16
      %v4387 = vrot.slane %v4385, 4
      %v4388 = vor.u32 %v4387, %v4383
      %v4389 = vrot.slane %v4388, 4
      %v4391 = vshll.u32 %v4241, 16
      %v4393 = vrot.slane %v4391, 5
      %v4394 = vsel %vm916, %v4389, %v4393
      %v4396 = vshrl.u32 %v4242, 16
      %v4398 = vrot.slane %v4396, 4
      %v4399 = vshll.u32 %v4242, 16
      %v4401 = vrot.slane %v4399, 5
      %v4402 = vor.u32 %v4398, %v4401
      %v4403 = vrot.slane %v4402, 4
      %v4405 = vshll.u32 %v4243, 16
      %v4407 = vrot.slane %v4405, 5
      %v4408 = vsel %vm916, %v4403, %v4407
      %v4409 = vshrl.u32 %v4243, 16
      %v4411 = vrot.slane %v4409, 4
      %v4412 = vor.u32 %v4411, %v4407
      %v4413 = vrot.slane %v4412, 4
      %v4415 = vshll.u32 %v4244, 16
      %v4417 = vrot.slane %v4415, 5
      %v4418 = vsel %vm916, %v4413, %v4417
      %v4420 = vshrl.u32 %v4245, 16
      %v4422 = vrot.slane %v4420, 4
      %v4423 = vshll.u32 %v4245, 16
      %v4425 = vrot.slane %v4423, 5
      %v4426 = vor.u32 %v4422, %v4425
      %v4427 = vrot.slane %v4426, 4
      %v4429 = vshll.u32 %v4246, 16
      %v4431 = vrot.slane %v4429, 5
      %v4432 = vsel %vm916, %v4427, %v4431
      %v4433 = vshrl.u32 %v4246, 16
      %v4435 = vrot.slane %v4433, 4
      %v4436 = vor.u32 %v4435, %v4431
      %v4437 = vrot.slane %v4436, 4
      %v4439 = vshll.u32 %v4247, 16
      %v4441 = vrot.slane %v4439, 5
      %v4442 = vsel %vm916, %v4437, %v4441
      %v4444 = vshrl.u32 %v4248, 16
      %v4446 = vrot.slane %v4444, 4
      %v4447 = vshll.u32 %v4248, 16
      %v4449 = vrot.slane %v4447, 5
      %v4450 = vor.u32 %v4446, %v4449
      %v4451 = vrot.slane %v4450, 4
      %v4453 = vshll.u32 %v4249, 16
      %v4455 = vrot.slane %v4453, 5
      %v4456 = vsel %vm916, %v4451, %v4455
      %v4457 = vshrl.u32 %v4249, 16
      %v4459 = vrot.slane %v4457, 4
      %v4460 = vor.u32 %v4459, %v4455
      %v4461 = vrot.slane %v4460, 4
      %v4463 = vshll.u32 %v4250, 16
      %v4465 = vrot.slane %v4463, 5
      %v4466 = vsel %vm916, %v4461, %v4465
      %v4468 = vshrl.u32 %v4251, 16
      %v4470 = vrot.slane %v4468, 4
      %v4471 = vshll.u32 %v4251, 16
      %v4473 = vrot.slane %v4471, 5
      %v4474 = vor.u32 %v4470, %v4473
      %v4475 = vrot.slane %v4474, 4
      %v4477 = vshll.u32 %v4252, 16
      %v4479 = vrot.slane %v4477, 5
      %v4480 = vsel %vm916, %v4475, %v4479
      %v4481 = vshrl.u32 %v4252, 16
      %v4483 = vrot.slane %v4481, 4
      %v4484 = vor.u32 %v4483, %v4479
      %v4485 = vrot.slane %v4484, 4
      %v4487 = vshll.u32 %v4253, 16
      %v4489 = vrot.slane %v4487, 5
      %v4490 = vsel %vm916, %v4485, %v4489
      %v4492 = vshrl.u32 %v4254, 16
      %v4494 = vrot.slane %v4492, 4
      %v4495 = vshll.u32 %v4254, 16
      %v4497 = vrot.slane %v4495, 5
      %v4498 = vor.u32 %v4494, %v4497
      %v4499 = vrot.slane %v4498, 4
      %v4501 = vshll.u32 %v4255, 16
      %v4503 = vrot.slane %v4501, 5
      %v4504 = vsel %vm916, %v4499, %v4503
      %v4505 = vshrl.u32 %v4255, 16
      %v4507 = vrot.slane %v4505, 4
      %v4508 = vor.u32 %v4507, %v4503
      %v4509 = vrot.slane %v4508, 4
      %v4511 = vshll.u32 %v4256, 16
      %v4513 = vrot.slane %v4511, 5
      %v4514 = vsel %vm916, %v4509, %v4513
      %v4516 = vshrl.u32 %v4257, 16
      %v4518 = vrot.slane %v4516, 4
      %v4519 = vshll.u32 %v4257, 16
      %v4521 = vrot.slane %v4519, 5
      %v4522 = vor.u32 %v4518, %v4521
      %v4523 = vrot.slane %v4522, 4
      %v4525 = vshll.u32 %v4258, 16
      %v4527 = vrot.slane %v4525, 5
      %v4528 = vsel %vm916, %v4523, %v4527
      %v4529 = vshrl.u32 %v4258, 16
      %v4531 = vrot.slane %v4529, 4
      %v4532 = vor.u32 %v4531, %v4527
      %v4533 = vrot.slane %v4532, 4
      %v4535 = vshll.u32 %v4259, 16
      %v4537 = vrot.slane %v4535, 5
      %v4538 = vsel %vm916, %v4533, %v4537
      %v4540 = vshrl.u32 %v4260, 16
      %v4542 = vrot.slane %v4540, 4
      %v4543 = vshll.u32 %v4260, 16
      %v4545 = vrot.slane %v4543, 5
      %v4546 = vor.u32 %v4542, %v4545
      %v4547 = vrot.slane %v4546, 4
      %v4549 = vshll.u32 %v4261, 16
      %v4551 = vrot.slane %v4549, 5
      %v4552 = vsel %vm916, %v4547, %v4551
      %v4553 = vshrl.u32 %v4261, 16
      %v4555 = vrot.slane %v4553, 4
      %v4556 = vor.u32 %v4555, %v4551
      %v4557 = vrot.slane %v4556, 4
      %v4559 = vshll.u32 %v4262, 16
      %v4561 = vrot.slane %v4559, 5
      %v4562 = vsel %vm916, %v4557, %v4561
      %v4564 = vshrl.u32 %v4263, 16
      %v4566 = vrot.slane %v4564, 4
      %v4567 = vshll.u32 %v4263, 16
      %v4569 = vrot.slane %v4567, 5
      %v4570 = vor.u32 %v4566, %v4569
      %v4571 = vrot.slane %v4570, 4
      %v4573 = vshll.u32 %v4264, 16
      %v4575 = vrot.slane %v4573, 5
      %v4576 = vsel %vm916, %v4571, %v4575
      %v4577 = vshrl.u32 %v4264, 16
      %v4579 = vrot.slane %v4577, 4
      %v4580 = vor.u32 %v4579, %v4575
      %v4581 = vrot.slane %v4580, 4
      %v4583 = vshll.u32 %v4265, 16
      %v4585 = vrot.slane %v4583, 5
      %v4586 = vsel %vm916, %v4581, %v4585
      %v4588 = vshrl.u32 %v4266, 16
      %v4590 = vrot.slane %v4588, 4
      %v4591 = vshll.u32 %v4266, 16
      %v4593 = vrot.slane %v4591, 5
      %v4594 = vor.u32 %v4590, %v4593
      %v4595 = vrot.slane %v4594, 4
      %v4597 = vshll.u32 %v4267, 16
      %v4599 = vrot.slane %v4597, 5
      %v4600 = vsel %vm916, %v4595, %v4599
      %v4601 = vshrl.u32 %v4267, 16
      %v4603 = vrot.slane %v4601, 4
      %v4604 = vor.u32 %v4603, %v4599
      %v4605 = vrot.slane %v4604, 4
      %v4607 = vshll.u32 %v4268, 16
      %v4609 = vrot.slane %v4607, 5
      %v4610 = vsel %vm916, %v4605, %v4609
      %v4612 = vshrl.u32 %v4269, 16
      %v4614 = vrot.slane %v4612, 4
      %v4615 = vshll.u32 %v4269, 16
      %v4617 = vrot.slane %v4615, 5
      %v4618 = vor.u32 %v4614, %v4617
      %v4619 = vrot.slane %v4618, 4
      %v4621 = vshll.u32 %v4270, 16
      %v4623 = vrot.slane %v4621, 5
      %v4624 = vsel %vm916, %v4619, %v4623
      %v4625 = vshrl.u32 %v4270, 16
      %v4627 = vrot.slane %v4625, 4
      %v4628 = vor.u32 %v4627, %v4623
      %v4629 = vrot.slane %v4628, 4
      %v4631 = vshll.u32 %v4271, 16
      %v4633 = vrot.slane %v4631, 5
      %v4634 = vsel %vm916, %v4629, %v4633
      %v4636 = vshrl.u32 %v4272, 16
      %v4638 = vrot.slane %v4636, 4
      %v4639 = vshll.u32 %v4272, 16
      %v4641 = vrot.slane %v4639, 5
      %v4642 = vor.u32 %v4638, %v4641
      %v4643 = vrot.slane %v4642, 4
      %v4645 = vshll.u32 %v4273, 16
      %v4647 = vrot.slane %v4645, 5
      %v4648 = vsel %vm916, %v4643, %v4647
      %v4649 = vshrl.u32 %v4273, 16
      %v4651 = vrot.slane %v4649, 4
      %v4652 = vor.u32 %v4651, %v4647
      %v4653 = vrot.slane %v4652, 4
      %v4655 = vshll.u32 %v4274, 16
      %v4657 = vrot.slane %v4655, 5
      %v4658 = vsel %vm916, %v4653, %v4657
      %s4659 = scalar_lea.vmem %s4, 28
      %v4660 = vld [vmem:[%s4659] sm:$0xf]
      %v4661 = vunpack.c.l.b16 %v4288
      %v4662 = vunpack.c.l.b16 %v4298
      %v4663 = vunpack.c.l.b16 %v4312
      %v4664 = vunpack.c.l.b16 %v4322
      %v4665 = vunpack.c.l.b16 %v4336
      %v4666 = vunpack.c.l.b16 %v4346
      %v4667 = vunpack.c.l.b16 %v4360
      %v4668 = vunpack.c.l.b16 %v4370
      %v4669 = vunpack.c.l.b16 %v4384
      %v4670 = vunpack.c.l.b16 %v4394
      %v4671 = vunpack.c.l.b16 %v4408
      %v4672 = vunpack.c.l.b16 %v4418
      %v4673 = vunpack.c.l.b16 %v4432
      %v4674 = vunpack.c.l.b16 %v4442
      %v4675 = vunpack.c.l.b16 %v4456
      %v4676 = vunpack.c.l.b16 %v4466
      %v4677 = vunpack.c.l.b16 %v4480
      %v4678 = vunpack.c.l.b16 %v4490
      %v4679 = vunpack.c.l.b16 %v4504
      %v4680 = vunpack.c.l.b16 %v4514
      %v4681 = vunpack.c.l.b16 %v4528
      %v4682 = vunpack.c.l.b16 %v4538
      %v4683 = vunpack.c.l.b16 %v4552
      %v4684 = vunpack.c.l.b16 %v4562
      %v4685 = vunpack.c.l.b16 %v4576
      %v4686 = vunpack.c.l.b16 %v4586
      %v4687 = vunpack.c.l.b16 %v4600
      %v4688 = vunpack.c.l.b16 %v4610
      %v4689 = vunpack.c.l.b16 %v4624
      %v4690 = vunpack.c.l.b16 %v4634
      %v4691 = vunpack.c.l.b16 %v4648
      %v4692 = vunpack.c.l.b16 %v4658
      %v4693 = vpack.c.b16 %v4662, %v4661
      %v4694 = vpack.c.b16 %v4664, %v4663
      %v4695 = vpack.c.b16 %v4666, %v4665
      %v4696 = vpack.c.b16 %v4668, %v4667
      %v4697 = vpack.c.b16 %v4670, %v4669
      %v4698 = vpack.c.b16 %v4672, %v4671
      %v4699 = vpack.c.b16 %v4674, %v4673
      %v4700 = vpack.c.b16 %v4676, %v4675
      %v4701 = vpack.c.b16 %v4678, %v4677
      %v4702 = vpack.c.b16 %v4680, %v4679
      %v4703 = vpack.c.b16 %v4682, %v4681
      %v4704 = vpack.c.b16 %v4684, %v4683
      %v4705 = vpack.c.b16 %v4686, %v4685
      %v4706 = vpack.c.b16 %v4688, %v4687
      %v4707 = vpack.c.b16 %v4690, %v4689
      %v4708 = vpack.c.b16 %v4692, %v4691
      %v4710 = vsel %vm1351, %v4693, 0
      %v4713 = vsel %vm1351, %v4694, 0
      %v4716 = vsel %vm1351, %v4695, 0
      %v4719 = vsel %vm1351, %v4696, 0
      %v4722 = vsel %vm1351, %v4697, 0
      %v4725 = vsel %vm1351, %v4698, 0
      %v4728 = vsel %vm1351, %v4699, 0
      %v4731 = vsel %vm1351, %v4700, 0
      %v4734 = vsel %vm1351, %v4701, 0
      %v4737 = vsel %vm1351, %v4702, 0
      %v4740 = vsel %vm1351, %v4703, 0
      %v4743 = vsel %vm1351, %v4704, 0
      %v4746 = vsel %vm1351, %v4705, 0
      %v4749 = vsel %vm1351, %v4706, 0
      %v4752 = vsel %vm1351, %v4707, 0
      %v4755 = vsel %vm1351, %v4708, 0
      %v4758 = vsel %vm1400, %v4660, 0
      %4760 = vmatprep.subr.bf16.mxu0 0
      %4761 = vmatpush1.bf16.msra.mxu0 0
      %4762 = vmatprep.subr.bf16.mxu0 0
      %4763 = vmatpush1.bf16.msra.mxu0 0
      %4764 = vmatprep.subr.bf16.mxu0 0
      %4765 = vmatpush1.bf16.msra.mxu0 0
      %4766 = vmatprep.subr.bf16.mxu0 0
      %4767 = vmatpush1.bf16.msra.mxu0 0
      %4768 = vmatprep.subr.bf16.mxu0 0
      %4769 = vmatpush1.bf16.msra.mxu0 0
      %4770 = vmatprep.subr.bf16.mxu0 0
      %4771 = vmatpush1.bf16.msra.mxu0 0
      %4772 = vmatprep.subr.bf16.mxu0 0
      %4773 = vmatpush1.bf16.msra.mxu0 0
      %4774 = vmatprep.subr.bf16.mxu0 0
      %4775 = vmatpush1.bf16.msra.mxu0 %v4758
      %4776 = vmatprep.subr.bf16.mxu0 0
      %4777 = vmatpush2.bf16.msra.mxu0 0
      %4778 = vmatprep.subr.bf16.mxu0 0
      %4779 = vmatpush2.bf16.msra.mxu0 0
      %4780 = vmatprep.subr.bf16.mxu0 0
      %4781 = vmatpush2.bf16.msra.mxu0 0
      %4782 = vmatprep.subr.bf16.mxu0 0
      %4783 = vmatpush2.bf16.msra.mxu0 0
      %4784 = vmatprep.subr.bf16.mxu0 0
      %4785 = vmatpush2.bf16.msra.mxu0 0
      %4786 = vmatprep.subr.bf16.mxu0 0
      %4787 = vmatpush2.bf16.msra.mxu0 0
      %4788 = vmatprep.subr.bf16.mxu0 0
      %4789 = vmatpush2.bf16.msra.mxu0 0
      %4790 = vmatprep.subr.bf16.mxu0 0
      %4791 = vmatpush2.bf16.msra.mxu0 0
      %4792 = vmatprep.mubr.bf16.mxu0 0
      %4793 = vmatmul.mubr.bf16.gmra.mxu0 %v4710
      %v4794 = vpop.f32.mrf.mxu0
      %v4795 = vadd.f32 0.0, %v4794
      %v4796 = vpop.f32.mrf.mxu0
      %v4797 = vpop.f32.mrf.mxu0
      %v4798 = vadd.f32 0.0, %v4797
      %v4799 = vpop.f32.mrf.mxu0
      %4800 = vmatprep.mubr.bf16.mxu0 0
      %4801 = vmatmul.mubr.bf16.gmra.mxu0 %v4713
      %v4802 = vpop.f32.mrf.mxu0
      %v4803 = vadd.f32 0.0, %v4802
      %v4804 = vpop.f32.mrf.mxu0
      %v4805 = vpop.f32.mrf.mxu0
      %v4806 = vadd.f32 0.0, %v4805
      %v4807 = vpop.f32.mrf.mxu0
      %4808 = vmatprep.mubr.bf16.mxu0 0
      %4809 = vmatmul.mubr.bf16.gmra.mxu0 %v4716
      %v4810 = vpop.f32.mrf.mxu0
      %v4811 = vadd.f32 0.0, %v4810
      %v4812 = vpop.f32.mrf.mxu0
      %v4813 = vpop.f32.mrf.mxu0
      %v4814 = vadd.f32 0.0, %v4813
      %v4815 = vpop.f32.mrf.mxu0
      %4816 = vmatprep.mubr.bf16.mxu0 0
      %4817 = vmatmul.mubr.bf16.gmra.mxu0 %v4719
      %v4818 = vpop.f32.mrf.mxu0
      %v4819 = vadd.f32 0.0, %v4818
      %v4820 = vpop.f32.mrf.mxu0
      %v4821 = vpop.f32.mrf.mxu0
      %v4822 = vadd.f32 0.0, %v4821
      %v4823 = vpop.f32.mrf.mxu0
      %4824 = vmatprep.mubr.bf16.mxu0 0
      %4825 = vmatmul.mubr.bf16.gmra.mxu0 %v4722
      %v4826 = vpop.f32.mrf.mxu0
      %v4827 = vadd.f32 0.0, %v4826
      %v4828 = vpop.f32.mrf.mxu0
      %v4829 = vpop.f32.mrf.mxu0
      %v4830 = vadd.f32 0.0, %v4829
      %v4831 = vpop.f32.mrf.mxu0
      %4832 = vmatprep.mubr.bf16.mxu0 0
      %4833 = vmatmul.mubr.bf16.gmra.mxu0 %v4725
      %v4834 = vpop.f32.mrf.mxu0
      %v4835 = vadd.f32 0.0, %v4834
      %v4836 = vpop.f32.mrf.mxu0
      %v4837 = vpop.f32.mrf.mxu0
      %v4838 = vadd.f32 0.0, %v4837
      %v4839 = vpop.f32.mrf.mxu0
      %4840 = vmatprep.mubr.bf16.mxu0 0
      %4841 = vmatmul.mubr.bf16.gmra.mxu0 %v4728
      %v4842 = vpop.f32.mrf.mxu0
      %v4843 = vadd.f32 0.0, %v4842
      %v4844 = vpop.f32.mrf.mxu0
      %v4845 = vpop.f32.mrf.mxu0
      %v4846 = vadd.f32 0.0, %v4845
      %v4847 = vpop.f32.mrf.mxu0
      %4848 = vmatprep.mubr.bf16.mxu0 0
      %4849 = vmatmul.mubr.bf16.gmra.mxu0 %v4731
      %v4850 = vpop.f32.mrf.mxu0
      %v4851 = vadd.f32 0.0, %v4850
      %v4852 = vpop.f32.mrf.mxu0
      %v4853 = vpop.f32.mrf.mxu0
      %v4854 = vadd.f32 0.0, %v4853
      %v4855 = vpop.f32.mrf.mxu0
      %4856 = vmatprep.mubr.bf16.mxu0 0
      %4857 = vmatmul.mubr.bf16.gmra.mxu0 %v4734
      %v4858 = vpop.f32.mrf.mxu0
      %v4859 = vadd.f32 0.0, %v4858
      %v4860 = vpop.f32.mrf.mxu0
      %v4861 = vpop.f32.mrf.mxu0
      %v4862 = vadd.f32 0.0, %v4861
      %v4863 = vpop.f32.mrf.mxu0
      %4864 = vmatprep.mubr.bf16.mxu0 0
      %4865 = vmatmul.mubr.bf16.gmra.mxu0 %v4737
      %v4866 = vpop.f32.mrf.mxu0
      %v4867 = vadd.f32 0.0, %v4866
      %v4868 = vpop.f32.mrf.mxu0
      %v4869 = vpop.f32.mrf.mxu0
      %v4870 = vadd.f32 0.0, %v4869
      %v4871 = vpop.f32.mrf.mxu0
      %4872 = vmatprep.mubr.bf16.mxu0 0
      %4873 = vmatmul.mubr.bf16.gmra.mxu0 %v4740
      %v4874 = vpop.f32.mrf.mxu0
      %v4875 = vadd.f32 0.0, %v4874
      %v4876 = vpop.f32.mrf.mxu0
      %v4877 = vpop.f32.mrf.mxu0
      %v4878 = vadd.f32 0.0, %v4877
      %v4879 = vpop.f32.mrf.mxu0
      %4880 = vmatprep.mubr.bf16.mxu0 0
      %4881 = vmatmul.mubr.bf16.gmra.mxu0 %v4743
      %v4882 = vpop.f32.mrf.mxu0
      %v4883 = vadd.f32 0.0, %v4882
      %v4884 = vpop.f32.mrf.mxu0
      %v4885 = vpop.f32.mrf.mxu0
      %v4886 = vadd.f32 0.0, %v4885
      %v4887 = vpop.f32.mrf.mxu0
      %4888 = vmatprep.mubr.bf16.mxu0 0
      %4889 = vmatmul.mubr.bf16.gmra.mxu0 %v4746
      %v4890 = vpop.f32.mrf.mxu0
      %v4891 = vadd.f32 0.0, %v4890
      %v4892 = vpop.f32.mrf.mxu0
      %v4893 = vpop.f32.mrf.mxu0
      %v4894 = vadd.f32 0.0, %v4893
      %v4895 = vpop.f32.mrf.mxu0
      %4896 = vmatprep.mubr.bf16.mxu0 0
      %4897 = vmatmul.mubr.bf16.gmra.mxu0 %v4749
      %v4898 = vpop.f32.mrf.mxu0
      %v4899 = vadd.f32 0.0, %v4898
      %v4900 = vpop.f32.mrf.mxu0
      %v4901 = vpop.f32.mrf.mxu0
      %v4902 = vadd.f32 0.0, %v4901
      %v4903 = vpop.f32.mrf.mxu0
      %4904 = vmatprep.mubr.bf16.mxu0 0
      %4905 = vmatmul.mubr.bf16.gmra.mxu0 %v4752
      %v4906 = vpop.f32.mrf.mxu0
      %v4907 = vadd.f32 0.0, %v4906
      %v4908 = vpop.f32.mrf.mxu0
      %v4909 = vpop.f32.mrf.mxu0
      %v4910 = vadd.f32 0.0, %v4909
      %v4911 = vpop.f32.mrf.mxu0
      %4912 = vmatprep.mubr.bf16.mxu0 0
      %4913 = vmatmul.mubr.bf16.gmra.mxu0 %v4755
      %v4914 = vpop.f32.mrf.mxu0
      %v4915 = vadd.f32 0.0, %v4914
      %v4916 = vpop.f32.mrf.mxu0
      %v4917 = vpop.f32.mrf.mxu0
      %v4918 = vadd.f32 0.0, %v4917
      %v4919 = vpop.f32.mrf.mxu0
      %4920 = vdwg.mxu0
      %v4921 = vadd.f32 %v4195, %v4795
      %v4922 = vadd.f32 %v4196, %v4798
      %v4923 = vadd.f32 %v4197, %v4803
      %v4924 = vadd.f32 %v4198, %v4806
      %v4925 = vadd.f32 %v4199, %v4811
      %v4926 = vadd.f32 %v4200, %v4814
      %v4927 = vadd.f32 %v4201, %v4819
      %v4928 = vadd.f32 %v4202, %v4822
      %v4929 = vadd.f32 %v4203, %v4827
      %v4930 = vadd.f32 %v4204, %v4830
      %v4931 = vadd.f32 %v4205, %v4835
      %v4932 = vadd.f32 %v4206, %v4838
      %v4933 = vadd.f32 %v4207, %v4843
      %v4934 = vadd.f32 %v4208, %v4846
      %v4935 = vadd.f32 %v4209, %v4851
      %v4936 = vadd.f32 %v4210, %v4854
      %v4937 = vadd.f32 %v4211, %v4859
      %v4938 = vadd.f32 %v4212, %v4862
      %v4939 = vadd.f32 %v4213, %v4867
      %v4940 = vadd.f32 %v4214, %v4870
      %v4941 = vadd.f32 %v4215, %v4875
      %v4942 = vadd.f32 %v4216, %v4878
      %v4943 = vadd.f32 %v4217, %v4883
      %v4944 = vadd.f32 %v4218, %v4886
      %v4945 = vadd.f32 %v4219, %v4891
      %v4946 = vadd.f32 %v4220, %v4894
      %v4947 = vadd.f32 %v4221, %v4899
      %v4948 = vadd.f32 %v4222, %v4902
      %v4949 = vadd.f32 %v4223, %v4907
      %v4950 = vadd.f32 %v4224, %v4910
      %v4951 = vadd.f32 %v4225, %v4915
      %v4952 = vadd.f32 %v4226, %v4918
      %v4953 = vld [vmem:[%s3868] sm:$0xe]
      %v4954 = vld [vmem:[%s3868 + $0xc] sm:$0xe]
      %v4955 = vld [vmem:[%s3868 + $0x18] sm:$0xe]
      %v4956 = vld [vmem:[%s3868 + $0x24] sm:$0xe]
      %v4957 = vld [vmem:[%s3868 + $0x30] sm:$0xe]
      %v4958 = vld [vmem:[%s3868 + $0x3c] sm:$0xe]
      %v4959 = vld [vmem:[%s3868 + $0x48] sm:$0xe]
      %v4960 = vld [vmem:[%s3868 + $0x54] sm:$0xe]
      %v4961 = vld [vmem:[%s3868 + $0x60] sm:$0xe]
      %v4962 = vld [vmem:[%s3868 + $0x6c] sm:$0xe]
      %v4963 = vld [vmem:[%s3868 + $0x78] sm:$0xe]
      %v4964 = vld [vmem:[%s3868 + $0x84] sm:$0xe]
      %v4965 = vld [vmem:[%s3868 + $0x90] sm:$0xe]
      %v4966 = vld [vmem:[%s3868 + $0x9c] sm:$0xe]
      %v4967 = vld [vmem:[%s3868 + $0xa8] sm:$0xe]
      %v4968 = vld [vmem:[%s3868 + $0xb4] sm:$0xe]
      %v5017 = vrot.slane %v4953, 5
      %v5018 = vrot.slane %v5017, 4
      %v5019 = vrot.slane %v4228, 5
      %v5020 = vsel %vm1907, %v5018, %v5019
      %v5021 = vrot.slane %v5019, 4
      %v5022 = vrot.slane %v4229, 5
      %v5023 = vsel %vm1907, %v5021, %v5022
      %v5024 = vrot.slane %v4954, 5
      %v5025 = vrot.slane %v5024, 4
      %v5026 = vrot.slane %v4231, 5
      %v5027 = vsel %vm1907, %v5025, %v5026
      %v5028 = vrot.slane %v5026, 4
      %v5029 = vrot.slane %v4232, 5
      %v5030 = vsel %vm1907, %v5028, %v5029
      %v5031 = vrot.slane %v4955, 5
      %v5032 = vrot.slane %v5031, 4
      %v5033 = vrot.slane %v4234, 5
      %v5034 = vsel %vm1907, %v5032, %v5033
      %v5035 = vrot.slane %v5033, 4
      %v5036 = vrot.slane %v4235, 5
      %v5037 = vsel %vm1907, %v5035, %v5036
      %v5038 = vrot.slane %v4956, 5
      %v5039 = vrot.slane %v5038, 4
      %v5040 = vrot.slane %v4237, 5
      %v5041 = vsel %vm1907, %v5039, %v5040
      %v5042 = vrot.slane %v5040, 4
      %v5043 = vrot.slane %v4238, 5
      %v5044 = vsel %vm1907, %v5042, %v5043
      %v5045 = vrot.slane %v4957, 5
      %v5046 = vrot.slane %v5045, 4
      %v5047 = vrot.slane %v4240, 5
      %v5048 = vsel %vm1907, %v5046, %v5047
      %v5049 = vrot.slane %v5047, 4
      %v5050 = vrot.slane %v4241, 5
      %v5051 = vsel %vm1907, %v5049, %v5050
      %v5052 = vrot.slane %v4958, 5
      %v5053 = vrot.slane %v5052, 4
      %v5054 = vrot.slane %v4243, 5
      %v5055 = vsel %vm1907, %v5053, %v5054
      %v5056 = vrot.slane %v5054, 4
      %v5057 = vrot.slane %v4244, 5
      %v5058 = vsel %vm1907, %v5056, %v5057
      %v5059 = vrot.slane %v4959, 5
      %v5060 = vrot.slane %v5059, 4
      %v5061 = vrot.slane %v4246, 5
      %v5062 = vsel %vm1907, %v5060, %v5061
      %v5063 = vrot.slane %v5061, 4
      %v5064 = vrot.slane %v4247, 5
      %v5065 = vsel %vm1907, %v5063, %v5064
      %v5066 = vrot.slane %v4960, 5
      %v5067 = vrot.slane %v5066, 4
      %v5068 = vrot.slane %v4249, 5
      %v5069 = vsel %vm1907, %v5067, %v5068
      %v5070 = vrot.slane %v5068, 4
      %v5071 = vrot.slane %v4250, 5
      %v5072 = vsel %vm1907, %v5070, %v5071
      %v5073 = vrot.slane %v4961, 5
      %v5074 = vrot.slane %v5073, 4
      %v5075 = vrot.slane %v4252, 5
      %v5076 = vsel %vm1907, %v5074, %v5075
      %v5077 = vrot.slane %v5075, 4
      %v5078 = vrot.slane %v4253, 5
      %v5079 = vsel %vm1907, %v5077, %v5078
      %v5080 = vrot.slane %v4962, 5
      %v5081 = vrot.slane %v5080, 4
      %v5082 = vrot.slane %v4255, 5
      %v5083 = vsel %vm1907, %v5081, %v5082
      %v5084 = vrot.slane %v5082, 4
      %v5085 = vrot.slane %v4256, 5
      %v5086 = vsel %vm1907, %v5084, %v5085
      %v5087 = vrot.slane %v4963, 5
      %v5088 = vrot.slane %v5087, 4
      %v5089 = vrot.slane %v4258, 5
      %v5090 = vsel %vm1907, %v5088, %v5089
      %v5091 = vrot.slane %v5089, 4
      %v5092 = vrot.slane %v4259, 5
      %v5093 = vsel %vm1907, %v5091, %v5092
      %v5094 = vrot.slane %v4964, 5
      %v5095 = vrot.slane %v5094, 4
      %v5096 = vrot.slane %v4261, 5
      %v5097 = vsel %vm1907, %v5095, %v5096
      %v5098 = vrot.slane %v5096, 4
      %v5099 = vrot.slane %v4262, 5
      %v5100 = vsel %vm1907, %v5098, %v5099
      %v5101 = vrot.slane %v4965, 5
      %v5102 = vrot.slane %v5101, 4
      %v5103 = vrot.slane %v4264, 5
      %v5104 = vsel %vm1907, %v5102, %v5103
      %v5105 = vrot.slane %v5103, 4
      %v5106 = vrot.slane %v4265, 5
      %v5107 = vsel %vm1907, %v5105, %v5106
      %v5108 = vrot.slane %v4966, 5
      %v5109 = vrot.slane %v5108, 4
      %v5110 = vrot.slane %v4267, 5
      %v5111 = vsel %vm1907, %v5109, %v5110
      %v5112 = vrot.slane %v5110, 4
      %v5113 = vrot.slane %v4268, 5
      %v5114 = vsel %vm1907, %v5112, %v5113
      %v5115 = vrot.slane %v4967, 5
      %v5116 = vrot.slane %v5115, 4
      %v5117 = vrot.slane %v4270, 5
      %v5118 = vsel %vm1907, %v5116, %v5117
      %v5119 = vrot.slane %v5117, 4
      %v5120 = vrot.slane %v4271, 5
      %v5121 = vsel %vm1907, %v5119, %v5120
      %v5122 = vrot.slane %v4968, 5
      %v5123 = vrot.slane %v5122, 4
      %v5124 = vrot.slane %v4273, 5
      %v5125 = vsel %vm1907, %v5123, %v5124
      %v5126 = vrot.slane %v5124, 4
      %v5127 = vrot.slane %v4274, 5
      %v5128 = vsel %vm1907, %v5126, %v5127
      %s5129 = scalar_lea.vmem %s4, 32
      %v5130 = vld [vmem:[%s5129] sm:$0xf]
      %v5131 = vunpack.c.l.b16 %v5020
      %v5132 = vunpack.c.l.b16 %v5023
      %v5133 = vunpack.c.l.b16 %v5027
      %v5134 = vunpack.c.l.b16 %v5030
      %v5135 = vunpack.c.l.b16 %v5034
      %v5136 = vunpack.c.l.b16 %v5037
      %v5137 = vunpack.c.l.b16 %v5041
      %v5138 = vunpack.c.l.b16 %v5044
      %v5139 = vunpack.c.l.b16 %v5048
      %v5140 = vunpack.c.l.b16 %v5051
      %v5141 = vunpack.c.l.b16 %v5055
      %v5142 = vunpack.c.l.b16 %v5058
      %v5143 = vunpack.c.l.b16 %v5062
      %v5144 = vunpack.c.l.b16 %v5065
      %v5145 = vunpack.c.l.b16 %v5069
      %v5146 = vunpack.c.l.b16 %v5072
      %v5147 = vunpack.c.l.b16 %v5076
      %v5148 = vunpack.c.l.b16 %v5079
      %v5149 = vunpack.c.l.b16 %v5083
      %v5150 = vunpack.c.l.b16 %v5086
      %v5151 = vunpack.c.l.b16 %v5090
      %v5152 = vunpack.c.l.b16 %v5093
      %v5153 = vunpack.c.l.b16 %v5097
      %v5154 = vunpack.c.l.b16 %v5100
      %v5155 = vunpack.c.l.b16 %v5104
      %v5156 = vunpack.c.l.b16 %v5107
      %v5157 = vunpack.c.l.b16 %v5111
      %v5158 = vunpack.c.l.b16 %v5114
      %v5159 = vunpack.c.l.b16 %v5118
      %v5160 = vunpack.c.l.b16 %v5121
      %v5161 = vunpack.c.l.b16 %v5125
      %v5162 = vunpack.c.l.b16 %v5128
      %v5163 = vpack.c.b16 %v5132, %v5131
      %v5164 = vpack.c.b16 %v5134, %v5133
      %v5165 = vpack.c.b16 %v5136, %v5135
      %v5166 = vpack.c.b16 %v5138, %v5137
      %v5167 = vpack.c.b16 %v5140, %v5139
      %v5168 = vpack.c.b16 %v5142, %v5141
      %v5169 = vpack.c.b16 %v5144, %v5143
      %v5170 = vpack.c.b16 %v5146, %v5145
      %v5171 = vpack.c.b16 %v5148, %v5147
      %v5172 = vpack.c.b16 %v5150, %v5149
      %v5173 = vpack.c.b16 %v5152, %v5151
      %v5174 = vpack.c.b16 %v5154, %v5153
      %v5175 = vpack.c.b16 %v5156, %v5155
      %v5176 = vpack.c.b16 %v5158, %v5157
      %v5177 = vpack.c.b16 %v5160, %v5159
      %v5178 = vpack.c.b16 %v5162, %v5161
      %v5180 = vsel %vm1351, %v5163, 0
      %v5183 = vsel %vm1351, %v5164, 0
      %v5186 = vsel %vm1351, %v5165, 0
      %v5189 = vsel %vm1351, %v5166, 0
      %v5192 = vsel %vm1351, %v5167, 0
      %v5195 = vsel %vm1351, %v5168, 0
      %v5198 = vsel %vm1351, %v5169, 0
      %v5201 = vsel %vm1351, %v5170, 0
      %v5204 = vsel %vm1351, %v5171, 0
      %v5207 = vsel %vm1351, %v5172, 0
      %v5210 = vsel %vm1351, %v5173, 0
      %v5213 = vsel %vm1351, %v5174, 0
      %v5216 = vsel %vm1351, %v5175, 0
      %v5219 = vsel %vm1351, %v5176, 0
      %v5222 = vsel %vm1351, %v5177, 0
      %v5225 = vsel %vm1351, %v5178, 0
      %v5228 = vsel %vm1400, %v5130, 0
      %5230 = vmatprep.subr.bf16.mxu0 0
      %5231 = vmatpush1.bf16.msra.mxu0 0
      %5232 = vmatprep.subr.bf16.mxu0 0
      %5233 = vmatpush1.bf16.msra.mxu0 0
      %5234 = vmatprep.subr.bf16.mxu0 0
      %5235 = vmatpush1.bf16.msra.mxu0 0
      %5236 = vmatprep.subr.bf16.mxu0 0
      %5237 = vmatpush1.bf16.msra.mxu0 0
      %5238 = vmatprep.subr.bf16.mxu0 0
      %5239 = vmatpush1.bf16.msra.mxu0 0
      %5240 = vmatprep.subr.bf16.mxu0 0
      %5241 = vmatpush1.bf16.msra.mxu0 0
      %5242 = vmatprep.subr.bf16.mxu0 0
      %5243 = vmatpush1.bf16.msra.mxu0 0
      %5244 = vmatprep.subr.bf16.mxu0 0
      %5245 = vmatpush1.bf16.msra.mxu0 %v5228
      %5246 = vmatprep.subr.bf16.mxu0 0
      %5247 = vmatpush2.bf16.msra.mxu0 0
      %5248 = vmatprep.subr.bf16.mxu0 0
      %5249 = vmatpush2.bf16.msra.mxu0 0
      %5250 = vmatprep.subr.bf16.mxu0 0
      %5251 = vmatpush2.bf16.msra.mxu0 0
      %5252 = vmatprep.subr.bf16.mxu0 0
      %5253 = vmatpush2.bf16.msra.mxu0 0
      %5254 = vmatprep.subr.bf16.mxu0 0
      %5255 = vmatpush2.bf16.msra.mxu0 0
      %5256 = vmatprep.subr.bf16.mxu0 0
      %5257 = vmatpush2.bf16.msra.mxu0 0
      %5258 = vmatprep.subr.bf16.mxu0 0
      %5259 = vmatpush2.bf16.msra.mxu0 0
      %5260 = vmatprep.subr.bf16.mxu0 0
      %5261 = vmatpush2.bf16.msra.mxu0 0
      %5262 = vmatprep.mubr.bf16.mxu0 0
      %5263 = vmatmul.mubr.bf16.gmra.mxu0 %v5180
      %v5264 = vpop.f32.mrf.mxu0
      %v5265 = vadd.f32 0.0, %v5264
      %v5266 = vpop.f32.mrf.mxu0
      %v5267 = vpop.f32.mrf.mxu0
      %v5268 = vadd.f32 0.0, %v5267
      %v5269 = vpop.f32.mrf.mxu0
      %5270 = vmatprep.mubr.bf16.mxu0 0
      %5271 = vmatmul.mubr.bf16.gmra.mxu0 %v5183
      %v5272 = vpop.f32.mrf.mxu0
      %v5273 = vadd.f32 0.0, %v5272
      %v5274 = vpop.f32.mrf.mxu0
      %v5275 = vpop.f32.mrf.mxu0
      %v5276 = vadd.f32 0.0, %v5275
      %v5277 = vpop.f32.mrf.mxu0
      %5278 = vmatprep.mubr.bf16.mxu0 0
      %5279 = vmatmul.mubr.bf16.gmra.mxu0 %v5186
      %v5280 = vpop.f32.mrf.mxu0
      %v5281 = vadd.f32 0.0, %v5280
      %v5282 = vpop.f32.mrf.mxu0
      %v5283 = vpop.f32.mrf.mxu0
      %v5284 = vadd.f32 0.0, %v5283
      %v5285 = vpop.f32.mrf.mxu0
      %5286 = vmatprep.mubr.bf16.mxu0 0
      %5287 = vmatmul.mubr.bf16.gmra.mxu0 %v5189
      %v5288 = vpop.f32.mrf.mxu0
      %v5289 = vadd.f32 0.0, %v5288
      %v5290 = vpop.f32.mrf.mxu0
      %v5291 = vpop.f32.mrf.mxu0
      %v5292 = vadd.f32 0.0, %v5291
      %v5293 = vpop.f32.mrf.mxu0
      %5294 = vmatprep.mubr.bf16.mxu0 0
      %5295 = vmatmul.mubr.bf16.gmra.mxu0 %v5192
      %v5296 = vpop.f32.mrf.mxu0
      %v5297 = vadd.f32 0.0, %v5296
      %v5298 = vpop.f32.mrf.mxu0
      %v5299 = vpop.f32.mrf.mxu0
      %v5300 = vadd.f32 0.0, %v5299
      %v5301 = vpop.f32.mrf.mxu0
      %5302 = vmatprep.mubr.bf16.mxu0 0
      %5303 = vmatmul.mubr.bf16.gmra.mxu0 %v5195
      %v5304 = vpop.f32.mrf.mxu0
      %v5305 = vadd.f32 0.0, %v5304
      %v5306 = vpop.f32.mrf.mxu0
      %v5307 = vpop.f32.mrf.mxu0
      %v5308 = vadd.f32 0.0, %v5307
      %v5309 = vpop.f32.mrf.mxu0
      %5310 = vmatprep.mubr.bf16.mxu0 0
      %5311 = vmatmul.mubr.bf16.gmra.mxu0 %v5198
      %v5312 = vpop.f32.mrf.mxu0
      %v5313 = vadd.f32 0.0, %v5312
      %v5314 = vpop.f32.mrf.mxu0
      %v5315 = vpop.f32.mrf.mxu0
      %v5316 = vadd.f32 0.0, %v5315
      %v5317 = vpop.f32.mrf.mxu0
      %5318 = vmatprep.mubr.bf16.mxu0 0
      %5319 = vmatmul.mubr.bf16.gmra.mxu0 %v5201
      %v5320 = vpop.f32.mrf.mxu0
      %v5321 = vadd.f32 0.0, %v5320
      %v5322 = vpop.f32.mrf.mxu0
      %v5323 = vpop.f32.mrf.mxu0
      %v5324 = vadd.f32 0.0, %v5323
      %v5325 = vpop.f32.mrf.mxu0
      %5326 = vmatprep.mubr.bf16.mxu0 0
      %5327 = vmatmul.mubr.bf16.gmra.mxu0 %v5204
      %v5328 = vpop.f32.mrf.mxu0
      %v5329 = vadd.f32 0.0, %v5328
      %v5330 = vpop.f32.mrf.mxu0
      %v5331 = vpop.f32.mrf.mxu0
      %v5332 = vadd.f32 0.0, %v5331
      %v5333 = vpop.f32.mrf.mxu0
      %5334 = vmatprep.mubr.bf16.mxu0 0
      %5335 = vmatmul.mubr.bf16.gmra.mxu0 %v5207
      %v5336 = vpop.f32.mrf.mxu0
      %v5337 = vadd.f32 0.0, %v5336
      %v5338 = vpop.f32.mrf.mxu0
      %v5339 = vpop.f32.mrf.mxu0
      %v5340 = vadd.f32 0.0, %v5339
      %v5341 = vpop.f32.mrf.mxu0
      %5342 = vmatprep.mubr.bf16.mxu0 0
      %5343 = vmatmul.mubr.bf16.gmra.mxu0 %v5210
      %v5344 = vpop.f32.mrf.mxu0
      %v5345 = vadd.f32 0.0, %v5344
      %v5346 = vpop.f32.mrf.mxu0
      %v5347 = vpop.f32.mrf.mxu0
      %v5348 = vadd.f32 0.0, %v5347
      %v5349 = vpop.f32.mrf.mxu0
      %5350 = vmatprep.mubr.bf16.mxu0 0
      %5351 = vmatmul.mubr.bf16.gmra.mxu0 %v5213
      %v5352 = vpop.f32.mrf.mxu0
      %v5353 = vadd.f32 0.0, %v5352
      %v5354 = vpop.f32.mrf.mxu0
      %v5355 = vpop.f32.mrf.mxu0
      %v5356 = vadd.f32 0.0, %v5355
      %v5357 = vpop.f32.mrf.mxu0
      %5358 = vmatprep.mubr.bf16.mxu0 0
      %5359 = vmatmul.mubr.bf16.gmra.mxu0 %v5216
      %v5360 = vpop.f32.mrf.mxu0
      %v5361 = vadd.f32 0.0, %v5360
      %v5362 = vpop.f32.mrf.mxu0
      %v5363 = vpop.f32.mrf.mxu0
      %v5364 = vadd.f32 0.0, %v5363
      %v5365 = vpop.f32.mrf.mxu0
      %5366 = vmatprep.mubr.bf16.mxu0 0
      %5367 = vmatmul.mubr.bf16.gmra.mxu0 %v5219
      %v5368 = vpop.f32.mrf.mxu0
      %v5369 = vadd.f32 0.0, %v5368
      %v5370 = vpop.f32.mrf.mxu0
      %v5371 = vpop.f32.mrf.mxu0
      %v5372 = vadd.f32 0.0, %v5371
      %v5373 = vpop.f32.mrf.mxu0
      %5374 = vmatprep.mubr.bf16.mxu0 0
      %5375 = vmatmul.mubr.bf16.gmra.mxu0 %v5222
      %v5376 = vpop.f32.mrf.mxu0
      %v5377 = vadd.f32 0.0, %v5376
      %v5378 = vpop.f32.mrf.mxu0
      %v5379 = vpop.f32.mrf.mxu0
      %v5380 = vadd.f32 0.0, %v5379
      %v5381 = vpop.f32.mrf.mxu0
      %5382 = vmatprep.mubr.bf16.mxu0 0
      %5383 = vmatmul.mubr.bf16.gmra.mxu0 %v5225
      %v5384 = vpop.f32.mrf.mxu0
      %v5385 = vadd.f32 0.0, %v5384
      %v5386 = vpop.f32.mrf.mxu0
      %v5387 = vpop.f32.mrf.mxu0
      %v5388 = vadd.f32 0.0, %v5387
      %v5389 = vpop.f32.mrf.mxu0
      %5390 = vdwg.mxu0
      %v5391 = vadd.f32 %v4921, %v5265
      %v5392 = vadd.f32 %v4922, %v5268
      %v5393 = vadd.f32 %v4923, %v5273
      %v5394 = vadd.f32 %v4924, %v5276
      %v5395 = vadd.f32 %v4925, %v5281
      %v5396 = vadd.f32 %v4926, %v5284
      %v5397 = vadd.f32 %v4927, %v5289
      %v5398 = vadd.f32 %v4928, %v5292
      %v5399 = vadd.f32 %v4929, %v5297
      %v5400 = vadd.f32 %v4930, %v5300
      %v5401 = vadd.f32 %v4931, %v5305
      %v5402 = vadd.f32 %v4932, %v5308
      %v5403 = vadd.f32 %v4933, %v5313
      %v5404 = vadd.f32 %v4934, %v5316
      %v5405 = vadd.f32 %v4935, %v5321
      %v5406 = vadd.f32 %v4936, %v5324
      %v5407 = vadd.f32 %v4937, %v5329
      %v5408 = vadd.f32 %v4938, %v5332
      %v5409 = vadd.f32 %v4939, %v5337
      %v5410 = vadd.f32 %v4940, %v5340
      %v5411 = vadd.f32 %v4941, %v5345
      %v5412 = vadd.f32 %v4942, %v5348
      %v5413 = vadd.f32 %v4943, %v5353
      %v5414 = vadd.f32 %v4944, %v5356
      %v5415 = vadd.f32 %v4945, %v5361
      %v5416 = vadd.f32 %v4946, %v5364
      %v5417 = vadd.f32 %v4947, %v5369
      %v5418 = vadd.f32 %v4948, %v5372
      %v5419 = vadd.f32 %v4949, %v5377
      %v5420 = vadd.f32 %v4950, %v5380
      %v5421 = vadd.f32 %v4951, %v5385
      %v5422 = vadd.f32 %v4952, %v5388
      %p5423 = scmp.eq.s32.totalorder %s18, 0
      // Predicated region
      $region41: #{double_conv_block_forward.4} parent=39 // pred_check
        %p5424 = pneg %p5423
      $region42: #{double_conv_block_forward.4} parent=39 // pred_check_branch
        %5426 = sbr.rel (%p5424) target = $region44
      $region43: #{double_conv_block_forward.4} parent=39 // pred_region
        %vm5427 = vcmask 58368
        %5428 = vst.msk [vmem:[%s6] sm:$0x3] %vm5427, 0.0
      $region44: #{double_conv_block_forward.4} parent=39 // pred_fallthru
        _
      %v5429 = vsel %vm1351, %v5391, 0.0
      %v5430 = vsel %vm1351, %v5392, 0.0
      %v5431 = vadd.f32 %v5429, %v5430
      %v5432 = vsel %vm1351, %v5393, 0.0
      %v5433 = vadd.f32 %v5431, %v5432
      %v5434 = vsel %vm1351, %v5394, 0.0
      %v5435 = vadd.f32 %v5433, %v5434
      %v5436 = vsel %vm1351, %v5395, 0.0
      %v5437 = vadd.f32 %v5435, %v5436
      %v5438 = vsel %vm1351, %v5396, 0.0
      %v5439 = vadd.f32 %v5437, %v5438
      %v5440 = vsel %vm1351, %v5397, 0.0
      %v5441 = vadd.f32 %v5439, %v5440
      %v5442 = vsel %vm1351, %v5398, 0.0
      %v5443 = vadd.f32 %v5441, %v5442
      %v5444 = vsel %vm1351, %v5399, 0.0
      %v5445 = vadd.f32 %v5443, %v5444
      %v5446 = vsel %vm1351, %v5400, 0.0
      %v5447 = vadd.f32 %v5445, %v5446
      %v5448 = vsel %vm1351, %v5401, 0.0
      %v5449 = vadd.f32 %v5447, %v5448
      %v5450 = vsel %vm1351, %v5402, 0.0
      %v5451 = vadd.f32 %v5449, %v5450
      %v5452 = vsel %vm1351, %v5403, 0.0
      %v5453 = vadd.f32 %v5451, %v5452
      %v5454 = vsel %vm1351, %v5404, 0.0
      %v5455 = vadd.f32 %v5453, %v5454
      %v5456 = vsel %vm1351, %v5405, 0.0
      %v5457 = vadd.f32 %v5455, %v5456
      %v5458 = vsel %vm1351, %v5406, 0.0
      %v5459 = vadd.f32 %v5457, %v5458
      %v5460 = vsel %vm1351, %v5407, 0.0
      %v5461 = vadd.f32 %v5459, %v5460
      %v5462 = vsel %vm1351, %v5408, 0.0
      %v5463 = vadd.f32 %v5461, %v5462
      %v5464 = vsel %vm1351, %v5409, 0.0
      %v5465 = vadd.f32 %v5463, %v5464
      %v5466 = vsel %vm1351, %v5410, 0.0
      %v5467 = vadd.f32 %v5465, %v5466
      %v5468 = vsel %vm1351, %v5411, 0.0
      %v5469 = vadd.f32 %v5467, %v5468
      %v5470 = vsel %vm1351, %v5412, 0.0
      %v5471 = vadd.f32 %v5469, %v5470
      %v5472 = vsel %vm1351, %v5413, 0.0
      %v5473 = vadd.f32 %v5471, %v5472
      %v5474 = vsel %vm1351, %v5414, 0.0
      %v5475 = vadd.f32 %v5473, %v5474
      %v5476 = vsel %vm1351, %v5415, 0.0
      %v5477 = vadd.f32 %v5475, %v5476
      %v5478 = vsel %vm1351, %v5416, 0.0
      %v5479 = vadd.f32 %v5477, %v5478
      %v5480 = vsel %vm1351, %v5417, 0.0
      %v5481 = vadd.f32 %v5479, %v5480
      %v5482 = vsel %vm1351, %v5418, 0.0
      %v5483 = vadd.f32 %v5481, %v5482
      %v5484 = vsel %vm1351, %v5419, 0.0
      %v5485 = vadd.f32 %v5483, %v5484
      %v5486 = vsel %vm1351, %v5420, 0.0
      %v5487 = vadd.f32 %v5485, %v5486
      %v5488 = vsel %vm1351, %v5421, 0.0
      %v5489 = vadd.f32 %v5487, %v5488
      %v5490 = vsel %vm1351, %v5422, 0.0
      %v5491 = vadd.f32 %v5489, %v5490
      %v5492 = vrot.slane %v5491, 4
      %v5493 = vadd.f32 %v5491, %v5492
      %v5494 = vrot.slane %v5493, 2
      %v5495 = vadd.f32 %v5493, %v5494
      %v5496 = vrot.slane %v5495, 1
      %v5497 = vadd.f32 %v5495, %v5496
      %v5498 = vmul.f32 %v5391, %v5391
      %v5499 = vmul.f32 %v5392, %v5392
      %v5500 = vmul.f32 %v5393, %v5393
      %v5501 = vmul.f32 %v5394, %v5394
      %v5502 = vmul.f32 %v5395, %v5395
      %v5503 = vmul.f32 %v5396, %v5396
      %v5504 = vmul.f32 %v5397, %v5397
      %v5505 = vmul.f32 %v5398, %v5398
      %v5506 = vmul.f32 %v5399, %v5399
      %v5507 = vmul.f32 %v5400, %v5400
      %v5508 = vmul.f32 %v5401, %v5401
      %v5509 = vmul.f32 %v5402, %v5402
      %v5510 = vmul.f32 %v5403, %v5403
      %v5511 = vmul.f32 %v5404, %v5404
      %v5512 = vmul.f32 %v5405, %v5405
      %v5513 = vmul.f32 %v5406, %v5406
      %v5514 = vmul.f32 %v5407, %v5407
      %v5515 = vmul.f32 %v5408, %v5408
      %v5516 = vmul.f32 %v5409, %v5409
      %v5517 = vmul.f32 %v5410, %v5410
      %v5518 = vmul.f32 %v5411, %v5411
      %v5519 = vmul.f32 %v5412, %v5412
      %v5520 = vmul.f32 %v5413, %v5413
      %v5521 = vmul.f32 %v5414, %v5414
      %v5522 = vmul.f32 %v5415, %v5415
      %v5523 = vmul.f32 %v5416, %v5416
      %v5524 = vmul.f32 %v5417, %v5417
      %v5525 = vmul.f32 %v5418, %v5418
      %v5526 = vmul.f32 %v5419, %v5419
      %v5527 = vmul.f32 %v5420, %v5420
      %v5528 = vmul.f32 %v5421, %v5421
      %v5529 = vmul.f32 %v5422, %v5422
      %v5530 = vsel %vm1351, %v5498, 0.0
      %v5531 = vsel %vm1351, %v5499, 0.0
      %v5532 = vadd.f32 %v5530, %v5531
      %v5533 = vsel %vm1351, %v5500, 0.0
      %v5534 = vadd.f32 %v5532, %v5533
      %v5535 = vsel %vm1351, %v5501, 0.0
      %v5536 = vadd.f32 %v5534, %v5535
      %v5537 = vsel %vm1351, %v5502, 0.0
      %v5538 = vadd.f32 %v5536, %v5537
      %v5539 = vsel %vm1351, %v5503, 0.0
      %v5540 = vadd.f32 %v5538, %v5539
      %v5541 = vsel %vm1351, %v5504, 0.0
      %v5542 = vadd.f32 %v5540, %v5541
      %v5543 = vsel %vm1351, %v5505, 0.0
      %v5544 = vadd.f32 %v5542, %v5543
      %v5545 = vsel %vm1351, %v5506, 0.0
      %v5546 = vadd.f32 %v5544, %v5545
      %v5547 = vsel %vm1351, %v5507, 0.0
      %v5548 = vadd.f32 %v5546, %v5547
      %v5549 = vsel %vm1351, %v5508, 0.0
      %v5550 = vadd.f32 %v5548, %v5549
      %v5551 = vsel %vm1351, %v5509, 0.0
      %v5552 = vadd.f32 %v5550, %v5551
      %v5553 = vsel %vm1351, %v5510, 0.0
      %v5554 = vadd.f32 %v5552, %v5553
      %v5555 = vsel %vm1351, %v5511, 0.0
      %v5556 = vadd.f32 %v5554, %v5555
      %v5557 = vsel %vm1351, %v5512, 0.0
      %v5558 = vadd.f32 %v5556, %v5557
      %v5559 = vsel %vm1351, %v5513, 0.0
      %v5560 = vadd.f32 %v5558, %v5559
      %v5561 = vsel %vm1351, %v5514, 0.0
      %v5562 = vadd.f32 %v5560, %v5561
      %v5563 = vsel %vm1351, %v5515, 0.0
      %v5564 = vadd.f32 %v5562, %v5563
      %v5565 = vsel %vm1351, %v5516, 0.0
      %v5566 = vadd.f32 %v5564, %v5565
      %v5567 = vsel %vm1351, %v5517, 0.0
      %v5568 = vadd.f32 %v5566, %v5567
      %v5569 = vsel %vm1351, %v5518, 0.0
      %v5570 = vadd.f32 %v5568, %v5569
      %v5571 = vsel %vm1351, %v5519, 0.0
      %v5572 = vadd.f32 %v5570, %v5571
      %v5573 = vsel %vm1351, %v5520, 0.0
      %v5574 = vadd.f32 %v5572, %v5573
      %v5575 = vsel %vm1351, %v5521, 0.0
      %v5576 = vadd.f32 %v5574, %v5575
      %v5577 = vsel %vm1351, %v5522, 0.0
      %v5578 = vadd.f32 %v5576, %v5577
      %v5579 = vsel %vm1351, %v5523, 0.0
      %v5580 = vadd.f32 %v5578, %v5579
      %v5581 = vsel %vm1351, %v5524, 0.0
      %v5582 = vadd.f32 %v5580, %v5581
      %v5583 = vsel %vm1351, %v5525, 0.0
      %v5584 = vadd.f32 %v5582, %v5583
      %v5585 = vsel %vm1351, %v5526, 0.0
      %v5586 = vadd.f32 %v5584, %v5585
      %v5587 = vsel %vm1351, %v5527, 0.0
      %v5588 = vadd.f32 %v5586, %v5587
      %v5589 = vsel %vm1351, %v5528, 0.0
      %v5590 = vadd.f32 %v5588, %v5589
      %v5591 = vsel %vm1351, %v5529, 0.0
      %v5592 = vadd.f32 %v5590, %v5591
      %v5593 = vrot.slane %v5592, 4
      %v5594 = vadd.f32 %v5592, %v5593
      %v5595 = vrot.slane %v5594, 2
      %v5596 = vadd.f32 %v5594, %v5595
      %v5597 = vrot.slane %v5596, 1
      %v5598 = vadd.f32 %v5596, %v5597
      %v5599 = vld [vmem:[%s6] sm:$0x3]
      %vm5600 = vcmask 1040384
      %v5601 = vsel %vm5600, %v5497, %v5598
      %v5602 = vadd.f32 %v5599, %v5601
      %vm5603 = vcmask 58368
      %5604 = vst.msk [vmem:[%s6] sm:$0x3] %vm5603, %v5602
      %v5605 = vpack.c.bf16 %v5392, %v5391
      %v5606 = vpack.c.bf16 %v5394, %v5393
      %v5607 = vpack.c.bf16 %v5396, %v5395
      %v5608 = vpack.c.bf16 %v5398, %v5397
      %v5609 = vpack.c.bf16 %v5400, %v5399
      %v5610 = vpack.c.bf16 %v5402, %v5401
      %v5611 = vpack.c.bf16 %v5404, %v5403
      %v5612 = vpack.c.bf16 %v5406, %v5405
      %v5613 = vpack.c.bf16 %v5408, %v5407
      %v5614 = vpack.c.bf16 %v5410, %v5409
      %v5615 = vpack.c.bf16 %v5412, %v5411
      %v5616 = vpack.c.bf16 %v5414, %v5413
      %v5617 = vpack.c.bf16 %v5416, %v5415
      %v5618 = vpack.c.bf16 %v5418, %v5417
      %v5619 = vpack.c.bf16 %v5420, %v5419
      %v5620 = vpack.c.bf16 %v5422, %v5421
      %v5637 = vunpack.c.l.b16 %v5605
      %v5638 = vunpack.c.h.b16 %v5605
      %v5639 = vunpack.c.l.b16 %v5606
      %v5640 = vunpack.c.h.b16 %v5606
      %v5641 = vunpack.c.l.b16 %v5607
      %v5642 = vunpack.c.h.b16 %v5607
      %v5643 = vunpack.c.l.b16 %v5608
      %v5644 = vunpack.c.h.b16 %v5608
      %v5645 = vunpack.c.l.b16 %v5609
      %v5646 = vunpack.c.h.b16 %v5609
      %v5647 = vunpack.c.l.b16 %v5610
      %v5648 = vunpack.c.h.b16 %v5610
      %v5649 = vunpack.c.l.b16 %v5611
      %v5650 = vunpack.c.h.b16 %v5611
      %v5651 = vunpack.c.l.b16 %v5612
      %v5652 = vunpack.c.h.b16 %v5612
      %v5653 = vunpack.c.l.b16 %v5613
      %v5654 = vunpack.c.h.b16 %v5613
      %v5655 = vunpack.c.l.b16 %v5614
      %v5656 = vunpack.c.h.b16 %v5614
      %v5657 = vunpack.c.l.b16 %v5615
      %v5658 = vunpack.c.h.b16 %v5615
      %v5659 = vunpack.c.l.b16 %v5616
      %v5660 = vunpack.c.h.b16 %v5616
      %v5661 = vunpack.c.l.b16 %v5617
      %v5662 = vunpack.c.h.b16 %v5617
      %v5663 = vunpack.c.l.b16 %v5618
      %v5664 = vunpack.c.h.b16 %v5618
      %v5665 = vunpack.c.l.b16 %v5619
      %v5666 = vunpack.c.h.b16 %v5619
      %v5667 = vunpack.c.l.b16 %v5620
      %v5668 = vunpack.c.h.b16 %v5620
      %v5669 = vpack.c.b16 %v5637, %v5637
      %v5670 = vpack.c.b16 %v5638, %v5638
      %v5671 = vpack.c.b16 %v5639, %v5639
      %v5672 = vpack.c.b16 %v5640, %v5640
      %v5673 = vpack.c.b16 %v5641, %v5641
      %v5674 = vpack.c.b16 %v5642, %v5642
      %v5675 = vpack.c.b16 %v5643, %v5643
      %v5676 = vpack.c.b16 %v5644, %v5644
      %v5677 = vpack.c.b16 %v5645, %v5645
      %v5678 = vpack.c.b16 %v5646, %v5646
      %v5679 = vpack.c.b16 %v5647, %v5647
      %v5680 = vpack.c.b16 %v5648, %v5648
      %v5681 = vpack.c.b16 %v5649, %v5649
      %v5682 = vpack.c.b16 %v5650, %v5650
      %v5683 = vpack.c.b16 %v5651, %v5651
      %v5684 = vpack.c.b16 %v5652, %v5652
      %v5685 = vpack.c.b16 %v5653, %v5653
      %v5686 = vpack.c.b16 %v5654, %v5654
      %v5687 = vpack.c.b16 %v5655, %v5655
      %v5688 = vpack.c.b16 %v5656, %v5656
      %v5689 = vpack.c.b16 %v5657, %v5657
      %v5690 = vpack.c.b16 %v5658, %v5658
      %v5691 = vpack.c.b16 %v5659, %v5659
      %v5692 = vpack.c.b16 %v5660, %v5660
      %v5693 = vpack.c.b16 %v5661, %v5661
      %v5694 = vpack.c.b16 %v5662, %v5662
      %v5695 = vpack.c.b16 %v5663, %v5663
      %v5696 = vpack.c.b16 %v5664, %v5664
      %v5697 = vpack.c.b16 %v5665, %v5665
      %v5698 = vpack.c.b16 %v5666, %v5666
      %v5699 = vpack.c.b16 %v5667, %v5667
      %v5700 = vpack.c.b16 %v5668, %v5668
      %5733 = vst.msk [vmem:[%s249] sm:$0xf] %vm452, %v5669
      %5734 = vst.msk [vmem:[%s249 + $0x4] sm:$0xf] %vm452, %v5670
      %5735 = vst.msk [vmem:[%s249 + $0x8] sm:$0xf] %vm452, %v5671
      %5736 = vst.msk [vmem:[%s249 + $0xc] sm:$0xf] %vm452, %v5672
      %5737 = vst.msk [vmem:[%s249 + $0x10] sm:$0xf] %vm452, %v5673
      %5738 = vst.msk [vmem:[%s249 + $0x14] sm:$0xf] %vm452, %v5674
      %5739 = vst.msk [vmem:[%s249 + $0x18] sm:$0xf] %vm452, %v5675
      %5740 = vst.msk [vmem:[%s249 + $0x1c] sm:$0xf] %vm452, %v5676
      %5741 = vst.msk [vmem:[%s249 + $0x20] sm:$0xf] %vm452, %v5677
      %5742 = vst.msk [vmem:[%s249 + $0x24] sm:$0xf] %vm452, %v5678
      %5743 = vst.msk [vmem:[%s249 + $0x28] sm:$0xf] %vm452, %v5679
      %5744 = vst.msk [vmem:[%s249 + $0x2c] sm:$0xf] %vm452, %v5680
      %5745 = vst.msk [vmem:[%s249 + $0x30] sm:$0xf] %vm452, %v5681
      %5746 = vst.msk [vmem:[%s249 + $0x34] sm:$0xf] %vm452, %v5682
      %5747 = vst.msk [vmem:[%s249 + $0x38] sm:$0xf] %vm452, %v5683
      %5748 = vst.msk [vmem:[%s249 + $0x3c] sm:$0xf] %vm452, %v5684
      %5749 = vst.msk [vmem:[%s249 + $0x40] sm:$0xf] %vm452, %v5685
      %5750 = vst.msk [vmem:[%s249 + $0x44] sm:$0xf] %vm452, %v5686
      %5751 = vst.msk [vmem:[%s249 + $0x48] sm:$0xf] %vm452, %v5687
      %5752 = vst.msk [vmem:[%s249 + $0x4c] sm:$0xf] %vm452, %v5688
      %5753 = vst.msk [vmem:[%s249 + $0x50] sm:$0xf] %vm452, %v5689
      %5754 = vst.msk [vmem:[%s249 + $0x54] sm:$0xf] %vm452, %v5690
      %5755 = vst.msk [vmem:[%s249 + $0x58] sm:$0xf] %vm452, %v5691
      %5756 = vst.msk [vmem:[%s249 + $0x5c] sm:$0xf] %vm452, %v5692
      %5757 = vst.msk [vmem:[%s249 + $0x60] sm:$0xf] %vm452, %v5693
      %5758 = vst.msk [vmem:[%s249 + $0x64] sm:$0xf] %vm452, %v5694
      %5759 = vst.msk [vmem:[%s249 + $0x68] sm:$0xf] %vm452, %v5695
      %5760 = vst.msk [vmem:[%s249 + $0x6c] sm:$0xf] %vm452, %v5696
      %5761 = vst.msk [vmem:[%s249 + $0x70] sm:$0xf] %vm452, %v5697
      %5762 = vst.msk [vmem:[%s249 + $0x74] sm:$0xf] %vm452, %v5698
      %5763 = vst.msk [vmem:[%s249 + $0x78] sm:$0xf] %vm452, %v5699
      %5764 = vst.msk [vmem:[%s249 + $0x7c] sm:$0xf] %vm452, %v5700
      %p5765 = scmp.lt.s32.totalorder %s18, 1
      %s5766 = scalar_select %p5765, %s18, 1
      %s5767 = smul.addr %s5766, 32
      %s5768 = smul.addr %s5767, 4
      %s5769 = scalar_lea.vmem %s5, %s5768
      // Predicated region
      $region45: #{double_conv_block_forward.4} parent=39 // pred_check
        %p5770 = pneg %p146
      $region46: #{double_conv_block_forward.4} parent=39 // pred_check_branch
        %5772 = sbr.rel (%p5770) target = $region48
      $region47: #{double_conv_block_forward.4} parent=39 // pred_region
        _
      $region48: #{double_conv_block_forward.4} parent=39 // pred_fallthru
        _
      // Predicated region
      $region49: #{double_conv_block_forward.4} parent=39 // pred_check
        %p5773 = pneg %p167
      $region50: #{double_conv_block_forward.4} parent=39 // pred_check_branch
        %5775 = sbr.rel (%p5773) target = $region52
      $region51: #{double_conv_block_forward.4} parent=39 // pred_region
        _
      $region52: #{double_conv_block_forward.4} parent=39 // pred_fallthru
        _
      // Predicated region
      $region53: #{double_conv_block_forward.4} parent=39 // pred_check
        %p5776 = pneg %p167
      $region54: #{double_conv_block_forward.4} parent=39 // pred_check_branch
        %5778 = sbr.rel (%p5776) target = $region56
      $region55: #{double_conv_block_forward.4} parent=39 // pred_region
        _
      $region56: #{double_conv_block_forward.4} parent=39 // pred_fallthru
        _
    $region40: #{double_conv_block_forward.4} parent=5 // pred_fallthru
      _
    %p5779 = scmp.le.s32.totalorder 2, %s13
    // Predicated region
    $region57: #{double_conv_block_forward.4} parent=5 // pred_check
      %p5780 = pneg %p5779
    $region58: #{double_conv_block_forward.4} parent=5 // pred_check_branch
      %5782 = sbr.rel (%p5780) target = $region60
    $region59: #{double_conv_block_forward.4} parent=5 // pred_region
      %s5783 = ssub.s32 %s13, 2
      // Predicated region
      $region61: #{double_conv_block_forward.4} parent=59 // pred_check
        %p5784 = pneg %p152
      $region62: #{double_conv_block_forward.4} parent=59 // pred_check_branch
        %5786 = sbr.rel (%p5784) target = $region64
      $region63: #{double_conv_block_forward.4} parent=59 // pred_region
        %p5787 = scmp.lt.s32.totalorder %s19, 1
        %s5788 = scalar_select %p5787, %s19, 1
        %s5789 = smul.addr %s5788, 32
        %s5790 = smul.addr %s5789, 4
        %s5791 = scalar_lea.vmem %s5, %s5790
      $region64: #{double_conv_block_forward.4} parent=59 // pred_fallthru
        _
    $region60: #{double_conv_block_forward.4} parent=5 // pred_fallthru
      _
  $region6: #{double_conv_block_forward.4} parent=0 // loop_footer
    %s17 = sadd.s32 1, %s13
  $region7: #{double_conv_block_forward.4} parent=0 // loop_footer_branch
    %12 = sbr.rel target = $region3
  $region8: #{double_conv_block_forward.4} parent=0 // loop_exit
    _

</llo_original>
